<compile_context>
chip_gen: v6e
topology: v6e:2x2x1
jax: 0.10.0
libtpu: 0.0.40
codegen_flags: <defaults>
</compile_context>

<pallas_src>
import math
import numpy as np

import jax
import jax.numpy as jnp
from jax.experimental import pallas as pl
from jax.experimental.pallas import tpu as pltpu

_VMEM_LIMIT = 48 * 1024 * 1024  # <= v7x physical (64 MiB); above v5e/v6e default scoped limits


def _pick_tile(n, target):
    """Largest divisor of n that is <= target (keeps edge blocks exact)."""
    n = int(n)
    target = max(1, int(target))
    if n <= target:
        return n
    best = 1
    for d in range(1, target + 1):
        if n % d == 0:
            best = d
    return best


def _attend_head(qh, kh, vh, scale, mxu_dtype):
    """One attention head on [B, S, d] blocks. Softmax math stays f32; MXU operands may be bf16."""
    s = jnp.einsum('bqd,bkd->bqk', qh.astype(mxu_dtype), kh.astype(mxu_dtype),
                   preferred_element_type=jnp.float32) * scale
    mx = jnp.max(s, axis=-1, keepdims=True)
    e = jnp.exp(s - mx)
    p = e * pl.reciprocal(jnp.sum(e, axis=-1, keepdims=True), approx=True)
    return jnp.einsum('bqk,bkd->bqd', p.astype(mxu_dtype), vh.astype(mxu_dtype),
                      preferred_element_type=jnp.float32)


# ---------------------------------------------------------------------------
# Kernel 1: fused 1x1-conv + local-context re-weighting (Q and K streams together)
# ---------------------------------------------------------------------------
def local_weight_fused(q, qpad, k, kpad, wq, bq, wk, bk, *, L,
                       mxu_dtype=jnp.float32, tile_v=8, tile_b=8):
    """q/k: [v, b, t, c]; qpad/kpad: [v, b, L-1, c] -> (q_local, k_local): [v, b, t, c]."""
    v_, b_, t_, c_ = q.shape
    Lm1 = L - 1
    T = t_ + Lm1
    scale = 1.0 / math.sqrt(c_)

    tv = _pick_tile(v_, tile_v)
    tb = _pick_tile(b_, tile_b)
    G = tv * tb

    # Tiny static 0/1 selection matrices reproducing the PyTorch flat-index (L, t) regrouping:
    #   out[r, :] = sum_j sum_i sel[j, r, i] * band_softmax[i, j] * xproj[i + j, :]
    sel_np = np.zeros((L, t_, t_), np.float32)
    for j in range(L):
        for i in range(t_):
            sel_np[j, (i * L + j) % t_, i] = 1.0
    sel = jnp.asarray(sel_np)

    def kernel(qx_ref, qp_ref, kx_ref, kp_ref, wq_ref, bq_ref, wk_ref, bk_ref,
               sel_ref, qo_ref, ko_ref):
        def stream(x_ref, p_ref, w_ref, bias_ref, o_ref):
            x = x_ref[...].reshape(G, t_, c_)
            p = p_ref[...].reshape(G, Lm1, c_)
            xp = jnp.concatenate([p, x], axis=1)                         # [G, T, c] (VMEM)
            # 1x1 conv == per-position channel linear, as ONE flattened MXU matmul (M = G*T)
            proj = jnp.dot(xp.reshape(G * T, c_).astype(mxu_dtype),
                           w_ref[...].astype(mxu_dtype),
                           preferred_element_type=jnp.float32) + bias_ref[...]
            xproj = proj.reshape(G, T, c_)                               # f32
            qt = xproj[:, Lm1:, :]                                       # [G, t, c]
            # band scores only over the L-wide local window (no [t, T] scores, no mask)
            xs = [xproj[:, j:j + t_, :] for j in range(L)]               # each [G, t, c]
            sc = [jnp.sum(qt * xs[j], axis=-1) * scale for j in range(L)]  # each [G, t]
            m = sc[0]
            for j in range(1, L):
                m = jnp.maximum(m, sc[j])
            es = [jnp.exp(sc[j] - m) for j in range(L)]
            den = es[0]
            for j in range(1, L):
                den = den + es[j]
            inv = pl.reciprocal(den, approx=True)                        # [G, t]
            # flat-index regrouping as L small MXU contractions against static 0/1 matrices
            acc = jnp.zeros((G, t_, c_), jnp.float32)
            for j in range(L):
                yj = ((es[j] * inv)[..., None] * xs[j]).astype(mxu_dtype)   # [G, t, c]
                pj = jnp.broadcast_to(sel_ref[j].astype(mxu_dtype)[None], (G, t_, t_))
                acc = acc + jnp.einsum('gri,gic->grc', pj, yj,
                                       preferred_element_type=jnp.float32)
            o_ref[...] = acc.reshape(tv, tb, t_, c_).astype(o_ref.dtype)

        stream(qx_ref, qp_ref, wq_ref, bq_ref, qo_ref)
        stream(kx_ref, kp_ref, wk_ref, bk_ref, ko_ref)

    x_spec = pl.BlockSpec((tv, tb, t_, c_), lambda bi, vi: (vi, bi, 0, 0))
    pad_spec = pl.BlockSpec((tv, tb, Lm1, c_), lambda bi, vi: (vi, bi, 0, 0))
    w_spec = pl.BlockSpec((c_, c_), lambda bi, vi: (0, 0))
    b_spec = pl.BlockSpec((1, c_), lambda bi, vi: (0, 0))
    sel_spec = pl.BlockSpec((L, t_, t_), lambda bi, vi: (0, 0, 0))
    out_spec = pl.BlockSpec((tv, tb, t_, c_), lambda bi, vi: (vi, bi, 0, 0))

    flops = 2 * (2 * v_ * b_ * T * c_ * c_
                 + 2 * v_ * b_ * t_ * L * c_
                 + 2 * v_ * b_ * L * t_ * t_ * c_)
    transcendentals = 2 * v_ * b_ * t_ * L
    bytes_accessed = 4 * (4 * v_ * b_ * t_ * c_ + 2 * v_ * b_ * Lm1 * c_
                          + 2 * c_ * c_ + 2 * c_ + L * t_ * t_)

    return pl.pallas_call(
        kernel,
        out_shape=(jax.ShapeDtypeStruct((v_, b_, t_, c_), q.dtype),
                   jax.ShapeDtypeStruct((v_, b_, t_, c_), k.dtype)),
        grid=(b_ // tb, v_ // tv),
        in_specs=[x_spec, pad_spec, x_spec, pad_spec,
                  w_spec, b_spec, w_spec, b_spec, sel_spec],
        out_specs=(out_spec, out_spec),
        compiler_params=pltpu.CompilerParams(
            dimension_semantics=("parallel", "parallel"),
            vmem_limit_bytes=_VMEM_LIMIT),
        cost_estimate=pl.CostEstimate(flops=flops, transcendentals=transcendentals,
                                      bytes_accessed=bytes_accessed),
    )(q, qpad, k, kpad, wq, bq.reshape(1, c_), wk, bk.reshape(1, c_), sel)


# ---------------------------------------------------------------------------
# Kernel 2: multi-head attention over time with the value linear fused
# ---------------------------------------------------------------------------
def time_attention(q, k, v, w_v, b_v, *, h, mxu_dtype=jnp.float32, tile_nb=128):
    """q/k/v: [NB, S, C] -> [NB, S, C]; value pre-projection fused; heads stay lane-folded."""
    nb, s, c = q.shape
    assert c % h == 0
    d = c // h
    scale = 1.0 / math.sqrt(d)
    tile = _pick_tile(nb, tile_nb)

    def kernel(q_ref, k_ref, v_ref, wv_ref, bv_ref, o_ref):
        qb = q_ref[...]
        kb = k_ref[...]
        # fused value linear as ONE flattened MXU matmul (M = tile*s)
        vf = v_ref[...].reshape(tile * s, c).astype(mxu_dtype)
        vproj = jnp.dot(vf, wv_ref[...].astype(mxu_dtype),
                        preferred_element_type=jnp.float32) + bv_ref[...]
        vproj = vproj.reshape(tile, s, c)
        # static unroll over heads; each head's result is stored directly into its lane slice
        for hh in range(h):
            sl = slice(hh * d, (hh + 1) * d)
            oh = _attend_head(qb[:, :, sl], kb[:, :, sl], vproj[:, :, sl], scale, mxu_dtype)
            o_ref[:, :, sl] = oh.astype(o_ref.dtype)

    x_spec = pl.BlockSpec((tile, s, c), lambda i: (i, 0, 0))
    w_spec = pl.BlockSpec((c, c), lambda i: (0, 0))
    b_spec = pl.BlockSpec((1, c), lambda i: (0, 0))

    flops = 2 * nb * s * c * c + 4 * nb * s * s * c
    transcendentals = nb * h * s * s
    bytes_accessed = 4 * (4 * nb * s * c + c * c + c)

    return pl.pallas_call(
        kernel,
        out_shape=jax.ShapeDtypeStruct((nb, s, c), q.dtype),
        grid=(nb // tile,),
        in_specs=[x_spec, x_spec, x_spec, w_spec, b_spec],
        out_specs=x_spec,
        compiler_params=pltpu.CompilerParams(
            dimension_semantics=("parallel",),
            vmem_limit_bytes=_VMEM_LIMIT),
        cost_estimate=pl.CostEstimate(flops=flops, transcendentals=transcendentals,
                                      bytes_accessed=bytes_accessed),
    )(q, k, v, w_v, b_v.reshape(1, c))


# ---------------------------------------------------------------------------
# Kernel 3: multi-head self-attention across assets with the output linear fused
#           (consumes and produces [v, b, t, c] directly -- no wrapper HBM transposes)
# ---------------------------------------------------------------------------
def asset_attention(x, w_o, b_o, *, h, mxu_dtype=jnp.float32, tile_b=8):
    v_, b_, t_, c_ = x.shape
    assert c_ % h == 0
    d = c_ // h
    scale = 1.0 / math.sqrt(d)
    tb = _pick_tile(b_, tile_b)
    N = tb * t_

    def kernel(x_ref, wo_ref, bo_ref, o_ref, acc_ref):
        xa = x_ref[...]                                                  # [v, tb, t, c]
        # layout change done per-block in VMEM with static slices (not a full HBM transpose)
        xb = jnp.stack([xa[i] for i in range(v_)], axis=2)               # [tb, t, v, c]
        xb = xb.reshape(N, v_, c_)                                       # free leading merge
        for hh in range(h):
            sl = slice(hh * d, (hh + 1) * d)
            xh = xb[:, :, sl]
            acc_ref[:, :, sl] = _attend_head(xh, xh, xh, scale, mxu_dtype)
        # fused output linear as ONE flattened MXU matmul (M = N*v)
        oflat = acc_ref[...].reshape(N * v_, c_).astype(mxu_dtype)
        oproj = jnp.dot(oflat, wo_ref[...].astype(mxu_dtype),
                        preferred_element_type=jnp.float32) + bo_ref[...]
        oproj4 = oproj.reshape(tb, t_, v_, c_)
        o_ref[...] = jnp.stack([oproj4[:, :, i, :] for i in range(v_)],
                               axis=0).astype(o_ref.dtype)               # [v, tb, t, c]

    x_spec = pl.BlockSpec((v_, tb, t_, c_), lambda i: (0, i, 0, 0))
    w_spec = pl.BlockSpec((c_, c_), lambda i: (0, 0))
    b_spec = pl.BlockSpec((1, c_), lambda i: (0, 0))

    ntot = b_ * t_
    flops = 4 * ntot * v_ * v_ * c_ + 2 * ntot * v_ * c_ * c_
    transcendentals = ntot * h * v_ * v_
    bytes_accessed = 4 * (2 * v_ * b_ * t_ * c_ + c_ * c_ + c_)

    return pl.pallas_call(
        kernel,
        out_shape=jax.ShapeDtypeStruct((v_, b_, t_, c_), x.dtype),
        grid=(b_ // tb,),
        in_specs=[x_spec, w_spec, b_spec],
        out_specs=x_spec,
        scratch_shapes=[pltpu.VMEM((N, v_, c_), jnp.float32)],
        compiler_params=pltpu.CompilerParams(
            dimension_semantics=("parallel",),
            vmem_limit_bytes=_VMEM_LIMIT),
        cost_estimate=pl.CostEstimate(flops=flops, transcendentals=transcendentals,
                                      bytes_accessed=bytes_accessed),
    )(x, w_o, b_o.reshape(1, c_))


# ---------------------------------------------------------------------------
# Kernel 4: tiled row-parallel linear (used on the asset_atten=False path / L==1 conv)
# ---------------------------------------------------------------------------
def linear_pallas(x, w, b, *, tile_rows=1024, mxu_dtype=jnp.float32):
    """y = x @ w + b.  x: [N, cin] -> [N, cout], tiled over rows."""
    n, cin = x.shape
    cout = w.shape[1]
    tile = _pick_tile(n, tile_rows)

    def kernel(x_ref, w_ref, b_ref, o_ref):
        acc = jnp.dot(x_ref[...].astype(mxu_dtype), w_ref[...].astype(mxu_dtype),
                      preferred_element_type=jnp.float32)
        o_ref[...] = (acc + b_ref[...]).astype(o_ref.dtype)

    flops = 2 * n * cin * cout
    bytes_accessed = 4 * (n * cin + cin * cout + cout + n * cout)

    return pl.pallas_call(
        kernel,
        out_shape=jax.ShapeDtypeStruct((n, cout), x.dtype),
        grid=(n // tile,),
        in_specs=[pl.BlockSpec((tile, cin), lambda i: (i, 0)),
                  pl.BlockSpec((cin, cout), lambda i: (0, 0)),
                  pl.BlockSpec((1, cout), lambda i: (0, 0))],
        out_specs=pl.BlockSpec((tile, cout), lambda i: (i, 0)),
        compiler_params=pltpu.CompilerParams(
            dimension_semantics=("parallel",),
            vmem_limit_bytes=_VMEM_LIMIT),
        cost_estimate=pl.CostEstimate(flops=flops, transcendentals=0,
                                      bytes_accessed=bytes_accessed),
    )(x, w, b.reshape(1, cout))


# ---------------------------------------------------------------------------
# Forward pass (all wrapper glue is free reshapes; no HBM transposes / concats)
# ---------------------------------------------------------------------------
def multi_headed_attention(query, key, value, padding_price_q, padding_price_k,
                           params, *, h, local_context_length, asset_atten=True,
                           mxu_dtype=jnp.float32, tile_v=8, tile_b=8,
                           tile_nb=128, tile_rows=1024):
    v_, b_, t_, c_ = query.shape
    L = local_context_length

    if L > 1:
        def _pad(p):
            if p is None:
                return jnp.zeros((v_, b_, L - 1, c_), query.dtype)
            return p
        q_local, k_local = local_weight_fused(
            query, _pad(padding_price_q), key, _pad(padding_price_k),
            params['conv_q_w'], params['conv_q_b'],
            params['conv_k_w'], params['conv_k_b'],
            L=L, mxu_dtype=mxu_dtype, tile_v=tile_v, tile_b=tile_b)
    else:
        # L == 1: local re-weighting degenerates to the 1x1 conv itself
        q_local = linear_pallas(query.reshape(-1, c_), params['conv_q_w'],
                                params['conv_q_b'], tile_rows=tile_rows,
                                mxu_dtype=mxu_dtype).reshape(v_, b_, t_, c_)
        k_local = linear_pallas(key.reshape(-1, c_), params['conv_k_w'],
                                params['conv_k_b'], tile_rows=tile_rows,
                                mxu_dtype=mxu_dtype).reshape(v_, b_, t_, c_)

    nb = v_ * b_
    # leading-dim reshapes only -> no HBM copies
    x = time_attention(q_local.reshape(nb, t_, c_),
                       k_local.reshape(nb, t_, c_),
                       value.reshape(nb, t_, c_),
                       params['lin_v_w'], params['lin_v_b'],
                       h=h, mxu_dtype=mxu_dtype, tile_nb=tile_nb)        # [nb, t, c]
    x = x.reshape(v_, b_, t_, c_)

    if asset_atten:
        return asset_attention(x, params['lin_o_w'], params['lin_o_b'],
                               h=h, mxu_dtype=mxu_dtype, tile_b=tile_b)  # [v, b, t, c]

    out = linear_pallas(x.reshape(-1, c_), params['lin_o_w'], params['lin_o_b'],
                        tile_rows=tile_rows, mxu_dtype=mxu_dtype)
    return out.reshape(v_, b_, t_, c_)


# ---------------------------------------------------------------------------
# Pure-JAX reference (mirrors the PyTorch forward literally) for validation
# ---------------------------------------------------------------------------
def ref_forward(query, key, value, pp_q, pp_k, params, *, h, L, asset_atten=True):
    v_, b_, t_, c_ = query.shape
    d_k = c_ // h

    def conv1x1(x_bchw, w, b):                              # w: [c_in, c_out]
        return jnp.einsum('bchw,cd->bdhw', x_bchw, w) + b[None, :, None, None]

    def local_branch(x, pp, w, bias):
        s0, s1, s2, s3 = x.shape
        pad = jnp.transpose(pp, (1, 3, 0, 2)) if pp is not None else (
            jnp.zeros((s1, s3, s0, L - 1), x.dtype) if L > 1 else None)
        xp = jnp.transpose(x, (1, 3, 0, 2))
        if pad is not None:
            xp = jnp.concatenate([pad, xp], axis=-1)
        xp = conv1x1(xp, w, bias)
        xp = jnp.transpose(xp, (0, 2, 3, 1))                 # [b, v, T, c]
        lw = jnp.matmul(xp[:, :, L - 1:, :], jnp.swapaxes(xp, -2, -1)) / math.sqrt(s3)
        lw_list = jnp.concatenate(
            [jax.nn.softmax(lw[:, :, i:i + 1, i:i + L], axis=-1) for i in range(s2)], axis=3)
        lw_list = jnp.transpose(lw_list, (0, 1, 3, 2))
        x_list = jnp.concatenate([xp[:, :, i:i + L, :] for i in range(s2)], axis=2)
        y = lw_list * x_list
        y = jnp.sum(y.reshape(s1, s0, L, s2, s3), axis=2)
        y = jnp.transpose(jnp.transpose(y, (0, 3, 1, 2)), (2, 0, 3, 1))
        y = y.reshape(s0 * s1, s2, s3)
        return jnp.swapaxes(y.reshape(s0 * s1, s2, h, d_k), 1, 2)

    def attn(q, k, vv):
        sc = jnp.matmul(q, jnp.swapaxes(k, -2, -1)) / math.sqrt(q.shape[-1])
        return jnp.matmul(jax.nn.softmax(sc, axis=-1), vv)

    qh = local_branch(query, pp_q, params['conv_q_w'], params['conv_q_b'])
    kh = local_branch(key, pp_k, params['conv_k_w'], params['conv_k_b'])
    val = value.reshape(v_ * b_, t_, c_) @ params['lin_v_w'] + params['lin_v_b']
    vh = jnp.swapaxes(val.reshape(v_ * b_, t_, h, d_k), 1, 2)
    x = attn(qh, kh, vh)
    x = jnp.swapaxes(x, 1, 2).reshape(v_ * b_, t_, c_).reshape(v_, b_, t_, c_)
    if asset_atten:
        xa = jnp.transpose(x, (2, 1, 0, 3)).reshape(t_ * b_, v_, c_)
        ah = jnp.swapaxes(xa.reshape(t_ * b_, v_, h, d_k), 1, 2)
        xo = attn(ah, ah, ah)
        xo = jnp.swapaxes(xo, 1, 2).reshape(t_ * b_, v_, c_).reshape(t_, b_, v_, c_)
        x = jnp.transpose(xo, (2, 1, 0, 3))
    return x @ params['lin_o_w'] + params['lin_o_b']


# ---------------------------------------------------------------------------
if __name__ == "__main__":
    v_, b_, t_, c_ = 4, 2, 8, 32      # assets, batch, time, d_model
    h, L = 4, 3                       # heads, local_context_length
    key0 = jax.random.PRNGKey(0)
    ks = jax.random.split(key0, 16)
    scale = 1.0 / math.sqrt(c_)

    query = jax.random.normal(ks[0], (v_, b_, t_, c_), jnp.float32)
    key_in = jax.random.normal(ks[1], (v_, b_, t_, c_), jnp.float32)
    value = jax.random.normal(ks[2], (v_, b_, t_, c_), jnp.float32)
    pp_q = jax.random.normal(ks[3], (v_, b_, L - 1, c_), jnp.float32) * 0.1
    pp_k = jax.random.normal(ks[4], (v_, b_, L - 1, c_), jnp.float32) * 0.1

    params = {
        'conv_q_w': jax.random.normal(ks[5], (c_, c_), jnp.float32) * scale,
        'conv_q_b': jax.random.normal(ks[6], (c_,), jnp.float32) * scale,
        'conv_k_w': jax.random.normal(ks[7], (c_, c_), jnp.float32) * scale,
        'conv_k_b': jax.random.normal(ks[8], (c_,), jnp.float32) * scale,
        'lin_v_w': jax.random.normal(ks[9], (c_, c_), jnp.float32) * scale,
        'lin_v_b': jax.random.normal(ks[10], (c_,), jnp.float32) * scale,
        'lin_o_w': jax.random.normal(ks[11], (c_, c_), jnp.float32) * scale,
        'lin_o_b': jax.random.normal(ks[12], (c_,), jnp.float32) * scale,
    }

    ref = jax.block_until_ready(
        ref_forward(query, key_in, value, pp_q, pp_k, params, h=h, L=L, asset_atten=True))

    # 1) f32 MXU operands: tight check against the literal PyTorch-mirroring reference
    #    (approx reciprocal in softmax denominators accounts for the tolerance).
    out_f32 = jax.block_until_ready(multi_headed_attention(
        query, key_in, value, pp_q, pp_k, params,
        h=h, local_context_length=L, asset_atten=True, mxu_dtype=jnp.float32))
    assert out_f32.shape == (v_, b_, t_, c_)
    np.testing.assert_allclose(np.asarray(out_f32), np.asarray(ref), atol=2e-2, rtol=2e-2)

    # 2) bf16 MXU operands (fast path on v5e/v6e/v7x; softmax & accumulation stay f32)
    out_bf16 = jax.block_until_ready(multi_headed_attention(
        query, key_in, value, pp_q, pp_k, params,
        h=h, local_context_length=L, asset_atten=True, mxu_dtype=jnp.bfloat16))
    np.testing.assert_allclose(np.asarray(out_bf16), np.asarray(ref), atol=1e-1, rtol=1e-1)

    # 3) asset_atten=False branch (exercises the tiled row-parallel linear_pallas)
    ref_na = jax.block_until_ready(
        ref_forward(query, key_in, value, pp_q, pp_k, params, h=h, L=L, asset_atten=False))
    out_na = jax.block_until_ready(multi_headed_attention(
        query, key_in, value, pp_q, pp_k, params,
        h=h, local_context_length=L, asset_atten=False, mxu_dtype=jnp.float32))
    np.testing.assert_allclose(np.asarray(out_na), np.asarray(ref_na), atol=2e-2, rtol=2e-2)

    print("KERNEL_OK")
</pallas_src>

<mosaic_0001>
module attributes {stable_mosaic.version = 11 : i64} {
  func.func @kernel(%arg0: i32, %arg1: i32, %arg2: memref<4x2x8x32xf32, #tpu.memory_space<vmem>>, %arg3: memref<4x2x2x32xf32, #tpu.memory_space<vmem>>, %arg4: memref<4x2x8x32xf32, #tpu.memory_space<vmem>>, %arg5: memref<4x2x2x32xf32, #tpu.memory_space<vmem>>, %arg6: memref<32x32xf32, #tpu.memory_space<vmem>>, %arg7: memref<1x32xf32, #tpu.memory_space<vmem>>, %arg8: memref<32x32xf32, #tpu.memory_space<vmem>>, %arg9: memref<1x32xf32, #tpu.memory_space<vmem>>, %arg10: memref<3x8x8xf32, #tpu.memory_space<vmem>>, %arg11: memref<4x2x8x32xf32, #tpu.memory_space<vmem>>, %arg12: memref<4x2x8x32xf32, #tpu.memory_space<vmem>>) attributes {dimension_semantics = [#tpu.dimension_semantics<parallel>, #tpu.dimension_semantics<parallel>], iteration_bounds = array<i64: 1, 1>, scalar_prefetch = 0 : i64, scratch_operands = 0 : i64, tpu.core_type = #tpu.core_type<tc>, window_params = [{transform_indices = @transform_0, window_bounds = array<i64: 4, 2, 8, 32>}, {transform_indices = @transform_1, window_bounds = array<i64: 4, 2, 2, 32>}, {transform_indices = @transform_2, window_bounds = array<i64: 4, 2, 8, 32>}, {transform_indices = @transform_3, window_bounds = array<i64: 4, 2, 2, 32>}, {pipeline_mode = #tpu.pipeline_mode<synchronous>, transform_indices = @transform_4, window_bounds = array<i64: 32, 32>}, {pipeline_mode = #tpu.pipeline_mode<synchronous>, transform_indices = @transform_5, window_bounds = array<i64: 1, 32>}, {pipeline_mode = #tpu.pipeline_mode<synchronous>, transform_indices = @transform_6, window_bounds = array<i64: 32, 32>}, {pipeline_mode = #tpu.pipeline_mode<synchronous>, transform_indices = @transform_7, window_bounds = array<i64: 1, 32>}, {pipeline_mode = #tpu.pipeline_mode<synchronous>, transform_indices = @transform_8, window_bounds = array<i64: 3, 8, 8>}, {transform_indices = @transform_9, window_bounds = array<i64: 4, 2, 8, 32>}, {transform_indices = @transform_10, window_bounds = array<i64: 4, 2, 8, 32>}]} {
    %c0 = arith.constant 0 : index
    %c0_0 = arith.constant 0 : index
    %c0_1 = arith.constant 0 : index
    %c0_2 = arith.constant 0 : index
    %0 = vector.load %arg2[%c0, %c0_0, %c0_1, %c0_2] : memref<4x2x8x32xf32, #tpu.memory_space<vmem>>, vector<4x2x8x32xf32>
    %1 = vector.shape_cast %0 : vector<4x2x8x32xf32> to vector<8x8x32xf32>
    %c0_3 = arith.constant 0 : index
    %c0_4 = arith.constant 0 : index
    %c0_5 = arith.constant 0 : index
    %c0_6 = arith.constant 0 : index
    %2 = vector.load %arg3[%c0_3, %c0_4, %c0_5, %c0_6] : memref<4x2x2x32xf32, #tpu.memory_space<vmem>>, vector<4x2x2x32xf32>
    %3 = vector.shape_cast %2 : vector<4x2x2x32xf32> to vector<8x2x32xf32>
    %4 = tpu.concatenate %3, %1 in 1 : vector<8x2x32xf32>, vector<8x8x32xf32> -> vector<8x10x32xf32>
    %5 = vector.shape_cast %4 : vector<8x10x32xf32> to vector<80x32xf32>
    %c0_7 = arith.constant 0 : index
    %c0_8 = arith.constant 0 : index
    %6 = vector.load %arg6[%c0_7, %c0_8] : memref<32x32xf32, #tpu.memory_space<vmem>>, vector<32x32xf32>
    %cst = arith.constant dense<0.000000e+00> : vector<80x32xf32>
    %7 = tpu.matmul %5, %6, %cst {dimension_numbers = #tpu.dot_dimension_numbers<[1], [0], [0], [1], [0, 0, 1, 1], [], []>} : vector<80x32xf32>, vector<32x32xf32>, vector<80x32xf32> -> vector<80x32xf32>
    %c0_9 = arith.constant 0 : index
    %c0_10 = arith.constant 0 : index
    %8 = vector.load %arg7[%c0_9, %c0_10] : memref<1x32xf32, #tpu.memory_space<vmem>>, vector<1x32xf32>
    %9 = vector.broadcast %8 : vector<1x32xf32> to vector<80x32xf32>
    %10 = arith.addf %7, %9 : vector<80x32xf32>
    %11 = vector.shape_cast %10 : vector<80x32xf32> to vector<8x10x32xf32>
    %12 = vector.extract_strided_slice %11 {offsets = [0, 2, 0], sizes = [8, 8, 32], strides = [1, 1, 1]} : vector<8x10x32xf32> to vector<8x8x32xf32>
    %13 = vector.extract_strided_slice %11 {offsets = [0, 0, 0], sizes = [8, 8, 32], strides = [1, 1, 1]} : vector<8x10x32xf32> to vector<8x8x32xf32>
    %14 = vector.extract_strided_slice %11 {offsets = [0, 1, 0], sizes = [8, 8, 32], strides = [1, 1, 1]} : vector<8x10x32xf32> to vector<8x8x32xf32>
    %15 = vector.extract_strided_slice %11 {offsets = [0, 2, 0], sizes = [8, 8, 32], strides = [1, 1, 1]} : vector<8x10x32xf32> to vector<8x8x32xf32>
    %16 = arith.mulf %12, %13 : vector<8x8x32xf32>
    %cst_11 = arith.constant dense<0.000000e+00> : vector<8x8xf32>
    %17 = vector.multi_reduction <add>, %16, %cst_11 [2] : vector<8x8x32xf32> to vector<8x8xf32>
    %cst_12 = arith.constant 0.176776692 : f32
    %18 = vector.broadcast %cst_12 : f32 to vector<8x8xf32>
    %19 = arith.mulf %17, %18 : vector<8x8xf32>
    %20 = arith.mulf %12, %14 : vector<8x8x32xf32>
    %cst_13 = arith.constant dense<0.000000e+00> : vector<8x8xf32>
    %21 = vector.multi_reduction <add>, %20, %cst_13 [2] : vector<8x8x32xf32> to vector<8x8xf32>
    %cst_14 = arith.constant 0.176776692 : f32
    %22 = vector.broadcast %cst_14 : f32 to vector<8x8xf32>
    %23 = arith.mulf %21, %22 : vector<8x8xf32>
    %24 = arith.mulf %12, %15 : vector<8x8x32xf32>
    %cst_15 = arith.constant dense<0.000000e+00> : vector<8x8xf32>
    %25 = vector.multi_reduction <add>, %24, %cst_15 [2] : vector<8x8x32xf32> to vector<8x8xf32>
    %cst_16 = arith.constant 0.176776692 : f32
    %26 = vector.broadcast %cst_16 : f32 to vector<8x8xf32>
    %27 = arith.mulf %25, %26 : vector<8x8xf32>
    %28 = arith.maximumf %19, %23 : vector<8x8xf32>
    %29 = arith.maximumf %28, %27 : vector<8x8xf32>
    %30 = arith.subf %19, %29 : vector<8x8xf32>
    %31 = math.exp %30 : vector<8x8xf32>
    %32 = arith.subf %23, %29 : vector<8x8xf32>
    %33 = math.exp %32 : vector<8x8xf32>
    %34 = arith.subf %27, %29 : vector<8x8xf32>
    %35 = math.exp %34 : vector<8x8xf32>
    %36 = arith.addf %31, %33 : vector<8x8xf32>
    %37 = arith.addf %36, %35 : vector<8x8xf32>
    %38 = tpu.reciprocal %37 {approx = true} : vector<8x8xf32> -> vector<8x8xf32>
    %cst_17 = arith.constant 0.000000e+00 : f32
    %39 = vector.broadcast %cst_17 : f32 to vector<8x8x32xf32>
    %40 = arith.mulf %31, %38 : vector<8x8xf32>
    %41 = vector.shape_cast %40 : vector<8x8xf32> to vector<8x8x1xf32>
    %42 = vector.broadcast %41 : vector<8x8x1xf32> to vector<8x8x32xf32>
    %43 = arith.mulf %42, %13 : vector<8x8x32xf32>
    %c0_18 = arith.constant 0 : index
    %c0_19 = arith.constant 0 : index
    %c0_20 = arith.constant 0 : index
    %44 = vector.load %arg10[%c0_18, %c0_19, %c0_20] : memref<3x8x8xf32, #tpu.memory_space<vmem>>, vector<1x8x8xf32>
    %45 = vector.shape_cast %44 : vector<1x8x8xf32> to vector<8x8xf32>
    %46 = vector.shape_cast %45 : vector<8x8xf32> to vector<1x8x8xf32>
    %47 = vector.shape_cast %46 : vector<1x8x8xf32> to vector<1x8x8xf32>
    %48 = vector.broadcast %47 : vector<1x8x8xf32> to vector<8x8x8xf32>
    "tpu.trace_start"() <{level = 10 : i32, message = "gri,gic->grc"}> : () -> ()
    %cst_21 = arith.constant dense<0.000000e+00> : vector<8x8x32xf32>
    %49 = tpu.matmul %48, %43, %cst_21 {dimension_numbers = #tpu.dot_dimension_numbers<[2], [1], [1], [2], [0, 0, 0, 1, 1, 2], [0], [0]>} : vector<8x8x8xf32>, vector<8x8x32xf32>, vector<8x8x32xf32> -> vector<8x8x32xf32>
    "tpu.trace_stop"() : () -> ()
    %50 = arith.addf %39, %49 : vector<8x8x32xf32>
    %51 = arith.mulf %33, %38 : vector<8x8xf32>
    %52 = vector.shape_cast %51 : vector<8x8xf32> to vector<8x8x1xf32>
    %53 = vector.broadcast %52 : vector<8x8x1xf32> to vector<8x8x32xf32>
    %54 = arith.mulf %53, %14 : vector<8x8x32xf32>
    %c1 = arith.constant 1 : index
    %c0_22 = arith.constant 0 : index
    %c0_23 = arith.constant 0 : index
    %55 = vector.load %arg10[%c1, %c0_22, %c0_23] : memref<3x8x8xf32, #tpu.memory_space<vmem>>, vector<1x8x8xf32>
    %56 = vector.shape_cast %55 : vector<1x8x8xf32> to vector<8x8xf32>
    %57 = vector.shape_cast %56 : vector<8x8xf32> to vector<1x8x8xf32>
    %58 = vector.shape_cast %57 : vector<1x8x8xf32> to vector<1x8x8xf32>
    %59 = vector.broadcast %58 : vector<1x8x8xf32> to vector<8x8x8xf32>
    "tpu.trace_start"() <{level = 10 : i32, message = "gri,gic->grc"}> : () -> ()
    %cst_24 = arith.constant dense<0.000000e+00> : vector<8x8x32xf32>
    %60 = tpu.matmul %59, %54, %cst_24 {dimension_numbers = #tpu.dot_dimension_numbers<[2], [1], [1], [2], [0, 0, 0, 1, 1, 2], [0], [0]>} : vector<8x8x8xf32>, vector<8x8x32xf32>, vector<8x8x32xf32> -> vector<8x8x32xf32>
    "tpu.trace_stop"() : () -> ()
    %61 = arith.addf %50, %60 : vector<8x8x32xf32>
    %62 = arith.mulf %35, %38 : vector<8x8xf32>
    %63 = vector.shape_cast %62 : vector<8x8xf32> to vector<8x8x1xf32>
    %64 = vector.broadcast %63 : vector<8x8x1xf32> to vector<8x8x32xf32>
    %65 = arith.mulf %64, %15 : vector<8x8x32xf32>
    %c2 = arith.constant 2 : index
    %c0_25 = arith.constant 0 : index
    %c0_26 = arith.constant 0 : index
    %66 = vector.load %arg10[%c2, %c0_25, %c0_26] : memref<3x8x8xf32, #tpu.memory_space<vmem>>, vector<1x8x8xf32>
    %67 = vector.shape_cast %66 : vector<1x8x8xf32> to vector<8x8xf32>
    %68 = vector.shape_cast %67 : vector<8x8xf32> to vector<1x8x8xf32>
    %69 = vector.shape_cast %68 : vector<1x8x8xf32> to vector<1x8x8xf32>
    %70 = vector.broadcast %69 : vector<1x8x8xf32> to vector<8x8x8xf32>
    "tpu.trace_start"() <{level = 10 : i32, message = "gri,gic->grc"}> : () -> ()
    %cst_27 = arith.constant dense<0.000000e+00> : vector<8x8x32xf32>
    %71 = tpu.matmul %70, %65, %cst_27 {dimension_numbers = #tpu.dot_dimension_numbers<[2], [1], [1], [2], [0, 0, 0, 1, 1, 2], [0], [0]>} : vector<8x8x8xf32>, vector<8x8x32xf32>, vector<8x8x32xf32> -> vector<8x8x32xf32>
    "tpu.trace_stop"() : () -> ()
    %72 = arith.addf %61, %71 : vector<8x8x32xf32>
    %73 = vector.shape_cast %72 : vector<8x8x32xf32> to vector<4x2x8x32xf32>
    %c0_28 = arith.constant 0 : index
    %c0_29 = arith.constant 0 : index
    %c0_30 = arith.constant 0 : index
    %c0_31 = arith.constant 0 : index
    %74 = vector.load %arg11[%c0_28, %c0_29, %c0_30, %c0_31] : memref<4x2x8x32xf32, #tpu.memory_space<vmem>>, vector<4x2x8x32xf32>
    tpu.vector_store %arg11[%c0_28, %c0_29, %c0_30, %c0_31], %73 {strides = array<i32>} : memref<4x2x8x32xf32, #tpu.memory_space<vmem>>, vector<4x2x8x32xf32>,
    %c0_32 = arith.constant 0 : index
    %c0_33 = arith.constant 0 : index
    %c0_34 = arith.constant 0 : index
    %c0_35 = arith.constant 0 : index
    %75 = vector.load %arg4[%c0_32, %c0_33, %c0_34, %c0_35] : memref<4x2x8x32xf32, #tpu.memory_space<vmem>>, vector<4x2x8x32xf32>
    %76 = vector.shape_cast %75 : vector<4x2x8x32xf32> to vector<8x8x32xf32>
    %c0_36 = arith.constant 0 : index
    %c0_37 = arith.constant 0 : index
    %c0_38 = arith.constant 0 : index
    %c0_39 = arith.constant 0 : index
    %77 = vector.load %arg5[%c0_36, %c0_37, %c0_38, %c0_39] : memref<4x2x2x32xf32, #tpu.memory_space<vmem>>, vector<4x2x2x32xf32>
    %78 = vector.shape_cast %77 : vector<4x2x2x32xf32> to vector<8x2x32xf32>
    %79 = tpu.concatenate %78, %76 in 1 : vector<8x2x32xf32>, vector<8x8x32xf32> -> vector<8x10x32xf32>
    %80 = vector.shape_cast %79 : vector<8x10x32xf32> to vector<80x32xf32>
    %c0_40 = arith.constant 0 : index
    %c0_41 = arith.constant 0 : index
    %81 = vector.load %arg8[%c0_40, %c0_41] : memref<32x32xf32, #tpu.memory_space<vmem>>, vector<32x32xf32>
    %cst_42 = arith.constant dense<0.000000e+00> : vector<80x32xf32>
    %82 = tpu.matmul %80, %81, %cst_42 {dimension_numbers = #tpu.dot_dimension_numbers<[1], [0], [0], [1], [0, 0, 1, 1], [], []>} : vector<80x32xf32>, vector<32x32xf32>, vector<80x32xf32> -> vector<80x32xf32>
    %c0_43 = arith.constant 0 : index
    %c0_44 = arith.constant 0 : index
    %83 = vector.load %arg9[%c0_43, %c0_44] : memref<1x32xf32, #tpu.memory_space<vmem>>, vector<1x32xf32>
    %84 = vector.broadcast %83 : vector<1x32xf32> to vector<80x32xf32>
    %85 = arith.addf %82, %84 : vector<80x32xf32>
    %86 = vector.shape_cast %85 : vector<80x32xf32> to vector<8x10x32xf32>
    %87 = vector.extract_strided_slice %86 {offsets = [0, 2, 0], sizes = [8, 8, 32], strides = [1, 1, 1]} : vector<8x10x32xf32> to vector<8x8x32xf32>
    %88 = vector.extract_strided_slice %86 {offsets = [0, 0, 0], sizes = [8, 8, 32], strides = [1, 1, 1]} : vector<8x10x32xf32> to vector<8x8x32xf32>
    %89 = vector.extract_strided_slice %86 {offsets = [0, 1, 0], sizes = [8, 8, 32], strides = [1, 1, 1]} : vector<8x10x32xf32> to vector<8x8x32xf32>
    %90 = vector.extract_strided_slice %86 {offsets = [0, 2, 0], sizes = [8, 8, 32], strides = [1, 1, 1]} : vector<8x10x32xf32> to vector<8x8x32xf32>
    %91 = arith.mulf %87, %88 : vector<8x8x32xf32>
    %cst_45 = arith.constant dense<0.000000e+00> : vector<8x8xf32>
    %92 = vector.multi_reduction <add>, %91, %cst_45 [2] : vector<8x8x32xf32> to vector<8x8xf32>
    %cst_46 = arith.constant 0.176776692 : f32
    %93 = vector.broadcast %cst_46 : f32 to vector<8x8xf32>
    %94 = arith.mulf %92, %93 : vector<8x8xf32>
    %95 = arith.mulf %87, %89 : vector<8x8x32xf32>
    %cst_47 = arith.constant dense<0.000000e+00> : vector<8x8xf32>
    %96 = vector.multi_reduction <add>, %95, %cst_47 [2] : vector<8x8x32xf32> to vector<8x8xf32>
    %cst_48 = arith.constant 0.176776692 : f32
    %97 = vector.broadcast %cst_48 : f32 to vector<8x8xf32>
    %98 = arith.mulf %96, %97 : vector<8x8xf32>
    %99 = arith.mulf %87, %90 : vector<8x8x32xf32>
    %cst_49 = arith.constant dense<0.000000e+00> : vector<8x8xf32>
    %100 = vector.multi_reduction <add>, %99, %cst_49 [2] : vector<8x8x32xf32> to vector<8x8xf32>
    %cst_50 = arith.constant 0.176776692 : f32
    %101 = vector.broadcast %cst_50 : f32 to vector<8x8xf32>
    %102 = arith.mulf %100, %101 : vector<8x8xf32>
    %103 = arith.maximumf %94, %98 : vector<8x8xf32>
    %104 = arith.maximumf %103, %102 : vector<8x8xf32>
    %105 = arith.subf %94, %104 : vector<8x8xf32>
    %106 = math.exp %105 : vector<8x8xf32>
    %107 = arith.subf %98, %104 : vector<8x8xf32>
    %108 = math.exp %107 : vector<8x8xf32>
    %109 = arith.subf %102, %104 : vector<8x8xf32>
    %110 = math.exp %109 : vector<8x8xf32>
    %111 = arith.addf %106, %108 : vector<8x8xf32>
    %112 = arith.addf %111, %110 : vector<8x8xf32>
    %113 = tpu.reciprocal %112 {approx = true} : vector<8x8xf32> -> vector<8x8xf32>
    %cst_51 = arith.constant 0.000000e+00 : f32
    %114 = vector.broadcast %cst_51 : f32 to vector<8x8x32xf32>
    %115 = arith.mulf %106, %113 : vector<8x8xf32>
    %116 = vector.shape_cast %115 : vector<8x8xf32> to vector<8x8x1xf32>
    %117 = vector.broadcast %116 : vector<8x8x1xf32> to vector<8x8x32xf32>
    %118 = arith.mulf %117, %88 : vector<8x8x32xf32>
    %c0_52 = arith.constant 0 : index
    %c0_53 = arith.constant 0 : index
    %c0_54 = arith.constant 0 : index
    %119 = vector.load %arg10[%c0_52, %c0_53, %c0_54] : memref<3x8x8xf32, #tpu.memory_space<vmem>>, vector<1x8x8xf32>
    %120 = vector.shape_cast %119 : vector<1x8x8xf32> to vector<8x8xf32>
    %121 = vector.shape_cast %120 : vector<8x8xf32> to vector<1x8x8xf32>
    %122 = vector.shape_cast %121 : vector<1x8x8xf32> to vector<1x8x8xf32>
    %123 = vector.broadcast %122 : vector<1x8x8xf32> to vector<8x8x8xf32>
    "tpu.trace_start"() <{level = 10 : i32, message = "gri,gic->grc"}> : () -> ()
    %cst_55 = arith.constant dense<0.000000e+00> : vector<8x8x32xf32>
    %124 = tpu.matmul %123, %118, %cst_55 {dimension_numbers = #tpu.dot_dimension_numbers<[2], [1], [1], [2], [0, 0, 0, 1, 1, 2], [0], [0]>} : vector<8x8x8xf32>, vector<8x8x32xf32>, vector<8x8x32xf32> -> vector<8x8x32xf32>
    "tpu.trace_stop"() : () -> ()
    %125 = arith.addf %114, %124 : vector<8x8x32xf32>
    %126 = arith.mulf %108, %113 : vector<8x8xf32>
    %127 = vector.shape_cast %126 : vector<8x8xf32> to vector<8x8x1xf32>
    %128 = vector.broadcast %127 : vector<8x8x1xf32> to vector<8x8x32xf32>
    %129 = arith.mulf %128, %89 : vector<8x8x32xf32>
    %c1_56 = arith.constant 1 : index
    %c0_57 = arith.constant 0 : index
    %c0_58 = arith.constant 0 : index
    %130 = vector.load %arg10[%c1_56, %c0_57, %c0_58] : memref<3x8x8xf32, #tpu.memory_space<vmem>>, vector<1x8x8xf32>
    %131 = vector.shape_cast %130 : vector<1x8x8xf32> to vector<8x8xf32>
    %132 = vector.shape_cast %131 : vector<8x8xf32> to vector<1x8x8xf32>
    %133 = vector.shape_cast %132 : vector<1x8x8xf32> to vector<1x8x8xf32>
    %134 = vector.broadcast %133 : vector<1x8x8xf32> to vector<8x8x8xf32>
    "tpu.trace_start"() <{level = 10 : i32, message = "gri,gic->grc"}> : () -> ()
    %cst_59 = arith.constant dense<0.000000e+00> : vector<8x8x32xf32>
    %135 = tpu.matmul %134, %129, %cst_59 {dimension_numbers = #tpu.dot_dimension_numbers<[2], [1], [1], [2], [0, 0, 0, 1, 1, 2], [0], [0]>} : vector<8x8x8xf32>, vector<8x8x32xf32>, vector<8x8x32xf32> -> vector<8x8x32xf32>
    "tpu.trace_stop"() : () -> ()
    %136 = arith.addf %125, %135 : vector<8x8x32xf32>
    %137 = arith.mulf %110, %113 : vector<8x8xf32>
    %138 = vector.shape_cast %137 : vector<8x8xf32> to vector<8x8x1xf32>
    %139 = vector.broadcast %138 : vector<8x8x1xf32> to vector<8x8x32xf32>
    %140 = arith.mulf %139, %90 : vector<8x8x32xf32>
    %c2_60 = arith.constant 2 : index
    %c0_61 = arith.constant 0 : index
    %c0_62 = arith.constant 0 : index
    %141 = vector.load %arg10[%c2_60, %c0_61, %c0_62] : memref<3x8x8xf32, #tpu.memory_space<vmem>>, vector<1x8x8xf32>
    %142 = vector.shape_cast %141 : vector<1x8x8xf32> to vector<8x8xf32>
    %143 = vector.shape_cast %142 : vector<8x8xf32> to vector<1x8x8xf32>
    %144 = vector.shape_cast %143 : vector<1x8x8xf32> to vector<1x8x8xf32>
    %145 = vector.broadcast %144 : vector<1x8x8xf32> to vector<8x8x8xf32>
    "tpu.trace_start"() <{level = 10 : i32, message = "gri,gic->grc"}> : () -> ()
    %cst_63 = arith.constant dense<0.000000e+00> : vector<8x8x32xf32>
    %146 = tpu.matmul %145, %140, %cst_63 {dimension_numbers = #tpu.dot_dimension_numbers<[2], [1], [1], [2], [0, 0, 0, 1, 1, 2], [0], [0]>} : vector<8x8x8xf32>, vector<8x8x32xf32>, vector<8x8x32xf32> -> vector<8x8x32xf32>
    "tpu.trace_stop"() : () -> ()
    %147 = arith.addf %136, %146 : vector<8x8x32xf32>
    %148 = vector.shape_cast %147 : vector<8x8x32xf32> to vector<4x2x8x32xf32>
    %c0_64 = arith.constant 0 : index
    %c0_65 = arith.constant 0 : index
    %c0_66 = arith.constant 0 : index
    %c0_67 = arith.constant 0 : index
    %149 = vector.load %arg12[%c0_64, %c0_65, %c0_66, %c0_67] : memref<4x2x8x32xf32, #tpu.memory_space<vmem>>, vector<4x2x8x32xf32>
    tpu.vector_store %arg12[%c0_64, %c0_65, %c0_66, %c0_67], %148 {strides = array<i32>} : memref<4x2x8x32xf32, #tpu.memory_space<vmem>>, vector<4x2x8x32xf32>,
    return
  }
  func.func @transform_0(%arg0: i32, %arg1: i32) -> (i32, i32, i32, i32) {
    %c0_i32 = arith.constant 0 : i32
    %c0_i32_0 = arith.constant 0 : i32
    %c0_i32_1 = arith.constant 0 : i32
    return %arg1, %arg0, %c0_i32, %c0_i32_0 : i32, i32, i32, i32
  }
  func.func @transform_1(%arg0: i32, %arg1: i32) -> (i32, i32, i32, i32) {
    %c0_i32 = arith.constant 0 : i32
    %c0_i32_0 = arith.constant 0 : i32
    %c0_i32_1 = arith.constant 0 : i32
    return %arg1, %arg0, %c0_i32, %c0_i32_0 : i32, i32, i32, i32
  }
  func.func @transform_2(%arg0: i32, %arg1: i32) -> (i32, i32, i32, i32) {
    %c0_i32 = arith.constant 0 : i32
    %c0_i32_0 = arith.constant 0 : i32
    %c0_i32_1 = arith.constant 0 : i32
    return %arg1, %arg0, %c0_i32, %c0_i32_0 : i32, i32, i32, i32
  }
  func.func @transform_3(%arg0: i32, %arg1: i32) -> (i32, i32, i32, i32) {
    %c0_i32 = arith.constant 0 : i32
    %c0_i32_0 = arith.constant 0 : i32
    %c0_i32_1 = arith.constant 0 : i32
    return %arg1, %arg0, %c0_i32, %c0_i32_0 : i32, i32, i32, i32
  }
  func.func @transform_4(%arg0: i32, %arg1: i32) -> (i32, i32) {
    %c0_i32 = arith.constant 0 : i32
    %c0_i32_0 = arith.constant 0 : i32
    %c0_i32_1 = arith.constant 0 : i32
    return %c0_i32, %c0_i32_0 : i32, i32
  }
  func.func @transform_5(%arg0: i32, %arg1: i32) -> (i32, i32) {
    %c0_i32 = arith.constant 0 : i32
    %c0_i32_0 = arith.constant 0 : i32
    %c0_i32_1 = arith.constant 0 : i32
    return %c0_i32, %c0_i32_0 : i32, i32
  }
  func.func @transform_6(%arg0: i32, %arg1: i32) -> (i32, i32) {
    %c0_i32 = arith.constant 0 : i32
    %c0_i32_0 = arith.constant 0 : i32
    %c0_i32_1 = arith.constant 0 : i32
    return %c0_i32, %c0_i32_0 : i32, i32
  }
  func.func @transform_7(%arg0: i32, %arg1: i32) -> (i32, i32) {
    %c0_i32 = arith.constant 0 : i32
    %c0_i32_0 = arith.constant 0 : i32
    %c0_i32_1 = arith.constant 0 : i32
    return %c0_i32, %c0_i32_0 : i32, i32
  }
  func.func @transform_8(%arg0: i32, %arg1: i32) -> (i32, i32, i32) {
    %c0_i32 = arith.constant 0 : i32
    %c0_i32_0 = arith.constant 0 : i32
    %c0_i32_1 = arith.constant 0 : i32
    %c0_i32_2 = arith.constant 0 : i32
    return %c0_i32, %c0_i32_0, %c0_i32_1 : i32, i32, i32
  }
  func.func @transform_9(%arg0: i32, %arg1: i32) -> (i32, i32, i32, i32) {
    %c0_i32 = arith.constant 0 : i32
    %c0_i32_0 = arith.constant 0 : i32
    %c0_i32_1 = arith.constant 0 : i32
    return %arg1, %arg0, %c0_i32, %c0_i32_0 : i32, i32, i32, i32
  }
  func.func @transform_10(%arg0: i32, %arg1: i32) -> (i32, i32, i32, i32) {
    %c0_i32 = arith.constant 0 : i32
    %c0_i32_0 = arith.constant 0 : i32
    %c0_i32_1 = arith.constant 0 : i32
    return %arg1, %arg0, %c0_i32, %c0_i32_0 : i32, i32, i32, i32
  }
}

</mosaic_0001>

<llo_original>
// kernel: tpu_custom_call.1
$region0: #{tpu_custom_call.1}
  #allocation0 [shape = 'u32[]', space=smem, size = 0x4, offset = 0x4, fixed_abs, tag = 'smem constant byte address 0x4 - core index']
  #allocation1 [shape = 'u32[144,128]{1,0:T(1,128)}', space=vmem, size = 0x12000, scoped, tag = 'internal scratch']
  %s0 = inlined_call_operand.hbm [shape: f32[4,2,8,32], index: 0, kind: input, shape index: {}]
  %s1 = inlined_call_operand.hbm [shape: f32[4,2,2,32], index: 1, kind: input, shape index: {}]
  %s2 = inlined_call_operand.hbm [shape: f32[4,2,8,32], index: 2, kind: input, shape index: {}]
  %s3 = inlined_call_operand.hbm [shape: f32[4,2,2,32], index: 3, kind: input, shape index: {}]
  %s4 = inlined_call_operand.hbm [shape: f32[32,32], index: 4, kind: input, shape index: {}]
  %s5 = inlined_call_operand.vmem [shape: f32[1,32], index: 5, kind: input, shape index: {}]
  %s6 = inlined_call_operand.hbm [shape: f32[32,32], index: 6, kind: input, shape index: {}]
  %s7 = inlined_call_operand.vmem [shape: f32[1,32], index: 7, kind: input, shape index: {}]
  %s8 = inlined_call_operand.hbm [shape: f32[3,8,8], index: 8, kind: input, shape index: {}]
  %s9 = inlined_call_operand.hbm [shape: f32[4,2,8,32], index: 9, kind: output, shape index: {0}]
  %s10 = inlined_call_operand.hbm [shape: f32[4,2,8,32], index: 10, kind: output, shape index: {1}]
  %11 = xla_tuple %s9, %s10
  %s12 = sld [smem:[#allocation0]]
  $region82: #{tpu_custom_call.1} parent=0
    _
  %s14 = ssub.s32 1, %s12
  %s15 = scalar_select 0, %s14, %s12
  $region1: #{tpu_custom_call.1} parent=0
    #allocation2 [shape = 'u8[32768]{0}', space=vmem, size = 0x8000, scoped, tag = 'input window, operand 0, single buffered']
    #allocation3 [shape = 's32[1]{0}', space=sflag, size = 0x4, scoped, tag = 'scoped memory for tpu_custom_call.1']
    #allocation4 [shape = 's32[1]{0}', space=sflag, size = 0x4, scoped, tag = 'scoped memory for tpu_custom_call.1']
    #allocation5 [shape = 'u8[8192]{0}', space=vmem, size = 0x2000, scoped, tag = 'input window, operand 1, single buffered']
    #allocation6 [shape = 's32[1]{0}', space=sflag, size = 0x4, scoped, tag = 'scoped memory for tpu_custom_call.1']
    #allocation7 [shape = 'u8[32768]{0}', space=vmem, size = 0x8000, scoped, tag = 'input window, operand 2, single buffered']
    #allocation8 [shape = 'u8[8192]{0}', space=vmem, size = 0x2000, scoped, tag = 'input window, operand 3, single buffered']
    #allocation9 [shape = 's32[1]{0}', space=sflag, size = 0x4, scoped, tag = 'scoped memory for tpu_custom_call.1']
    #allocation10 [shape = 'u8[16384]{0}', space=vmem, size = 0x4000, scoped, tag = 'input window, operand 4, single buffered']
    #allocation11 [shape = 'u8[16384]{0}', space=vmem, size = 0x4000, scoped, tag = 'input window, operand 6, single buffered']
    #allocation12 [shape = 's32[1]{0}', space=sflag, size = 0x4, scoped, tag = 'scoped memory for tpu_custom_call.1']
    #allocation13 [shape = 'u8[12288]{0}', space=vmem, size = 0x3000, scoped, tag = 'input window, operand 8, single buffered']
    #allocation14 [shape = 'u8[32768]{0}', space=vmem, size = 0x8000, scoped, tag = 'output window, operand 0, single buffered']
    #allocation15 [shape = 'u8[32768]{0}', space=vmem, size = 0x8000, scoped, tag = 'output window, operand 1, single buffered']
    #allocation16 [shape = 's32[1]{0}', space=sflag, size = 0x4, scoped, tag = 'scoped memory for tpu_custom_call.1']
    %16 = vsyncpa [#allocation3], 0
    %17 = vsyncpa [#allocation6], 0
    %18 = vsyncpa [#allocation9], 0
    %19 = vsyncpa [#allocation12], 0
    %20 = vsyncpa [#allocation4], 0
    %21 = vsyncpa [#allocation16], 0
    // Predicated region
    $region2: #{tpu_custom_call.1} parent=1 // pred_check
      _
    $region3: #{tpu_custom_call.1} parent=1 // pred_check_branch
      %23 = sbr.rel (0) target = $region5
    $region4: #{tpu_custom_call.1} parent=1 // pred_region
      %s25 = ssub.s32 1024, 1024
      %26 = vsyncadd [#allocation3], %s25
      %s27 = sshll.u32 [#allocation2], 4
      %s28 = int_to_ptr.vmem [resolvable:$true] %s27
      %33 = dma.hbm_to_vmem [thread:$0]  %s0, 1024, %s28, [#allocation3], 128, 128, 8
    $region5: #{tpu_custom_call.1} parent=1 // pred_fallthru
      _
    // Predicated region
    $region6: #{tpu_custom_call.1} parent=1 // pred_check
      _
    $region7: #{tpu_custom_call.1} parent=1 // pred_check_branch
      %35 = sbr.rel (0) target = $region9
    $region8: #{tpu_custom_call.1} parent=1 // pred_region
      %s37 = ssub.s32 256, 256
      %38 = vsyncadd [#allocation6], %s37
      %s39 = sshll.u32 [#allocation5], 4
      %s40 = int_to_ptr.vmem [resolvable:$true] %s39
      %45 = dma.hbm_to_vmem [thread:$0]  %s1, 256, %s40, [#allocation6], 32, 32, 2
    $region9: #{tpu_custom_call.1} parent=1 // pred_fallthru
      _
    // Predicated region
    $region10: #{tpu_custom_call.1} parent=1 // pred_check
      _
    $region11: #{tpu_custom_call.1} parent=1 // pred_check_branch
      %47 = sbr.rel (0) target = $region13
    $region12: #{tpu_custom_call.1} parent=1 // pred_region
      %s49 = ssub.s32 1024, 1024
      %50 = vsyncadd [#allocation6], %s49
      %s51 = sshll.u32 [#allocation7], 4
      %s52 = int_to_ptr.vmem [resolvable:$true] %s51
      %57 = dma.hbm_to_vmem [thread:$0]  %s2, 1024, %s52, [#allocation6], 128, 128, 8
    $region13: #{tpu_custom_call.1} parent=1 // pred_fallthru
      _
    // Predicated region
    $region14: #{tpu_custom_call.1} parent=1 // pred_check
      _
    $region15: #{tpu_custom_call.1} parent=1 // pred_check_branch
      %59 = sbr.rel (0) target = $region17
    $region16: #{tpu_custom_call.1} parent=1 // pred_region
      %s61 = ssub.s32 256, 256
      %62 = vsyncadd [#allocation9], %s61
      %s63 = sshll.u32 [#allocation8], 4
      %s64 = int_to_ptr.vmem [resolvable:$true] %s63
      %69 = dma.hbm_to_vmem [thread:$0]  %s3, 256, %s64, [#allocation9], 32, 32, 2
    $region17: #{tpu_custom_call.1} parent=1 // pred_fallthru
      _
    // Predicated region
    $region18: #{tpu_custom_call.1} parent=1 // pred_check
      _
    $region19: #{tpu_custom_call.1} parent=1 // pred_check_branch
      %71 = sbr.rel (0) target = $region21
    $region20: #{tpu_custom_call.1} parent=1 // pred_region
      %s73 = ssub.s32 512, 512
      %74 = vsyncadd [#allocation9], %s73
      %s75 = sshll.u32 [#allocation10], 4
      %s76 = int_to_ptr.vmem [resolvable:$true] %s75
      %81 = dma.hbm_to_vmem [thread:$0]  %s4, 512, %s76, [#allocation9], 128, 128, 8
    $region21: #{tpu_custom_call.1} parent=1 // pred_fallthru
      _
    // Predicated region
    $region22: #{tpu_custom_call.1} parent=1 // pred_check
      _
    $region23: #{tpu_custom_call.1} parent=1 // pred_check_branch
      %83 = sbr.rel (0) target = $region25
    $region24: #{tpu_custom_call.1} parent=1 // pred_region
      _
    $region25: #{tpu_custom_call.1} parent=1 // pred_fallthru
      _
    // Predicated region
    $region26: #{tpu_custom_call.1} parent=1 // pred_check
      _
    $region27: #{tpu_custom_call.1} parent=1 // pred_check_branch
      %85 = sbr.rel (0) target = $region29
    $region28: #{tpu_custom_call.1} parent=1 // pred_region
      %s87 = ssub.s32 512, 512
      %88 = vsyncadd [#allocation12], %s87
      %s89 = sshll.u32 [#allocation11], 4
      %s90 = int_to_ptr.vmem [resolvable:$true] %s89
      %95 = dma.hbm_to_vmem [thread:$0]  %s6, 512, %s90, [#allocation12], 128, 128, 8
    $region29: #{tpu_custom_call.1} parent=1 // pred_fallthru
      _
    // Predicated region
    $region30: #{tpu_custom_call.1} parent=1 // pred_check
      _
    $region31: #{tpu_custom_call.1} parent=1 // pred_check_branch
      %97 = sbr.rel (0) target = $region33
    $region32: #{tpu_custom_call.1} parent=1 // pred_region
      _
    $region33: #{tpu_custom_call.1} parent=1 // pred_fallthru
      _
    // Predicated region
    $region34: #{tpu_custom_call.1} parent=1 // pred_check
      _
    $region35: #{tpu_custom_call.1} parent=1 // pred_check_branch
      %99 = sbr.rel (0) target = $region37
    $region36: #{tpu_custom_call.1} parent=1 // pred_region
      %s101 = ssub.s32 384, 384
      %102 = vsyncadd [#allocation12], %s101
      %s103 = sshll.u32 [#allocation13], 4
      %s104 = int_to_ptr.vmem [resolvable:$true] %s103
      %109 = dma.hbm_to_vmem [thread:$0]  %s8, 384, %s104, [#allocation12], 128, 128, 8
    $region37: #{tpu_custom_call.1} parent=1 // pred_fallthru
      _
    // Predicated region
    $region38: #{tpu_custom_call.1} parent=1 // pred_check
      _
    $region39: #{tpu_custom_call.1} parent=1 // pred_check_branch
      %111 = sbr.rel (0) target = $region41
    $region40: #{tpu_custom_call.1} parent=1 // pred_region
      %112 = dma.done [#allocation3], 1024
    $region41: #{tpu_custom_call.1} parent=1 // pred_fallthru
      _
    // Predicated region
    $region42: #{tpu_custom_call.1} parent=1 // pred_check
      _
    $region43: #{tpu_custom_call.1} parent=1 // pred_check_branch
      %114 = sbr.rel (0) target = $region45
    $region44: #{tpu_custom_call.1} parent=1 // pred_region
      %115 = dma.done [#allocation6], 256
    $region45: #{tpu_custom_call.1} parent=1 // pred_fallthru
      _
    // Predicated region
    $region46: #{tpu_custom_call.1} parent=1 // pred_check
      _
    $region47: #{tpu_custom_call.1} parent=1 // pred_check_branch
      %117 = sbr.rel (0) target = $region49
    $region48: #{tpu_custom_call.1} parent=1 // pred_region
      %118 = dma.done [#allocation6], 1024
    $region49: #{tpu_custom_call.1} parent=1 // pred_fallthru
      _
    // Predicated region
    $region50: #{tpu_custom_call.1} parent=1 // pred_check
      _
    $region51: #{tpu_custom_call.1} parent=1 // pred_check_branch
      %120 = sbr.rel (0) target = $region53
    $region52: #{tpu_custom_call.1} parent=1 // pred_region
      %121 = dma.done [#allocation9], 256
    $region53: #{tpu_custom_call.1} parent=1 // pred_fallthru
      _
    // Predicated region
    $region54: #{tpu_custom_call.1} parent=1 // pred_check
      _
    $region55: #{tpu_custom_call.1} parent=1 // pred_check_branch
      %123 = sbr.rel (0) target = $region57
    $region56: #{tpu_custom_call.1} parent=1 // pred_region
      %124 = dma.done [#allocation9], 512
    $region57: #{tpu_custom_call.1} parent=1 // pred_fallthru
      _
    // Predicated region
    $region58: #{tpu_custom_call.1} parent=1 // pred_check
      _
    $region59: #{tpu_custom_call.1} parent=1 // pred_check_branch
      %126 = sbr.rel (0) target = $region61
    $region60: #{tpu_custom_call.1} parent=1 // pred_region
      %127 = dma.done [#allocation12], 512
    $region61: #{tpu_custom_call.1} parent=1 // pred_fallthru
      _
    // Predicated region
    $region62: #{tpu_custom_call.1} parent=1 // pred_check
      _
    $region63: #{tpu_custom_call.1} parent=1 // pred_check_branch
      %129 = sbr.rel (0) target = $region65
    $region64: #{tpu_custom_call.1} parent=1 // pred_region
      %130 = dma.done [#allocation12], 384
    $region65: #{tpu_custom_call.1} parent=1 // pred_fallthru
      _
    %v131 = vld [vmem:[#allocation2] sm:$0xff]
    %v132 = vld [vmem:[#allocation2 + $0x8] sm:$0xff]
    %v133 = vld [vmem:[#allocation2 + $0x10] sm:$0xff]
    %v134 = vld [vmem:[#allocation2 + $0x18] sm:$0xff]
    %v135 = vld [vmem:[#allocation2 + $0x20] sm:$0xff]
    %v136 = vld [vmem:[#allocation2 + $0x28] sm:$0xff]
    %v137 = vld [vmem:[#allocation2 + $0x30] sm:$0xff]
    %v138 = vld [vmem:[#allocation2 + $0x38] sm:$0xff]
    %v139 = vld [vmem:[#allocation5] sm:$0x3]
    %v140 = vld [vmem:[#allocation5 + $0x2] sm:$0x3]
    %v141 = vld [vmem:[#allocation5 + $0x4] sm:$0x3]
    %v142 = vld [vmem:[#allocation5 + $0x6] sm:$0x3]
    %v143 = vld [vmem:[#allocation5 + $0x8] sm:$0x3]
    %v144 = vld [vmem:[#allocation5 + $0xa] sm:$0x3]
    %v145 = vld [vmem:[#allocation5 + $0xc] sm:$0x3]
    %v146 = vld [vmem:[#allocation5 + $0xe] sm:$0x3]
    %v155 = vrot.slane %v131, 6
    %v156 = vrot.slane %v132, 6
    %v157 = vrot.slane %v133, 6
    %v158 = vrot.slane %v134, 6
    %v159 = vrot.slane %v135, 6
    %v160 = vrot.slane %v136, 6
    %v161 = vrot.slane %v137, 6
    %v162 = vrot.slane %v138, 6
    %vm171 = vcmask 1041408
    %v172 = vsel %vm171, %v139, %v155
    %v173 = vsel %vm171, %v140, %v156
    %v174 = vsel %vm171, %v141, %v157
    %v175 = vsel %vm171, %v142, %v158
    %v176 = vsel %vm171, %v143, %v159
    %v177 = vsel %vm171, %v144, %v160
    %v178 = vsel %vm171, %v145, %v161
    %v179 = vsel %vm171, %v146, %v162
    %v188 = vcombine.high %v172, %v172
    %v190 = vunpack.c.l.s4 1983009808
    %v191 = vunpack.c.0.s8 %v190
    %v192 = vlaneseq
    %v193 = vshrl.u32 %v192, 7
    %v194 = vsub.s32 %v191, %v193
    %v195 = vrot.slane %v172, %v194
    %v197 = vunpack.c.l.s4 1983009808
    %v198 = vunpack.c.0.s8 %v197
    %v199 = vlaneseq
    %v200 = vshrl.u32 %v199, 7
    %v201 = vsub.s32 %v198, %v200
    %v202 = vrot.slane %v188, %v201
    %v203 = vcombine.high %v195, %v195
    %v204 = vcombine.high %v202, %v202
    %v206 = vunpack.c.l.s4 1983009808
    %v207 = vunpack.c.0.s8 %v206
    %v208 = vlaneseq
    %v209 = vshrl.u32 %v208, 7
    %v210 = vsub.s32 %v207, %v209
    %v211 = vrot.slane %v155, %v210
    %v212 = vcombine.high %v173, %v173
    %v214 = vunpack.c.l.s4 1983009808
    %v215 = vunpack.c.0.s8 %v214
    %v216 = vlaneseq
    %v217 = vshrl.u32 %v216, 7
    %v218 = vsub.s32 %v215, %v217
    %v219 = vrot.slane %v173, %v218
    %v221 = vunpack.c.l.s4 1983009808
    %v222 = vunpack.c.0.s8 %v221
    %v223 = vlaneseq
    %v224 = vshrl.u32 %v223, 7
    %v225 = vsub.s32 %v222, %v224
    %v226 = vrot.slane %v212, %v225
    %v227 = vcombine.high %v219, %v219
    %v228 = vcombine.high %v226, %v226
    %v230 = vunpack.c.l.s4 1983009808
    %v231 = vunpack.c.0.s8 %v230
    %v232 = vlaneseq
    %v233 = vshrl.u32 %v232, 7
    %v234 = vsub.s32 %v231, %v233
    %v235 = vrot.slane %v156, %v234
    %v236 = vcombine.high %v174, %v174
    %v238 = vunpack.c.l.s4 1983009808
    %v239 = vunpack.c.0.s8 %v238
    %v240 = vlaneseq
    %v241 = vshrl.u32 %v240, 7
    %v242 = vsub.s32 %v239, %v241
    %v243 = vrot.slane %v174, %v242
    %v245 = vunpack.c.l.s4 1983009808
    %v246 = vunpack.c.0.s8 %v245
    %v247 = vlaneseq
    %v248 = vshrl.u32 %v247, 7
    %v249 = vsub.s32 %v246, %v248
    %v250 = vrot.slane %v236, %v249
    %v251 = vcombine.high %v243, %v243
    %v252 = vcombine.high %v250, %v250
    %v254 = vunpack.c.l.s4 1983009808
    %v255 = vunpack.c.0.s8 %v254
    %v256 = vlaneseq
    %v257 = vshrl.u32 %v256, 7
    %v258 = vsub.s32 %v255, %v257
    %v259 = vrot.slane %v157, %v258
    %v260 = vcombine.high %v175, %v175
    %v262 = vunpack.c.l.s4 1983009808
    %v263 = vunpack.c.0.s8 %v262
    %v264 = vlaneseq
    %v265 = vshrl.u32 %v264, 7
    %v266 = vsub.s32 %v263, %v265
    %v267 = vrot.slane %v175, %v266
    %v269 = vunpack.c.l.s4 1983009808
    %v270 = vunpack.c.0.s8 %v269
    %v271 = vlaneseq
    %v272 = vshrl.u32 %v271, 7
    %v273 = vsub.s32 %v270, %v272
    %v274 = vrot.slane %v260, %v273
    %v275 = vcombine.high %v267, %v267
    %v276 = vcombine.high %v274, %v274
    %v278 = vunpack.c.l.s4 1983009808
    %v279 = vunpack.c.0.s8 %v278
    %v280 = vlaneseq
    %v281 = vshrl.u32 %v280, 7
    %v282 = vsub.s32 %v279, %v281
    %v283 = vrot.slane %v158, %v282
    %v284 = vcombine.high %v176, %v176
    %v286 = vunpack.c.l.s4 1983009808
    %v287 = vunpack.c.0.s8 %v286
    %v288 = vlaneseq
    %v289 = vshrl.u32 %v288, 7
    %v290 = vsub.s32 %v287, %v289
    %v291 = vrot.slane %v176, %v290
    %v293 = vunpack.c.l.s4 1983009808
    %v294 = vunpack.c.0.s8 %v293
    %v295 = vlaneseq
    %v296 = vshrl.u32 %v295, 7
    %v297 = vsub.s32 %v294, %v296
    %v298 = vrot.slane %v284, %v297
    %v299 = vcombine.high %v291, %v291
    %v300 = vcombine.high %v298, %v298
    %v302 = vunpack.c.l.s4 1983009808
    %v303 = vunpack.c.0.s8 %v302
    %v304 = vlaneseq
    %v305 = vshrl.u32 %v304, 7
    %v306 = vsub.s32 %v303, %v305
    %v307 = vrot.slane %v159, %v306
    %v308 = vcombine.high %v177, %v177
    %v310 = vunpack.c.l.s4 1983009808
    %v311 = vunpack.c.0.s8 %v310
    %v312 = vlaneseq
    %v313 = vshrl.u32 %v312, 7
    %v314 = vsub.s32 %v311, %v313
    %v315 = vrot.slane %v177, %v314
    %v317 = vunpack.c.l.s4 1983009808
    %v318 = vunpack.c.0.s8 %v317
    %v319 = vlaneseq
    %v320 = vshrl.u32 %v319, 7
    %v321 = vsub.s32 %v318, %v320
    %v322 = vrot.slane %v308, %v321
    %v323 = vcombine.high %v315, %v315
    %v324 = vcombine.high %v322, %v322
    %v326 = vunpack.c.l.s4 1983009808
    %v327 = vunpack.c.0.s8 %v326
    %v328 = vlaneseq
    %v329 = vshrl.u32 %v328, 7
    %v330 = vsub.s32 %v327, %v329
    %v331 = vrot.slane %v160, %v330
    %v332 = vcombine.high %v178, %v178
    %v334 = vunpack.c.l.s4 1983009808
    %v335 = vunpack.c.0.s8 %v334
    %v336 = vlaneseq
    %v337 = vshrl.u32 %v336, 7
    %v338 = vsub.s32 %v335, %v337
    %v339 = vrot.slane %v178, %v338
    %v341 = vunpack.c.l.s4 1983009808
    %v342 = vunpack.c.0.s8 %v341
    %v343 = vlaneseq
    %v344 = vshrl.u32 %v343, 7
    %v345 = vsub.s32 %v342, %v344
    %v346 = vrot.slane %v332, %v345
    %v347 = vcombine.high %v339, %v339
    %v348 = vcombine.high %v346, %v346
    %v350 = vunpack.c.l.s4 1983009808
    %v351 = vunpack.c.0.s8 %v350
    %v352 = vlaneseq
    %v353 = vshrl.u32 %v352, 7
    %v354 = vsub.s32 %v351, %v353
    %v355 = vrot.slane %v161, %v354
    %v356 = vcombine.high %v179, %v179
    %v358 = vunpack.c.l.s4 1983009808
    %v359 = vunpack.c.0.s8 %v358
    %v360 = vlaneseq
    %v361 = vshrl.u32 %v360, 7
    %v362 = vsub.s32 %v359, %v361
    %v363 = vrot.slane %v179, %v362
    %v365 = vunpack.c.l.s4 1983009808
    %v366 = vunpack.c.0.s8 %v365
    %v367 = vlaneseq
    %v368 = vshrl.u32 %v367, 7
    %v369 = vsub.s32 %v366, %v368
    %v370 = vrot.slane %v356, %v369
    %v371 = vcombine.high %v363, %v363
    %v372 = vcombine.high %v370, %v370
    %v374 = vunpack.c.l.s4 1983009808
    %v375 = vunpack.c.0.s8 %v374
    %v376 = vlaneseq
    %v377 = vshrl.u32 %v376, 7
    %v378 = vsub.s32 %v375, %v377
    %v379 = vrot.slane %v162, %v378
    %v380 = vld [vmem:[#allocation10] sm:$0xff]
    %v381 = vld [vmem:[#allocation10 + $0x8] sm:$0xff]
    %v382 = vld [vmem:[#allocation10 + $0x10] sm:$0xff]
    %v383 = vld [vmem:[#allocation10 + $0x18] sm:$0xff]
    %v384 = vld [vmem:[%s5] sm:$0x1]
    %v386 = vlaneseq
    %v387 = vshrl.u32 %v386, 7
    %v388 = vsub.s32 0, %v387
    %v389 = vrot.slane %v384, %v388
    %v391 = vcombine.low %v195, %v203
    %v392 = vcombine.low %v202, %v204
    %v394 = vunpack.c.l.s4 1983009808
    %v395 = vunpack.c.0.s8 %v394
    %v396 = vlaneseq
    %v397 = vshrl.u32 %v396, 7
    %v398 = vsub.s32 %v395, %v397
    %v399 = vrot.slane %v391, %v398
    %v401 = vunpack.c.l.s4 1983009808
    %v402 = vunpack.c.0.s8 %v401
    %v403 = vlaneseq
    %v404 = vshrl.u32 %v403, 7
    %v405 = vsub.s32 %v402, %v404
    %v406 = vrot.slane %v392, %v405
    %v407 = vcombine.low %v399, %v406
    %v408 = vcombine.low %v211, %v219
    %v409 = vcombine.low %v227, %v226
    %v411 = vunpack.c.l.s4 1983009808
    %v412 = vunpack.c.0.s8 %v411
    %v413 = vlaneseq
    %v414 = vshrl.u32 %v413, 7
    %v415 = vsub.s32 %v412, %v414
    %v416 = vrot.slane %v408, %v415
    %v418 = vunpack.c.l.s4 1983009808
    %v419 = vunpack.c.0.s8 %v418
    %v420 = vlaneseq
    %v421 = vshrl.u32 %v420, 7
    %v422 = vsub.s32 %v419, %v421
    %v423 = vrot.slane %v409, %v422
    %v424 = vcombine.low %v416, %v423
    %v425 = vcombine.low %v228, %v235
    %v426 = vcombine.low %v243, %v251
    %v428 = vunpack.c.l.s4 1983009808
    %v429 = vunpack.c.0.s8 %v428
    %v430 = vlaneseq
    %v431 = vshrl.u32 %v430, 7
    %v432 = vsub.s32 %v429, %v431
    %v433 = vrot.slane %v425, %v432
    %v435 = vunpack.c.l.s4 1983009808
    %v436 = vunpack.c.0.s8 %v435
    %v437 = vlaneseq
    %v438 = vshrl.u32 %v437, 7
    %v439 = vsub.s32 %v436, %v438
    %v440 = vrot.slane %v426, %v439
    %v441 = vcombine.low %v433, %v440
    %v442 = vcombine.low %v250, %v252
    %v443 = vcombine.low %v259, %v267
    %v445 = vunpack.c.l.s4 1983009808
    %v446 = vunpack.c.0.s8 %v445
    %v447 = vlaneseq
    %v448 = vshrl.u32 %v447, 7
    %v449 = vsub.s32 %v446, %v448
    %v450 = vrot.slane %v442, %v449
    %v452 = vunpack.c.l.s4 1983009808
    %v453 = vunpack.c.0.s8 %v452
    %v454 = vlaneseq
    %v455 = vshrl.u32 %v454, 7
    %v456 = vsub.s32 %v453, %v455
    %v457 = vrot.slane %v443, %v456
    %v458 = vcombine.low %v450, %v457
    %v459 = vcombine.low %v275, %v274
    %v460 = vcombine.low %v276, %v283
    %v462 = vunpack.c.l.s4 1983009808
    %v463 = vunpack.c.0.s8 %v462
    %v464 = vlaneseq
    %v465 = vshrl.u32 %v464, 7
    %v466 = vsub.s32 %v463, %v465
    %v467 = vrot.slane %v459, %v466
    %v469 = vunpack.c.l.s4 1983009808
    %v470 = vunpack.c.0.s8 %v469
    %v471 = vlaneseq
    %v472 = vshrl.u32 %v471, 7
    %v473 = vsub.s32 %v470, %v472
    %v474 = vrot.slane %v460, %v473
    %v475 = vcombine.low %v467, %v474
    %v476 = vcombine.low %v291, %v299
    %v477 = vcombine.low %v298, %v300
    %v479 = vunpack.c.l.s4 1983009808
    %v480 = vunpack.c.0.s8 %v479
    %v481 = vlaneseq
    %v482 = vshrl.u32 %v481, 7
    %v483 = vsub.s32 %v480, %v482
    %v484 = vrot.slane %v476, %v483
    %v486 = vunpack.c.l.s4 1983009808
    %v487 = vunpack.c.0.s8 %v486
    %v488 = vlaneseq
    %v489 = vshrl.u32 %v488, 7
    %v490 = vsub.s32 %v487, %v489
    %v491 = vrot.slane %v477, %v490
    %v492 = vcombine.low %v484, %v491
    %v493 = vcombine.low %v307, %v315
    %v494 = vcombine.low %v323, %v322
    %v496 = vunpack.c.l.s4 1983009808
    %v497 = vunpack.c.0.s8 %v496
    %v498 = vlaneseq
    %v499 = vshrl.u32 %v498, 7
    %v500 = vsub.s32 %v497, %v499
    %v501 = vrot.slane %v493, %v500
    %v503 = vunpack.c.l.s4 1983009808
    %v504 = vunpack.c.0.s8 %v503
    %v505 = vlaneseq
    %v506 = vshrl.u32 %v505, 7
    %v507 = vsub.s32 %v504, %v506
    %v508 = vrot.slane %v494, %v507
    %v509 = vcombine.low %v501, %v508
    %v510 = vcombine.low %v324, %v331
    %v511 = vcombine.low %v339, %v347
    %v513 = vunpack.c.l.s4 1983009808
    %v514 = vunpack.c.0.s8 %v513
    %v515 = vlaneseq
    %v516 = vshrl.u32 %v515, 7
    %v517 = vsub.s32 %v514, %v516
    %v518 = vrot.slane %v510, %v517
    %v520 = vunpack.c.l.s4 1983009808
    %v521 = vunpack.c.0.s8 %v520
    %v522 = vlaneseq
    %v523 = vshrl.u32 %v522, 7
    %v524 = vsub.s32 %v521, %v523
    %v525 = vrot.slane %v511, %v524
    %v526 = vcombine.low %v518, %v525
    %v527 = vcombine.low %v346, %v348
    %v528 = vcombine.low %v355, %v363
    %v530 = vunpack.c.l.s4 1983009808
    %v531 = vunpack.c.0.s8 %v530
    %v532 = vlaneseq
    %v533 = vshrl.u32 %v532, 7
    %v534 = vsub.s32 %v531, %v533
    %v535 = vrot.slane %v527, %v534
    %v537 = vunpack.c.l.s4 1983009808
    %v538 = vunpack.c.0.s8 %v537
    %v539 = vlaneseq
    %v540 = vshrl.u32 %v539, 7
    %v541 = vsub.s32 %v538, %v540
    %v542 = vrot.slane %v528, %v541
    %v543 = vcombine.low %v535, %v542
    %v544 = vcombine.low %v371, %v370
    %v545 = vcombine.low %v372, %v379
    %v547 = vunpack.c.l.s4 1983009808
    %v548 = vunpack.c.0.s8 %v547
    %v549 = vlaneseq
    %v550 = vshrl.u32 %v549, 7
    %v551 = vsub.s32 %v548, %v550
    %v552 = vrot.slane %v544, %v551
    %v554 = vunpack.c.l.s4 1983009808
    %v555 = vunpack.c.0.s8 %v554
    %v556 = vlaneseq
    %v557 = vshrl.u32 %v556, 7
    %v558 = vsub.s32 %v555, %v557
    %v559 = vrot.slane %v545, %v558
    %v560 = vcombine.low %v552, %v559
    %vm561 = vcmask 261120
    %v562 = vsel %vm561, %v407, 0
    %v564 = vsel %vm561, %v424, 0
    %v566 = vsel %vm561, %v441, 0
    %v568 = vsel %vm561, %v458, 0
    %v570 = vsel %vm561, %v475, 0
    %v572 = vsel %vm561, %v492, 0
    %v574 = vsel %vm561, %v509, 0
    %v576 = vsel %vm561, %v526, 0
    %v578 = vsel %vm561, %v543, 0
    %v580 = vsel %vm561, %v560, 0
    %582 = vmatprep.subr.mxu0 0.0
    %583 = vmatpush1.msra.mxu0 0.0
    %584 = vmatprep.subr.mxu0 0.0
    %585 = vmatpush1.msra.mxu0 0.0
    %586 = vmatprep.subr.mxu0 0.0
    %587 = vmatpush1.msra.mxu0 0.0
    %588 = vmatprep.subr.mxu0 0.0
    %589 = vmatpush1.msra.mxu0 0.0
    %590 = vmatprep.subr.mxu0 0.0
    %591 = vmatpush1.msra.mxu0 0.0
    %592 = vmatprep.subr.mxu0 0.0
    %593 = vmatpush1.msra.mxu0 0.0
    %594 = vmatprep.subr.mxu0 0.0
    %595 = vmatpush1.msra.mxu0 0.0
    %596 = vmatprep.subr.mxu0 0.0
    %597 = vmatpush1.msra.mxu0 0.0
    %598 = vmatprep.subr.mxu0 0.0
    %599 = vmatpush1.msra.mxu0 0.0
    %600 = vmatprep.subr.mxu0 0.0
    %601 = vmatpush1.msra.mxu0 0.0
    %602 = vmatprep.subr.mxu0 0.0
    %603 = vmatpush1.msra.mxu0 0.0
    %604 = vmatprep.subr.mxu0 0.0
    %605 = vmatpush1.msra.mxu0 0.0
    %606 = vmatprep.subr.mxu0 0.0
    %607 = vmatpush1.msra.mxu0 %v383
    %608 = vmatprep.subr.mxu0 0.0
    %609 = vmatpush1.msra.mxu0 %v382
    %610 = vmatprep.subr.mxu0 0.0
    %611 = vmatpush1.msra.mxu0 %v381
    %612 = vmatprep.subr.mxu0 0.0
    %613 = vmatpush1.msra.mxu0 %v380
    %614 = vmatprep.subr.mxu0 0.0
    %615 = vmatpush2.msra.mxu0 0.0
    %616 = vmatprep.subr.mxu0 0.0
    %617 = vmatpush2.msra.mxu0 0.0
    %618 = vmatprep.subr.mxu0 0.0
    %619 = vmatpush2.msra.mxu0 0.0
    %620 = vmatprep.subr.mxu0 0.0
    %621 = vmatpush2.msra.mxu0 0.0
    %622 = vmatprep.subr.mxu0 0.0
    %623 = vmatpush2.msra.mxu0 0.0
    %624 = vmatprep.subr.mxu0 0.0
    %625 = vmatpush2.msra.mxu0 0.0
    %626 = vmatprep.subr.mxu0 0.0
    %627 = vmatpush2.msra.mxu0 0.0
    %628 = vmatprep.subr.mxu0 0.0
    %629 = vmatpush2.msra.mxu0 0.0
    %630 = vmatprep.subr.mxu0 0.0
    %631 = vmatpush2.msra.mxu0 0.0
    %632 = vmatprep.subr.mxu0 0.0
    %633 = vmatpush2.msra.mxu0 0.0
    %634 = vmatprep.subr.mxu0 0.0
    %635 = vmatpush2.msra.mxu0 0.0
    %636 = vmatprep.subr.mxu0 0.0
    %637 = vmatpush2.msra.mxu0 0.0
    %638 = vmatprep.subr.mxu0 0.0
    %639 = vmatpush2.msra.mxu0 0.0
    %640 = vmatprep.subr.mxu0 0.0
    %641 = vmatpush2.msra.mxu0 0.0
    %642 = vmatprep.subr.mxu0 0.0
    %643 = vmatpush2.msra.mxu0 0.0
    %644 = vmatprep.subr.mxu0 0.0
    %645 = vmatpush2.msra.mxu0 0.0
    %646 = vmatprep.mubr.f32.mxu0 0.0
    %647 = vmatmul.mubr.f32.gmra.mxu0 %v562
    %v648 = vpop.f32.mrf.mxu0
    %v649 = vadd.f32 %v389, %v648
    %v650 = vpop.f32.mrf.mxu0
    %651 = vmatprep.mubr.f32.mxu0 0.0
    %652 = vmatmul.mubr.f32.gmra.mxu0 %v564
    %v653 = vpop.f32.mrf.mxu0
    %v654 = vadd.f32 %v389, %v653
    %v655 = vpop.f32.mrf.mxu0
    %656 = vmatprep.mubr.f32.mxu0 0.0
    %657 = vmatmul.mubr.f32.gmra.mxu0 %v566
    %v658 = vpop.f32.mrf.mxu0
    %v659 = vadd.f32 %v389, %v658
    %v660 = vpop.f32.mrf.mxu0
    %661 = vmatprep.mubr.f32.mxu0 0.0
    %662 = vmatmul.mubr.f32.gmra.mxu0 %v568
    %v663 = vpop.f32.mrf.mxu0
    %v664 = vadd.f32 %v389, %v663
    %v665 = vpop.f32.mrf.mxu0
    %666 = vmatprep.mubr.f32.mxu0 0.0
    %667 = vmatmul.mubr.f32.gmra.mxu0 %v570
    %v668 = vpop.f32.mrf.mxu0
    %v669 = vadd.f32 %v389, %v668
    %v670 = vpop.f32.mrf.mxu0
    %671 = vmatprep.mubr.f32.mxu0 0.0
    %672 = vmatmul.mubr.f32.gmra.mxu0 %v572
    %v673 = vpop.f32.mrf.mxu0
    %v674 = vadd.f32 %v389, %v673
    %v675 = vpop.f32.mrf.mxu0
    %676 = vmatprep.mubr.f32.mxu0 0.0
    %677 = vmatmul.mubr.f32.gmra.mxu0 %v574
    %v678 = vpop.f32.mrf.mxu0
    %v679 = vadd.f32 %v389, %v678
    %v680 = vpop.f32.mrf.mxu0
    %681 = vmatprep.mubr.f32.mxu0 0.0
    %682 = vmatmul.mubr.f32.gmra.mxu0 %v576
    %v683 = vpop.f32.mrf.mxu0
    %v684 = vadd.f32 %v389, %v683
    %v685 = vpop.f32.mrf.mxu0
    %686 = vmatprep.mubr.f32.mxu0 0.0
    %687 = vmatmul.mubr.f32.gmra.mxu0 %v578
    %v688 = vpop.f32.mrf.mxu0
    %v689 = vadd.f32 %v389, %v688
    %v690 = vpop.f32.mrf.mxu0
    %691 = vmatprep.mubr.f32.mxu0 0.0
    %692 = vmatmul.mubr.f32.gmra.mxu0 %v580
    %v693 = vpop.f32.mrf.mxu0
    %v694 = vadd.f32 %v389, %v693
    %v695 = vpop.f32.mrf.mxu0
    %696 = vdwg.mxu0
    %v707 = vcombine.high %v649, %v649
    %v709 = vunpack.c.l.s4 1983009808
    %v710 = vunpack.c.0.s8 %v709
    %v711 = vlaneseq
    %v712 = vshrl.u32 %v711, 7
    %v713 = vsub.s32 %v710, %v712
    %v714 = vrot.slane %v649, %v713
    %v716 = vunpack.c.l.s4 1983009808
    %v717 = vunpack.c.0.s8 %v716
    %v718 = vlaneseq
    %v719 = vshrl.u32 %v718, 7
    %v720 = vsub.s32 %v717, %v719
    %v721 = vrot.slane %v707, %v720
    %v722 = vcombine.high %v714, %v714
    %v723 = vcombine.high %v721, %v721
    %v724 = vcombine.high %v654, %v654
    %v726 = vunpack.c.l.s4 1983009808
    %v727 = vunpack.c.0.s8 %v726
    %v728 = vlaneseq
    %v729 = vshrl.u32 %v728, 7
    %v730 = vsub.s32 %v727, %v729
    %v731 = vrot.slane %v654, %v730
    %v733 = vunpack.c.l.s4 1983009808
    %v734 = vunpack.c.0.s8 %v733
    %v735 = vlaneseq
    %v736 = vshrl.u32 %v735, 7
    %v737 = vsub.s32 %v734, %v736
    %v738 = vrot.slane %v724, %v737
    %v739 = vcombine.high %v731, %v731
    %v740 = vcombine.high %v738, %v738
    %v741 = vcombine.high %v659, %v659
    %v743 = vunpack.c.l.s4 1983009808
    %v744 = vunpack.c.0.s8 %v743
    %v745 = vlaneseq
    %v746 = vshrl.u32 %v745, 7
    %v747 = vsub.s32 %v744, %v746
    %v748 = vrot.slane %v659, %v747
    %v750 = vunpack.c.l.s4 1983009808
    %v751 = vunpack.c.0.s8 %v750
    %v752 = vlaneseq
    %v753 = vshrl.u32 %v752, 7
    %v754 = vsub.s32 %v751, %v753
    %v755 = vrot.slane %v741, %v754
    %v756 = vcombine.high %v748, %v748
    %v757 = vcombine.high %v755, %v755
    %v758 = vcombine.high %v664, %v664
    %v760 = vunpack.c.l.s4 1983009808
    %v761 = vunpack.c.0.s8 %v760
    %v762 = vlaneseq
    %v763 = vshrl.u32 %v762, 7
    %v764 = vsub.s32 %v761, %v763
    %v765 = vrot.slane %v664, %v764
    %v767 = vunpack.c.l.s4 1983009808
    %v768 = vunpack.c.0.s8 %v767
    %v769 = vlaneseq
    %v770 = vshrl.u32 %v769, 7
    %v771 = vsub.s32 %v768, %v770
    %v772 = vrot.slane %v758, %v771
    %v773 = vcombine.high %v765, %v765
    %v774 = vcombine.high %v772, %v772
    %v775 = vcombine.high %v669, %v669
    %v777 = vunpack.c.l.s4 1983009808
    %v778 = vunpack.c.0.s8 %v777
    %v779 = vlaneseq
    %v780 = vshrl.u32 %v779, 7
    %v781 = vsub.s32 %v778, %v780
    %v782 = vrot.slane %v669, %v781
    %v784 = vunpack.c.l.s4 1983009808
    %v785 = vunpack.c.0.s8 %v784
    %v786 = vlaneseq
    %v787 = vshrl.u32 %v786, 7
    %v788 = vsub.s32 %v785, %v787
    %v789 = vrot.slane %v775, %v788
    %v790 = vcombine.high %v782, %v782
    %v791 = vcombine.high %v789, %v789
    %v792 = vcombine.high %v674, %v674
    %v794 = vunpack.c.l.s4 1983009808
    %v795 = vunpack.c.0.s8 %v794
    %v796 = vlaneseq
    %v797 = vshrl.u32 %v796, 7
    %v798 = vsub.s32 %v795, %v797
    %v799 = vrot.slane %v674, %v798
    %v801 = vunpack.c.l.s4 1983009808
    %v802 = vunpack.c.0.s8 %v801
    %v803 = vlaneseq
    %v804 = vshrl.u32 %v803, 7
    %v805 = vsub.s32 %v802, %v804
    %v806 = vrot.slane %v792, %v805
    %v807 = vcombine.high %v799, %v799
    %v808 = vcombine.high %v806, %v806
    %v809 = vcombine.high %v679, %v679
    %v811 = vunpack.c.l.s4 1983009808
    %v812 = vunpack.c.0.s8 %v811
    %v813 = vlaneseq
    %v814 = vshrl.u32 %v813, 7
    %v815 = vsub.s32 %v812, %v814
    %v816 = vrot.slane %v679, %v815
    %v818 = vunpack.c.l.s4 1983009808
    %v819 = vunpack.c.0.s8 %v818
    %v820 = vlaneseq
    %v821 = vshrl.u32 %v820, 7
    %v822 = vsub.s32 %v819, %v821
    %v823 = vrot.slane %v809, %v822
    %v824 = vcombine.high %v816, %v816
    %v825 = vcombine.high %v823, %v823
    %v826 = vcombine.high %v684, %v684
    %v828 = vunpack.c.l.s4 1983009808
    %v829 = vunpack.c.0.s8 %v828
    %v830 = vlaneseq
    %v831 = vshrl.u32 %v830, 7
    %v832 = vsub.s32 %v829, %v831
    %v833 = vrot.slane %v684, %v832
    %v835 = vunpack.c.l.s4 1983009808
    %v836 = vunpack.c.0.s8 %v835
    %v837 = vlaneseq
    %v838 = vshrl.u32 %v837, 7
    %v839 = vsub.s32 %v836, %v838
    %v840 = vrot.slane %v826, %v839
    %v841 = vcombine.high %v833, %v833
    %v842 = vcombine.high %v840, %v840
    %v843 = vcombine.high %v689, %v689
    %v845 = vunpack.c.l.s4 1983009808
    %v846 = vunpack.c.0.s8 %v845
    %v847 = vlaneseq
    %v848 = vshrl.u32 %v847, 7
    %v849 = vsub.s32 %v846, %v848
    %v850 = vrot.slane %v689, %v849
    %v852 = vunpack.c.l.s4 1983009808
    %v853 = vunpack.c.0.s8 %v852
    %v854 = vlaneseq
    %v855 = vshrl.u32 %v854, 7
    %v856 = vsub.s32 %v853, %v855
    %v857 = vrot.slane %v843, %v856
    %v858 = vcombine.high %v850, %v850
    %v859 = vcombine.high %v857, %v857
    %v860 = vcombine.high %v694, %v694
    %v862 = vunpack.c.l.s4 1983009808
    %v863 = vunpack.c.0.s8 %v862
    %v864 = vlaneseq
    %v865 = vshrl.u32 %v864, 7
    %v866 = vsub.s32 %v863, %v865
    %v867 = vrot.slane %v694, %v866
    %v869 = vunpack.c.l.s4 1983009808
    %v870 = vunpack.c.0.s8 %v869
    %v871 = vlaneseq
    %v872 = vshrl.u32 %v871, 7
    %v873 = vsub.s32 %v870, %v872
    %v874 = vrot.slane %v860, %v873
    %v875 = vcombine.high %v867, %v867
    %v876 = vcombine.high %v874, %v874
    %v917 = vmul.f32 %v722, %v714
    %v918 = vmul.f32 %v721, %v722
    %v919 = vmul.f32 %v723, %v721
    %v920 = vmul.f32 %v731, %v723
    %v921 = vmul.f32 %v738, %v739
    %v922 = vmul.f32 %v740, %v738
    %v923 = vmul.f32 %v748, %v740
    %v924 = vmul.f32 %v756, %v748
    %v925 = vmul.f32 %v757, %v755
    %v926 = vmul.f32 %v765, %v757
    %v927 = vmul.f32 %v773, %v765
    %v928 = vmul.f32 %v772, %v773
    %v929 = vmul.f32 %v782, %v774
    %v930 = vmul.f32 %v790, %v782
    %v931 = vmul.f32 %v789, %v790
    %v932 = vmul.f32 %v791, %v789
    %v933 = vmul.f32 %v807, %v799
    %v934 = vmul.f32 %v806, %v807
    %v935 = vmul.f32 %v808, %v806
    %v936 = vmul.f32 %v816, %v808
    %v937 = vmul.f32 %v823, %v824
    %v938 = vmul.f32 %v825, %v823
    %v939 = vmul.f32 %v833, %v825
    %v940 = vmul.f32 %v841, %v833
    %v941 = vmul.f32 %v842, %v840
    %v942 = vmul.f32 %v850, %v842
    %v943 = vmul.f32 %v858, %v850
    %v944 = vmul.f32 %v857, %v858
    %v945 = vmul.f32 %v867, %v859
    %v946 = vmul.f32 %v875, %v867
    %v947 = vmul.f32 %v874, %v875
    %v948 = vmul.f32 %v876, %v874
    %v981 = vcombine.low %v917, %v918
    %v982 = vcombine.low %v919, %v920
    %v984 = vunpack.c.l.s4 1983009808
    %v985 = vunpack.c.0.s8 %v984
    %v986 = vlaneseq
    %v987 = vshrl.u32 %v986, 7
    %v988 = vsub.s32 %v985, %v987
    %v989 = vrot.slane %v981, %v988
    %v991 = vunpack.c.l.s4 1983009808
    %v992 = vunpack.c.0.s8 %v991
    %v993 = vlaneseq
    %v994 = vshrl.u32 %v993, 7
    %v995 = vsub.s32 %v992, %v994
    %v996 = vrot.slane %v982, %v995
    %v997 = vcombine.low %v989, %v996
    %v998 = vcombine.low %v921, %v922
    %v999 = vcombine.low %v923, %v924
    %v1001 = vunpack.c.l.s4 1983009808
    %v1002 = vunpack.c.0.s8 %v1001
    %v1003 = vlaneseq
    %v1004 = vshrl.u32 %v1003, 7
    %v1005 = vsub.s32 %v1002, %v1004
    %v1006 = vrot.slane %v998, %v1005
    %v1008 = vunpack.c.l.s4 1983009808
    %v1009 = vunpack.c.0.s8 %v1008
    %v1010 = vlaneseq
    %v1011 = vshrl.u32 %v1010, 7
    %v1012 = vsub.s32 %v1009, %v1011
    %v1013 = vrot.slane %v999, %v1012
    %v1014 = vcombine.low %v1006, %v1013
    %v1015 = vcombine.low %v925, %v926
    %v1016 = vcombine.low %v927, %v928
    %v1018 = vunpack.c.l.s4 1983009808
    %v1019 = vunpack.c.0.s8 %v1018
    %v1020 = vlaneseq
    %v1021 = vshrl.u32 %v1020, 7
    %v1022 = vsub.s32 %v1019, %v1021
    %v1023 = vrot.slane %v1015, %v1022
    %v1025 = vunpack.c.l.s4 1983009808
    %v1026 = vunpack.c.0.s8 %v1025
    %v1027 = vlaneseq
    %v1028 = vshrl.u32 %v1027, 7
    %v1029 = vsub.s32 %v1026, %v1028
    %v1030 = vrot.slane %v1016, %v1029
    %v1031 = vcombine.low %v1023, %v1030
    %v1032 = vcombine.low %v929, %v930
    %v1033 = vcombine.low %v931, %v932
    %v1035 = vunpack.c.l.s4 1983009808
    %v1036 = vunpack.c.0.s8 %v1035
    %v1037 = vlaneseq
    %v1038 = vshrl.u32 %v1037, 7
    %v1039 = vsub.s32 %v1036, %v1038
    %v1040 = vrot.slane %v1032, %v1039
    %v1042 = vunpack.c.l.s4 1983009808
    %v1043 = vunpack.c.0.s8 %v1042
    %v1044 = vlaneseq
    %v1045 = vshrl.u32 %v1044, 7
    %v1046 = vsub.s32 %v1043, %v1045
    %v1047 = vrot.slane %v1033, %v1046
    %v1048 = vcombine.low %v1040, %v1047
    %v1049 = vcombine.low %v933, %v934
    %v1050 = vcombine.low %v935, %v936
    %v1052 = vunpack.c.l.s4 1983009808
    %v1053 = vunpack.c.0.s8 %v1052
    %v1054 = vlaneseq
    %v1055 = vshrl.u32 %v1054, 7
    %v1056 = vsub.s32 %v1053, %v1055
    %v1057 = vrot.slane %v1049, %v1056
    %v1059 = vunpack.c.l.s4 1983009808
    %v1060 = vunpack.c.0.s8 %v1059
    %v1061 = vlaneseq
    %v1062 = vshrl.u32 %v1061, 7
    %v1063 = vsub.s32 %v1060, %v1062
    %v1064 = vrot.slane %v1050, %v1063
    %v1065 = vcombine.low %v1057, %v1064
    %v1066 = vcombine.low %v937, %v938
    %v1067 = vcombine.low %v939, %v940
    %v1069 = vunpack.c.l.s4 1983009808
    %v1070 = vunpack.c.0.s8 %v1069
    %v1071 = vlaneseq
    %v1072 = vshrl.u32 %v1071, 7
    %v1073 = vsub.s32 %v1070, %v1072
    %v1074 = vrot.slane %v1066, %v1073
    %v1076 = vunpack.c.l.s4 1983009808
    %v1077 = vunpack.c.0.s8 %v1076
    %v1078 = vlaneseq
    %v1079 = vshrl.u32 %v1078, 7
    %v1080 = vsub.s32 %v1077, %v1079
    %v1081 = vrot.slane %v1067, %v1080
    %v1082 = vcombine.low %v1074, %v1081
    %v1083 = vcombine.low %v941, %v942
    %v1084 = vcombine.low %v943, %v944
    %v1086 = vunpack.c.l.s4 1983009808
    %v1087 = vunpack.c.0.s8 %v1086
    %v1088 = vlaneseq
    %v1089 = vshrl.u32 %v1088, 7
    %v1090 = vsub.s32 %v1087, %v1089
    %v1091 = vrot.slane %v1083, %v1090
    %v1093 = vunpack.c.l.s4 1983009808
    %v1094 = vunpack.c.0.s8 %v1093
    %v1095 = vlaneseq
    %v1096 = vshrl.u32 %v1095, 7
    %v1097 = vsub.s32 %v1094, %v1096
    %v1098 = vrot.slane %v1084, %v1097
    %v1099 = vcombine.low %v1091, %v1098
    %v1100 = vcombine.low %v945, %v946
    %v1101 = vcombine.low %v947, %v948
    %v1103 = vunpack.c.l.s4 1983009808
    %v1104 = vunpack.c.0.s8 %v1103
    %v1105 = vlaneseq
    %v1106 = vshrl.u32 %v1105, 7
    %v1107 = vsub.s32 %v1104, %v1106
    %v1108 = vrot.slane %v1100, %v1107
    %v1110 = vunpack.c.l.s4 1983009808
    %v1111 = vunpack.c.0.s8 %v1110
    %v1112 = vlaneseq
    %v1113 = vshrl.u32 %v1112, 7
    %v1114 = vsub.s32 %v1111, %v1113
    %v1115 = vrot.slane %v1101, %v1114
    %v1116 = vcombine.low %v1108, %v1115
    %v1125 = vsel %vm561, %v997, 0.0
    %1126 = vadd.xlane.f32.xlu0 %v1125
    %v1127 = vpop.xlane.xlu0 %1126
    %v1128 = vsel %vm561, %v1014, 0.0
    %1129 = vadd.xlane.f32.xlu0 %v1128
    %v1130 = vpop.xlane.xlu0 %1129
    %v1131 = vsel %vm561, %v1031, 0.0
    %1132 = vadd.xlane.f32.xlu0 %v1131
    %v1133 = vpop.xlane.xlu0 %1132
    %v1134 = vsel %vm561, %v1048, 0.0
    %1135 = vadd.xlane.f32.xlu0 %v1134
    %v1136 = vpop.xlane.xlu0 %1135
    %v1137 = vsel %vm561, %v1065, 0.0
    %1138 = vadd.xlane.f32.xlu0 %v1137
    %v1139 = vpop.xlane.xlu0 %1138
    %v1140 = vsel %vm561, %v1082, 0.0
    %1141 = vadd.xlane.f32.xlu0 %v1140
    %v1142 = vpop.xlane.xlu0 %1141
    %v1143 = vsel %vm561, %v1099, 0.0
    %1144 = vadd.xlane.f32.xlu0 %v1143
    %v1145 = vpop.xlane.xlu0 %1144
    %v1146 = vsel %vm561, %v1116, 0.0
    %1147 = vadd.xlane.f32.xlu0 %v1146
    %v1148 = vpop.xlane.xlu0 %1147
    %v1149 = vmul.f32 %v1127, 0.17677669
    %v1150 = vmul.f32 %v1130, 0.17677669
    %v1151 = vmul.f32 %v1133, 0.17677669
    %v1152 = vmul.f32 %v1136, 0.17677669
    %v1153 = vmul.f32 %v1139, 0.17677669
    %v1154 = vmul.f32 %v1142, 0.17677669
    %v1155 = vmul.f32 %v1145, 0.17677669
    %v1156 = vmul.f32 %v1148, 0.17677669
    %vm1157 = vcmask 1040384
    %vm1158 = vcmask 1042434
    %vm1159 = vmor %vm1157, %vm1158
    %vm1160 = vcmask 1044484
    %vm1161 = vmor %vm1159, %vm1160
    %vm1162 = vcmask 1046534
    %vm1163 = vmor %vm1161, %vm1162
    %v1164 = vrot.slane %v714, 7
    %v1165 = vrot.slane %v1164, 2
    %v1166 = vrot.slane %v722, 7
    %v1167 = vsel %vm1163, %v1165, %v1166
    %v1168 = vrot.slane %v1166, 2
    %v1169 = vrot.slane %v721, 7
    %v1170 = vsel %vm1163, %v1168, %v1169
    %v1171 = vrot.slane %v1169, 2
    %v1172 = vrot.slane %v723, 7
    %v1173 = vsel %vm1163, %v1171, %v1172
    %v1174 = vrot.slane %v1172, 2
    %v1175 = vrot.slane %v731, 7
    %v1176 = vsel %vm1163, %v1174, %v1175
    %v1177 = vrot.slane %v739, 7
    %v1178 = vrot.slane %v1177, 2
    %v1179 = vrot.slane %v738, 7
    %v1180 = vsel %vm1163, %v1178, %v1179
    %v1181 = vrot.slane %v1179, 2
    %v1182 = vrot.slane %v740, 7
    %v1183 = vsel %vm1163, %v1181, %v1182
    %v1184 = vrot.slane %v1182, 2
    %v1185 = vrot.slane %v748, 7
    %v1186 = vsel %vm1163, %v1184, %v1185
    %v1187 = vrot.slane %v1185, 2
    %v1188 = vrot.slane %v756, 7
    %v1189 = vsel %vm1163, %v1187, %v1188
    %v1190 = vrot.slane %v755, 7
    %v1191 = vrot.slane %v1190, 2
    %v1192 = vrot.slane %v757, 7
    %v1193 = vsel %vm1163, %v1191, %v1192
    %v1194 = vrot.slane %v1192, 2
    %v1195 = vrot.slane %v765, 7
    %v1196 = vsel %vm1163, %v1194, %v1195
    %v1197 = vrot.slane %v1195, 2
    %v1198 = vrot.slane %v773, 7
    %v1199 = vsel %vm1163, %v1197, %v1198
    %v1200 = vrot.slane %v1198, 2
    %v1201 = vrot.slane %v772, 7
    %v1202 = vsel %vm1163, %v1200, %v1201
    %v1203 = vrot.slane %v774, 7
    %v1204 = vrot.slane %v1203, 2
    %v1205 = vrot.slane %v782, 7
    %v1206 = vsel %vm1163, %v1204, %v1205
    %v1207 = vrot.slane %v1205, 2
    %v1208 = vrot.slane %v790, 7
    %v1209 = vsel %vm1163, %v1207, %v1208
    %v1210 = vrot.slane %v1208, 2
    %v1211 = vrot.slane %v789, 7
    %v1212 = vsel %vm1163, %v1210, %v1211
    %v1213 = vrot.slane %v1211, 2
    %v1214 = vrot.slane %v791, 7
    %v1215 = vsel %vm1163, %v1213, %v1214
    %v1216 = vrot.slane %v799, 7
    %v1217 = vrot.slane %v1216, 2
    %v1218 = vrot.slane %v807, 7
    %v1219 = vsel %vm1163, %v1217, %v1218
    %v1220 = vrot.slane %v1218, 2
    %v1221 = vrot.slane %v806, 7
    %v1222 = vsel %vm1163, %v1220, %v1221
    %v1223 = vrot.slane %v1221, 2
    %v1224 = vrot.slane %v808, 7
    %v1225 = vsel %vm1163, %v1223, %v1224
    %v1226 = vrot.slane %v1224, 2
    %v1227 = vrot.slane %v816, 7
    %v1228 = vsel %vm1163, %v1226, %v1227
    %v1229 = vrot.slane %v824, 7
    %v1230 = vrot.slane %v1229, 2
    %v1231 = vrot.slane %v823, 7
    %v1232 = vsel %vm1163, %v1230, %v1231
    %v1233 = vrot.slane %v1231, 2
    %v1234 = vrot.slane %v825, 7
    %v1235 = vsel %vm1163, %v1233, %v1234
    %v1236 = vrot.slane %v1234, 2
    %v1237 = vrot.slane %v833, 7
    %v1238 = vsel %vm1163, %v1236, %v1237
    %v1239 = vrot.slane %v1237, 2
    %v1240 = vrot.slane %v841, 7
    %v1241 = vsel %vm1163, %v1239, %v1240
    %v1242 = vrot.slane %v840, 7
    %v1243 = vrot.slane %v1242, 2
    %v1244 = vrot.slane %v842, 7
    %v1245 = vsel %vm1163, %v1243, %v1244
    %v1246 = vrot.slane %v1244, 2
    %v1247 = vrot.slane %v850, 7
    %v1248 = vsel %vm1163, %v1246, %v1247
    %v1249 = vrot.slane %v1247, 2
    %v1250 = vrot.slane %v858, 7
    %v1251 = vsel %vm1163, %v1249, %v1250
    %v1252 = vrot.slane %v1250, 2
    %v1253 = vrot.slane %v857, 7
    %v1254 = vsel %vm1163, %v1252, %v1253
    %v1255 = vrot.slane %v859, 7
    %v1256 = vrot.slane %v1255, 2
    %v1257 = vrot.slane %v867, 7
    %v1258 = vsel %vm1163, %v1256, %v1257
    %v1259 = vrot.slane %v1257, 2
    %v1260 = vrot.slane %v875, 7
    %v1261 = vsel %vm1163, %v1259, %v1260
    %v1262 = vrot.slane %v1260, 2
    %v1263 = vrot.slane %v874, 7
    %v1264 = vsel %vm1163, %v1262, %v1263
    %v1265 = vrot.slane %v1263, 2
    %v1266 = vrot.slane %v876, 7
    %v1267 = vsel %vm1163, %v1265, %v1266
    %v1300 = vmul.f32 %v722, %v1167
    %v1301 = vmul.f32 %v721, %v1170
    %v1302 = vmul.f32 %v723, %v1173
    %v1303 = vmul.f32 %v731, %v1176
    %v1304 = vmul.f32 %v738, %v1180
    %v1305 = vmul.f32 %v740, %v1183
    %v1306 = vmul.f32 %v748, %v1186
    %v1307 = vmul.f32 %v756, %v1189
    %v1308 = vmul.f32 %v757, %v1193
    %v1309 = vmul.f32 %v765, %v1196
    %v1310 = vmul.f32 %v773, %v1199
    %v1311 = vmul.f32 %v772, %v1202
    %v1312 = vmul.f32 %v782, %v1206
    %v1313 = vmul.f32 %v790, %v1209
    %v1314 = vmul.f32 %v789, %v1212
    %v1315 = vmul.f32 %v791, %v1215
    %v1316 = vmul.f32 %v807, %v1219
    %v1317 = vmul.f32 %v806, %v1222
    %v1318 = vmul.f32 %v808, %v1225
    %v1319 = vmul.f32 %v816, %v1228
    %v1320 = vmul.f32 %v823, %v1232
    %v1321 = vmul.f32 %v825, %v1235
    %v1322 = vmul.f32 %v833, %v1238
    %v1323 = vmul.f32 %v841, %v1241
    %v1324 = vmul.f32 %v842, %v1245
    %v1325 = vmul.f32 %v850, %v1248
    %v1326 = vmul.f32 %v858, %v1251
    %v1327 = vmul.f32 %v857, %v1254
    %v1328 = vmul.f32 %v867, %v1258
    %v1329 = vmul.f32 %v875, %v1261
    %v1330 = vmul.f32 %v874, %v1264
    %v1331 = vmul.f32 %v876, %v1267
    %v1364 = vcombine.low %v1300, %v1301
    %v1365 = vcombine.low %v1302, %v1303
    %v1367 = vunpack.c.l.s4 1983009808
    %v1368 = vunpack.c.0.s8 %v1367
    %v1369 = vlaneseq
    %v1370 = vshrl.u32 %v1369, 7
    %v1371 = vsub.s32 %v1368, %v1370
    %v1372 = vrot.slane %v1364, %v1371
    %v1374 = vunpack.c.l.s4 1983009808
    %v1375 = vunpack.c.0.s8 %v1374
    %v1376 = vlaneseq
    %v1377 = vshrl.u32 %v1376, 7
    %v1378 = vsub.s32 %v1375, %v1377
    %v1379 = vrot.slane %v1365, %v1378
    %v1380 = vcombine.low %v1372, %v1379
    %v1381 = vcombine.low %v1304, %v1305
    %v1382 = vcombine.low %v1306, %v1307
    %v1384 = vunpack.c.l.s4 1983009808
    %v1385 = vunpack.c.0.s8 %v1384
    %v1386 = vlaneseq
    %v1387 = vshrl.u32 %v1386, 7
    %v1388 = vsub.s32 %v1385, %v1387
    %v1389 = vrot.slane %v1381, %v1388
    %v1391 = vunpack.c.l.s4 1983009808
    %v1392 = vunpack.c.0.s8 %v1391
    %v1393 = vlaneseq
    %v1394 = vshrl.u32 %v1393, 7
    %v1395 = vsub.s32 %v1392, %v1394
    %v1396 = vrot.slane %v1382, %v1395
    %v1397 = vcombine.low %v1389, %v1396
    %v1398 = vcombine.low %v1308, %v1309
    %v1399 = vcombine.low %v1310, %v1311
    %v1401 = vunpack.c.l.s4 1983009808
    %v1402 = vunpack.c.0.s8 %v1401
    %v1403 = vlaneseq
    %v1404 = vshrl.u32 %v1403, 7
    %v1405 = vsub.s32 %v1402, %v1404
    %v1406 = vrot.slane %v1398, %v1405
    %v1408 = vunpack.c.l.s4 1983009808
    %v1409 = vunpack.c.0.s8 %v1408
    %v1410 = vlaneseq
    %v1411 = vshrl.u32 %v1410, 7
    %v1412 = vsub.s32 %v1409, %v1411
    %v1413 = vrot.slane %v1399, %v1412
    %v1414 = vcombine.low %v1406, %v1413
    %v1415 = vcombine.low %v1312, %v1313
    %v1416 = vcombine.low %v1314, %v1315
    %v1418 = vunpack.c.l.s4 1983009808
    %v1419 = vunpack.c.0.s8 %v1418
    %v1420 = vlaneseq
    %v1421 = vshrl.u32 %v1420, 7
    %v1422 = vsub.s32 %v1419, %v1421
    %v1423 = vrot.slane %v1415, %v1422
    %v1425 = vunpack.c.l.s4 1983009808
    %v1426 = vunpack.c.0.s8 %v1425
    %v1427 = vlaneseq
    %v1428 = vshrl.u32 %v1427, 7
    %v1429 = vsub.s32 %v1426, %v1428
    %v1430 = vrot.slane %v1416, %v1429
    %v1431 = vcombine.low %v1423, %v1430
    %v1432 = vcombine.low %v1316, %v1317
    %v1433 = vcombine.low %v1318, %v1319
    %v1435 = vunpack.c.l.s4 1983009808
    %v1436 = vunpack.c.0.s8 %v1435
    %v1437 = vlaneseq
    %v1438 = vshrl.u32 %v1437, 7
    %v1439 = vsub.s32 %v1436, %v1438
    %v1440 = vrot.slane %v1432, %v1439
    %v1442 = vunpack.c.l.s4 1983009808
    %v1443 = vunpack.c.0.s8 %v1442
    %v1444 = vlaneseq
    %v1445 = vshrl.u32 %v1444, 7
    %v1446 = vsub.s32 %v1443, %v1445
    %v1447 = vrot.slane %v1433, %v1446
    %v1448 = vcombine.low %v1440, %v1447
    %v1449 = vcombine.low %v1320, %v1321
    %v1450 = vcombine.low %v1322, %v1323
    %v1452 = vunpack.c.l.s4 1983009808
    %v1453 = vunpack.c.0.s8 %v1452
    %v1454 = vlaneseq
    %v1455 = vshrl.u32 %v1454, 7
    %v1456 = vsub.s32 %v1453, %v1455
    %v1457 = vrot.slane %v1449, %v1456
    %v1459 = vunpack.c.l.s4 1983009808
    %v1460 = vunpack.c.0.s8 %v1459
    %v1461 = vlaneseq
    %v1462 = vshrl.u32 %v1461, 7
    %v1463 = vsub.s32 %v1460, %v1462
    %v1464 = vrot.slane %v1450, %v1463
    %v1465 = vcombine.low %v1457, %v1464
    %v1466 = vcombine.low %v1324, %v1325
    %v1467 = vcombine.low %v1326, %v1327
    %v1469 = vunpack.c.l.s4 1983009808
    %v1470 = vunpack.c.0.s8 %v1469
    %v1471 = vlaneseq
    %v1472 = vshrl.u32 %v1471, 7
    %v1473 = vsub.s32 %v1470, %v1472
    %v1474 = vrot.slane %v1466, %v1473
    %v1476 = vunpack.c.l.s4 1983009808
    %v1477 = vunpack.c.0.s8 %v1476
    %v1478 = vlaneseq
    %v1479 = vshrl.u32 %v1478, 7
    %v1480 = vsub.s32 %v1477, %v1479
    %v1481 = vrot.slane %v1467, %v1480
    %v1482 = vcombine.low %v1474, %v1481
    %v1483 = vcombine.low %v1328, %v1329
    %v1484 = vcombine.low %v1330, %v1331
    %v1486 = vunpack.c.l.s4 1983009808
    %v1487 = vunpack.c.0.s8 %v1486
    %v1488 = vlaneseq
    %v1489 = vshrl.u32 %v1488, 7
    %v1490 = vsub.s32 %v1487, %v1489
    %v1491 = vrot.slane %v1483, %v1490
    %v1493 = vunpack.c.l.s4 1983009808
    %v1494 = vunpack.c.0.s8 %v1493
    %v1495 = vlaneseq
    %v1496 = vshrl.u32 %v1495, 7
    %v1497 = vsub.s32 %v1494, %v1496
    %v1498 = vrot.slane %v1484, %v1497
    %v1499 = vcombine.low %v1491, %v1498
    %v1508 = vsel %vm561, %v1380, 0.0
    %1509 = vadd.xlane.f32.xlu0 %v1508
    %v1510 = vpop.xlane.xlu0 %1509
    %v1511 = vsel %vm561, %v1397, 0.0
    %1512 = vadd.xlane.f32.xlu0 %v1511
    %v1513 = vpop.xlane.xlu0 %1512
    %v1514 = vsel %vm561, %v1414, 0.0
    %1515 = vadd.xlane.f32.xlu0 %v1514
    %v1516 = vpop.xlane.xlu0 %1515
    %v1517 = vsel %vm561, %v1431, 0.0
    %1518 = vadd.xlane.f32.xlu0 %v1517
    %v1519 = vpop.xlane.xlu0 %1518
    %v1520 = vsel %vm561, %v1448, 0.0
    %1521 = vadd.xlane.f32.xlu0 %v1520
    %v1522 = vpop.xlane.xlu0 %1521
    %v1523 = vsel %vm561, %v1465, 0.0
    %1524 = vadd.xlane.f32.xlu0 %v1523
    %v1525 = vpop.xlane.xlu0 %1524
    %v1526 = vsel %vm561, %v1482, 0.0
    %1527 = vadd.xlane.f32.xlu0 %v1526
    %v1528 = vpop.xlane.xlu0 %1527
    %v1529 = vsel %vm561, %v1499, 0.0
    %1530 = vadd.xlane.f32.xlu0 %v1529
    %v1531 = vpop.xlane.xlu0 %1530
    %v1532 = vmul.f32 %v1510, 0.17677669
    %v1533 = vmul.f32 %v1513, 0.17677669
    %v1534 = vmul.f32 %v1516, 0.17677669
    %v1535 = vmul.f32 %v1519, 0.17677669
    %v1536 = vmul.f32 %v1522, 0.17677669
    %v1537 = vmul.f32 %v1525, 0.17677669
    %v1538 = vmul.f32 %v1528, 0.17677669
    %v1539 = vmul.f32 %v1531, 0.17677669
    %v1540 = vmul.f32 %v722, %v722
    %v1541 = vmul.f32 %v721, %v721
    %v1542 = vmul.f32 %v723, %v723
    %v1543 = vmul.f32 %v731, %v731
    %v1544 = vmul.f32 %v738, %v738
    %v1545 = vmul.f32 %v740, %v740
    %v1546 = vmul.f32 %v748, %v748
    %v1547 = vmul.f32 %v756, %v756
    %v1548 = vmul.f32 %v757, %v757
    %v1549 = vmul.f32 %v765, %v765
    %v1550 = vmul.f32 %v773, %v773
    %v1551 = vmul.f32 %v772, %v772
    %v1552 = vmul.f32 %v782, %v782
    %v1553 = vmul.f32 %v790, %v790
    %v1554 = vmul.f32 %v789, %v789
    %v1555 = vmul.f32 %v791, %v791
    %v1556 = vmul.f32 %v807, %v807
    %v1557 = vmul.f32 %v806, %v806
    %v1558 = vmul.f32 %v808, %v808
    %v1559 = vmul.f32 %v816, %v816
    %v1560 = vmul.f32 %v823, %v823
    %v1561 = vmul.f32 %v825, %v825
    %v1562 = vmul.f32 %v833, %v833
    %v1563 = vmul.f32 %v841, %v841
    %v1564 = vmul.f32 %v842, %v842
    %v1565 = vmul.f32 %v850, %v850
    %v1566 = vmul.f32 %v858, %v858
    %v1567 = vmul.f32 %v857, %v857
    %v1568 = vmul.f32 %v867, %v867
    %v1569 = vmul.f32 %v875, %v875
    %v1570 = vmul.f32 %v874, %v874
    %v1571 = vmul.f32 %v876, %v876
    %v1604 = vcombine.low %v1540, %v1541
    %v1605 = vcombine.low %v1542, %v1543
    %v1607 = vunpack.c.l.s4 1983009808
    %v1608 = vunpack.c.0.s8 %v1607
    %v1609 = vlaneseq
    %v1610 = vshrl.u32 %v1609, 7
    %v1611 = vsub.s32 %v1608, %v1610
    %v1612 = vrot.slane %v1604, %v1611
    %v1614 = vunpack.c.l.s4 1983009808
    %v1615 = vunpack.c.0.s8 %v1614
    %v1616 = vlaneseq
    %v1617 = vshrl.u32 %v1616, 7
    %v1618 = vsub.s32 %v1615, %v1617
    %v1619 = vrot.slane %v1605, %v1618
    %v1620 = vcombine.low %v1612, %v1619
    %v1621 = vcombine.low %v1544, %v1545
    %v1622 = vcombine.low %v1546, %v1547
    %v1624 = vunpack.c.l.s4 1983009808
    %v1625 = vunpack.c.0.s8 %v1624
    %v1626 = vlaneseq
    %v1627 = vshrl.u32 %v1626, 7
    %v1628 = vsub.s32 %v1625, %v1627
    %v1629 = vrot.slane %v1621, %v1628
    %v1631 = vunpack.c.l.s4 1983009808
    %v1632 = vunpack.c.0.s8 %v1631
    %v1633 = vlaneseq
    %v1634 = vshrl.u32 %v1633, 7
    %v1635 = vsub.s32 %v1632, %v1634
    %v1636 = vrot.slane %v1622, %v1635
    %v1637 = vcombine.low %v1629, %v1636
    %v1638 = vcombine.low %v1548, %v1549
    %v1639 = vcombine.low %v1550, %v1551
    %v1641 = vunpack.c.l.s4 1983009808
    %v1642 = vunpack.c.0.s8 %v1641
    %v1643 = vlaneseq
    %v1644 = vshrl.u32 %v1643, 7
    %v1645 = vsub.s32 %v1642, %v1644
    %v1646 = vrot.slane %v1638, %v1645
    %v1648 = vunpack.c.l.s4 1983009808
    %v1649 = vunpack.c.0.s8 %v1648
    %v1650 = vlaneseq
    %v1651 = vshrl.u32 %v1650, 7
    %v1652 = vsub.s32 %v1649, %v1651
    %v1653 = vrot.slane %v1639, %v1652
    %v1654 = vcombine.low %v1646, %v1653
    %v1655 = vcombine.low %v1552, %v1553
    %v1656 = vcombine.low %v1554, %v1555
    %v1658 = vunpack.c.l.s4 1983009808
    %v1659 = vunpack.c.0.s8 %v1658
    %v1660 = vlaneseq
    %v1661 = vshrl.u32 %v1660, 7
    %v1662 = vsub.s32 %v1659, %v1661
    %v1663 = vrot.slane %v1655, %v1662
    %v1665 = vunpack.c.l.s4 1983009808
    %v1666 = vunpack.c.0.s8 %v1665
    %v1667 = vlaneseq
    %v1668 = vshrl.u32 %v1667, 7
    %v1669 = vsub.s32 %v1666, %v1668
    %v1670 = vrot.slane %v1656, %v1669
    %v1671 = vcombine.low %v1663, %v1670
    %v1672 = vcombine.low %v1556, %v1557
    %v1673 = vcombine.low %v1558, %v1559
    %v1675 = vunpack.c.l.s4 1983009808
    %v1676 = vunpack.c.0.s8 %v1675
    %v1677 = vlaneseq
    %v1678 = vshrl.u32 %v1677, 7
    %v1679 = vsub.s32 %v1676, %v1678
    %v1680 = vrot.slane %v1672, %v1679
    %v1682 = vunpack.c.l.s4 1983009808
    %v1683 = vunpack.c.0.s8 %v1682
    %v1684 = vlaneseq
    %v1685 = vshrl.u32 %v1684, 7
    %v1686 = vsub.s32 %v1683, %v1685
    %v1687 = vrot.slane %v1673, %v1686
    %v1688 = vcombine.low %v1680, %v1687
    %v1689 = vcombine.low %v1560, %v1561
    %v1690 = vcombine.low %v1562, %v1563
    %v1692 = vunpack.c.l.s4 1983009808
    %v1693 = vunpack.c.0.s8 %v1692
    %v1694 = vlaneseq
    %v1695 = vshrl.u32 %v1694, 7
    %v1696 = vsub.s32 %v1693, %v1695
    %v1697 = vrot.slane %v1689, %v1696
    %v1699 = vunpack.c.l.s4 1983009808
    %v1700 = vunpack.c.0.s8 %v1699
    %v1701 = vlaneseq
    %v1702 = vshrl.u32 %v1701, 7
    %v1703 = vsub.s32 %v1700, %v1702
    %v1704 = vrot.slane %v1690, %v1703
    %v1705 = vcombine.low %v1697, %v1704
    %v1706 = vcombine.low %v1564, %v1565
    %v1707 = vcombine.low %v1566, %v1567
    %v1709 = vunpack.c.l.s4 1983009808
    %v1710 = vunpack.c.0.s8 %v1709
    %v1711 = vlaneseq
    %v1712 = vshrl.u32 %v1711, 7
    %v1713 = vsub.s32 %v1710, %v1712
    %v1714 = vrot.slane %v1706, %v1713
    %v1716 = vunpack.c.l.s4 1983009808
    %v1717 = vunpack.c.0.s8 %v1716
    %v1718 = vlaneseq
    %v1719 = vshrl.u32 %v1718, 7
    %v1720 = vsub.s32 %v1717, %v1719
    %v1721 = vrot.slane %v1707, %v1720
    %v1722 = vcombine.low %v1714, %v1721
    %v1723 = vcombine.low %v1568, %v1569
    %v1724 = vcombine.low %v1570, %v1571
    %v1726 = vunpack.c.l.s4 1983009808
    %v1727 = vunpack.c.0.s8 %v1726
    %v1728 = vlaneseq
    %v1729 = vshrl.u32 %v1728, 7
    %v1730 = vsub.s32 %v1727, %v1729
    %v1731 = vrot.slane %v1723, %v1730
    %v1733 = vunpack.c.l.s4 1983009808
    %v1734 = vunpack.c.0.s8 %v1733
    %v1735 = vlaneseq
    %v1736 = vshrl.u32 %v1735, 7
    %v1737 = vsub.s32 %v1734, %v1736
    %v1738 = vrot.slane %v1724, %v1737
    %v1739 = vcombine.low %v1731, %v1738
    %v1748 = vsel %vm561, %v1620, 0.0
    %1749 = vadd.xlane.f32.xlu0 %v1748
    %v1750 = vpop.xlane.xlu0 %1749
    %v1751 = vsel %vm561, %v1637, 0.0
    %1752 = vadd.xlane.f32.xlu0 %v1751
    %v1753 = vpop.xlane.xlu0 %1752
    %v1754 = vsel %vm561, %v1654, 0.0
    %1755 = vadd.xlane.f32.xlu0 %v1754
    %v1756 = vpop.xlane.xlu0 %1755
    %v1757 = vsel %vm561, %v1671, 0.0
    %1758 = vadd.xlane.f32.xlu0 %v1757
    %v1759 = vpop.xlane.xlu0 %1758
    %v1760 = vsel %vm561, %v1688, 0.0
    %1761 = vadd.xlane.f32.xlu0 %v1760
    %v1762 = vpop.xlane.xlu0 %1761
    %v1763 = vsel %vm561, %v1705, 0.0
    %1764 = vadd.xlane.f32.xlu0 %v1763
    %v1765 = vpop.xlane.xlu0 %1764
    %v1766 = vsel %vm561, %v1722, 0.0
    %1767 = vadd.xlane.f32.xlu0 %v1766
    %v1768 = vpop.xlane.xlu0 %1767
    %v1769 = vsel %vm561, %v1739, 0.0
    %1770 = vadd.xlane.f32.xlu0 %v1769
    %v1771 = vpop.xlane.xlu0 %1770
    %v1772 = vmul.f32 %v1750, 0.17677669
    %v1773 = vmul.f32 %v1753, 0.17677669
    %v1774 = vmul.f32 %v1756, 0.17677669
    %v1775 = vmul.f32 %v1759, 0.17677669
    %v1776 = vmul.f32 %v1762, 0.17677669
    %v1777 = vmul.f32 %v1765, 0.17677669
    %v1778 = vmul.f32 %v1768, 0.17677669
    %v1779 = vmul.f32 %v1771, 0.17677669
    %v1780 = vmax.f32 %v1149, %v1532
    %v1781 = vmax.f32 %v1150, %v1533
    %v1782 = vmax.f32 %v1151, %v1534
    %v1783 = vmax.f32 %v1152, %v1535
    %v1784 = vmax.f32 %v1153, %v1536
    %v1785 = vmax.f32 %v1154, %v1537
    %v1786 = vmax.f32 %v1155, %v1538
    %v1787 = vmax.f32 %v1156, %v1539
    %v1788 = vmax.f32 %v1780, %v1772
    %v1789 = vmax.f32 %v1781, %v1773
    %v1790 = vmax.f32 %v1782, %v1774
    %v1791 = vmax.f32 %v1783, %v1775
    %v1792 = vmax.f32 %v1784, %v1776
    %v1793 = vmax.f32 %v1785, %v1777
    %v1794 = vmax.f32 %v1786, %v1778
    %v1795 = vmax.f32 %v1787, %v1779
    %v1796 = vsub.f32 %v1149, %v1788
    %v1797 = vsub.f32 %v1150, %v1789
    %v1798 = vsub.f32 %v1151, %v1790
    %v1799 = vsub.f32 %v1152, %v1791
    %v1800 = vsub.f32 %v1153, %v1792
    %v1801 = vsub.f32 %v1154, %v1793
    %v1802 = vsub.f32 %v1155, %v1794
    %v1803 = vsub.f32 %v1156, %v1795
    %v1804 = vmul.f32 %v1796, 1.442695
    %v1805 = vpow.pop %v1804
    %v1806 = vmul.f32 %v1797, 1.442695
    %v1807 = vpow.pop %v1806
    %v1808 = vmul.f32 %v1798, 1.442695
    %v1809 = vpow.pop %v1808
    %v1810 = vmul.f32 %v1799, 1.442695
    %v1811 = vpow.pop %v1810
    %v1812 = vmul.f32 %v1800, 1.442695
    %v1813 = vpow.pop %v1812
    %v1814 = vmul.f32 %v1801, 1.442695
    %v1815 = vpow.pop %v1814
    %v1816 = vmul.f32 %v1802, 1.442695
    %v1817 = vpow.pop %v1816
    %v1818 = vmul.f32 %v1803, 1.442695
    %v1819 = vpow.pop %v1818
    %v1820 = vsub.f32 %v1532, %v1788
    %v1821 = vsub.f32 %v1533, %v1789
    %v1822 = vsub.f32 %v1534, %v1790
    %v1823 = vsub.f32 %v1535, %v1791
    %v1824 = vsub.f32 %v1536, %v1792
    %v1825 = vsub.f32 %v1537, %v1793
    %v1826 = vsub.f32 %v1538, %v1794
    %v1827 = vsub.f32 %v1539, %v1795
    %v1828 = vmul.f32 %v1820, 1.442695
    %v1829 = vpow.pop %v1828
    %v1830 = vmul.f32 %v1821, 1.442695
    %v1831 = vpow.pop %v1830
    %v1832 = vmul.f32 %v1822, 1.442695
    %v1833 = vpow.pop %v1832
    %v1834 = vmul.f32 %v1823, 1.442695
    %v1835 = vpow.pop %v1834
    %v1836 = vmul.f32 %v1824, 1.442695
    %v1837 = vpow.pop %v1836
    %v1838 = vmul.f32 %v1825, 1.442695
    %v1839 = vpow.pop %v1838
    %v1840 = vmul.f32 %v1826, 1.442695
    %v1841 = vpow.pop %v1840
    %v1842 = vmul.f32 %v1827, 1.442695
    %v1843 = vpow.pop %v1842
    %v1844 = vsub.f32 %v1772, %v1788
    %v1845 = vsub.f32 %v1773, %v1789
    %v1846 = vsub.f32 %v1774, %v1790
    %v1847 = vsub.f32 %v1775, %v1791
    %v1848 = vsub.f32 %v1776, %v1792
    %v1849 = vsub.f32 %v1777, %v1793
    %v1850 = vsub.f32 %v1778, %v1794
    %v1851 = vsub.f32 %v1779, %v1795
    %v1852 = vmul.f32 %v1844, 1.442695
    %v1853 = vpow.pop %v1852
    %v1854 = vmul.f32 %v1845, 1.442695
    %v1855 = vpow.pop %v1854
    %v1856 = vmul.f32 %v1846, 1.442695
    %v1857 = vpow.pop %v1856
    %v1858 = vmul.f32 %v1847, 1.442695
    %v1859 = vpow.pop %v1858
    %v1860 = vmul.f32 %v1848, 1.442695
    %v1861 = vpow.pop %v1860
    %v1862 = vmul.f32 %v1849, 1.442695
    %v1863 = vpow.pop %v1862
    %v1864 = vmul.f32 %v1850, 1.442695
    %v1865 = vpow.pop %v1864
    %v1866 = vmul.f32 %v1851, 1.442695
    %v1867 = vpow.pop %v1866
    %v1868 = vadd.f32 %v1805, %v1829
    %v1869 = vadd.f32 %v1807, %v1831
    %v1870 = vadd.f32 %v1809, %v1833
    %v1871 = vadd.f32 %v1811, %v1835
    %v1872 = vadd.f32 %v1813, %v1837
    %v1873 = vadd.f32 %v1815, %v1839
    %v1874 = vadd.f32 %v1817, %v1841
    %v1875 = vadd.f32 %v1819, %v1843
    %v1876 = vadd.f32 %v1868, %v1853
    %v1877 = vadd.f32 %v1869, %v1855
    %v1878 = vadd.f32 %v1870, %v1857
    %v1879 = vadd.f32 %v1871, %v1859
    %v1880 = vadd.f32 %v1872, %v1861
    %v1881 = vadd.f32 %v1873, %v1863
    %v1882 = vadd.f32 %v1874, %v1865
    %v1883 = vadd.f32 %v1875, %v1867
    %v1884 = vrcp.pop %v1876
    %v1885 = vrcp.pop %v1877
    %v1886 = vrcp.pop %v1878
    %v1887 = vrcp.pop %v1879
    %v1888 = vrcp.pop %v1880
    %v1889 = vrcp.pop %v1881
    %v1890 = vrcp.pop %v1882
    %v1891 = vrcp.pop %v1883
    %v1892 = vmul.f32 %v1805, %v1884
    %v1893 = vmul.f32 %v1807, %v1885
    %v1894 = vmul.f32 %v1809, %v1886
    %v1895 = vmul.f32 %v1811, %v1887
    %v1896 = vmul.f32 %v1813, %v1888
    %v1897 = vmul.f32 %v1815, %v1889
    %v1898 = vmul.f32 %v1817, %v1890
    %v1899 = vmul.f32 %v1819, %v1891
    %v1900 = vcombine.low %v714, %v722
    %v1901 = vcombine.low %v721, %v723
    %v1903 = vunpack.c.l.s4 1983009808
    %v1904 = vunpack.c.0.s8 %v1903
    %v1905 = vlaneseq
    %v1906 = vshrl.u32 %v1905, 7
    %v1907 = vsub.s32 %v1904, %v1906
    %v1908 = vrot.slane %v1900, %v1907
    %v1910 = vunpack.c.l.s4 1983009808
    %v1911 = vunpack.c.0.s8 %v1910
    %v1912 = vlaneseq
    %v1913 = vshrl.u32 %v1912, 7
    %v1914 = vsub.s32 %v1911, %v1913
    %v1915 = vrot.slane %v1901, %v1914
    %v1916 = vcombine.low %v1908, %v1915
    %v1917 = vcombine.low %v739, %v738
    %v1918 = vcombine.low %v740, %v748
    %v1920 = vunpack.c.l.s4 1983009808
    %v1921 = vunpack.c.0.s8 %v1920
    %v1922 = vlaneseq
    %v1923 = vshrl.u32 %v1922, 7
    %v1924 = vsub.s32 %v1921, %v1923
    %v1925 = vrot.slane %v1917, %v1924
    %v1927 = vunpack.c.l.s4 1983009808
    %v1928 = vunpack.c.0.s8 %v1927
    %v1929 = vlaneseq
    %v1930 = vshrl.u32 %v1929, 7
    %v1931 = vsub.s32 %v1928, %v1930
    %v1932 = vrot.slane %v1918, %v1931
    %v1933 = vcombine.low %v1925, %v1932
    %v1934 = vcombine.low %v755, %v757
    %v1935 = vcombine.low %v765, %v773
    %v1937 = vunpack.c.l.s4 1983009808
    %v1938 = vunpack.c.0.s8 %v1937
    %v1939 = vlaneseq
    %v1940 = vshrl.u32 %v1939, 7
    %v1941 = vsub.s32 %v1938, %v1940
    %v1942 = vrot.slane %v1934, %v1941
    %v1944 = vunpack.c.l.s4 1983009808
    %v1945 = vunpack.c.0.s8 %v1944
    %v1946 = vlaneseq
    %v1947 = vshrl.u32 %v1946, 7
    %v1948 = vsub.s32 %v1945, %v1947
    %v1949 = vrot.slane %v1935, %v1948
    %v1950 = vcombine.low %v1942, %v1949
    %v1951 = vcombine.low %v774, %v782
    %v1952 = vcombine.low %v790, %v789
    %v1954 = vunpack.c.l.s4 1983009808
    %v1955 = vunpack.c.0.s8 %v1954
    %v1956 = vlaneseq
    %v1957 = vshrl.u32 %v1956, 7
    %v1958 = vsub.s32 %v1955, %v1957
    %v1959 = vrot.slane %v1951, %v1958
    %v1961 = vunpack.c.l.s4 1983009808
    %v1962 = vunpack.c.0.s8 %v1961
    %v1963 = vlaneseq
    %v1964 = vshrl.u32 %v1963, 7
    %v1965 = vsub.s32 %v1962, %v1964
    %v1966 = vrot.slane %v1952, %v1965
    %v1967 = vcombine.low %v1959, %v1966
    %v1968 = vcombine.low %v799, %v807
    %v1969 = vcombine.low %v806, %v808
    %v1971 = vunpack.c.l.s4 1983009808
    %v1972 = vunpack.c.0.s8 %v1971
    %v1973 = vlaneseq
    %v1974 = vshrl.u32 %v1973, 7
    %v1975 = vsub.s32 %v1972, %v1974
    %v1976 = vrot.slane %v1968, %v1975
    %v1978 = vunpack.c.l.s4 1983009808
    %v1979 = vunpack.c.0.s8 %v1978
    %v1980 = vlaneseq
    %v1981 = vshrl.u32 %v1980, 7
    %v1982 = vsub.s32 %v1979, %v1981
    %v1983 = vrot.slane %v1969, %v1982
    %v1984 = vcombine.low %v1976, %v1983
    %v1985 = vcombine.low %v824, %v823
    %v1986 = vcombine.low %v825, %v833
    %v1988 = vunpack.c.l.s4 1983009808
    %v1989 = vunpack.c.0.s8 %v1988
    %v1990 = vlaneseq
    %v1991 = vshrl.u32 %v1990, 7
    %v1992 = vsub.s32 %v1989, %v1991
    %v1993 = vrot.slane %v1985, %v1992
    %v1995 = vunpack.c.l.s4 1983009808
    %v1996 = vunpack.c.0.s8 %v1995
    %v1997 = vlaneseq
    %v1998 = vshrl.u32 %v1997, 7
    %v1999 = vsub.s32 %v1996, %v1998
    %v2000 = vrot.slane %v1986, %v1999
    %v2001 = vcombine.low %v1993, %v2000
    %v2002 = vcombine.low %v840, %v842
    %v2003 = vcombine.low %v850, %v858
    %v2005 = vunpack.c.l.s4 1983009808
    %v2006 = vunpack.c.0.s8 %v2005
    %v2007 = vlaneseq
    %v2008 = vshrl.u32 %v2007, 7
    %v2009 = vsub.s32 %v2006, %v2008
    %v2010 = vrot.slane %v2002, %v2009
    %v2012 = vunpack.c.l.s4 1983009808
    %v2013 = vunpack.c.0.s8 %v2012
    %v2014 = vlaneseq
    %v2015 = vshrl.u32 %v2014, 7
    %v2016 = vsub.s32 %v2013, %v2015
    %v2017 = vrot.slane %v2003, %v2016
    %v2018 = vcombine.low %v2010, %v2017
    %v2019 = vcombine.low %v859, %v867
    %v2020 = vcombine.low %v875, %v874
    %v2022 = vunpack.c.l.s4 1983009808
    %v2023 = vunpack.c.0.s8 %v2022
    %v2024 = vlaneseq
    %v2025 = vshrl.u32 %v2024, 7
    %v2026 = vsub.s32 %v2023, %v2025
    %v2027 = vrot.slane %v2019, %v2026
    %v2029 = vunpack.c.l.s4 1983009808
    %v2030 = vunpack.c.0.s8 %v2029
    %v2031 = vlaneseq
    %v2032 = vshrl.u32 %v2031, 7
    %v2033 = vsub.s32 %v2030, %v2032
    %v2034 = vrot.slane %v2020, %v2033
    %v2035 = vcombine.low %v2027, %v2034
    %v2044 = vmul.f32 %v1892, %v1916
    %v2045 = vmul.f32 %v1893, %v1933
    %v2046 = vmul.f32 %v1894, %v1950
    %v2047 = vmul.f32 %v1895, %v1967
    %v2048 = vmul.f32 %v1896, %v1984
    %v2049 = vmul.f32 %v1897, %v2001
    %v2050 = vmul.f32 %v1898, %v2018
    %v2051 = vmul.f32 %v1899, %v2035
    %v2052 = vld [vmem:[#allocation13] sm:$0xff]
    %v2053 = vmul.f32 %v1829, %v1884
    %v2054 = vmul.f32 %v1831, %v1885
    %v2055 = vmul.f32 %v1833, %v1886
    %v2056 = vmul.f32 %v1835, %v1887
    %v2057 = vmul.f32 %v1837, %v1888
    %v2058 = vmul.f32 %v1839, %v1889
    %v2059 = vmul.f32 %v1841, %v1890
    %v2060 = vmul.f32 %v1843, %v1891
    %v2062 = vunpack.c.l.s4 1983009808
    %v2063 = vunpack.c.0.s8 %v2062
    %v2064 = vlaneseq
    %v2065 = vshrl.u32 %v2064, 7
    %v2066 = vsub.s32 %v2063, %v2065
    %v2067 = vrot.slane %v731, %v2066
    %v2069 = vunpack.c.l.s4 1983009808
    %v2070 = vunpack.c.0.s8 %v2069
    %v2071 = vlaneseq
    %v2072 = vshrl.u32 %v2071, 7
    %v2073 = vsub.s32 %v2070, %v2072
    %v2074 = vrot.slane %v756, %v2073
    %v2076 = vunpack.c.l.s4 1983009808
    %v2077 = vunpack.c.0.s8 %v2076
    %v2078 = vlaneseq
    %v2079 = vshrl.u32 %v2078, 7
    %v2080 = vsub.s32 %v2077, %v2079
    %v2081 = vrot.slane %v772, %v2080
    %v2083 = vunpack.c.l.s4 1983009808
    %v2084 = vunpack.c.0.s8 %v2083
    %v2085 = vlaneseq
    %v2086 = vshrl.u32 %v2085, 7
    %v2087 = vsub.s32 %v2084, %v2086
    %v2088 = vrot.slane %v791, %v2087
    %v2090 = vunpack.c.l.s4 1983009808
    %v2091 = vunpack.c.0.s8 %v2090
    %v2092 = vlaneseq
    %v2093 = vshrl.u32 %v2092, 7
    %v2094 = vsub.s32 %v2091, %v2093
    %v2095 = vrot.slane %v816, %v2094
    %v2097 = vunpack.c.l.s4 1983009808
    %v2098 = vunpack.c.0.s8 %v2097
    %v2099 = vlaneseq
    %v2100 = vshrl.u32 %v2099, 7
    %v2101 = vsub.s32 %v2098, %v2100
    %v2102 = vrot.slane %v841, %v2101
    %v2104 = vunpack.c.l.s4 1983009808
    %v2105 = vunpack.c.0.s8 %v2104
    %v2106 = vlaneseq
    %v2107 = vshrl.u32 %v2106, 7
    %v2108 = vsub.s32 %v2105, %v2107
    %v2109 = vrot.slane %v857, %v2108
    %v2111 = vunpack.c.l.s4 1983009808
    %v2112 = vunpack.c.0.s8 %v2111
    %v2113 = vlaneseq
    %v2114 = vshrl.u32 %v2113, 7
    %v2115 = vsub.s32 %v2112, %v2114
    %v2116 = vrot.slane %v876, %v2115
    %vm2117 = vcmask 1046528
    %v2118 = vrot.slane %v1916, 1
    %v2119 = vrot.slane %v2067, 1
    %v2120 = vsel %vm2117, %v2118, %v2119
    %v2121 = vrot.slane %v1933, 1
    %v2122 = vrot.slane %v2074, 1
    %v2123 = vsel %vm2117, %v2121, %v2122
    %v2124 = vrot.slane %v1950, 1
    %v2125 = vrot.slane %v2081, 1
    %v2126 = vsel %vm2117, %v2124, %v2125
    %v2127 = vrot.slane %v1967, 1
    %v2128 = vrot.slane %v2088, 1
    %v2129 = vsel %vm2117, %v2127, %v2128
    %v2130 = vrot.slane %v1984, 1
    %v2131 = vrot.slane %v2095, 1
    %v2132 = vsel %vm2117, %v2130, %v2131
    %v2133 = vrot.slane %v2001, 1
    %v2134 = vrot.slane %v2102, 1
    %v2135 = vsel %vm2117, %v2133, %v2134
    %v2136 = vrot.slane %v2018, 1
    %v2137 = vrot.slane %v2109, 1
    %v2138 = vsel %vm2117, %v2136, %v2137
    %v2139 = vrot.slane %v2035, 1
    %v2140 = vrot.slane %v2116, 1
    %v2141 = vsel %vm2117, %v2139, %v2140
    %v2150 = vmul.f32 %v2053, %v2120
    %v2151 = vmul.f32 %v2054, %v2123
    %v2152 = vmul.f32 %v2055, %v2126
    %v2153 = vmul.f32 %v2056, %v2129
    %v2154 = vmul.f32 %v2057, %v2132
    %v2155 = vmul.f32 %v2058, %v2135
    %v2156 = vmul.f32 %v2059, %v2138
    %v2157 = vmul.f32 %v2060, %v2141
    %s2158 = scalar_lea.vmem [#allocation13], 8
    %v2159 = vld [vmem:[%s2158] sm:$0xff]
    %vm2160 = vcmask 64512
    %v2162 = vsel %vm2160, %v2159, 0
    %2164 = vmatprep.subr.mxu0 0.0
    %2165 = vmatpush1.msra.mxu0 0.0
    %2166 = vmatprep.subr.mxu0 0.0
    %2167 = vmatpush1.msra.mxu0 0.0
    %2168 = vmatprep.subr.mxu0 0.0
    %2169 = vmatpush1.msra.mxu0 0.0
    %2170 = vmatprep.subr.mxu0 0.0
    %2171 = vmatpush1.msra.mxu0 0.0
    %2172 = vmatprep.subr.mxu0 0.0
    %2173 = vmatpush1.msra.mxu0 0.0
    %2174 = vmatprep.subr.mxu0 0.0
    %2175 = vmatpush1.msra.mxu0 0.0
    %2176 = vmatprep.subr.mxu0 0.0
    %2177 = vmatpush1.msra.mxu0 0.0
    %2178 = vmatprep.subr.mxu0 0.0
    %2179 = vmatpush1.msra.mxu0 0.0
    %2180 = vmatprep.subr.mxu0 0.0
    %2181 = vmatpush1.msra.mxu0 0.0
    %2182 = vmatprep.subr.mxu0 0.0
    %2183 = vmatpush1.msra.mxu0 0.0
    %2184 = vmatprep.subr.mxu0 0.0
    %2185 = vmatpush1.msra.mxu0 0.0
    %2186 = vmatprep.subr.mxu0 0.0
    %2187 = vmatpush1.msra.mxu0 0.0
    %2188 = vmatprep.subr.mxu0 0.0
    %2189 = vmatpush1.msra.mxu0 0.0
    %2190 = vmatprep.subr.mxu0 0.0
    %2191 = vmatpush1.msra.mxu0 0.0
    %2192 = vmatprep.subr.mxu0 0.0
    %2193 = vmatpush1.msra.mxu0 0.0
    %2194 = vmatprep.subr.mxu0 0.0
    %2195 = vmatpush1.msra.mxu0 %v2150
    %2196 = vmatprep.subr.mxu0 0.0
    %2197 = vmatpush2.msra.mxu0 0.0
    %2198 = vmatprep.subr.mxu0 0.0
    %2199 = vmatpush2.msra.mxu0 0.0
    %2200 = vmatprep.subr.mxu0 0.0
    %2201 = vmatpush2.msra.mxu0 0.0
    %2202 = vmatprep.subr.mxu0 0.0
    %2203 = vmatpush2.msra.mxu0 0.0
    %2204 = vmatprep.subr.mxu0 0.0
    %2205 = vmatpush2.msra.mxu0 0.0
    %2206 = vmatprep.subr.mxu0 0.0
    %2207 = vmatpush2.msra.mxu0 0.0
    %2208 = vmatprep.subr.mxu0 0.0
    %2209 = vmatpush2.msra.mxu0 0.0
    %2210 = vmatprep.subr.mxu0 0.0
    %2211 = vmatpush2.msra.mxu0 0.0
    %2212 = vmatprep.subr.mxu0 0.0
    %2213 = vmatpush2.msra.mxu0 0.0
    %2214 = vmatprep.subr.mxu0 0.0
    %2215 = vmatpush2.msra.mxu0 0.0
    %2216 = vmatprep.subr.mxu0 0.0
    %2217 = vmatpush2.msra.mxu0 0.0
    %2218 = vmatprep.subr.mxu0 0.0
    %2219 = vmatpush2.msra.mxu0 0.0
    %2220 = vmatprep.subr.mxu0 0.0
    %2221 = vmatpush2.msra.mxu0 0.0
    %2222 = vmatprep.subr.mxu0 0.0
    %2223 = vmatpush2.msra.mxu0 0.0
    %2224 = vmatprep.subr.mxu0 0.0
    %2225 = vmatpush2.msra.mxu0 0.0
    %2226 = vmatprep.subr.mxu0 0.0
    %2227 = vmatpush2.msra.mxu0 0.0
    %2228 = vmatprep.mubr.f32.mxu0 0.0
    %2229 = vmatmul.mubr.f32.gmra.mxu0 %v2162
    %v2230 = vpop.f32.mrf.mxu0
    %v2231 = vadd.f32 0.0, %v2230
    %v2232 = vpop.f32.mrf.mxu0
    %2233 = vdwg.mxu0
    %2234 = vmatprep.subr.mxu0 0.0
    %2235 = vmatpush1.msra.mxu0 0.0
    %2236 = vmatprep.subr.mxu0 0.0
    %2237 = vmatpush1.msra.mxu0 0.0
    %2238 = vmatprep.subr.mxu0 0.0
    %2239 = vmatpush1.msra.mxu0 0.0
    %2240 = vmatprep.subr.mxu0 0.0
    %2241 = vmatpush1.msra.mxu0 0.0
    %2242 = vmatprep.subr.mxu0 0.0
    %2243 = vmatpush1.msra.mxu0 0.0
    %2244 = vmatprep.subr.mxu0 0.0
    %2245 = vmatpush1.msra.mxu0 0.0
    %2246 = vmatprep.subr.mxu0 0.0
    %2247 = vmatpush1.msra.mxu0 0.0
    %2248 = vmatprep.subr.mxu0 0.0
    %2249 = vmatpush1.msra.mxu0 0.0
    %2250 = vmatprep.subr.mxu0 0.0
    %2251 = vmatpush1.msra.mxu0 0.0
    %2252 = vmatprep.subr.mxu0 0.0
    %2253 = vmatpush1.msra.mxu0 0.0
    %2254 = vmatprep.subr.mxu0 0.0
    %2255 = vmatpush1.msra.mxu0 0.0
    %2256 = vmatprep.subr.mxu0 0.0
    %2257 = vmatpush1.msra.mxu0 0.0
    %2258 = vmatprep.subr.mxu0 0.0
    %2259 = vmatpush1.msra.mxu0 0.0
    %2260 = vmatprep.subr.mxu0 0.0
    %2261 = vmatpush1.msra.mxu0 0.0
    %2262 = vmatprep.subr.mxu0 0.0
    %2263 = vmatpush1.msra.mxu0 0.0
    %2264 = vmatprep.subr.mxu0 0.0
    %2265 = vmatpush1.msra.mxu0 %v2151
    %2266 = vmatprep.subr.mxu0 0.0
    %2267 = vmatpush2.msra.mxu0 0.0
    %2268 = vmatprep.subr.mxu0 0.0
    %2269 = vmatpush2.msra.mxu0 0.0
    %2270 = vmatprep.subr.mxu0 0.0
    %2271 = vmatpush2.msra.mxu0 0.0
    %2272 = vmatprep.subr.mxu0 0.0
    %2273 = vmatpush2.msra.mxu0 0.0
    %2274 = vmatprep.subr.mxu0 0.0
    %2275 = vmatpush2.msra.mxu0 0.0
    %2276 = vmatprep.subr.mxu0 0.0
    %2277 = vmatpush2.msra.mxu0 0.0
    %2278 = vmatprep.subr.mxu0 0.0
    %2279 = vmatpush2.msra.mxu0 0.0
    %2280 = vmatprep.subr.mxu0 0.0
    %2281 = vmatpush2.msra.mxu0 0.0
    %2282 = vmatprep.subr.mxu0 0.0
    %2283 = vmatpush2.msra.mxu0 0.0
    %2284 = vmatprep.subr.mxu0 0.0
    %2285 = vmatpush2.msra.mxu0 0.0
    %2286 = vmatprep.subr.mxu0 0.0
    %2287 = vmatpush2.msra.mxu0 0.0
    %2288 = vmatprep.subr.mxu0 0.0
    %2289 = vmatpush2.msra.mxu0 0.0
    %2290 = vmatprep.subr.mxu0 0.0
    %2291 = vmatpush2.msra.mxu0 0.0
    %2292 = vmatprep.subr.mxu0 0.0
    %2293 = vmatpush2.msra.mxu0 0.0
    %2294 = vmatprep.subr.mxu0 0.0
    %2295 = vmatpush2.msra.mxu0 0.0
    %2296 = vmatprep.subr.mxu0 0.0
    %2297 = vmatpush2.msra.mxu0 0.0
    %2298 = vmatprep.mubr.f32.mxu0 0.0
    %2299 = vmatmul.mubr.f32.gmra.mxu0 %v2162
    %v2300 = vpop.f32.mrf.mxu0
    %v2301 = vadd.f32 0.0, %v2300
    %v2302 = vpop.f32.mrf.mxu0
    %2303 = vdwg.mxu0
    %2304 = vmatprep.subr.mxu0 0.0
    %2305 = vmatpush1.msra.mxu0 0.0
    %2306 = vmatprep.subr.mxu0 0.0
    %2307 = vmatpush1.msra.mxu0 0.0
    %2308 = vmatprep.subr.mxu0 0.0
    %2309 = vmatpush1.msra.mxu0 0.0
    %2310 = vmatprep.subr.mxu0 0.0
    %2311 = vmatpush1.msra.mxu0 0.0
    %2312 = vmatprep.subr.mxu0 0.0
    %2313 = vmatpush1.msra.mxu0 0.0
    %2314 = vmatprep.subr.mxu0 0.0
    %2315 = vmatpush1.msra.mxu0 0.0
    %2316 = vmatprep.subr.mxu0 0.0
    %2317 = vmatpush1.msra.mxu0 0.0
    %2318 = vmatprep.subr.mxu0 0.0
    %2319 = vmatpush1.msra.mxu0 0.0
    %2320 = vmatprep.subr.mxu0 0.0
    %2321 = vmatpush1.msra.mxu0 0.0
    %2322 = vmatprep.subr.mxu0 0.0
    %2323 = vmatpush1.msra.mxu0 0.0
    %2324 = vmatprep.subr.mxu0 0.0
    %2325 = vmatpush1.msra.mxu0 0.0
    %2326 = vmatprep.subr.mxu0 0.0
    %2327 = vmatpush1.msra.mxu0 0.0
    %2328 = vmatprep.subr.mxu0 0.0
    %2329 = vmatpush1.msra.mxu0 0.0
    %2330 = vmatprep.subr.mxu0 0.0
    %2331 = vmatpush1.msra.mxu0 0.0
    %2332 = vmatprep.subr.mxu0 0.0
    %2333 = vmatpush1.msra.mxu0 0.0
    %2334 = vmatprep.subr.mxu0 0.0
    %2335 = vmatpush1.msra.mxu0 %v2152
    %2336 = vmatprep.subr.mxu0 0.0
    %2337 = vmatpush2.msra.mxu0 0.0
    %2338 = vmatprep.subr.mxu0 0.0
    %2339 = vmatpush2.msra.mxu0 0.0
    %2340 = vmatprep.subr.mxu0 0.0
    %2341 = vmatpush2.msra.mxu0 0.0
    %2342 = vmatprep.subr.mxu0 0.0
    %2343 = vmatpush2.msra.mxu0 0.0
    %2344 = vmatprep.subr.mxu0 0.0
    %2345 = vmatpush2.msra.mxu0 0.0
    %2346 = vmatprep.subr.mxu0 0.0
    %2347 = vmatpush2.msra.mxu0 0.0
    %2348 = vmatprep.subr.mxu0 0.0
    %2349 = vmatpush2.msra.mxu0 0.0
    %2350 = vmatprep.subr.mxu0 0.0
    %2351 = vmatpush2.msra.mxu0 0.0
    %2352 = vmatprep.subr.mxu0 0.0
    %2353 = vmatpush2.msra.mxu0 0.0
    %2354 = vmatprep.subr.mxu0 0.0
    %2355 = vmatpush2.msra.mxu0 0.0
    %2356 = vmatprep.subr.mxu0 0.0
    %2357 = vmatpush2.msra.mxu0 0.0
    %2358 = vmatprep.subr.mxu0 0.0
    %2359 = vmatpush2.msra.mxu0 0.0
    %2360 = vmatprep.subr.mxu0 0.0
    %2361 = vmatpush2.msra.mxu0 0.0
    %2362 = vmatprep.subr.mxu0 0.0
    %2363 = vmatpush2.msra.mxu0 0.0
    %2364 = vmatprep.subr.mxu0 0.0
    %2365 = vmatpush2.msra.mxu0 0.0
    %2366 = vmatprep.subr.mxu0 0.0
    %2367 = vmatpush2.msra.mxu0 0.0
    %2368 = vmatprep.mubr.f32.mxu0 0.0
    %2369 = vmatmul.mubr.f32.gmra.mxu0 %v2162
    %v2370 = vpop.f32.mrf.mxu0
    %v2371 = vadd.f32 0.0, %v2370
    %v2372 = vpop.f32.mrf.mxu0
    %2373 = vdwg.mxu0
    %2374 = vmatprep.subr.mxu0 0.0
    %2375 = vmatpush1.msra.mxu0 0.0
    %2376 = vmatprep.subr.mxu0 0.0
    %2377 = vmatpush1.msra.mxu0 0.0
    %2378 = vmatprep.subr.mxu0 0.0
    %2379 = vmatpush1.msra.mxu0 0.0
    %2380 = vmatprep.subr.mxu0 0.0
    %2381 = vmatpush1.msra.mxu0 0.0
    %2382 = vmatprep.subr.mxu0 0.0
    %2383 = vmatpush1.msra.mxu0 0.0
    %2384 = vmatprep.subr.mxu0 0.0
    %2385 = vmatpush1.msra.mxu0 0.0
    %2386 = vmatprep.subr.mxu0 0.0
    %2387 = vmatpush1.msra.mxu0 0.0
    %2388 = vmatprep.subr.mxu0 0.0
    %2389 = vmatpush1.msra.mxu0 0.0
    %2390 = vmatprep.subr.mxu0 0.0
    %2391 = vmatpush1.msra.mxu0 0.0
    %2392 = vmatprep.subr.mxu0 0.0
    %2393 = vmatpush1.msra.mxu0 0.0
    %2394 = vmatprep.subr.mxu0 0.0
    %2395 = vmatpush1.msra.mxu0 0.0
    %2396 = vmatprep.subr.mxu0 0.0
    %2397 = vmatpush1.msra.mxu0 0.0
    %2398 = vmatprep.subr.mxu0 0.0
    %2399 = vmatpush1.msra.mxu0 0.0
    %2400 = vmatprep.subr.mxu0 0.0
    %2401 = vmatpush1.msra.mxu0 0.0
    %2402 = vmatprep.subr.mxu0 0.0
    %2403 = vmatpush1.msra.mxu0 0.0
    %2404 = vmatprep.subr.mxu0 0.0
    %2405 = vmatpush1.msra.mxu0 %v2153
    %2406 = vmatprep.subr.mxu0 0.0
    %2407 = vmatpush2.msra.mxu0 0.0
    %2408 = vmatprep.subr.mxu0 0.0
    %2409 = vmatpush2.msra.mxu0 0.0
    %2410 = vmatprep.subr.mxu0 0.0
    %2411 = vmatpush2.msra.mxu0 0.0
    %2412 = vmatprep.subr.mxu0 0.0
    %2413 = vmatpush2.msra.mxu0 0.0
    %2414 = vmatprep.subr.mxu0 0.0
    %2415 = vmatpush2.msra.mxu0 0.0
    %2416 = vmatprep.subr.mxu0 0.0
    %2417 = vmatpush2.msra.mxu0 0.0
    %2418 = vmatprep.subr.mxu0 0.0
    %2419 = vmatpush2.msra.mxu0 0.0
    %2420 = vmatprep.subr.mxu0 0.0
    %2421 = vmatpush2.msra.mxu0 0.0
    %2422 = vmatprep.subr.mxu0 0.0
    %2423 = vmatpush2.msra.mxu0 0.0
    %2424 = vmatprep.subr.mxu0 0.0
    %2425 = vmatpush2.msra.mxu0 0.0
    %2426 = vmatprep.subr.mxu0 0.0
    %2427 = vmatpush2.msra.mxu0 0.0
    %2428 = vmatprep.subr.mxu0 0.0
    %2429 = vmatpush2.msra.mxu0 0.0
    %2430 = vmatprep.subr.mxu0 0.0
    %2431 = vmatpush2.msra.mxu0 0.0
    %2432 = vmatprep.subr.mxu0 0.0
    %2433 = vmatpush2.msra.mxu0 0.0
    %2434 = vmatprep.subr.mxu0 0.0
    %2435 = vmatpush2.msra.mxu0 0.0
    %2436 = vmatprep.subr.mxu0 0.0
    %2437 = vmatpush2.msra.mxu0 0.0
    %2438 = vmatprep.mubr.f32.mxu0 0.0
    %2439 = vmatmul.mubr.f32.gmra.mxu0 %v2162
    %v2440 = vpop.f32.mrf.mxu0
    %v2441 = vadd.f32 0.0, %v2440
    %v2442 = vpop.f32.mrf.mxu0
    %2443 = vdwg.mxu0
    %2444 = vmatprep.subr.mxu0 0.0
    %2445 = vmatpush1.msra.mxu0 0.0
    %2446 = vmatprep.subr.mxu0 0.0
    %2447 = vmatpush1.msra.mxu0 0.0
    %2448 = vmatprep.subr.mxu0 0.0
    %2449 = vmatpush1.msra.mxu0 0.0
    %2450 = vmatprep.subr.mxu0 0.0
    %2451 = vmatpush1.msra.mxu0 0.0
    %2452 = vmatprep.subr.mxu0 0.0
    %2453 = vmatpush1.msra.mxu0 0.0
    %2454 = vmatprep.subr.mxu0 0.0
    %2455 = vmatpush1.msra.mxu0 0.0
    %2456 = vmatprep.subr.mxu0 0.0
    %2457 = vmatpush1.msra.mxu0 0.0
    %2458 = vmatprep.subr.mxu0 0.0
    %2459 = vmatpush1.msra.mxu0 0.0
    %2460 = vmatprep.subr.mxu0 0.0
    %2461 = vmatpush1.msra.mxu0 0.0
    %2462 = vmatprep.subr.mxu0 0.0
    %2463 = vmatpush1.msra.mxu0 0.0
    %2464 = vmatprep.subr.mxu0 0.0
    %2465 = vmatpush1.msra.mxu0 0.0
    %2466 = vmatprep.subr.mxu0 0.0
    %2467 = vmatpush1.msra.mxu0 0.0
    %2468 = vmatprep.subr.mxu0 0.0
    %2469 = vmatpush1.msra.mxu0 0.0
    %2470 = vmatprep.subr.mxu0 0.0
    %2471 = vmatpush1.msra.mxu0 0.0
    %2472 = vmatprep.subr.mxu0 0.0
    %2473 = vmatpush1.msra.mxu0 0.0
    %2474 = vmatprep.subr.mxu0 0.0
    %2475 = vmatpush1.msra.mxu0 %v2154
    %2476 = vmatprep.subr.mxu0 0.0
    %2477 = vmatpush2.msra.mxu0 0.0
    %2478 = vmatprep.subr.mxu0 0.0
    %2479 = vmatpush2.msra.mxu0 0.0
    %2480 = vmatprep.subr.mxu0 0.0
    %2481 = vmatpush2.msra.mxu0 0.0
    %2482 = vmatprep.subr.mxu0 0.0
    %2483 = vmatpush2.msra.mxu0 0.0
    %2484 = vmatprep.subr.mxu0 0.0
    %2485 = vmatpush2.msra.mxu0 0.0
    %2486 = vmatprep.subr.mxu0 0.0
    %2487 = vmatpush2.msra.mxu0 0.0
    %2488 = vmatprep.subr.mxu0 0.0
    %2489 = vmatpush2.msra.mxu0 0.0
    %2490 = vmatprep.subr.mxu0 0.0
    %2491 = vmatpush2.msra.mxu0 0.0
    %2492 = vmatprep.subr.mxu0 0.0
    %2493 = vmatpush2.msra.mxu0 0.0
    %2494 = vmatprep.subr.mxu0 0.0
    %2495 = vmatpush2.msra.mxu0 0.0
    %2496 = vmatprep.subr.mxu0 0.0
    %2497 = vmatpush2.msra.mxu0 0.0
    %2498 = vmatprep.subr.mxu0 0.0
    %2499 = vmatpush2.msra.mxu0 0.0
    %2500 = vmatprep.subr.mxu0 0.0
    %2501 = vmatpush2.msra.mxu0 0.0
    %2502 = vmatprep.subr.mxu0 0.0
    %2503 = vmatpush2.msra.mxu0 0.0
    %2504 = vmatprep.subr.mxu0 0.0
    %2505 = vmatpush2.msra.mxu0 0.0
    %2506 = vmatprep.subr.mxu0 0.0
    %2507 = vmatpush2.msra.mxu0 0.0
    %2508 = vmatprep.mubr.f32.mxu0 0.0
    %2509 = vmatmul.mubr.f32.gmra.mxu0 %v2162
    %v2510 = vpop.f32.mrf.mxu0
    %v2511 = vadd.f32 0.0, %v2510
    %v2512 = vpop.f32.mrf.mxu0
    %2513 = vdwg.mxu0
    %2514 = vmatprep.subr.mxu0 0.0
    %2515 = vmatpush1.msra.mxu0 0.0
    %2516 = vmatprep.subr.mxu0 0.0
    %2517 = vmatpush1.msra.mxu0 0.0
    %2518 = vmatprep.subr.mxu0 0.0
    %2519 = vmatpush1.msra.mxu0 0.0
    %2520 = vmatprep.subr.mxu0 0.0
    %2521 = vmatpush1.msra.mxu0 0.0
    %2522 = vmatprep.subr.mxu0 0.0
    %2523 = vmatpush1.msra.mxu0 0.0
    %2524 = vmatprep.subr.mxu0 0.0
    %2525 = vmatpush1.msra.mxu0 0.0
    %2526 = vmatprep.subr.mxu0 0.0
    %2527 = vmatpush1.msra.mxu0 0.0
    %2528 = vmatprep.subr.mxu0 0.0
    %2529 = vmatpush1.msra.mxu0 0.0
    %2530 = vmatprep.subr.mxu0 0.0
    %2531 = vmatpush1.msra.mxu0 0.0
    %2532 = vmatprep.subr.mxu0 0.0
    %2533 = vmatpush1.msra.mxu0 0.0
    %2534 = vmatprep.subr.mxu0 0.0
    %2535 = vmatpush1.msra.mxu0 0.0
    %2536 = vmatprep.subr.mxu0 0.0
    %2537 = vmatpush1.msra.mxu0 0.0
    %2538 = vmatprep.subr.mxu0 0.0
    %2539 = vmatpush1.msra.mxu0 0.0
    %2540 = vmatprep.subr.mxu0 0.0
    %2541 = vmatpush1.msra.mxu0 0.0
    %2542 = vmatprep.subr.mxu0 0.0
    %2543 = vmatpush1.msra.mxu0 0.0
    %2544 = vmatprep.subr.mxu0 0.0
    %2545 = vmatpush1.msra.mxu0 %v2155
    %2546 = vmatprep.subr.mxu0 0.0
    %2547 = vmatpush2.msra.mxu0 0.0
    %2548 = vmatprep.subr.mxu0 0.0
    %2549 = vmatpush2.msra.mxu0 0.0
    %2550 = vmatprep.subr.mxu0 0.0
    %2551 = vmatpush2.msra.mxu0 0.0
    %2552 = vmatprep.subr.mxu0 0.0
    %2553 = vmatpush2.msra.mxu0 0.0
    %2554 = vmatprep.subr.mxu0 0.0
    %2555 = vmatpush2.msra.mxu0 0.0
    %2556 = vmatprep.subr.mxu0 0.0
    %2557 = vmatpush2.msra.mxu0 0.0
    %2558 = vmatprep.subr.mxu0 0.0
    %2559 = vmatpush2.msra.mxu0 0.0
    %2560 = vmatprep.subr.mxu0 0.0
    %2561 = vmatpush2.msra.mxu0 0.0
    %2562 = vmatprep.subr.mxu0 0.0
    %2563 = vmatpush2.msra.mxu0 0.0
    %2564 = vmatprep.subr.mxu0 0.0
    %2565 = vmatpush2.msra.mxu0 0.0
    %2566 = vmatprep.subr.mxu0 0.0
    %2567 = vmatpush2.msra.mxu0 0.0
    %2568 = vmatprep.subr.mxu0 0.0
    %2569 = vmatpush2.msra.mxu0 0.0
    %2570 = vmatprep.subr.mxu0 0.0
    %2571 = vmatpush2.msra.mxu0 0.0
    %2572 = vmatprep.subr.mxu0 0.0
    %2573 = vmatpush2.msra.mxu0 0.0
    %2574 = vmatprep.subr.mxu0 0.0
    %2575 = vmatpush2.msra.mxu0 0.0
    %2576 = vmatprep.subr.mxu0 0.0
    %2577 = vmatpush2.msra.mxu0 0.0
    %2578 = vmatprep.mubr.f32.mxu0 0.0
    %2579 = vmatmul.mubr.f32.gmra.mxu0 %v2162
    %v2580 = vpop.f32.mrf.mxu0
    %v2581 = vadd.f32 0.0, %v2580
    %v2582 = vpop.f32.mrf.mxu0
    %2583 = vdwg.mxu0
    %2584 = vmatprep.subr.mxu0 0.0
    %2585 = vmatpush1.msra.mxu0 0.0
    %2586 = vmatprep.subr.mxu0 0.0
    %2587 = vmatpush1.msra.mxu0 0.0
    %2588 = vmatprep.subr.mxu0 0.0
    %2589 = vmatpush1.msra.mxu0 0.0
    %2590 = vmatprep.subr.mxu0 0.0
    %2591 = vmatpush1.msra.mxu0 0.0
    %2592 = vmatprep.subr.mxu0 0.0
    %2593 = vmatpush1.msra.mxu0 0.0
    %2594 = vmatprep.subr.mxu0 0.0
    %2595 = vmatpush1.msra.mxu0 0.0
    %2596 = vmatprep.subr.mxu0 0.0
    %2597 = vmatpush1.msra.mxu0 0.0
    %2598 = vmatprep.subr.mxu0 0.0
    %2599 = vmatpush1.msra.mxu0 0.0
    %2600 = vmatprep.subr.mxu0 0.0
    %2601 = vmatpush1.msra.mxu0 0.0
    %2602 = vmatprep.subr.mxu0 0.0
    %2603 = vmatpush1.msra.mxu0 0.0
    %2604 = vmatprep.subr.mxu0 0.0
    %2605 = vmatpush1.msra.mxu0 0.0
    %2606 = vmatprep.subr.mxu0 0.0
    %2607 = vmatpush1.msra.mxu0 0.0
    %2608 = vmatprep.subr.mxu0 0.0
    %2609 = vmatpush1.msra.mxu0 0.0
    %2610 = vmatprep.subr.mxu0 0.0
    %2611 = vmatpush1.msra.mxu0 0.0
    %2612 = vmatprep.subr.mxu0 0.0
    %2613 = vmatpush1.msra.mxu0 0.0
    %2614 = vmatprep.subr.mxu0 0.0
    %2615 = vmatpush1.msra.mxu0 %v2156
    %2616 = vmatprep.subr.mxu0 0.0
    %2617 = vmatpush2.msra.mxu0 0.0
    %2618 = vmatprep.subr.mxu0 0.0
    %2619 = vmatpush2.msra.mxu0 0.0
    %2620 = vmatprep.subr.mxu0 0.0
    %2621 = vmatpush2.msra.mxu0 0.0
    %2622 = vmatprep.subr.mxu0 0.0
    %2623 = vmatpush2.msra.mxu0 0.0
    %2624 = vmatprep.subr.mxu0 0.0
    %2625 = vmatpush2.msra.mxu0 0.0
    %2626 = vmatprep.subr.mxu0 0.0
    %2627 = vmatpush2.msra.mxu0 0.0
    %2628 = vmatprep.subr.mxu0 0.0
    %2629 = vmatpush2.msra.mxu0 0.0
    %2630 = vmatprep.subr.mxu0 0.0
    %2631 = vmatpush2.msra.mxu0 0.0
    %2632 = vmatprep.subr.mxu0 0.0
    %2633 = vmatpush2.msra.mxu0 0.0
    %2634 = vmatprep.subr.mxu0 0.0
    %2635 = vmatpush2.msra.mxu0 0.0
    %2636 = vmatprep.subr.mxu0 0.0
    %2637 = vmatpush2.msra.mxu0 0.0
    %2638 = vmatprep.subr.mxu0 0.0
    %2639 = vmatpush2.msra.mxu0 0.0
    %2640 = vmatprep.subr.mxu0 0.0
    %2641 = vmatpush2.msra.mxu0 0.0
    %2642 = vmatprep.subr.mxu0 0.0
    %2643 = vmatpush2.msra.mxu0 0.0
    %2644 = vmatprep.subr.mxu0 0.0
    %2645 = vmatpush2.msra.mxu0 0.0
    %2646 = vmatprep.subr.mxu0 0.0
    %2647 = vmatpush2.msra.mxu0 0.0
    %2648 = vmatprep.mubr.f32.mxu0 0.0
    %2649 = vmatmul.mubr.f32.gmra.mxu0 %v2162
    %v2650 = vpop.f32.mrf.mxu0
    %v2651 = vadd.f32 0.0, %v2650
    %v2652 = vpop.f32.mrf.mxu0
    %2653 = vdwg.mxu0
    %2654 = vmatprep.subr.mxu0 0.0
    %2655 = vmatpush1.msra.mxu0 0.0
    %2656 = vmatprep.subr.mxu0 0.0
    %2657 = vmatpush1.msra.mxu0 0.0
    %2658 = vmatprep.subr.mxu0 0.0
    %2659 = vmatpush1.msra.mxu0 0.0
    %2660 = vmatprep.subr.mxu0 0.0
    %2661 = vmatpush1.msra.mxu0 0.0
    %2662 = vmatprep.subr.mxu0 0.0
    %2663 = vmatpush1.msra.mxu0 0.0
    %2664 = vmatprep.subr.mxu0 0.0
    %2665 = vmatpush1.msra.mxu0 0.0
    %2666 = vmatprep.subr.mxu0 0.0
    %2667 = vmatpush1.msra.mxu0 0.0
    %2668 = vmatprep.subr.mxu0 0.0
    %2669 = vmatpush1.msra.mxu0 0.0
    %2670 = vmatprep.subr.mxu0 0.0
    %2671 = vmatpush1.msra.mxu0 0.0
    %2672 = vmatprep.subr.mxu0 0.0
    %2673 = vmatpush1.msra.mxu0 0.0
    %2674 = vmatprep.subr.mxu0 0.0
    %2675 = vmatpush1.msra.mxu0 0.0
    %2676 = vmatprep.subr.mxu0 0.0
    %2677 = vmatpush1.msra.mxu0 0.0
    %2678 = vmatprep.subr.mxu0 0.0
    %2679 = vmatpush1.msra.mxu0 0.0
    %2680 = vmatprep.subr.mxu0 0.0
    %2681 = vmatpush1.msra.mxu0 0.0
    %2682 = vmatprep.subr.mxu0 0.0
    %2683 = vmatpush1.msra.mxu0 0.0
    %2684 = vmatprep.subr.mxu0 0.0
    %2685 = vmatpush1.msra.mxu0 %v2157
    %2686 = vmatprep.subr.mxu0 0.0
    %2687 = vmatpush2.msra.mxu0 0.0
    %2688 = vmatprep.subr.mxu0 0.0
    %2689 = vmatpush2.msra.mxu0 0.0
    %2690 = vmatprep.subr.mxu0 0.0
    %2691 = vmatpush2.msra.mxu0 0.0
    %2692 = vmatprep.subr.mxu0 0.0
    %2693 = vmatpush2.msra.mxu0 0.0
    %2694 = vmatprep.subr.mxu0 0.0
    %2695 = vmatpush2.msra.mxu0 0.0
    %2696 = vmatprep.subr.mxu0 0.0
    %2697 = vmatpush2.msra.mxu0 0.0
    %2698 = vmatprep.subr.mxu0 0.0
    %2699 = vmatpush2.msra.mxu0 0.0
    %2700 = vmatprep.subr.mxu0 0.0
    %2701 = vmatpush2.msra.mxu0 0.0
    %2702 = vmatprep.subr.mxu0 0.0
    %2703 = vmatpush2.msra.mxu0 0.0
    %2704 = vmatprep.subr.mxu0 0.0
    %2705 = vmatpush2.msra.mxu0 0.0
    %2706 = vmatprep.subr.mxu0 0.0
    %2707 = vmatpush2.msra.mxu0 0.0
    %2708 = vmatprep.subr.mxu0 0.0
    %2709 = vmatpush2.msra.mxu0 0.0
    %2710 = vmatprep.subr.mxu0 0.0
    %2711 = vmatpush2.msra.mxu0 0.0
    %2712 = vmatprep.subr.mxu0 0.0
    %2713 = vmatpush2.msra.mxu0 0.0
    %2714 = vmatprep.subr.mxu0 0.0
    %2715 = vmatpush2.msra.mxu0 0.0
    %2716 = vmatprep.subr.mxu0 0.0
    %2717 = vmatpush2.msra.mxu0 0.0
    %2718 = vmatprep.mubr.f32.mxu0 0.0
    %2719 = vmatmul.mubr.f32.gmra.mxu0 %v2162
    %v2720 = vpop.f32.mrf.mxu0
    %v2721 = vadd.f32 0.0, %v2720
    %v2722 = vpop.f32.mrf.mxu0
    %2723 = vdwg.mxu0
    %v2725 = vsel %vm2160, %v2052, 0
    %2727 = vmatprep.subr.mxu0 0.0
    %2728 = vmatpush1.msra.mxu0 0.0
    %2729 = vmatprep.subr.mxu0 0.0
    %2730 = vmatpush1.msra.mxu0 0.0
    %2731 = vmatprep.subr.mxu0 0.0
    %2732 = vmatpush1.msra.mxu0 0.0
    %2733 = vmatprep.subr.mxu0 0.0
    %2734 = vmatpush1.msra.mxu0 0.0
    %2735 = vmatprep.subr.mxu0 0.0
    %2736 = vmatpush1.msra.mxu0 0.0
    %2737 = vmatprep.subr.mxu0 0.0
    %2738 = vmatpush1.msra.mxu0 0.0
    %2739 = vmatprep.subr.mxu0 0.0
    %2740 = vmatpush1.msra.mxu0 0.0
    %2741 = vmatprep.subr.mxu0 0.0
    %2742 = vmatpush1.msra.mxu0 0.0
    %2743 = vmatprep.subr.mxu0 0.0
    %2744 = vmatpush1.msra.mxu0 0.0
    %2745 = vmatprep.subr.mxu0 0.0
    %2746 = vmatpush1.msra.mxu0 0.0
    %2747 = vmatprep.subr.mxu0 0.0
    %2748 = vmatpush1.msra.mxu0 0.0
    %2749 = vmatprep.subr.mxu0 0.0
    %2750 = vmatpush1.msra.mxu0 0.0
    %2751 = vmatprep.subr.mxu0 0.0
    %2752 = vmatpush1.msra.mxu0 0.0
    %2753 = vmatprep.subr.mxu0 0.0
    %2754 = vmatpush1.msra.mxu0 0.0
    %2755 = vmatprep.subr.mxu0 0.0
    %2756 = vmatpush1.msra.mxu0 0.0
    %2757 = vmatprep.subr.mxu0 0.0
    %2758 = vmatpush1.msra.mxu0 %v2044
    %2759 = vmatprep.subr.mxu0 0.0
    %2760 = vmatpush2.msra.mxu0 0.0
    %2761 = vmatprep.subr.mxu0 0.0
    %2762 = vmatpush2.msra.mxu0 0.0
    %2763 = vmatprep.subr.mxu0 0.0
    %2764 = vmatpush2.msra.mxu0 0.0
    %2765 = vmatprep.subr.mxu0 0.0
    %2766 = vmatpush2.msra.mxu0 0.0
    %2767 = vmatprep.subr.mxu0 0.0
    %2768 = vmatpush2.msra.mxu0 0.0
    %2769 = vmatprep.subr.mxu0 0.0
    %2770 = vmatpush2.msra.mxu0 0.0
    %2771 = vmatprep.subr.mxu0 0.0
    %2772 = vmatpush2.msra.mxu0 0.0
    %2773 = vmatprep.subr.mxu0 0.0
    %2774 = vmatpush2.msra.mxu0 0.0
    %2775 = vmatprep.subr.mxu0 0.0
    %2776 = vmatpush2.msra.mxu0 0.0
    %2777 = vmatprep.subr.mxu0 0.0
    %2778 = vmatpush2.msra.mxu0 0.0
    %2779 = vmatprep.subr.mxu0 0.0
    %2780 = vmatpush2.msra.mxu0 0.0
    %2781 = vmatprep.subr.mxu0 0.0
    %2782 = vmatpush2.msra.mxu0 0.0
    %2783 = vmatprep.subr.mxu0 0.0
    %2784 = vmatpush2.msra.mxu0 0.0
    %2785 = vmatprep.subr.mxu0 0.0
    %2786 = vmatpush2.msra.mxu0 0.0
    %2787 = vmatprep.subr.mxu0 0.0
    %2788 = vmatpush2.msra.mxu0 0.0
    %2789 = vmatprep.subr.mxu0 0.0
    %2790 = vmatpush2.msra.mxu0 0.0
    %2791 = vmatprep.mubr.f32.mxu0 0.0
    %2792 = vmatmul.mubr.f32.gmra.mxu0 %v2725
    %v2793 = vpop.f32.mrf.mxu0
    %v2794 = vadd.f32 %v2231, %v2793
    %v2795 = vpop.f32.mrf.mxu0
    %2796 = vdwg.mxu0
    %2797 = vmatprep.subr.mxu0 0.0
    %2798 = vmatpush1.msra.mxu0 0.0
    %2799 = vmatprep.subr.mxu0 0.0
    %2800 = vmatpush1.msra.mxu0 0.0
    %2801 = vmatprep.subr.mxu0 0.0
    %2802 = vmatpush1.msra.mxu0 0.0
    %2803 = vmatprep.subr.mxu0 0.0
    %2804 = vmatpush1.msra.mxu0 0.0
    %2805 = vmatprep.subr.mxu0 0.0
    %2806 = vmatpush1.msra.mxu0 0.0
    %2807 = vmatprep.subr.mxu0 0.0
    %2808 = vmatpush1.msra.mxu0 0.0
    %2809 = vmatprep.subr.mxu0 0.0
    %2810 = vmatpush1.msra.mxu0 0.0
    %2811 = vmatprep.subr.mxu0 0.0
    %2812 = vmatpush1.msra.mxu0 0.0
    %2813 = vmatprep.subr.mxu0 0.0
    %2814 = vmatpush1.msra.mxu0 0.0
    %2815 = vmatprep.subr.mxu0 0.0
    %2816 = vmatpush1.msra.mxu0 0.0
    %2817 = vmatprep.subr.mxu0 0.0
    %2818 = vmatpush1.msra.mxu0 0.0
    %2819 = vmatprep.subr.mxu0 0.0
    %2820 = vmatpush1.msra.mxu0 0.0
    %2821 = vmatprep.subr.mxu0 0.0
    %2822 = vmatpush1.msra.mxu0 0.0
    %2823 = vmatprep.subr.mxu0 0.0
    %2824 = vmatpush1.msra.mxu0 0.0
    %2825 = vmatprep.subr.mxu0 0.0
    %2826 = vmatpush1.msra.mxu0 0.0
    %2827 = vmatprep.subr.mxu0 0.0
    %2828 = vmatpush1.msra.mxu0 %v2045
    %2829 = vmatprep.subr.mxu0 0.0
    %2830 = vmatpush2.msra.mxu0 0.0
    %2831 = vmatprep.subr.mxu0 0.0
    %2832 = vmatpush2.msra.mxu0 0.0
    %2833 = vmatprep.subr.mxu0 0.0
    %2834 = vmatpush2.msra.mxu0 0.0
    %2835 = vmatprep.subr.mxu0 0.0
    %2836 = vmatpush2.msra.mxu0 0.0
    %2837 = vmatprep.subr.mxu0 0.0
    %2838 = vmatpush2.msra.mxu0 0.0
    %2839 = vmatprep.subr.mxu0 0.0
    %2840 = vmatpush2.msra.mxu0 0.0
    %2841 = vmatprep.subr.mxu0 0.0
    %2842 = vmatpush2.msra.mxu0 0.0
    %2843 = vmatprep.subr.mxu0 0.0
    %2844 = vmatpush2.msra.mxu0 0.0
    %2845 = vmatprep.subr.mxu0 0.0
    %2846 = vmatpush2.msra.mxu0 0.0
    %2847 = vmatprep.subr.mxu0 0.0
    %2848 = vmatpush2.msra.mxu0 0.0
    %2849 = vmatprep.subr.mxu0 0.0
    %2850 = vmatpush2.msra.mxu0 0.0
    %2851 = vmatprep.subr.mxu0 0.0
    %2852 = vmatpush2.msra.mxu0 0.0
    %2853 = vmatprep.subr.mxu0 0.0
    %2854 = vmatpush2.msra.mxu0 0.0
    %2855 = vmatprep.subr.mxu0 0.0
    %2856 = vmatpush2.msra.mxu0 0.0
    %2857 = vmatprep.subr.mxu0 0.0
    %2858 = vmatpush2.msra.mxu0 0.0
    %2859 = vmatprep.subr.mxu0 0.0
    %2860 = vmatpush2.msra.mxu0 0.0
    %2861 = vmatprep.mubr.f32.mxu0 0.0
    %2862 = vmatmul.mubr.f32.gmra.mxu0 %v2725
    %v2863 = vpop.f32.mrf.mxu0
    %v2864 = vadd.f32 %v2301, %v2863
    %v2865 = vpop.f32.mrf.mxu0
    %2866 = vdwg.mxu0
    %2867 = vmatprep.subr.mxu0 0.0
    %2868 = vmatpush1.msra.mxu0 0.0
    %2869 = vmatprep.subr.mxu0 0.0
    %2870 = vmatpush1.msra.mxu0 0.0
    %2871 = vmatprep.subr.mxu0 0.0
    %2872 = vmatpush1.msra.mxu0 0.0
    %2873 = vmatprep.subr.mxu0 0.0
    %2874 = vmatpush1.msra.mxu0 0.0
    %2875 = vmatprep.subr.mxu0 0.0
    %2876 = vmatpush1.msra.mxu0 0.0
    %2877 = vmatprep.subr.mxu0 0.0
    %2878 = vmatpush1.msra.mxu0 0.0
    %2879 = vmatprep.subr.mxu0 0.0
    %2880 = vmatpush1.msra.mxu0 0.0
    %2881 = vmatprep.subr.mxu0 0.0
    %2882 = vmatpush1.msra.mxu0 0.0
    %2883 = vmatprep.subr.mxu0 0.0
    %2884 = vmatpush1.msra.mxu0 0.0
    %2885 = vmatprep.subr.mxu0 0.0
    %2886 = vmatpush1.msra.mxu0 0.0
    %2887 = vmatprep.subr.mxu0 0.0
    %2888 = vmatpush1.msra.mxu0 0.0
    %2889 = vmatprep.subr.mxu0 0.0
    %2890 = vmatpush1.msra.mxu0 0.0
    %2891 = vmatprep.subr.mxu0 0.0
    %2892 = vmatpush1.msra.mxu0 0.0
    %2893 = vmatprep.subr.mxu0 0.0
    %2894 = vmatpush1.msra.mxu0 0.0
    %2895 = vmatprep.subr.mxu0 0.0
    %2896 = vmatpush1.msra.mxu0 0.0
    %2897 = vmatprep.subr.mxu0 0.0
    %2898 = vmatpush1.msra.mxu0 %v2046
    %2899 = vmatprep.subr.mxu0 0.0
    %2900 = vmatpush2.msra.mxu0 0.0
    %2901 = vmatprep.subr.mxu0 0.0
    %2902 = vmatpush2.msra.mxu0 0.0
    %2903 = vmatprep.subr.mxu0 0.0
    %2904 = vmatpush2.msra.mxu0 0.0
    %2905 = vmatprep.subr.mxu0 0.0
    %2906 = vmatpush2.msra.mxu0 0.0
    %2907 = vmatprep.subr.mxu0 0.0
    %2908 = vmatpush2.msra.mxu0 0.0
    %2909 = vmatprep.subr.mxu0 0.0
    %2910 = vmatpush2.msra.mxu0 0.0
    %2911 = vmatprep.subr.mxu0 0.0
    %2912 = vmatpush2.msra.mxu0 0.0
    %2913 = vmatprep.subr.mxu0 0.0
    %2914 = vmatpush2.msra.mxu0 0.0
    %2915 = vmatprep.subr.mxu0 0.0
    %2916 = vmatpush2.msra.mxu0 0.0
    %2917 = vmatprep.subr.mxu0 0.0
    %2918 = vmatpush2.msra.mxu0 0.0
    %2919 = vmatprep.subr.mxu0 0.0
    %2920 = vmatpush2.msra.mxu0 0.0
    %2921 = vmatprep.subr.mxu0 0.0
    %2922 = vmatpush2.msra.mxu0 0.0
    %2923 = vmatprep.subr.mxu0 0.0
    %2924 = vmatpush2.msra.mxu0 0.0
    %2925 = vmatprep.subr.mxu0 0.0
    %2926 = vmatpush2.msra.mxu0 0.0
    %2927 = vmatprep.subr.mxu0 0.0
    %2928 = vmatpush2.msra.mxu0 0.0
    %2929 = vmatprep.subr.mxu0 0.0
    %2930 = vmatpush2.msra.mxu0 0.0
    %2931 = vmatprep.mubr.f32.mxu0 0.0
    %2932 = vmatmul.mubr.f32.gmra.mxu0 %v2725
    %v2933 = vpop.f32.mrf.mxu0
    %v2934 = vadd.f32 %v2371, %v2933
    %v2935 = vpop.f32.mrf.mxu0
    %2936 = vdwg.mxu0
    %2937 = vmatprep.subr.mxu0 0.0
    %2938 = vmatpush1.msra.mxu0 0.0
    %2939 = vmatprep.subr.mxu0 0.0
    %2940 = vmatpush1.msra.mxu0 0.0
    %2941 = vmatprep.subr.mxu0 0.0
    %2942 = vmatpush1.msra.mxu0 0.0
    %2943 = vmatprep.subr.mxu0 0.0
    %2944 = vmatpush1.msra.mxu0 0.0
    %2945 = vmatprep.subr.mxu0 0.0
    %2946 = vmatpush1.msra.mxu0 0.0
    %2947 = vmatprep.subr.mxu0 0.0
    %2948 = vmatpush1.msra.mxu0 0.0
    %2949 = vmatprep.subr.mxu0 0.0
    %2950 = vmatpush1.msra.mxu0 0.0
    %2951 = vmatprep.subr.mxu0 0.0
    %2952 = vmatpush1.msra.mxu0 0.0
    %2953 = vmatprep.subr.mxu0 0.0
    %2954 = vmatpush1.msra.mxu0 0.0
    %2955 = vmatprep.subr.mxu0 0.0
    %2956 = vmatpush1.msra.mxu0 0.0
    %2957 = vmatprep.subr.mxu0 0.0
    %2958 = vmatpush1.msra.mxu0 0.0
    %2959 = vmatprep.subr.mxu0 0.0
    %2960 = vmatpush1.msra.mxu0 0.0
    %2961 = vmatprep.subr.mxu0 0.0
    %2962 = vmatpush1.msra.mxu0 0.0
    %2963 = vmatprep.subr.mxu0 0.0
    %2964 = vmatpush1.msra.mxu0 0.0
    %2965 = vmatprep.subr.mxu0 0.0
    %2966 = vmatpush1.msra.mxu0 0.0
    %2967 = vmatprep.subr.mxu0 0.0
    %2968 = vmatpush1.msra.mxu0 %v2047
    %2969 = vmatprep.subr.mxu0 0.0
    %2970 = vmatpush2.msra.mxu0 0.0
    %2971 = vmatprep.subr.mxu0 0.0
    %2972 = vmatpush2.msra.mxu0 0.0
    %2973 = vmatprep.subr.mxu0 0.0
    %2974 = vmatpush2.msra.mxu0 0.0
    %2975 = vmatprep.subr.mxu0 0.0
    %2976 = vmatpush2.msra.mxu0 0.0
    %2977 = vmatprep.subr.mxu0 0.0
    %2978 = vmatpush2.msra.mxu0 0.0
    %2979 = vmatprep.subr.mxu0 0.0
    %2980 = vmatpush2.msra.mxu0 0.0
    %2981 = vmatprep.subr.mxu0 0.0
    %2982 = vmatpush2.msra.mxu0 0.0
    %2983 = vmatprep.subr.mxu0 0.0
    %2984 = vmatpush2.msra.mxu0 0.0
    %2985 = vmatprep.subr.mxu0 0.0
    %2986 = vmatpush2.msra.mxu0 0.0
    %2987 = vmatprep.subr.mxu0 0.0
    %2988 = vmatpush2.msra.mxu0 0.0
    %2989 = vmatprep.subr.mxu0 0.0
    %2990 = vmatpush2.msra.mxu0 0.0
    %2991 = vmatprep.subr.mxu0 0.0
    %2992 = vmatpush2.msra.mxu0 0.0
    %2993 = vmatprep.subr.mxu0 0.0
    %2994 = vmatpush2.msra.mxu0 0.0
    %2995 = vmatprep.subr.mxu0 0.0
    %2996 = vmatpush2.msra.mxu0 0.0
    %2997 = vmatprep.subr.mxu0 0.0
    %2998 = vmatpush2.msra.mxu0 0.0
    %2999 = vmatprep.subr.mxu0 0.0
    %3000 = vmatpush2.msra.mxu0 0.0
    %3001 = vmatprep.mubr.f32.mxu0 0.0
    %3002 = vmatmul.mubr.f32.gmra.mxu0 %v2725
    %v3003 = vpop.f32.mrf.mxu0
    %v3004 = vadd.f32 %v2441, %v3003
    %v3005 = vpop.f32.mrf.mxu0
    %3006 = vdwg.mxu0
    %3007 = vmatprep.subr.mxu0 0.0
    %3008 = vmatpush1.msra.mxu0 0.0
    %3009 = vmatprep.subr.mxu0 0.0
    %3010 = vmatpush1.msra.mxu0 0.0
    %3011 = vmatprep.subr.mxu0 0.0
    %3012 = vmatpush1.msra.mxu0 0.0
    %3013 = vmatprep.subr.mxu0 0.0
    %3014 = vmatpush1.msra.mxu0 0.0
    %3015 = vmatprep.subr.mxu0 0.0
    %3016 = vmatpush1.msra.mxu0 0.0
    %3017 = vmatprep.subr.mxu0 0.0
    %3018 = vmatpush1.msra.mxu0 0.0
    %3019 = vmatprep.subr.mxu0 0.0
    %3020 = vmatpush1.msra.mxu0 0.0
    %3021 = vmatprep.subr.mxu0 0.0
    %3022 = vmatpush1.msra.mxu0 0.0
    %3023 = vmatprep.subr.mxu0 0.0
    %3024 = vmatpush1.msra.mxu0 0.0
    %3025 = vmatprep.subr.mxu0 0.0
    %3026 = vmatpush1.msra.mxu0 0.0
    %3027 = vmatprep.subr.mxu0 0.0
    %3028 = vmatpush1.msra.mxu0 0.0
    %3029 = vmatprep.subr.mxu0 0.0
    %3030 = vmatpush1.msra.mxu0 0.0
    %3031 = vmatprep.subr.mxu0 0.0
    %3032 = vmatpush1.msra.mxu0 0.0
    %3033 = vmatprep.subr.mxu0 0.0
    %3034 = vmatpush1.msra.mxu0 0.0
    %3035 = vmatprep.subr.mxu0 0.0
    %3036 = vmatpush1.msra.mxu0 0.0
    %3037 = vmatprep.subr.mxu0 0.0
    %3038 = vmatpush1.msra.mxu0 %v2048
    %3039 = vmatprep.subr.mxu0 0.0
    %3040 = vmatpush2.msra.mxu0 0.0
    %3041 = vmatprep.subr.mxu0 0.0
    %3042 = vmatpush2.msra.mxu0 0.0
    %3043 = vmatprep.subr.mxu0 0.0
    %3044 = vmatpush2.msra.mxu0 0.0
    %3045 = vmatprep.subr.mxu0 0.0
    %3046 = vmatpush2.msra.mxu0 0.0
    %3047 = vmatprep.subr.mxu0 0.0
    %3048 = vmatpush2.msra.mxu0 0.0
    %3049 = vmatprep.subr.mxu0 0.0
    %3050 = vmatpush2.msra.mxu0 0.0
    %3051 = vmatprep.subr.mxu0 0.0
    %3052 = vmatpush2.msra.mxu0 0.0
    %3053 = vmatprep.subr.mxu0 0.0
    %3054 = vmatpush2.msra.mxu0 0.0
    %3055 = vmatprep.subr.mxu0 0.0
    %3056 = vmatpush2.msra.mxu0 0.0
    %3057 = vmatprep.subr.mxu0 0.0
    %3058 = vmatpush2.msra.mxu0 0.0
    %3059 = vmatprep.subr.mxu0 0.0
    %3060 = vmatpush2.msra.mxu0 0.0
    %3061 = vmatprep.subr.mxu0 0.0
    %3062 = vmatpush2.msra.mxu0 0.0
    %3063 = vmatprep.subr.mxu0 0.0
    %3064 = vmatpush2.msra.mxu0 0.0
    %3065 = vmatprep.subr.mxu0 0.0
    %3066 = vmatpush2.msra.mxu0 0.0
    %3067 = vmatprep.subr.mxu0 0.0
    %3068 = vmatpush2.msra.mxu0 0.0
    %3069 = vmatprep.subr.mxu0 0.0
    %3070 = vmatpush2.msra.mxu0 0.0
    %3071 = vmatprep.mubr.f32.mxu0 0.0
    %3072 = vmatmul.mubr.f32.gmra.mxu0 %v2725
    %v3073 = vpop.f32.mrf.mxu0
    %v3074 = vadd.f32 %v2511, %v3073
    %v3075 = vpop.f32.mrf.mxu0
    %3076 = vdwg.mxu0
    %3077 = vmatprep.subr.mxu0 0.0
    %3078 = vmatpush1.msra.mxu0 0.0
    %3079 = vmatprep.subr.mxu0 0.0
    %3080 = vmatpush1.msra.mxu0 0.0
    %3081 = vmatprep.subr.mxu0 0.0
    %3082 = vmatpush1.msra.mxu0 0.0
    %3083 = vmatprep.subr.mxu0 0.0
    %3084 = vmatpush1.msra.mxu0 0.0
    %3085 = vmatprep.subr.mxu0 0.0
    %3086 = vmatpush1.msra.mxu0 0.0
    %3087 = vmatprep.subr.mxu0 0.0
    %3088 = vmatpush1.msra.mxu0 0.0
    %3089 = vmatprep.subr.mxu0 0.0
    %3090 = vmatpush1.msra.mxu0 0.0
    %3091 = vmatprep.subr.mxu0 0.0
    %3092 = vmatpush1.msra.mxu0 0.0
    %3093 = vmatprep.subr.mxu0 0.0
    %3094 = vmatpush1.msra.mxu0 0.0
    %3095 = vmatprep.subr.mxu0 0.0
    %3096 = vmatpush1.msra.mxu0 0.0
    %3097 = vmatprep.subr.mxu0 0.0
    %3098 = vmatpush1.msra.mxu0 0.0
    %3099 = vmatprep.subr.mxu0 0.0
    %3100 = vmatpush1.msra.mxu0 0.0
    %3101 = vmatprep.subr.mxu0 0.0
    %3102 = vmatpush1.msra.mxu0 0.0
    %3103 = vmatprep.subr.mxu0 0.0
    %3104 = vmatpush1.msra.mxu0 0.0
    %3105 = vmatprep.subr.mxu0 0.0
    %3106 = vmatpush1.msra.mxu0 0.0
    %3107 = vmatprep.subr.mxu0 0.0
    %3108 = vmatpush1.msra.mxu0 %v2049
    %3109 = vmatprep.subr.mxu0 0.0
    %3110 = vmatpush2.msra.mxu0 0.0
    %3111 = vmatprep.subr.mxu0 0.0
    %3112 = vmatpush2.msra.mxu0 0.0
    %3113 = vmatprep.subr.mxu0 0.0
    %3114 = vmatpush2.msra.mxu0 0.0
    %3115 = vmatprep.subr.mxu0 0.0
    %3116 = vmatpush2.msra.mxu0 0.0
    %3117 = vmatprep.subr.mxu0 0.0
    %3118 = vmatpush2.msra.mxu0 0.0
    %3119 = vmatprep.subr.mxu0 0.0
    %3120 = vmatpush2.msra.mxu0 0.0
    %3121 = vmatprep.subr.mxu0 0.0
    %3122 = vmatpush2.msra.mxu0 0.0
    %3123 = vmatprep.subr.mxu0 0.0
    %3124 = vmatpush2.msra.mxu0 0.0
    %3125 = vmatprep.subr.mxu0 0.0
    %3126 = vmatpush2.msra.mxu0 0.0
    %3127 = vmatprep.subr.mxu0 0.0
    %3128 = vmatpush2.msra.mxu0 0.0
    %3129 = vmatprep.subr.mxu0 0.0
    %3130 = vmatpush2.msra.mxu0 0.0
    %3131 = vmatprep.subr.mxu0 0.0
    %3132 = vmatpush2.msra.mxu0 0.0
    %3133 = vmatprep.subr.mxu0 0.0
    %3134 = vmatpush2.msra.mxu0 0.0
    %3135 = vmatprep.subr.mxu0 0.0
    %3136 = vmatpush2.msra.mxu0 0.0
    %3137 = vmatprep.subr.mxu0 0.0
    %3138 = vmatpush2.msra.mxu0 0.0
    %3139 = vmatprep.subr.mxu0 0.0
    %3140 = vmatpush2.msra.mxu0 0.0
    %3141 = vmatprep.mubr.f32.mxu0 0.0
    %3142 = vmatmul.mubr.f32.gmra.mxu0 %v2725
    %v3143 = vpop.f32.mrf.mxu0
    %v3144 = vadd.f32 %v2581, %v3143
    %v3145 = vpop.f32.mrf.mxu0
    %3146 = vdwg.mxu0
    %3147 = vmatprep.subr.mxu0 0.0
    %3148 = vmatpush1.msra.mxu0 0.0
    %3149 = vmatprep.subr.mxu0 0.0
    %3150 = vmatpush1.msra.mxu0 0.0
    %3151 = vmatprep.subr.mxu0 0.0
    %3152 = vmatpush1.msra.mxu0 0.0
    %3153 = vmatprep.subr.mxu0 0.0
    %3154 = vmatpush1.msra.mxu0 0.0
    %3155 = vmatprep.subr.mxu0 0.0
    %3156 = vmatpush1.msra.mxu0 0.0
    %3157 = vmatprep.subr.mxu0 0.0
    %3158 = vmatpush1.msra.mxu0 0.0
    %3159 = vmatprep.subr.mxu0 0.0
    %3160 = vmatpush1.msra.mxu0 0.0
    %3161 = vmatprep.subr.mxu0 0.0
    %3162 = vmatpush1.msra.mxu0 0.0
    %3163 = vmatprep.subr.mxu0 0.0
    %3164 = vmatpush1.msra.mxu0 0.0
    %3165 = vmatprep.subr.mxu0 0.0
    %3166 = vmatpush1.msra.mxu0 0.0
    %3167 = vmatprep.subr.mxu0 0.0
    %3168 = vmatpush1.msra.mxu0 0.0
    %3169 = vmatprep.subr.mxu0 0.0
    %3170 = vmatpush1.msra.mxu0 0.0
    %3171 = vmatprep.subr.mxu0 0.0
    %3172 = vmatpush1.msra.mxu0 0.0
    %3173 = vmatprep.subr.mxu0 0.0
    %3174 = vmatpush1.msra.mxu0 0.0
    %3175 = vmatprep.subr.mxu0 0.0
    %3176 = vmatpush1.msra.mxu0 0.0
    %3177 = vmatprep.subr.mxu0 0.0
    %3178 = vmatpush1.msra.mxu0 %v2050
    %3179 = vmatprep.subr.mxu0 0.0
    %3180 = vmatpush2.msra.mxu0 0.0
    %3181 = vmatprep.subr.mxu0 0.0
    %3182 = vmatpush2.msra.mxu0 0.0
    %3183 = vmatprep.subr.mxu0 0.0
    %3184 = vmatpush2.msra.mxu0 0.0
    %3185 = vmatprep.subr.mxu0 0.0
    %3186 = vmatpush2.msra.mxu0 0.0
    %3187 = vmatprep.subr.mxu0 0.0
    %3188 = vmatpush2.msra.mxu0 0.0
    %3189 = vmatprep.subr.mxu0 0.0
    %3190 = vmatpush2.msra.mxu0 0.0
    %3191 = vmatprep.subr.mxu0 0.0
    %3192 = vmatpush2.msra.mxu0 0.0
    %3193 = vmatprep.subr.mxu0 0.0
    %3194 = vmatpush2.msra.mxu0 0.0
    %3195 = vmatprep.subr.mxu0 0.0
    %3196 = vmatpush2.msra.mxu0 0.0
    %3197 = vmatprep.subr.mxu0 0.0
    %3198 = vmatpush2.msra.mxu0 0.0
    %3199 = vmatprep.subr.mxu0 0.0
    %3200 = vmatpush2.msra.mxu0 0.0
    %3201 = vmatprep.subr.mxu0 0.0
    %3202 = vmatpush2.msra.mxu0 0.0
    %3203 = vmatprep.subr.mxu0 0.0
    %3204 = vmatpush2.msra.mxu0 0.0
    %3205 = vmatprep.subr.mxu0 0.0
    %3206 = vmatpush2.msra.mxu0 0.0
    %3207 = vmatprep.subr.mxu0 0.0
    %3208 = vmatpush2.msra.mxu0 0.0
    %3209 = vmatprep.subr.mxu0 0.0
    %3210 = vmatpush2.msra.mxu0 0.0
    %3211 = vmatprep.mubr.f32.mxu0 0.0
    %3212 = vmatmul.mubr.f32.gmra.mxu0 %v2725
    %v3213 = vpop.f32.mrf.mxu0
    %v3214 = vadd.f32 %v2651, %v3213
    %v3215 = vpop.f32.mrf.mxu0
    %3216 = vdwg.mxu0
    %3217 = vmatprep.subr.mxu0 0.0
    %3218 = vmatpush1.msra.mxu0 0.0
    %3219 = vmatprep.subr.mxu0 0.0
    %3220 = vmatpush1.msra.mxu0 0.0
    %3221 = vmatprep.subr.mxu0 0.0
    %3222 = vmatpush1.msra.mxu0 0.0
    %3223 = vmatprep.subr.mxu0 0.0
    %3224 = vmatpush1.msra.mxu0 0.0
    %3225 = vmatprep.subr.mxu0 0.0
    %3226 = vmatpush1.msra.mxu0 0.0
    %3227 = vmatprep.subr.mxu0 0.0
    %3228 = vmatpush1.msra.mxu0 0.0
    %3229 = vmatprep.subr.mxu0 0.0
    %3230 = vmatpush1.msra.mxu0 0.0
    %3231 = vmatprep.subr.mxu0 0.0
    %3232 = vmatpush1.msra.mxu0 0.0
    %3233 = vmatprep.subr.mxu0 0.0
    %3234 = vmatpush1.msra.mxu0 0.0
    %3235 = vmatprep.subr.mxu0 0.0
    %3236 = vmatpush1.msra.mxu0 0.0
    %3237 = vmatprep.subr.mxu0 0.0
    %3238 = vmatpush1.msra.mxu0 0.0
    %3239 = vmatprep.subr.mxu0 0.0
    %3240 = vmatpush1.msra.mxu0 0.0
    %3241 = vmatprep.subr.mxu0 0.0
    %3242 = vmatpush1.msra.mxu0 0.0
    %3243 = vmatprep.subr.mxu0 0.0
    %3244 = vmatpush1.msra.mxu0 0.0
    %3245 = vmatprep.subr.mxu0 0.0
    %3246 = vmatpush1.msra.mxu0 0.0
    %3247 = vmatprep.subr.mxu0 0.0
    %3248 = vmatpush1.msra.mxu0 %v2051
    %3249 = vmatprep.subr.mxu0 0.0
    %3250 = vmatpush2.msra.mxu0 0.0
    %3251 = vmatprep.subr.mxu0 0.0
    %3252 = vmatpush2.msra.mxu0 0.0
    %3253 = vmatprep.subr.mxu0 0.0
    %3254 = vmatpush2.msra.mxu0 0.0
    %3255 = vmatprep.subr.mxu0 0.0
    %3256 = vmatpush2.msra.mxu0 0.0
    %3257 = vmatprep.subr.mxu0 0.0
    %3258 = vmatpush2.msra.mxu0 0.0
    %3259 = vmatprep.subr.mxu0 0.0
    %3260 = vmatpush2.msra.mxu0 0.0
    %3261 = vmatprep.subr.mxu0 0.0
    %3262 = vmatpush2.msra.mxu0 0.0
    %3263 = vmatprep.subr.mxu0 0.0
    %3264 = vmatpush2.msra.mxu0 0.0
    %3265 = vmatprep.subr.mxu0 0.0
    %3266 = vmatpush2.msra.mxu0 0.0
    %3267 = vmatprep.subr.mxu0 0.0
    %3268 = vmatpush2.msra.mxu0 0.0
    %3269 = vmatprep.subr.mxu0 0.0
    %3270 = vmatpush2.msra.mxu0 0.0
    %3271 = vmatprep.subr.mxu0 0.0
    %3272 = vmatpush2.msra.mxu0 0.0
    %3273 = vmatprep.subr.mxu0 0.0
    %3274 = vmatpush2.msra.mxu0 0.0
    %3275 = vmatprep.subr.mxu0 0.0
    %3276 = vmatpush2.msra.mxu0 0.0
    %3277 = vmatprep.subr.mxu0 0.0
    %3278 = vmatpush2.msra.mxu0 0.0
    %3279 = vmatprep.subr.mxu0 0.0
    %3280 = vmatpush2.msra.mxu0 0.0
    %3281 = vmatprep.mubr.f32.mxu0 0.0
    %3282 = vmatmul.mubr.f32.gmra.mxu0 %v2725
    %v3283 = vpop.f32.mrf.mxu0
    %v3284 = vadd.f32 %v2721, %v3283
    %v3285 = vpop.f32.mrf.mxu0
    %3286 = vdwg.mxu0
    %v3287 = vmul.f32 %v1853, %v1884
    %v3288 = vmul.f32 %v1855, %v1885
    %v3289 = vmul.f32 %v1857, %v1886
    %v3290 = vmul.f32 %v1859, %v1887
    %v3291 = vmul.f32 %v1861, %v1888
    %v3292 = vmul.f32 %v1863, %v1889
    %v3293 = vmul.f32 %v1865, %v1890
    %v3294 = vmul.f32 %v1867, %v1891
    %v3295 = vcombine.low %v722, %v721
    %v3296 = vcombine.low %v723, %v731
    %v3298 = vunpack.c.l.s4 1983009808
    %v3299 = vunpack.c.0.s8 %v3298
    %v3300 = vlaneseq
    %v3301 = vshrl.u32 %v3300, 7
    %v3302 = vsub.s32 %v3299, %v3301
    %v3303 = vrot.slane %v3295, %v3302
    %v3305 = vunpack.c.l.s4 1983009808
    %v3306 = vunpack.c.0.s8 %v3305
    %v3307 = vlaneseq
    %v3308 = vshrl.u32 %v3307, 7
    %v3309 = vsub.s32 %v3306, %v3308
    %v3310 = vrot.slane %v3296, %v3309
    %v3311 = vcombine.low %v3303, %v3310
    %v3312 = vcombine.low %v738, %v740
    %v3313 = vcombine.low %v748, %v756
    %v3315 = vunpack.c.l.s4 1983009808
    %v3316 = vunpack.c.0.s8 %v3315
    %v3317 = vlaneseq
    %v3318 = vshrl.u32 %v3317, 7
    %v3319 = vsub.s32 %v3316, %v3318
    %v3320 = vrot.slane %v3312, %v3319
    %v3322 = vunpack.c.l.s4 1983009808
    %v3323 = vunpack.c.0.s8 %v3322
    %v3324 = vlaneseq
    %v3325 = vshrl.u32 %v3324, 7
    %v3326 = vsub.s32 %v3323, %v3325
    %v3327 = vrot.slane %v3313, %v3326
    %v3328 = vcombine.low %v3320, %v3327
    %v3329 = vcombine.low %v757, %v765
    %v3330 = vcombine.low %v773, %v772
    %v3332 = vunpack.c.l.s4 1983009808
    %v3333 = vunpack.c.0.s8 %v3332
    %v3334 = vlaneseq
    %v3335 = vshrl.u32 %v3334, 7
    %v3336 = vsub.s32 %v3333, %v3335
    %v3337 = vrot.slane %v3329, %v3336
    %v3339 = vunpack.c.l.s4 1983009808
    %v3340 = vunpack.c.0.s8 %v3339
    %v3341 = vlaneseq
    %v3342 = vshrl.u32 %v3341, 7
    %v3343 = vsub.s32 %v3340, %v3342
    %v3344 = vrot.slane %v3330, %v3343
    %v3345 = vcombine.low %v3337, %v3344
    %v3346 = vcombine.low %v782, %v790
    %v3347 = vcombine.low %v789, %v791
    %v3349 = vunpack.c.l.s4 1983009808
    %v3350 = vunpack.c.0.s8 %v3349
    %v3351 = vlaneseq
    %v3352 = vshrl.u32 %v3351, 7
    %v3353 = vsub.s32 %v3350, %v3352
    %v3354 = vrot.slane %v3346, %v3353
    %v3356 = vunpack.c.l.s4 1983009808
    %v3357 = vunpack.c.0.s8 %v3356
    %v3358 = vlaneseq
    %v3359 = vshrl.u32 %v3358, 7
    %v3360 = vsub.s32 %v3357, %v3359
    %v3361 = vrot.slane %v3347, %v3360
    %v3362 = vcombine.low %v3354, %v3361
    %v3363 = vcombine.low %v807, %v806
    %v3364 = vcombine.low %v808, %v816
    %v3366 = vunpack.c.l.s4 1983009808
    %v3367 = vunpack.c.0.s8 %v3366
    %v3368 = vlaneseq
    %v3369 = vshrl.u32 %v3368, 7
    %v3370 = vsub.s32 %v3367, %v3369
    %v3371 = vrot.slane %v3363, %v3370
    %v3373 = vunpack.c.l.s4 1983009808
    %v3374 = vunpack.c.0.s8 %v3373
    %v3375 = vlaneseq
    %v3376 = vshrl.u32 %v3375, 7
    %v3377 = vsub.s32 %v3374, %v3376
    %v3378 = vrot.slane %v3364, %v3377
    %v3379 = vcombine.low %v3371, %v3378
    %v3380 = vcombine.low %v823, %v825
    %v3381 = vcombine.low %v833, %v841
    %v3383 = vunpack.c.l.s4 1983009808
    %v3384 = vunpack.c.0.s8 %v3383
    %v3385 = vlaneseq
    %v3386 = vshrl.u32 %v3385, 7
    %v3387 = vsub.s32 %v3384, %v3386
    %v3388 = vrot.slane %v3380, %v3387
    %v3390 = vunpack.c.l.s4 1983009808
    %v3391 = vunpack.c.0.s8 %v3390
    %v3392 = vlaneseq
    %v3393 = vshrl.u32 %v3392, 7
    %v3394 = vsub.s32 %v3391, %v3393
    %v3395 = vrot.slane %v3381, %v3394
    %v3396 = vcombine.low %v3388, %v3395
    %v3397 = vcombine.low %v842, %v850
    %v3398 = vcombine.low %v858, %v857
    %v3400 = vunpack.c.l.s4 1983009808
    %v3401 = vunpack.c.0.s8 %v3400
    %v3402 = vlaneseq
    %v3403 = vshrl.u32 %v3402, 7
    %v3404 = vsub.s32 %v3401, %v3403
    %v3405 = vrot.slane %v3397, %v3404
    %v3407 = vunpack.c.l.s4 1983009808
    %v3408 = vunpack.c.0.s8 %v3407
    %v3409 = vlaneseq
    %v3410 = vshrl.u32 %v3409, 7
    %v3411 = vsub.s32 %v3408, %v3410
    %v3412 = vrot.slane %v3398, %v3411
    %v3413 = vcombine.low %v3405, %v3412
    %v3414 = vcombine.low %v867, %v875
    %v3415 = vcombine.low %v874, %v876
    %v3417 = vunpack.c.l.s4 1983009808
    %v3418 = vunpack.c.0.s8 %v3417
    %v3419 = vlaneseq
    %v3420 = vshrl.u32 %v3419, 7
    %v3421 = vsub.s32 %v3418, %v3420
    %v3422 = vrot.slane %v3414, %v3421
    %v3424 = vunpack.c.l.s4 1983009808
    %v3425 = vunpack.c.0.s8 %v3424
    %v3426 = vlaneseq
    %v3427 = vshrl.u32 %v3426, 7
    %v3428 = vsub.s32 %v3425, %v3427
    %v3429 = vrot.slane %v3415, %v3428
    %v3430 = vcombine.low %v3422, %v3429
    %v3439 = vmul.f32 %v3287, %v3311
    %v3440 = vmul.f32 %v3288, %v3328
    %v3441 = vmul.f32 %v3289, %v3345
    %v3442 = vmul.f32 %v3290, %v3362
    %v3443 = vmul.f32 %v3291, %v3379
    %v3444 = vmul.f32 %v3292, %v3396
    %v3445 = vmul.f32 %v3293, %v3413
    %v3446 = vmul.f32 %v3294, %v3430
    %s3447 = scalar_lea.vmem [#allocation13], 16
    %v3448 = vld [vmem:[%s3447] sm:$0xff]
    %v3450 = vsel %vm2160, %v3448, 0
    %3452 = vmatprep.subr.mxu0 0.0
    %3453 = vmatpush1.msra.mxu0 0.0
    %3454 = vmatprep.subr.mxu0 0.0
    %3455 = vmatpush1.msra.mxu0 0.0
    %3456 = vmatprep.subr.mxu0 0.0
    %3457 = vmatpush1.msra.mxu0 0.0
    %3458 = vmatprep.subr.mxu0 0.0
    %3459 = vmatpush1.msra.mxu0 0.0
    %3460 = vmatprep.subr.mxu0 0.0
    %3461 = vmatpush1.msra.mxu0 0.0
    %3462 = vmatprep.subr.mxu0 0.0
    %3463 = vmatpush1.msra.mxu0 0.0
    %3464 = vmatprep.subr.mxu0 0.0
    %3465 = vmatpush1.msra.mxu0 0.0
    %3466 = vmatprep.subr.mxu0 0.0
    %3467 = vmatpush1.msra.mxu0 0.0
    %3468 = vmatprep.subr.mxu0 0.0
    %3469 = vmatpush1.msra.mxu0 0.0
    %3470 = vmatprep.subr.mxu0 0.0
    %3471 = vmatpush1.msra.mxu0 0.0
    %3472 = vmatprep.subr.mxu0 0.0
    %3473 = vmatpush1.msra.mxu0 0.0
    %3474 = vmatprep.subr.mxu0 0.0
    %3475 = vmatpush1.msra.mxu0 0.0
    %3476 = vmatprep.subr.mxu0 0.0
    %3477 = vmatpush1.msra.mxu0 0.0
    %3478 = vmatprep.subr.mxu0 0.0
    %3479 = vmatpush1.msra.mxu0 0.0
    %3480 = vmatprep.subr.mxu0 0.0
    %3481 = vmatpush1.msra.mxu0 0.0
    %3482 = vmatprep.subr.mxu0 0.0
    %3483 = vmatpush1.msra.mxu0 %v3439
    %3484 = vmatprep.subr.mxu0 0.0
    %3485 = vmatpush2.msra.mxu0 0.0
    %3486 = vmatprep.subr.mxu0 0.0
    %3487 = vmatpush2.msra.mxu0 0.0
    %3488 = vmatprep.subr.mxu0 0.0
    %3489 = vmatpush2.msra.mxu0 0.0
    %3490 = vmatprep.subr.mxu0 0.0
    %3491 = vmatpush2.msra.mxu0 0.0
    %3492 = vmatprep.subr.mxu0 0.0
    %3493 = vmatpush2.msra.mxu0 0.0
    %3494 = vmatprep.subr.mxu0 0.0
    %3495 = vmatpush2.msra.mxu0 0.0
    %3496 = vmatprep.subr.mxu0 0.0
    %3497 = vmatpush2.msra.mxu0 0.0
    %3498 = vmatprep.subr.mxu0 0.0
    %3499 = vmatpush2.msra.mxu0 0.0
    %3500 = vmatprep.subr.mxu0 0.0
    %3501 = vmatpush2.msra.mxu0 0.0
    %3502 = vmatprep.subr.mxu0 0.0
    %3503 = vmatpush2.msra.mxu0 0.0
    %3504 = vmatprep.subr.mxu0 0.0
    %3505 = vmatpush2.msra.mxu0 0.0
    %3506 = vmatprep.subr.mxu0 0.0
    %3507 = vmatpush2.msra.mxu0 0.0
    %3508 = vmatprep.subr.mxu0 0.0
    %3509 = vmatpush2.msra.mxu0 0.0
    %3510 = vmatprep.subr.mxu0 0.0
    %3511 = vmatpush2.msra.mxu0 0.0
    %3512 = vmatprep.subr.mxu0 0.0
    %3513 = vmatpush2.msra.mxu0 0.0
    %3514 = vmatprep.subr.mxu0 0.0
    %3515 = vmatpush2.msra.mxu0 0.0
    %3516 = vmatprep.mubr.f32.mxu0 0.0
    %3517 = vmatmul.mubr.f32.gmra.mxu0 %v3450
    %v3518 = vpop.f32.mrf.mxu0
    %v3519 = vadd.f32 0.0, %v3518
    %v3520 = vpop.f32.mrf.mxu0
    %3521 = vdwg.mxu0
    %3522 = vmatprep.subr.mxu0 0.0
    %3523 = vmatpush1.msra.mxu0 0.0
    %3524 = vmatprep.subr.mxu0 0.0
    %3525 = vmatpush1.msra.mxu0 0.0
    %3526 = vmatprep.subr.mxu0 0.0
    %3527 = vmatpush1.msra.mxu0 0.0
    %3528 = vmatprep.subr.mxu0 0.0
    %3529 = vmatpush1.msra.mxu0 0.0
    %3530 = vmatprep.subr.mxu0 0.0
    %3531 = vmatpush1.msra.mxu0 0.0
    %3532 = vmatprep.subr.mxu0 0.0
    %3533 = vmatpush1.msra.mxu0 0.0
    %3534 = vmatprep.subr.mxu0 0.0
    %3535 = vmatpush1.msra.mxu0 0.0
    %3536 = vmatprep.subr.mxu0 0.0
    %3537 = vmatpush1.msra.mxu0 0.0
    %3538 = vmatprep.subr.mxu0 0.0
    %3539 = vmatpush1.msra.mxu0 0.0
    %3540 = vmatprep.subr.mxu0 0.0
    %3541 = vmatpush1.msra.mxu0 0.0
    %3542 = vmatprep.subr.mxu0 0.0
    %3543 = vmatpush1.msra.mxu0 0.0
    %3544 = vmatprep.subr.mxu0 0.0
    %3545 = vmatpush1.msra.mxu0 0.0
    %3546 = vmatprep.subr.mxu0 0.0
    %3547 = vmatpush1.msra.mxu0 0.0
    %3548 = vmatprep.subr.mxu0 0.0
    %3549 = vmatpush1.msra.mxu0 0.0
    %3550 = vmatprep.subr.mxu0 0.0
    %3551 = vmatpush1.msra.mxu0 0.0
    %3552 = vmatprep.subr.mxu0 0.0
    %3553 = vmatpush1.msra.mxu0 %v3440
    %3554 = vmatprep.subr.mxu0 0.0
    %3555 = vmatpush2.msra.mxu0 0.0
    %3556 = vmatprep.subr.mxu0 0.0
    %3557 = vmatpush2.msra.mxu0 0.0
    %3558 = vmatprep.subr.mxu0 0.0
    %3559 = vmatpush2.msra.mxu0 0.0
    %3560 = vmatprep.subr.mxu0 0.0
    %3561 = vmatpush2.msra.mxu0 0.0
    %3562 = vmatprep.subr.mxu0 0.0
    %3563 = vmatpush2.msra.mxu0 0.0
    %3564 = vmatprep.subr.mxu0 0.0
    %3565 = vmatpush2.msra.mxu0 0.0
    %3566 = vmatprep.subr.mxu0 0.0
    %3567 = vmatpush2.msra.mxu0 0.0
    %3568 = vmatprep.subr.mxu0 0.0
    %3569 = vmatpush2.msra.mxu0 0.0
    %3570 = vmatprep.subr.mxu0 0.0
    %3571 = vmatpush2.msra.mxu0 0.0
    %3572 = vmatprep.subr.mxu0 0.0
    %3573 = vmatpush2.msra.mxu0 0.0
    %3574 = vmatprep.subr.mxu0 0.0
    %3575 = vmatpush2.msra.mxu0 0.0
    %3576 = vmatprep.subr.mxu0 0.0
    %3577 = vmatpush2.msra.mxu0 0.0
    %3578 = vmatprep.subr.mxu0 0.0
    %3579 = vmatpush2.msra.mxu0 0.0
    %3580 = vmatprep.subr.mxu0 0.0
    %3581 = vmatpush2.msra.mxu0 0.0
    %3582 = vmatprep.subr.mxu0 0.0
    %3583 = vmatpush2.msra.mxu0 0.0
    %3584 = vmatprep.subr.mxu0 0.0
    %3585 = vmatpush2.msra.mxu0 0.0
    %3586 = vmatprep.mubr.f32.mxu0 0.0
    %3587 = vmatmul.mubr.f32.gmra.mxu0 %v3450
    %v3588 = vpop.f32.mrf.mxu0
    %v3589 = vadd.f32 0.0, %v3588
    %v3590 = vpop.f32.mrf.mxu0
    %3591 = vdwg.mxu0
    %3592 = vmatprep.subr.mxu0 0.0
    %3593 = vmatpush1.msra.mxu0 0.0
    %3594 = vmatprep.subr.mxu0 0.0
    %3595 = vmatpush1.msra.mxu0 0.0
    %3596 = vmatprep.subr.mxu0 0.0
    %3597 = vmatpush1.msra.mxu0 0.0
    %3598 = vmatprep.subr.mxu0 0.0
    %3599 = vmatpush1.msra.mxu0 0.0
    %3600 = vmatprep.subr.mxu0 0.0
    %3601 = vmatpush1.msra.mxu0 0.0
    %3602 = vmatprep.subr.mxu0 0.0
    %3603 = vmatpush1.msra.mxu0 0.0
    %3604 = vmatprep.subr.mxu0 0.0
    %3605 = vmatpush1.msra.mxu0 0.0
    %3606 = vmatprep.subr.mxu0 0.0
    %3607 = vmatpush1.msra.mxu0 0.0
    %3608 = vmatprep.subr.mxu0 0.0
    %3609 = vmatpush1.msra.mxu0 0.0
    %3610 = vmatprep.subr.mxu0 0.0
    %3611 = vmatpush1.msra.mxu0 0.0
    %3612 = vmatprep.subr.mxu0 0.0
    %3613 = vmatpush1.msra.mxu0 0.0
    %3614 = vmatprep.subr.mxu0 0.0
    %3615 = vmatpush1.msra.mxu0 0.0
    %3616 = vmatprep.subr.mxu0 0.0
    %3617 = vmatpush1.msra.mxu0 0.0
    %3618 = vmatprep.subr.mxu0 0.0
    %3619 = vmatpush1.msra.mxu0 0.0
    %3620 = vmatprep.subr.mxu0 0.0
    %3621 = vmatpush1.msra.mxu0 0.0
    %3622 = vmatprep.subr.mxu0 0.0
    %3623 = vmatpush1.msra.mxu0 %v3441
    %3624 = vmatprep.subr.mxu0 0.0
    %3625 = vmatpush2.msra.mxu0 0.0
    %3626 = vmatprep.subr.mxu0 0.0
    %3627 = vmatpush2.msra.mxu0 0.0
    %3628 = vmatprep.subr.mxu0 0.0
    %3629 = vmatpush2.msra.mxu0 0.0
    %3630 = vmatprep.subr.mxu0 0.0
    %3631 = vmatpush2.msra.mxu0 0.0
    %3632 = vmatprep.subr.mxu0 0.0
    %3633 = vmatpush2.msra.mxu0 0.0
    %3634 = vmatprep.subr.mxu0 0.0
    %3635 = vmatpush2.msra.mxu0 0.0
    %3636 = vmatprep.subr.mxu0 0.0
    %3637 = vmatpush2.msra.mxu0 0.0
    %3638 = vmatprep.subr.mxu0 0.0
    %3639 = vmatpush2.msra.mxu0 0.0
    %3640 = vmatprep.subr.mxu0 0.0
    %3641 = vmatpush2.msra.mxu0 0.0
    %3642 = vmatprep.subr.mxu0 0.0
    %3643 = vmatpush2.msra.mxu0 0.0
    %3644 = vmatprep.subr.mxu0 0.0
    %3645 = vmatpush2.msra.mxu0 0.0
    %3646 = vmatprep.subr.mxu0 0.0
    %3647 = vmatpush2.msra.mxu0 0.0
    %3648 = vmatprep.subr.mxu0 0.0
    %3649 = vmatpush2.msra.mxu0 0.0
    %3650 = vmatprep.subr.mxu0 0.0
    %3651 = vmatpush2.msra.mxu0 0.0
    %3652 = vmatprep.subr.mxu0 0.0
    %3653 = vmatpush2.msra.mxu0 0.0
    %3654 = vmatprep.subr.mxu0 0.0
    %3655 = vmatpush2.msra.mxu0 0.0
    %3656 = vmatprep.mubr.f32.mxu0 0.0
    %3657 = vmatmul.mubr.f32.gmra.mxu0 %v3450
    %v3658 = vpop.f32.mrf.mxu0
    %v3659 = vadd.f32 0.0, %v3658
    %v3660 = vpop.f32.mrf.mxu0
    %3661 = vdwg.mxu0
    %3662 = vmatprep.subr.mxu0 0.0
    %3663 = vmatpush1.msra.mxu0 0.0
    %3664 = vmatprep.subr.mxu0 0.0
    %3665 = vmatpush1.msra.mxu0 0.0
    %3666 = vmatprep.subr.mxu0 0.0
    %3667 = vmatpush1.msra.mxu0 0.0
    %3668 = vmatprep.subr.mxu0 0.0
    %3669 = vmatpush1.msra.mxu0 0.0
    %3670 = vmatprep.subr.mxu0 0.0
    %3671 = vmatpush1.msra.mxu0 0.0
    %3672 = vmatprep.subr.mxu0 0.0
    %3673 = vmatpush1.msra.mxu0 0.0
    %3674 = vmatprep.subr.mxu0 0.0
    %3675 = vmatpush1.msra.mxu0 0.0
    %3676 = vmatprep.subr.mxu0 0.0
    %3677 = vmatpush1.msra.mxu0 0.0
    %3678 = vmatprep.subr.mxu0 0.0
    %3679 = vmatpush1.msra.mxu0 0.0
    %3680 = vmatprep.subr.mxu0 0.0
    %3681 = vmatpush1.msra.mxu0 0.0
    %3682 = vmatprep.subr.mxu0 0.0
    %3683 = vmatpush1.msra.mxu0 0.0
    %3684 = vmatprep.subr.mxu0 0.0
    %3685 = vmatpush1.msra.mxu0 0.0
    %3686 = vmatprep.subr.mxu0 0.0
    %3687 = vmatpush1.msra.mxu0 0.0
    %3688 = vmatprep.subr.mxu0 0.0
    %3689 = vmatpush1.msra.mxu0 0.0
    %3690 = vmatprep.subr.mxu0 0.0
    %3691 = vmatpush1.msra.mxu0 0.0
    %3692 = vmatprep.subr.mxu0 0.0
    %3693 = vmatpush1.msra.mxu0 %v3442
    %3694 = vmatprep.subr.mxu0 0.0
    %3695 = vmatpush2.msra.mxu0 0.0
    %3696 = vmatprep.subr.mxu0 0.0
    %3697 = vmatpush2.msra.mxu0 0.0
    %3698 = vmatprep.subr.mxu0 0.0
    %3699 = vmatpush2.msra.mxu0 0.0
    %3700 = vmatprep.subr.mxu0 0.0
    %3701 = vmatpush2.msra.mxu0 0.0
    %3702 = vmatprep.subr.mxu0 0.0
    %3703 = vmatpush2.msra.mxu0 0.0
    %3704 = vmatprep.subr.mxu0 0.0
    %3705 = vmatpush2.msra.mxu0 0.0
    %3706 = vmatprep.subr.mxu0 0.0
    %3707 = vmatpush2.msra.mxu0 0.0
    %3708 = vmatprep.subr.mxu0 0.0
    %3709 = vmatpush2.msra.mxu0 0.0
    %3710 = vmatprep.subr.mxu0 0.0
    %3711 = vmatpush2.msra.mxu0 0.0
    %3712 = vmatprep.subr.mxu0 0.0
    %3713 = vmatpush2.msra.mxu0 0.0
    %3714 = vmatprep.subr.mxu0 0.0
    %3715 = vmatpush2.msra.mxu0 0.0
    %3716 = vmatprep.subr.mxu0 0.0
    %3717 = vmatpush2.msra.mxu0 0.0
    %3718 = vmatprep.subr.mxu0 0.0
    %3719 = vmatpush2.msra.mxu0 0.0
    %3720 = vmatprep.subr.mxu0 0.0
    %3721 = vmatpush2.msra.mxu0 0.0
    %3722 = vmatprep.subr.mxu0 0.0
    %3723 = vmatpush2.msra.mxu0 0.0
    %3724 = vmatprep.subr.mxu0 0.0
    %3725 = vmatpush2.msra.mxu0 0.0
    %3726 = vmatprep.mubr.f32.mxu0 0.0
    %3727 = vmatmul.mubr.f32.gmra.mxu0 %v3450
    %v3728 = vpop.f32.mrf.mxu0
    %v3729 = vadd.f32 0.0, %v3728
    %v3730 = vpop.f32.mrf.mxu0
    %3731 = vdwg.mxu0
    %3732 = vmatprep.subr.mxu0 0.0
    %3733 = vmatpush1.msra.mxu0 0.0
    %3734 = vmatprep.subr.mxu0 0.0
    %3735 = vmatpush1.msra.mxu0 0.0
    %3736 = vmatprep.subr.mxu0 0.0
    %3737 = vmatpush1.msra.mxu0 0.0
    %3738 = vmatprep.subr.mxu0 0.0
    %3739 = vmatpush1.msra.mxu0 0.0
    %3740 = vmatprep.subr.mxu0 0.0
    %3741 = vmatpush1.msra.mxu0 0.0
    %3742 = vmatprep.subr.mxu0 0.0
    %3743 = vmatpush1.msra.mxu0 0.0
    %3744 = vmatprep.subr.mxu0 0.0
    %3745 = vmatpush1.msra.mxu0 0.0
    %3746 = vmatprep.subr.mxu0 0.0
    %3747 = vmatpush1.msra.mxu0 0.0
    %3748 = vmatprep.subr.mxu0 0.0
    %3749 = vmatpush1.msra.mxu0 0.0
    %3750 = vmatprep.subr.mxu0 0.0
    %3751 = vmatpush1.msra.mxu0 0.0
    %3752 = vmatprep.subr.mxu0 0.0
    %3753 = vmatpush1.msra.mxu0 0.0
    %3754 = vmatprep.subr.mxu0 0.0
    %3755 = vmatpush1.msra.mxu0 0.0
    %3756 = vmatprep.subr.mxu0 0.0
    %3757 = vmatpush1.msra.mxu0 0.0
    %3758 = vmatprep.subr.mxu0 0.0
    %3759 = vmatpush1.msra.mxu0 0.0
    %3760 = vmatprep.subr.mxu0 0.0
    %3761 = vmatpush1.msra.mxu0 0.0
    %3762 = vmatprep.subr.mxu0 0.0
    %3763 = vmatpush1.msra.mxu0 %v3443
    %3764 = vmatprep.subr.mxu0 0.0
    %3765 = vmatpush2.msra.mxu0 0.0
    %3766 = vmatprep.subr.mxu0 0.0
    %3767 = vmatpush2.msra.mxu0 0.0
    %3768 = vmatprep.subr.mxu0 0.0
    %3769 = vmatpush2.msra.mxu0 0.0
    %3770 = vmatprep.subr.mxu0 0.0
    %3771 = vmatpush2.msra.mxu0 0.0
    %3772 = vmatprep.subr.mxu0 0.0
    %3773 = vmatpush2.msra.mxu0 0.0
    %3774 = vmatprep.subr.mxu0 0.0
    %3775 = vmatpush2.msra.mxu0 0.0
    %3776 = vmatprep.subr.mxu0 0.0
    %3777 = vmatpush2.msra.mxu0 0.0
    %3778 = vmatprep.subr.mxu0 0.0
    %3779 = vmatpush2.msra.mxu0 0.0
    %3780 = vmatprep.subr.mxu0 0.0
    %3781 = vmatpush2.msra.mxu0 0.0
    %3782 = vmatprep.subr.mxu0 0.0
    %3783 = vmatpush2.msra.mxu0 0.0
    %3784 = vmatprep.subr.mxu0 0.0
    %3785 = vmatpush2.msra.mxu0 0.0
    %3786 = vmatprep.subr.mxu0 0.0
    %3787 = vmatpush2.msra.mxu0 0.0
    %3788 = vmatprep.subr.mxu0 0.0
    %3789 = vmatpush2.msra.mxu0 0.0
    %3790 = vmatprep.subr.mxu0 0.0
    %3791 = vmatpush2.msra.mxu0 0.0
    %3792 = vmatprep.subr.mxu0 0.0
    %3793 = vmatpush2.msra.mxu0 0.0
    %3794 = vmatprep.subr.mxu0 0.0
    %3795 = vmatpush2.msra.mxu0 0.0
    %3796 = vmatprep.mubr.f32.mxu0 0.0
    %3797 = vmatmul.mubr.f32.gmra.mxu0 %v3450
    %v3798 = vpop.f32.mrf.mxu0
    %v3799 = vadd.f32 0.0, %v3798
    %v3800 = vpop.f32.mrf.mxu0
    %3801 = vdwg.mxu0
    %3802 = vmatprep.subr.mxu0 0.0
    %3803 = vmatpush1.msra.mxu0 0.0
    %3804 = vmatprep.subr.mxu0 0.0
    %3805 = vmatpush1.msra.mxu0 0.0
    %3806 = vmatprep.subr.mxu0 0.0
    %3807 = vmatpush1.msra.mxu0 0.0
    %3808 = vmatprep.subr.mxu0 0.0
    %3809 = vmatpush1.msra.mxu0 0.0
    %3810 = vmatprep.subr.mxu0 0.0
    %3811 = vmatpush1.msra.mxu0 0.0
    %3812 = vmatprep.subr.mxu0 0.0
    %3813 = vmatpush1.msra.mxu0 0.0
    %3814 = vmatprep.subr.mxu0 0.0
    %3815 = vmatpush1.msra.mxu0 0.0
    %3816 = vmatprep.subr.mxu0 0.0
    %3817 = vmatpush1.msra.mxu0 0.0
    %3818 = vmatprep.subr.mxu0 0.0
    %3819 = vmatpush1.msra.mxu0 0.0
    %3820 = vmatprep.subr.mxu0 0.0
    %3821 = vmatpush1.msra.mxu0 0.0
    %3822 = vmatprep.subr.mxu0 0.0
    %3823 = vmatpush1.msra.mxu0 0.0
    %3824 = vmatprep.subr.mxu0 0.0
    %3825 = vmatpush1.msra.mxu0 0.0
    %3826 = vmatprep.subr.mxu0 0.0
    %3827 = vmatpush1.msra.mxu0 0.0
    %3828 = vmatprep.subr.mxu0 0.0
    %3829 = vmatpush1.msra.mxu0 0.0
    %3830 = vmatprep.subr.mxu0 0.0
    %3831 = vmatpush1.msra.mxu0 0.0
    %3832 = vmatprep.subr.mxu0 0.0
    %3833 = vmatpush1.msra.mxu0 %v3444
    %3834 = vmatprep.subr.mxu0 0.0
    %3835 = vmatpush2.msra.mxu0 0.0
    %3836 = vmatprep.subr.mxu0 0.0
    %3837 = vmatpush2.msra.mxu0 0.0
    %3838 = vmatprep.subr.mxu0 0.0
    %3839 = vmatpush2.msra.mxu0 0.0
    %3840 = vmatprep.subr.mxu0 0.0
    %3841 = vmatpush2.msra.mxu0 0.0
    %3842 = vmatprep.subr.mxu0 0.0
    %3843 = vmatpush2.msra.mxu0 0.0
    %3844 = vmatprep.subr.mxu0 0.0
    %3845 = vmatpush2.msra.mxu0 0.0
    %3846 = vmatprep.subr.mxu0 0.0
    %3847 = vmatpush2.msra.mxu0 0.0
    %3848 = vmatprep.subr.mxu0 0.0
    %3849 = vmatpush2.msra.mxu0 0.0
    %3850 = vmatprep.subr.mxu0 0.0
    %3851 = vmatpush2.msra.mxu0 0.0
    %3852 = vmatprep.subr.mxu0 0.0
    %3853 = vmatpush2.msra.mxu0 0.0
    %3854 = vmatprep.subr.mxu0 0.0
    %3855 = vmatpush2.msra.mxu0 0.0
    %3856 = vmatprep.subr.mxu0 0.0
    %3857 = vmatpush2.msra.mxu0 0.0
    %3858 = vmatprep.subr.mxu0 0.0
    %3859 = vmatpush2.msra.mxu0 0.0
    %3860 = vmatprep.subr.mxu0 0.0
    %3861 = vmatpush2.msra.mxu0 0.0
    %3862 = vmatprep.subr.mxu0 0.0
    %3863 = vmatpush2.msra.mxu0 0.0
    %3864 = vmatprep.subr.mxu0 0.0
    %3865 = vmatpush2.msra.mxu0 0.0
    %3866 = vmatprep.mubr.f32.mxu0 0.0
    %3867 = vmatmul.mubr.f32.gmra.mxu0 %v3450
    %v3868 = vpop.f32.mrf.mxu0
    %v3869 = vadd.f32 0.0, %v3868
    %v3870 = vpop.f32.mrf.mxu0
    %3871 = vdwg.mxu0
    %3872 = vmatprep.subr.mxu0 0.0
    %3873 = vmatpush1.msra.mxu0 0.0
    %3874 = vmatprep.subr.mxu0 0.0
    %3875 = vmatpush1.msra.mxu0 0.0
    %3876 = vmatprep.subr.mxu0 0.0
    %3877 = vmatpush1.msra.mxu0 0.0
    %3878 = vmatprep.subr.mxu0 0.0
    %3879 = vmatpush1.msra.mxu0 0.0
    %3880 = vmatprep.subr.mxu0 0.0
    %3881 = vmatpush1.msra.mxu0 0.0
    %3882 = vmatprep.subr.mxu0 0.0
    %3883 = vmatpush1.msra.mxu0 0.0
    %3884 = vmatprep.subr.mxu0 0.0
    %3885 = vmatpush1.msra.mxu0 0.0
    %3886 = vmatprep.subr.mxu0 0.0
    %3887 = vmatpush1.msra.mxu0 0.0
    %3888 = vmatprep.subr.mxu0 0.0
    %3889 = vmatpush1.msra.mxu0 0.0
    %3890 = vmatprep.subr.mxu0 0.0
    %3891 = vmatpush1.msra.mxu0 0.0
    %3892 = vmatprep.subr.mxu0 0.0
    %3893 = vmatpush1.msra.mxu0 0.0
    %3894 = vmatprep.subr.mxu0 0.0
    %3895 = vmatpush1.msra.mxu0 0.0
    %3896 = vmatprep.subr.mxu0 0.0
    %3897 = vmatpush1.msra.mxu0 0.0
    %3898 = vmatprep.subr.mxu0 0.0
    %3899 = vmatpush1.msra.mxu0 0.0
    %3900 = vmatprep.subr.mxu0 0.0
    %3901 = vmatpush1.msra.mxu0 0.0
    %3902 = vmatprep.subr.mxu0 0.0
    %3903 = vmatpush1.msra.mxu0 %v3445
    %3904 = vmatprep.subr.mxu0 0.0
    %3905 = vmatpush2.msra.mxu0 0.0
    %3906 = vmatprep.subr.mxu0 0.0
    %3907 = vmatpush2.msra.mxu0 0.0
    %3908 = vmatprep.subr.mxu0 0.0
    %3909 = vmatpush2.msra.mxu0 0.0
    %3910 = vmatprep.subr.mxu0 0.0
    %3911 = vmatpush2.msra.mxu0 0.0
    %3912 = vmatprep.subr.mxu0 0.0
    %3913 = vmatpush2.msra.mxu0 0.0
    %3914 = vmatprep.subr.mxu0 0.0
    %3915 = vmatpush2.msra.mxu0 0.0
    %3916 = vmatprep.subr.mxu0 0.0
    %3917 = vmatpush2.msra.mxu0 0.0
    %3918 = vmatprep.subr.mxu0 0.0
    %3919 = vmatpush2.msra.mxu0 0.0
    %3920 = vmatprep.subr.mxu0 0.0
    %3921 = vmatpush2.msra.mxu0 0.0
    %3922 = vmatprep.subr.mxu0 0.0
    %3923 = vmatpush2.msra.mxu0 0.0
    %3924 = vmatprep.subr.mxu0 0.0
    %3925 = vmatpush2.msra.mxu0 0.0
    %3926 = vmatprep.subr.mxu0 0.0
    %3927 = vmatpush2.msra.mxu0 0.0
    %3928 = vmatprep.subr.mxu0 0.0
    %3929 = vmatpush2.msra.mxu0 0.0
    %3930 = vmatprep.subr.mxu0 0.0
    %3931 = vmatpush2.msra.mxu0 0.0
    %3932 = vmatprep.subr.mxu0 0.0
    %3933 = vmatpush2.msra.mxu0 0.0
    %3934 = vmatprep.subr.mxu0 0.0
    %3935 = vmatpush2.msra.mxu0 0.0
    %3936 = vmatprep.mubr.f32.mxu0 0.0
    %3937 = vmatmul.mubr.f32.gmra.mxu0 %v3450
    %v3938 = vpop.f32.mrf.mxu0
    %v3939 = vadd.f32 0.0, %v3938
    %v3940 = vpop.f32.mrf.mxu0
    %3941 = vdwg.mxu0
    %3942 = vmatprep.subr.mxu0 0.0
    %3943 = vmatpush1.msra.mxu0 0.0
    %3944 = vmatprep.subr.mxu0 0.0
    %3945 = vmatpush1.msra.mxu0 0.0
    %3946 = vmatprep.subr.mxu0 0.0
    %3947 = vmatpush1.msra.mxu0 0.0
    %3948 = vmatprep.subr.mxu0 0.0
    %3949 = vmatpush1.msra.mxu0 0.0
    %3950 = vmatprep.subr.mxu0 0.0
    %3951 = vmatpush1.msra.mxu0 0.0
    %3952 = vmatprep.subr.mxu0 0.0
    %3953 = vmatpush1.msra.mxu0 0.0
    %3954 = vmatprep.subr.mxu0 0.0
    %3955 = vmatpush1.msra.mxu0 0.0
    %3956 = vmatprep.subr.mxu0 0.0
    %3957 = vmatpush1.msra.mxu0 0.0
    %3958 = vmatprep.subr.mxu0 0.0
    %3959 = vmatpush1.msra.mxu0 0.0
    %3960 = vmatprep.subr.mxu0 0.0
    %3961 = vmatpush1.msra.mxu0 0.0
    %3962 = vmatprep.subr.mxu0 0.0
    %3963 = vmatpush1.msra.mxu0 0.0
    %3964 = vmatprep.subr.mxu0 0.0
    %3965 = vmatpush1.msra.mxu0 0.0
    %3966 = vmatprep.subr.mxu0 0.0
    %3967 = vmatpush1.msra.mxu0 0.0
    %3968 = vmatprep.subr.mxu0 0.0
    %3969 = vmatpush1.msra.mxu0 0.0
    %3970 = vmatprep.subr.mxu0 0.0
    %3971 = vmatpush1.msra.mxu0 0.0
    %3972 = vmatprep.subr.mxu0 0.0
    %3973 = vmatpush1.msra.mxu0 %v3446
    %3974 = vmatprep.subr.mxu0 0.0
    %3975 = vmatpush2.msra.mxu0 0.0
    %3976 = vmatprep.subr.mxu0 0.0
    %3977 = vmatpush2.msra.mxu0 0.0
    %3978 = vmatprep.subr.mxu0 0.0
    %3979 = vmatpush2.msra.mxu0 0.0
    %3980 = vmatprep.subr.mxu0 0.0
    %3981 = vmatpush2.msra.mxu0 0.0
    %3982 = vmatprep.subr.mxu0 0.0
    %3983 = vmatpush2.msra.mxu0 0.0
    %3984 = vmatprep.subr.mxu0 0.0
    %3985 = vmatpush2.msra.mxu0 0.0
    %3986 = vmatprep.subr.mxu0 0.0
    %3987 = vmatpush2.msra.mxu0 0.0
    %3988 = vmatprep.subr.mxu0 0.0
    %3989 = vmatpush2.msra.mxu0 0.0
    %3990 = vmatprep.subr.mxu0 0.0
    %3991 = vmatpush2.msra.mxu0 0.0
    %3992 = vmatprep.subr.mxu0 0.0
    %3993 = vmatpush2.msra.mxu0 0.0
    %3994 = vmatprep.subr.mxu0 0.0
    %3995 = vmatpush2.msra.mxu0 0.0
    %3996 = vmatprep.subr.mxu0 0.0
    %3997 = vmatpush2.msra.mxu0 0.0
    %3998 = vmatprep.subr.mxu0 0.0
    %3999 = vmatpush2.msra.mxu0 0.0
    %4000 = vmatprep.subr.mxu0 0.0
    %4001 = vmatpush2.msra.mxu0 0.0
    %4002 = vmatprep.subr.mxu0 0.0
    %4003 = vmatpush2.msra.mxu0 0.0
    %4004 = vmatprep.subr.mxu0 0.0
    %4005 = vmatpush2.msra.mxu0 0.0
    %4006 = vmatprep.mubr.f32.mxu0 0.0
    %4007 = vmatmul.mubr.f32.gmra.mxu0 %v3450
    %v4008 = vpop.f32.mrf.mxu0
    %v4009 = vadd.f32 0.0, %v4008
    %v4010 = vpop.f32.mrf.mxu0
    %4011 = vdwg.mxu0
    %v4012 = vadd.f32 %v2794, %v3519
    %v4013 = vadd.f32 %v2864, %v3589
    %v4014 = vadd.f32 %v2934, %v3659
    %v4015 = vadd.f32 %v3004, %v3729
    %v4016 = vadd.f32 %v3074, %v3799
    %v4017 = vadd.f32 %v3144, %v3869
    %v4018 = vadd.f32 %v3214, %v3939
    %v4019 = vadd.f32 %v3284, %v4009
    %4020 = vst.msk [vmem:[#allocation14] sm:$0xff] %vm561, %v4012
    %4021 = vst.msk [vmem:[#allocation14 + $0x8] sm:$0xff] %vm561, %v4013
    %4022 = vst.msk [vmem:[#allocation14 + $0x10] sm:$0xff] %vm561, %v4014
    %4023 = vst.msk [vmem:[#allocation14 + $0x18] sm:$0xff] %vm561, %v4015
    %4024 = vst.msk [vmem:[#allocation14 + $0x20] sm:$0xff] %vm561, %v4016
    %4025 = vst.msk [vmem:[#allocation14 + $0x28] sm:$0xff] %vm561, %v4017
    %4026 = vst.msk [vmem:[#allocation14 + $0x30] sm:$0xff] %vm561, %v4018
    %4027 = vst.msk [vmem:[#allocation14 + $0x38] sm:$0xff] %vm561, %v4019
    %v4028 = vld [vmem:[#allocation7] sm:$0xff]
    %v4029 = vld [vmem:[#allocation7 + $0x8] sm:$0xff]
    %v4030 = vld [vmem:[#allocation7 + $0x10] sm:$0xff]
    %v4031 = vld [vmem:[#allocation7 + $0x18] sm:$0xff]
    %v4032 = vld [vmem:[#allocation7 + $0x20] sm:$0xff]
    %v4033 = vld [vmem:[#allocation7 + $0x28] sm:$0xff]
    %v4034 = vld [vmem:[#allocation7 + $0x30] sm:$0xff]
    %v4035 = vld [vmem:[#allocation7 + $0x38] sm:$0xff]
    %v4036 = vld [vmem:[#allocation8] sm:$0x3]
    %v4037 = vld [vmem:[#allocation8 + $0x2] sm:$0x3]
    %v4038 = vld [vmem:[#allocation8 + $0x4] sm:$0x3]
    %v4039 = vld [vmem:[#allocation8 + $0x6] sm:$0x3]
    %v4040 = vld [vmem:[#allocation8 + $0x8] sm:$0x3]
    %v4041 = vld [vmem:[#allocation8 + $0xa] sm:$0x3]
    %v4042 = vld [vmem:[#allocation8 + $0xc] sm:$0x3]
    %v4043 = vld [vmem:[#allocation8 + $0xe] sm:$0x3]
    %v4052 = vrot.slane %v4028, 6
    %v4053 = vrot.slane %v4029, 6
    %v4054 = vrot.slane %v4030, 6
    %v4055 = vrot.slane %v4031, 6
    %v4056 = vrot.slane %v4032, 6
    %v4057 = vrot.slane %v4033, 6
    %v4058 = vrot.slane %v4034, 6
    %v4059 = vrot.slane %v4035, 6
    %v4068 = vsel %vm171, %v4036, %v4052
    %v4069 = vsel %vm171, %v4037, %v4053
    %v4070 = vsel %vm171, %v4038, %v4054
    %v4071 = vsel %vm171, %v4039, %v4055
    %v4072 = vsel %vm171, %v4040, %v4056
    %v4073 = vsel %vm171, %v4041, %v4057
    %v4074 = vsel %vm171, %v4042, %v4058
    %v4075 = vsel %vm171, %v4043, %v4059
    %v4084 = vcombine.high %v4068, %v4068
    %v4086 = vunpack.c.l.s4 1983009808
    %v4087 = vunpack.c.0.s8 %v4086
    %v4088 = vlaneseq
    %v4089 = vshrl.u32 %v4088, 7
    %v4090 = vsub.s32 %v4087, %v4089
    %v4091 = vrot.slane %v4068, %v4090
    %v4093 = vunpack.c.l.s4 1983009808
    %v4094 = vunpack.c.0.s8 %v4093
    %v4095 = vlaneseq
    %v4096 = vshrl.u32 %v4095, 7
    %v4097 = vsub.s32 %v4094, %v4096
    %v4098 = vrot.slane %v4084, %v4097
    %v4099 = vcombine.high %v4091, %v4091
    %v4100 = vcombine.high %v4098, %v4098
    %v4102 = vunpack.c.l.s4 1983009808
    %v4103 = vunpack.c.0.s8 %v4102
    %v4104 = vlaneseq
    %v4105 = vshrl.u32 %v4104, 7
    %v4106 = vsub.s32 %v4103, %v4105
    %v4107 = vrot.slane %v4052, %v4106
    %v4108 = vcombine.high %v4069, %v4069
    %v4110 = vunpack.c.l.s4 1983009808
    %v4111 = vunpack.c.0.s8 %v4110
    %v4112 = vlaneseq
    %v4113 = vshrl.u32 %v4112, 7
    %v4114 = vsub.s32 %v4111, %v4113
    %v4115 = vrot.slane %v4069, %v4114
    %v4117 = vunpack.c.l.s4 1983009808
    %v4118 = vunpack.c.0.s8 %v4117
    %v4119 = vlaneseq
    %v4120 = vshrl.u32 %v4119, 7
    %v4121 = vsub.s32 %v4118, %v4120
    %v4122 = vrot.slane %v4108, %v4121
    %v4123 = vcombine.high %v4115, %v4115
    %v4124 = vcombine.high %v4122, %v4122
    %v4126 = vunpack.c.l.s4 1983009808
    %v4127 = vunpack.c.0.s8 %v4126
    %v4128 = vlaneseq
    %v4129 = vshrl.u32 %v4128, 7
    %v4130 = vsub.s32 %v4127, %v4129
    %v4131 = vrot.slane %v4053, %v4130
    %v4132 = vcombine.high %v4070, %v4070
    %v4134 = vunpack.c.l.s4 1983009808
    %v4135 = vunpack.c.0.s8 %v4134
    %v4136 = vlaneseq
    %v4137 = vshrl.u32 %v4136, 7
    %v4138 = vsub.s32 %v4135, %v4137
    %v4139 = vrot.slane %v4070, %v4138
    %v4141 = vunpack.c.l.s4 1983009808
    %v4142 = vunpack.c.0.s8 %v4141
    %v4143 = vlaneseq
    %v4144 = vshrl.u32 %v4143, 7
    %v4145 = vsub.s32 %v4142, %v4144
    %v4146 = vrot.slane %v4132, %v4145
    %v4147 = vcombine.high %v4139, %v4139
    %v4148 = vcombine.high %v4146, %v4146
    %v4150 = vunpack.c.l.s4 1983009808
    %v4151 = vunpack.c.0.s8 %v4150
    %v4152 = vlaneseq
    %v4153 = vshrl.u32 %v4152, 7
    %v4154 = vsub.s32 %v4151, %v4153
    %v4155 = vrot.slane %v4054, %v4154
    %v4156 = vcombine.high %v4071, %v4071
    %v4158 = vunpack.c.l.s4 1983009808
    %v4159 = vunpack.c.0.s8 %v4158
    %v4160 = vlaneseq
    %v4161 = vshrl.u32 %v4160, 7
    %v4162 = vsub.s32 %v4159, %v4161
    %v4163 = vrot.slane %v4071, %v4162
    %v4165 = vunpack.c.l.s4 1983009808
    %v4166 = vunpack.c.0.s8 %v4165
    %v4167 = vlaneseq
    %v4168 = vshrl.u32 %v4167, 7
    %v4169 = vsub.s32 %v4166, %v4168
    %v4170 = vrot.slane %v4156, %v4169
    %v4171 = vcombine.high %v4163, %v4163
    %v4172 = vcombine.high %v4170, %v4170
    %v4174 = vunpack.c.l.s4 1983009808
    %v4175 = vunpack.c.0.s8 %v4174
    %v4176 = vlaneseq
    %v4177 = vshrl.u32 %v4176, 7
    %v4178 = vsub.s32 %v4175, %v4177
    %v4179 = vrot.slane %v4055, %v4178
    %v4180 = vcombine.high %v4072, %v4072
    %v4182 = vunpack.c.l.s4 1983009808
    %v4183 = vunpack.c.0.s8 %v4182
    %v4184 = vlaneseq
    %v4185 = vshrl.u32 %v4184, 7
    %v4186 = vsub.s32 %v4183, %v4185
    %v4187 = vrot.slane %v4072, %v4186
    %v4189 = vunpack.c.l.s4 1983009808
    %v4190 = vunpack.c.0.s8 %v4189
    %v4191 = vlaneseq
    %v4192 = vshrl.u32 %v4191, 7
    %v4193 = vsub.s32 %v4190, %v4192
    %v4194 = vrot.slane %v4180, %v4193
    %v4195 = vcombine.high %v4187, %v4187
    %v4196 = vcombine.high %v4194, %v4194
    %v4198 = vunpack.c.l.s4 1983009808
    %v4199 = vunpack.c.0.s8 %v4198
    %v4200 = vlaneseq
    %v4201 = vshrl.u32 %v4200, 7
    %v4202 = vsub.s32 %v4199, %v4201
    %v4203 = vrot.slane %v4056, %v4202
    %v4204 = vcombine.high %v4073, %v4073
    %v4206 = vunpack.c.l.s4 1983009808
    %v4207 = vunpack.c.0.s8 %v4206
    %v4208 = vlaneseq
    %v4209 = vshrl.u32 %v4208, 7
    %v4210 = vsub.s32 %v4207, %v4209
    %v4211 = vrot.slane %v4073, %v4210
    %v4213 = vunpack.c.l.s4 1983009808
    %v4214 = vunpack.c.0.s8 %v4213
    %v4215 = vlaneseq
    %v4216 = vshrl.u32 %v4215, 7
    %v4217 = vsub.s32 %v4214, %v4216
    %v4218 = vrot.slane %v4204, %v4217
    %v4219 = vcombine.high %v4211, %v4211
    %v4220 = vcombine.high %v4218, %v4218
    %v4222 = vunpack.c.l.s4 1983009808
    %v4223 = vunpack.c.0.s8 %v4222
    %v4224 = vlaneseq
    %v4225 = vshrl.u32 %v4224, 7
    %v4226 = vsub.s32 %v4223, %v4225
    %v4227 = vrot.slane %v4057, %v4226
    %v4228 = vcombine.high %v4074, %v4074
    %v4230 = vunpack.c.l.s4 1983009808
    %v4231 = vunpack.c.0.s8 %v4230
    %v4232 = vlaneseq
    %v4233 = vshrl.u32 %v4232, 7
    %v4234 = vsub.s32 %v4231, %v4233
    %v4235 = vrot.slane %v4074, %v4234
    %v4237 = vunpack.c.l.s4 1983009808
    %v4238 = vunpack.c.0.s8 %v4237
    %v4239 = vlaneseq
    %v4240 = vshrl.u32 %v4239, 7
    %v4241 = vsub.s32 %v4238, %v4240
    %v4242 = vrot.slane %v4228, %v4241
    %v4243 = vcombine.high %v4235, %v4235
    %v4244 = vcombine.high %v4242, %v4242
    %v4246 = vunpack.c.l.s4 1983009808
    %v4247 = vunpack.c.0.s8 %v4246
    %v4248 = vlaneseq
    %v4249 = vshrl.u32 %v4248, 7
    %v4250 = vsub.s32 %v4247, %v4249
    %v4251 = vrot.slane %v4058, %v4250
    %v4252 = vcombine.high %v4075, %v4075
    %v4254 = vunpack.c.l.s4 1983009808
    %v4255 = vunpack.c.0.s8 %v4254
    %v4256 = vlaneseq
    %v4257 = vshrl.u32 %v4256, 7
    %v4258 = vsub.s32 %v4255, %v4257
    %v4259 = vrot.slane %v4075, %v4258
    %v4261 = vunpack.c.l.s4 1983009808
    %v4262 = vunpack.c.0.s8 %v4261
    %v4263 = vlaneseq
    %v4264 = vshrl.u32 %v4263, 7
    %v4265 = vsub.s32 %v4262, %v4264
    %v4266 = vrot.slane %v4252, %v4265
    %v4267 = vcombine.high %v4259, %v4259
    %v4268 = vcombine.high %v4266, %v4266
    %v4270 = vunpack.c.l.s4 1983009808
    %v4271 = vunpack.c.0.s8 %v4270
    %v4272 = vlaneseq
    %v4273 = vshrl.u32 %v4272, 7
    %v4274 = vsub.s32 %v4271, %v4273
    %v4275 = vrot.slane %v4059, %v4274
    %v4276 = vld [vmem:[#allocation11] sm:$0xff]
    %v4277 = vld [vmem:[#allocation11 + $0x8] sm:$0xff]
    %v4278 = vld [vmem:[#allocation11 + $0x10] sm:$0xff]
    %v4279 = vld [vmem:[#allocation11 + $0x18] sm:$0xff]
    %v4280 = vld [vmem:[%s7] sm:$0x1]
    %v4282 = vlaneseq
    %v4283 = vshrl.u32 %v4282, 7
    %v4284 = vsub.s32 0, %v4283
    %v4285 = vrot.slane %v4280, %v4284
    %v4287 = vcombine.low %v4091, %v4099
    %v4288 = vcombine.low %v4098, %v4100
    %v4290 = vunpack.c.l.s4 1983009808
    %v4291 = vunpack.c.0.s8 %v4290
    %v4292 = vlaneseq
    %v4293 = vshrl.u32 %v4292, 7
    %v4294 = vsub.s32 %v4291, %v4293
    %v4295 = vrot.slane %v4287, %v4294
    %v4297 = vunpack.c.l.s4 1983009808
    %v4298 = vunpack.c.0.s8 %v4297
    %v4299 = vlaneseq
    %v4300 = vshrl.u32 %v4299, 7
    %v4301 = vsub.s32 %v4298, %v4300
    %v4302 = vrot.slane %v4288, %v4301
    %v4303 = vcombine.low %v4295, %v4302
    %v4304 = vcombine.low %v4107, %v4115
    %v4305 = vcombine.low %v4123, %v4122
    %v4307 = vunpack.c.l.s4 1983009808
    %v4308 = vunpack.c.0.s8 %v4307
    %v4309 = vlaneseq
    %v4310 = vshrl.u32 %v4309, 7
    %v4311 = vsub.s32 %v4308, %v4310
    %v4312 = vrot.slane %v4304, %v4311
    %v4314 = vunpack.c.l.s4 1983009808
    %v4315 = vunpack.c.0.s8 %v4314
    %v4316 = vlaneseq
    %v4317 = vshrl.u32 %v4316, 7
    %v4318 = vsub.s32 %v4315, %v4317
    %v4319 = vrot.slane %v4305, %v4318
    %v4320 = vcombine.low %v4312, %v4319
    %v4321 = vcombine.low %v4124, %v4131
    %v4322 = vcombine.low %v4139, %v4147
    %v4324 = vunpack.c.l.s4 1983009808
    %v4325 = vunpack.c.0.s8 %v4324
    %v4326 = vlaneseq
    %v4327 = vshrl.u32 %v4326, 7
    %v4328 = vsub.s32 %v4325, %v4327
    %v4329 = vrot.slane %v4321, %v4328
    %v4331 = vunpack.c.l.s4 1983009808
    %v4332 = vunpack.c.0.s8 %v4331
    %v4333 = vlaneseq
    %v4334 = vshrl.u32 %v4333, 7
    %v4335 = vsub.s32 %v4332, %v4334
    %v4336 = vrot.slane %v4322, %v4335
    %v4337 = vcombine.low %v4329, %v4336
    %v4338 = vcombine.low %v4146, %v4148
    %v4339 = vcombine.low %v4155, %v4163
    %v4341 = vunpack.c.l.s4 1983009808
    %v4342 = vunpack.c.0.s8 %v4341
    %v4343 = vlaneseq
    %v4344 = vshrl.u32 %v4343, 7
    %v4345 = vsub.s32 %v4342, %v4344
    %v4346 = vrot.slane %v4338, %v4345
    %v4348 = vunpack.c.l.s4 1983009808
    %v4349 = vunpack.c.0.s8 %v4348
    %v4350 = vlaneseq
    %v4351 = vshrl.u32 %v4350, 7
    %v4352 = vsub.s32 %v4349, %v4351
    %v4353 = vrot.slane %v4339, %v4352
    %v4354 = vcombine.low %v4346, %v4353
    %v4355 = vcombine.low %v4171, %v4170
    %v4356 = vcombine.low %v4172, %v4179
    %v4358 = vunpack.c.l.s4 1983009808
    %v4359 = vunpack.c.0.s8 %v4358
    %v4360 = vlaneseq
    %v4361 = vshrl.u32 %v4360, 7
    %v4362 = vsub.s32 %v4359, %v4361
    %v4363 = vrot.slane %v4355, %v4362
    %v4365 = vunpack.c.l.s4 1983009808
    %v4366 = vunpack.c.0.s8 %v4365
    %v4367 = vlaneseq
    %v4368 = vshrl.u32 %v4367, 7
    %v4369 = vsub.s32 %v4366, %v4368
    %v4370 = vrot.slane %v4356, %v4369
    %v4371 = vcombine.low %v4363, %v4370
    %v4372 = vcombine.low %v4187, %v4195
    %v4373 = vcombine.low %v4194, %v4196
    %v4375 = vunpack.c.l.s4 1983009808
    %v4376 = vunpack.c.0.s8 %v4375
    %v4377 = vlaneseq
    %v4378 = vshrl.u32 %v4377, 7
    %v4379 = vsub.s32 %v4376, %v4378
    %v4380 = vrot.slane %v4372, %v4379
    %v4382 = vunpack.c.l.s4 1983009808
    %v4383 = vunpack.c.0.s8 %v4382
    %v4384 = vlaneseq
    %v4385 = vshrl.u32 %v4384, 7
    %v4386 = vsub.s32 %v4383, %v4385
    %v4387 = vrot.slane %v4373, %v4386
    %v4388 = vcombine.low %v4380, %v4387
    %v4389 = vcombine.low %v4203, %v4211
    %v4390 = vcombine.low %v4219, %v4218
    %v4392 = vunpack.c.l.s4 1983009808
    %v4393 = vunpack.c.0.s8 %v4392
    %v4394 = vlaneseq
    %v4395 = vshrl.u32 %v4394, 7
    %v4396 = vsub.s32 %v4393, %v4395
    %v4397 = vrot.slane %v4389, %v4396
    %v4399 = vunpack.c.l.s4 1983009808
    %v4400 = vunpack.c.0.s8 %v4399
    %v4401 = vlaneseq
    %v4402 = vshrl.u32 %v4401, 7
    %v4403 = vsub.s32 %v4400, %v4402
    %v4404 = vrot.slane %v4390, %v4403
    %v4405 = vcombine.low %v4397, %v4404
    %v4406 = vcombine.low %v4220, %v4227
    %v4407 = vcombine.low %v4235, %v4243
    %v4409 = vunpack.c.l.s4 1983009808
    %v4410 = vunpack.c.0.s8 %v4409
    %v4411 = vlaneseq
    %v4412 = vshrl.u32 %v4411, 7
    %v4413 = vsub.s32 %v4410, %v4412
    %v4414 = vrot.slane %v4406, %v4413
    %v4416 = vunpack.c.l.s4 1983009808
    %v4417 = vunpack.c.0.s8 %v4416
    %v4418 = vlaneseq
    %v4419 = vshrl.u32 %v4418, 7
    %v4420 = vsub.s32 %v4417, %v4419
    %v4421 = vrot.slane %v4407, %v4420
    %v4422 = vcombine.low %v4414, %v4421
    %v4423 = vcombine.low %v4242, %v4244
    %v4424 = vcombine.low %v4251, %v4259
    %v4426 = vunpack.c.l.s4 1983009808
    %v4427 = vunpack.c.0.s8 %v4426
    %v4428 = vlaneseq
    %v4429 = vshrl.u32 %v4428, 7
    %v4430 = vsub.s32 %v4427, %v4429
    %v4431 = vrot.slane %v4423, %v4430
    %v4433 = vunpack.c.l.s4 1983009808
    %v4434 = vunpack.c.0.s8 %v4433
    %v4435 = vlaneseq
    %v4436 = vshrl.u32 %v4435, 7
    %v4437 = vsub.s32 %v4434, %v4436
    %v4438 = vrot.slane %v4424, %v4437
    %v4439 = vcombine.low %v4431, %v4438
    %v4440 = vcombine.low %v4267, %v4266
    %v4441 = vcombine.low %v4268, %v4275
    %v4443 = vunpack.c.l.s4 1983009808
    %v4444 = vunpack.c.0.s8 %v4443
    %v4445 = vlaneseq
    %v4446 = vshrl.u32 %v4445, 7
    %v4447 = vsub.s32 %v4444, %v4446
    %v4448 = vrot.slane %v4440, %v4447
    %v4450 = vunpack.c.l.s4 1983009808
    %v4451 = vunpack.c.0.s8 %v4450
    %v4452 = vlaneseq
    %v4453 = vshrl.u32 %v4452, 7
    %v4454 = vsub.s32 %v4451, %v4453
    %v4455 = vrot.slane %v4441, %v4454
    %v4456 = vcombine.low %v4448, %v4455
    %v4457 = vsel %vm561, %v4303, 0
    %v4459 = vsel %vm561, %v4320, 0
    %v4461 = vsel %vm561, %v4337, 0
    %v4463 = vsel %vm561, %v4354, 0
    %v4465 = vsel %vm561, %v4371, 0
    %v4467 = vsel %vm561, %v4388, 0
    %v4469 = vsel %vm561, %v4405, 0
    %v4471 = vsel %vm561, %v4422, 0
    %v4473 = vsel %vm561, %v4439, 0
    %v4475 = vsel %vm561, %v4456, 0
    %4477 = vmatprep.subr.mxu0 0.0
    %4478 = vmatpush1.msra.mxu0 0.0
    %4479 = vmatprep.subr.mxu0 0.0
    %4480 = vmatpush1.msra.mxu0 0.0
    %4481 = vmatprep.subr.mxu0 0.0
    %4482 = vmatpush1.msra.mxu0 0.0
    %4483 = vmatprep.subr.mxu0 0.0
    %4484 = vmatpush1.msra.mxu0 0.0
    %4485 = vmatprep.subr.mxu0 0.0
    %4486 = vmatpush1.msra.mxu0 0.0
    %4487 = vmatprep.subr.mxu0 0.0
    %4488 = vmatpush1.msra.mxu0 0.0
    %4489 = vmatprep.subr.mxu0 0.0
    %4490 = vmatpush1.msra.mxu0 0.0
    %4491 = vmatprep.subr.mxu0 0.0
    %4492 = vmatpush1.msra.mxu0 0.0
    %4493 = vmatprep.subr.mxu0 0.0
    %4494 = vmatpush1.msra.mxu0 0.0
    %4495 = vmatprep.subr.mxu0 0.0
    %4496 = vmatpush1.msra.mxu0 0.0
    %4497 = vmatprep.subr.mxu0 0.0
    %4498 = vmatpush1.msra.mxu0 0.0
    %4499 = vmatprep.subr.mxu0 0.0
    %4500 = vmatpush1.msra.mxu0 0.0
    %4501 = vmatprep.subr.mxu0 0.0
    %4502 = vmatpush1.msra.mxu0 %v4279
    %4503 = vmatprep.subr.mxu0 0.0
    %4504 = vmatpush1.msra.mxu0 %v4278
    %4505 = vmatprep.subr.mxu0 0.0
    %4506 = vmatpush1.msra.mxu0 %v4277
    %4507 = vmatprep.subr.mxu0 0.0
    %4508 = vmatpush1.msra.mxu0 %v4276
    %4509 = vmatprep.subr.mxu0 0.0
    %4510 = vmatpush2.msra.mxu0 0.0
    %4511 = vmatprep.subr.mxu0 0.0
    %4512 = vmatpush2.msra.mxu0 0.0
    %4513 = vmatprep.subr.mxu0 0.0
    %4514 = vmatpush2.msra.mxu0 0.0
    %4515 = vmatprep.subr.mxu0 0.0
    %4516 = vmatpush2.msra.mxu0 0.0
    %4517 = vmatprep.subr.mxu0 0.0
    %4518 = vmatpush2.msra.mxu0 0.0
    %4519 = vmatprep.subr.mxu0 0.0
    %4520 = vmatpush2.msra.mxu0 0.0
    %4521 = vmatprep.subr.mxu0 0.0
    %4522 = vmatpush2.msra.mxu0 0.0
    %4523 = vmatprep.subr.mxu0 0.0
    %4524 = vmatpush2.msra.mxu0 0.0
    %4525 = vmatprep.subr.mxu0 0.0
    %4526 = vmatpush2.msra.mxu0 0.0
    %4527 = vmatprep.subr.mxu0 0.0
    %4528 = vmatpush2.msra.mxu0 0.0
    %4529 = vmatprep.subr.mxu0 0.0
    %4530 = vmatpush2.msra.mxu0 0.0
    %4531 = vmatprep.subr.mxu0 0.0
    %4532 = vmatpush2.msra.mxu0 0.0
    %4533 = vmatprep.subr.mxu0 0.0
    %4534 = vmatpush2.msra.mxu0 0.0
    %4535 = vmatprep.subr.mxu0 0.0
    %4536 = vmatpush2.msra.mxu0 0.0
    %4537 = vmatprep.subr.mxu0 0.0
    %4538 = vmatpush2.msra.mxu0 0.0
    %4539 = vmatprep.subr.mxu0 0.0
    %4540 = vmatpush2.msra.mxu0 0.0
    %4541 = vmatprep.mubr.f32.mxu0 0.0
    %4542 = vmatmul.mubr.f32.gmra.mxu0 %v4457
    %v4543 = vpop.f32.mrf.mxu0
    %v4544 = vadd.f32 %v4285, %v4543
    %v4545 = vpop.f32.mrf.mxu0
    %4546 = vmatprep.mubr.f32.mxu0 0.0
    %4547 = vmatmul.mubr.f32.gmra.mxu0 %v4459
    %v4548 = vpop.f32.mrf.mxu0
    %v4549 = vadd.f32 %v4285, %v4548
    %v4550 = vpop.f32.mrf.mxu0
    %4551 = vmatprep.mubr.f32.mxu0 0.0
    %4552 = vmatmul.mubr.f32.gmra.mxu0 %v4461
    %v4553 = vpop.f32.mrf.mxu0
    %v4554 = vadd.f32 %v4285, %v4553
    %v4555 = vpop.f32.mrf.mxu0
    %4556 = vmatprep.mubr.f32.mxu0 0.0
    %4557 = vmatmul.mubr.f32.gmra.mxu0 %v4463
    %v4558 = vpop.f32.mrf.mxu0
    %v4559 = vadd.f32 %v4285, %v4558
    %v4560 = vpop.f32.mrf.mxu0
    %4561 = vmatprep.mubr.f32.mxu0 0.0
    %4562 = vmatmul.mubr.f32.gmra.mxu0 %v4465
    %v4563 = vpop.f32.mrf.mxu0
    %v4564 = vadd.f32 %v4285, %v4563
    %v4565 = vpop.f32.mrf.mxu0
    %4566 = vmatprep.mubr.f32.mxu0 0.0
    %4567 = vmatmul.mubr.f32.gmra.mxu0 %v4467
    %v4568 = vpop.f32.mrf.mxu0
    %v4569 = vadd.f32 %v4285, %v4568
    %v4570 = vpop.f32.mrf.mxu0
    %4571 = vmatprep.mubr.f32.mxu0 0.0
    %4572 = vmatmul.mubr.f32.gmra.mxu0 %v4469
    %v4573 = vpop.f32.mrf.mxu0
    %v4574 = vadd.f32 %v4285, %v4573
    %v4575 = vpop.f32.mrf.mxu0
    %4576 = vmatprep.mubr.f32.mxu0 0.0
    %4577 = vmatmul.mubr.f32.gmra.mxu0 %v4471
    %v4578 = vpop.f32.mrf.mxu0
    %v4579 = vadd.f32 %v4285, %v4578
    %v4580 = vpop.f32.mrf.mxu0
    %4581 = vmatprep.mubr.f32.mxu0 0.0
    %4582 = vmatmul.mubr.f32.gmra.mxu0 %v4473
    %v4583 = vpop.f32.mrf.mxu0
    %v4584 = vadd.f32 %v4285, %v4583
    %v4585 = vpop.f32.mrf.mxu0
    %4586 = vmatprep.mubr.f32.mxu0 0.0
    %4587 = vmatmul.mubr.f32.gmra.mxu0 %v4475
    %v4588 = vpop.f32.mrf.mxu0
    %v4589 = vadd.f32 %v4285, %v4588
    %v4590 = vpop.f32.mrf.mxu0
    %4591 = vdwg.mxu0
    %v4602 = vcombine.high %v4544, %v4544
    %v4604 = vunpack.c.l.s4 1983009808
    %v4605 = vunpack.c.0.s8 %v4604
    %v4606 = vlaneseq
    %v4607 = vshrl.u32 %v4606, 7
    %v4608 = vsub.s32 %v4605, %v4607
    %v4609 = vrot.slane %v4544, %v4608
    %v4611 = vunpack.c.l.s4 1983009808
    %v4612 = vunpack.c.0.s8 %v4611
    %v4613 = vlaneseq
    %v4614 = vshrl.u32 %v4613, 7
    %v4615 = vsub.s32 %v4612, %v4614
    %v4616 = vrot.slane %v4602, %v4615
    %v4617 = vcombine.high %v4609, %v4609
    %v4618 = vcombine.high %v4616, %v4616
    %v4619 = vcombine.high %v4549, %v4549
    %v4621 = vunpack.c.l.s4 1983009808
    %v4622 = vunpack.c.0.s8 %v4621
    %v4623 = vlaneseq
    %v4624 = vshrl.u32 %v4623, 7
    %v4625 = vsub.s32 %v4622, %v4624
    %v4626 = vrot.slane %v4549, %v4625
    %v4628 = vunpack.c.l.s4 1983009808
    %v4629 = vunpack.c.0.s8 %v4628
    %v4630 = vlaneseq
    %v4631 = vshrl.u32 %v4630, 7
    %v4632 = vsub.s32 %v4629, %v4631
    %v4633 = vrot.slane %v4619, %v4632
    %v4634 = vcombine.high %v4626, %v4626
    %v4635 = vcombine.high %v4633, %v4633
    %v4636 = vcombine.high %v4554, %v4554
    %v4638 = vunpack.c.l.s4 1983009808
    %v4639 = vunpack.c.0.s8 %v4638
    %v4640 = vlaneseq
    %v4641 = vshrl.u32 %v4640, 7
    %v4642 = vsub.s32 %v4639, %v4641
    %v4643 = vrot.slane %v4554, %v4642
    %v4645 = vunpack.c.l.s4 1983009808
    %v4646 = vunpack.c.0.s8 %v4645
    %v4647 = vlaneseq
    %v4648 = vshrl.u32 %v4647, 7
    %v4649 = vsub.s32 %v4646, %v4648
    %v4650 = vrot.slane %v4636, %v4649
    %v4651 = vcombine.high %v4643, %v4643
    %v4652 = vcombine.high %v4650, %v4650
    %v4653 = vcombine.high %v4559, %v4559
    %v4655 = vunpack.c.l.s4 1983009808
    %v4656 = vunpack.c.0.s8 %v4655
    %v4657 = vlaneseq
    %v4658 = vshrl.u32 %v4657, 7
    %v4659 = vsub.s32 %v4656, %v4658
    %v4660 = vrot.slane %v4559, %v4659
    %v4662 = vunpack.c.l.s4 1983009808
    %v4663 = vunpack.c.0.s8 %v4662
    %v4664 = vlaneseq
    %v4665 = vshrl.u32 %v4664, 7
    %v4666 = vsub.s32 %v4663, %v4665
    %v4667 = vrot.slane %v4653, %v4666
    %v4668 = vcombine.high %v4660, %v4660
    %v4669 = vcombine.high %v4667, %v4667
    %v4670 = vcombine.high %v4564, %v4564
    %v4672 = vunpack.c.l.s4 1983009808
    %v4673 = vunpack.c.0.s8 %v4672
    %v4674 = vlaneseq
    %v4675 = vshrl.u32 %v4674, 7
    %v4676 = vsub.s32 %v4673, %v4675
    %v4677 = vrot.slane %v4564, %v4676
    %v4679 = vunpack.c.l.s4 1983009808
    %v4680 = vunpack.c.0.s8 %v4679
    %v4681 = vlaneseq
    %v4682 = vshrl.u32 %v4681, 7
    %v4683 = vsub.s32 %v4680, %v4682
    %v4684 = vrot.slane %v4670, %v4683
    %v4685 = vcombine.high %v4677, %v4677
    %v4686 = vcombine.high %v4684, %v4684
    %v4687 = vcombine.high %v4569, %v4569
    %v4689 = vunpack.c.l.s4 1983009808
    %v4690 = vunpack.c.0.s8 %v4689
    %v4691 = vlaneseq
    %v4692 = vshrl.u32 %v4691, 7
    %v4693 = vsub.s32 %v4690, %v4692
    %v4694 = vrot.slane %v4569, %v4693
    %v4696 = vunpack.c.l.s4 1983009808
    %v4697 = vunpack.c.0.s8 %v4696
    %v4698 = vlaneseq
    %v4699 = vshrl.u32 %v4698, 7
    %v4700 = vsub.s32 %v4697, %v4699
    %v4701 = vrot.slane %v4687, %v4700
    %v4702 = vcombine.high %v4694, %v4694
    %v4703 = vcombine.high %v4701, %v4701
    %v4704 = vcombine.high %v4574, %v4574
    %v4706 = vunpack.c.l.s4 1983009808
    %v4707 = vunpack.c.0.s8 %v4706
    %v4708 = vlaneseq
    %v4709 = vshrl.u32 %v4708, 7
    %v4710 = vsub.s32 %v4707, %v4709
    %v4711 = vrot.slane %v4574, %v4710
    %v4713 = vunpack.c.l.s4 1983009808
    %v4714 = vunpack.c.0.s8 %v4713
    %v4715 = vlaneseq
    %v4716 = vshrl.u32 %v4715, 7
    %v4717 = vsub.s32 %v4714, %v4716
    %v4718 = vrot.slane %v4704, %v4717
    %v4719 = vcombine.high %v4711, %v4711
    %v4720 = vcombine.high %v4718, %v4718
    %v4721 = vcombine.high %v4579, %v4579
    %v4723 = vunpack.c.l.s4 1983009808
    %v4724 = vunpack.c.0.s8 %v4723
    %v4725 = vlaneseq
    %v4726 = vshrl.u32 %v4725, 7
    %v4727 = vsub.s32 %v4724, %v4726
    %v4728 = vrot.slane %v4579, %v4727
    %v4730 = vunpack.c.l.s4 1983009808
    %v4731 = vunpack.c.0.s8 %v4730
    %v4732 = vlaneseq
    %v4733 = vshrl.u32 %v4732, 7
    %v4734 = vsub.s32 %v4731, %v4733
    %v4735 = vrot.slane %v4721, %v4734
    %v4736 = vcombine.high %v4728, %v4728
    %v4737 = vcombine.high %v4735, %v4735
    %v4738 = vcombine.high %v4584, %v4584
    %v4740 = vunpack.c.l.s4 1983009808
    %v4741 = vunpack.c.0.s8 %v4740
    %v4742 = vlaneseq
    %v4743 = vshrl.u32 %v4742, 7
    %v4744 = vsub.s32 %v4741, %v4743
    %v4745 = vrot.slane %v4584, %v4744
    %v4747 = vunpack.c.l.s4 1983009808
    %v4748 = vunpack.c.0.s8 %v4747
    %v4749 = vlaneseq
    %v4750 = vshrl.u32 %v4749, 7
    %v4751 = vsub.s32 %v4748, %v4750
    %v4752 = vrot.slane %v4738, %v4751
    %v4753 = vcombine.high %v4745, %v4745
    %v4754 = vcombine.high %v4752, %v4752
    %v4755 = vcombine.high %v4589, %v4589
    %v4757 = vunpack.c.l.s4 1983009808
    %v4758 = vunpack.c.0.s8 %v4757
    %v4759 = vlaneseq
    %v4760 = vshrl.u32 %v4759, 7
    %v4761 = vsub.s32 %v4758, %v4760
    %v4762 = vrot.slane %v4589, %v4761
    %v4764 = vunpack.c.l.s4 1983009808
    %v4765 = vunpack.c.0.s8 %v4764
    %v4766 = vlaneseq
    %v4767 = vshrl.u32 %v4766, 7
    %v4768 = vsub.s32 %v4765, %v4767
    %v4769 = vrot.slane %v4755, %v4768
    %v4770 = vcombine.high %v4762, %v4762
    %v4771 = vcombine.high %v4769, %v4769
    %v4812 = vmul.f32 %v4617, %v4609
    %v4813 = vmul.f32 %v4616, %v4617
    %v4814 = vmul.f32 %v4618, %v4616
    %v4815 = vmul.f32 %v4626, %v4618
    %v4816 = vmul.f32 %v4633, %v4634
    %v4817 = vmul.f32 %v4635, %v4633
    %v4818 = vmul.f32 %v4643, %v4635
    %v4819 = vmul.f32 %v4651, %v4643
    %v4820 = vmul.f32 %v4652, %v4650
    %v4821 = vmul.f32 %v4660, %v4652
    %v4822 = vmul.f32 %v4668, %v4660
    %v4823 = vmul.f32 %v4667, %v4668
    %v4824 = vmul.f32 %v4677, %v4669
    %v4825 = vmul.f32 %v4685, %v4677
    %v4826 = vmul.f32 %v4684, %v4685
    %v4827 = vmul.f32 %v4686, %v4684
    %v4828 = vmul.f32 %v4702, %v4694
    %v4829 = vmul.f32 %v4701, %v4702
    %v4830 = vmul.f32 %v4703, %v4701
    %v4831 = vmul.f32 %v4711, %v4703
    %v4832 = vmul.f32 %v4718, %v4719
    %v4833 = vmul.f32 %v4720, %v4718
    %v4834 = vmul.f32 %v4728, %v4720
    %v4835 = vmul.f32 %v4736, %v4728
    %v4836 = vmul.f32 %v4737, %v4735
    %v4837 = vmul.f32 %v4745, %v4737
    %v4838 = vmul.f32 %v4753, %v4745
    %v4839 = vmul.f32 %v4752, %v4753
    %v4840 = vmul.f32 %v4762, %v4754
    %v4841 = vmul.f32 %v4770, %v4762
    %v4842 = vmul.f32 %v4769, %v4770
    %v4843 = vmul.f32 %v4771, %v4769
    %v4876 = vcombine.low %v4812, %v4813
    %v4877 = vcombine.low %v4814, %v4815
    %v4879 = vunpack.c.l.s4 1983009808
    %v4880 = vunpack.c.0.s8 %v4879
    %v4881 = vlaneseq
    %v4882 = vshrl.u32 %v4881, 7
    %v4883 = vsub.s32 %v4880, %v4882
    %v4884 = vrot.slane %v4876, %v4883
    %v4886 = vunpack.c.l.s4 1983009808
    %v4887 = vunpack.c.0.s8 %v4886
    %v4888 = vlaneseq
    %v4889 = vshrl.u32 %v4888, 7
    %v4890 = vsub.s32 %v4887, %v4889
    %v4891 = vrot.slane %v4877, %v4890
    %v4892 = vcombine.low %v4884, %v4891
    %v4893 = vcombine.low %v4816, %v4817
    %v4894 = vcombine.low %v4818, %v4819
    %v4896 = vunpack.c.l.s4 1983009808
    %v4897 = vunpack.c.0.s8 %v4896
    %v4898 = vlaneseq
    %v4899 = vshrl.u32 %v4898, 7
    %v4900 = vsub.s32 %v4897, %v4899
    %v4901 = vrot.slane %v4893, %v4900
    %v4903 = vunpack.c.l.s4 1983009808
    %v4904 = vunpack.c.0.s8 %v4903
    %v4905 = vlaneseq
    %v4906 = vshrl.u32 %v4905, 7
    %v4907 = vsub.s32 %v4904, %v4906
    %v4908 = vrot.slane %v4894, %v4907
    %v4909 = vcombine.low %v4901, %v4908
    %v4910 = vcombine.low %v4820, %v4821
    %v4911 = vcombine.low %v4822, %v4823
    %v4913 = vunpack.c.l.s4 1983009808
    %v4914 = vunpack.c.0.s8 %v4913
    %v4915 = vlaneseq
    %v4916 = vshrl.u32 %v4915, 7
    %v4917 = vsub.s32 %v4914, %v4916
    %v4918 = vrot.slane %v4910, %v4917
    %v4920 = vunpack.c.l.s4 1983009808
    %v4921 = vunpack.c.0.s8 %v4920
    %v4922 = vlaneseq
    %v4923 = vshrl.u32 %v4922, 7
    %v4924 = vsub.s32 %v4921, %v4923
    %v4925 = vrot.slane %v4911, %v4924
    %v4926 = vcombine.low %v4918, %v4925
    %v4927 = vcombine.low %v4824, %v4825
    %v4928 = vcombine.low %v4826, %v4827
    %v4930 = vunpack.c.l.s4 1983009808
    %v4931 = vunpack.c.0.s8 %v4930
    %v4932 = vlaneseq
    %v4933 = vshrl.u32 %v4932, 7
    %v4934 = vsub.s32 %v4931, %v4933
    %v4935 = vrot.slane %v4927, %v4934
    %v4937 = vunpack.c.l.s4 1983009808
    %v4938 = vunpack.c.0.s8 %v4937
    %v4939 = vlaneseq
    %v4940 = vshrl.u32 %v4939, 7
    %v4941 = vsub.s32 %v4938, %v4940
    %v4942 = vrot.slane %v4928, %v4941
    %v4943 = vcombine.low %v4935, %v4942
    %v4944 = vcombine.low %v4828, %v4829
    %v4945 = vcombine.low %v4830, %v4831
    %v4947 = vunpack.c.l.s4 1983009808
    %v4948 = vunpack.c.0.s8 %v4947
    %v4949 = vlaneseq
    %v4950 = vshrl.u32 %v4949, 7
    %v4951 = vsub.s32 %v4948, %v4950
    %v4952 = vrot.slane %v4944, %v4951
    %v4954 = vunpack.c.l.s4 1983009808
    %v4955 = vunpack.c.0.s8 %v4954
    %v4956 = vlaneseq
    %v4957 = vshrl.u32 %v4956, 7
    %v4958 = vsub.s32 %v4955, %v4957
    %v4959 = vrot.slane %v4945, %v4958
    %v4960 = vcombine.low %v4952, %v4959
    %v4961 = vcombine.low %v4832, %v4833
    %v4962 = vcombine.low %v4834, %v4835
    %v4964 = vunpack.c.l.s4 1983009808
    %v4965 = vunpack.c.0.s8 %v4964
    %v4966 = vlaneseq
    %v4967 = vshrl.u32 %v4966, 7
    %v4968 = vsub.s32 %v4965, %v4967
    %v4969 = vrot.slane %v4961, %v4968
    %v4971 = vunpack.c.l.s4 1983009808
    %v4972 = vunpack.c.0.s8 %v4971
    %v4973 = vlaneseq
    %v4974 = vshrl.u32 %v4973, 7
    %v4975 = vsub.s32 %v4972, %v4974
    %v4976 = vrot.slane %v4962, %v4975
    %v4977 = vcombine.low %v4969, %v4976
    %v4978 = vcombine.low %v4836, %v4837
    %v4979 = vcombine.low %v4838, %v4839
    %v4981 = vunpack.c.l.s4 1983009808
    %v4982 = vunpack.c.0.s8 %v4981
    %v4983 = vlaneseq
    %v4984 = vshrl.u32 %v4983, 7
    %v4985 = vsub.s32 %v4982, %v4984
    %v4986 = vrot.slane %v4978, %v4985
    %v4988 = vunpack.c.l.s4 1983009808
    %v4989 = vunpack.c.0.s8 %v4988
    %v4990 = vlaneseq
    %v4991 = vshrl.u32 %v4990, 7
    %v4992 = vsub.s32 %v4989, %v4991
    %v4993 = vrot.slane %v4979, %v4992
    %v4994 = vcombine.low %v4986, %v4993
    %v4995 = vcombine.low %v4840, %v4841
    %v4996 = vcombine.low %v4842, %v4843
    %v4998 = vunpack.c.l.s4 1983009808
    %v4999 = vunpack.c.0.s8 %v4998
    %v5000 = vlaneseq
    %v5001 = vshrl.u32 %v5000, 7
    %v5002 = vsub.s32 %v4999, %v5001
    %v5003 = vrot.slane %v4995, %v5002
    %v5005 = vunpack.c.l.s4 1983009808
    %v5006 = vunpack.c.0.s8 %v5005
    %v5007 = vlaneseq
    %v5008 = vshrl.u32 %v5007, 7
    %v5009 = vsub.s32 %v5006, %v5008
    %v5010 = vrot.slane %v4996, %v5009
    %v5011 = vcombine.low %v5003, %v5010
    %v5020 = vsel %vm561, %v4892, 0.0
    %5021 = vadd.xlane.f32.xlu0 %v5020
    %v5022 = vpop.xlane.xlu0 %5021
    %v5023 = vsel %vm561, %v4909, 0.0
    %5024 = vadd.xlane.f32.xlu0 %v5023
    %v5025 = vpop.xlane.xlu0 %5024
    %v5026 = vsel %vm561, %v4926, 0.0
    %5027 = vadd.xlane.f32.xlu0 %v5026
    %v5028 = vpop.xlane.xlu0 %5027
    %v5029 = vsel %vm561, %v4943, 0.0
    %5030 = vadd.xlane.f32.xlu0 %v5029
    %v5031 = vpop.xlane.xlu0 %5030
    %v5032 = vsel %vm561, %v4960, 0.0
    %5033 = vadd.xlane.f32.xlu0 %v5032
    %v5034 = vpop.xlane.xlu0 %5033
    %v5035 = vsel %vm561, %v4977, 0.0
    %5036 = vadd.xlane.f32.xlu0 %v5035
    %v5037 = vpop.xlane.xlu0 %5036
    %v5038 = vsel %vm561, %v4994, 0.0
    %5039 = vadd.xlane.f32.xlu0 %v5038
    %v5040 = vpop.xlane.xlu0 %5039
    %v5041 = vsel %vm561, %v5011, 0.0
    %5042 = vadd.xlane.f32.xlu0 %v5041
    %v5043 = vpop.xlane.xlu0 %5042
    %v5044 = vmul.f32 %v5022, 0.17677669
    %v5045 = vmul.f32 %v5025, 0.17677669
    %v5046 = vmul.f32 %v5028, 0.17677669
    %v5047 = vmul.f32 %v5031, 0.17677669
    %v5048 = vmul.f32 %v5034, 0.17677669
    %v5049 = vmul.f32 %v5037, 0.17677669
    %v5050 = vmul.f32 %v5040, 0.17677669
    %v5051 = vmul.f32 %v5043, 0.17677669
    %v5052 = vrot.slane %v4609, 7
    %v5053 = vrot.slane %v5052, 2
    %v5054 = vrot.slane %v4617, 7
    %v5055 = vsel %vm1163, %v5053, %v5054
    %v5056 = vrot.slane %v5054, 2
    %v5057 = vrot.slane %v4616, 7
    %v5058 = vsel %vm1163, %v5056, %v5057
    %v5059 = vrot.slane %v5057, 2
    %v5060 = vrot.slane %v4618, 7
    %v5061 = vsel %vm1163, %v5059, %v5060
    %v5062 = vrot.slane %v5060, 2
    %v5063 = vrot.slane %v4626, 7
    %v5064 = vsel %vm1163, %v5062, %v5063
    %v5065 = vrot.slane %v4634, 7
    %v5066 = vrot.slane %v5065, 2
    %v5067 = vrot.slane %v4633, 7
    %v5068 = vsel %vm1163, %v5066, %v5067
    %v5069 = vrot.slane %v5067, 2
    %v5070 = vrot.slane %v4635, 7
    %v5071 = vsel %vm1163, %v5069, %v5070
    %v5072 = vrot.slane %v5070, 2
    %v5073 = vrot.slane %v4643, 7
    %v5074 = vsel %vm1163, %v5072, %v5073
    %v5075 = vrot.slane %v5073, 2
    %v5076 = vrot.slane %v4651, 7
    %v5077 = vsel %vm1163, %v5075, %v5076
    %v5078 = vrot.slane %v4650, 7
    %v5079 = vrot.slane %v5078, 2
    %v5080 = vrot.slane %v4652, 7
    %v5081 = vsel %vm1163, %v5079, %v5080
    %v5082 = vrot.slane %v5080, 2
    %v5083 = vrot.slane %v4660, 7
    %v5084 = vsel %vm1163, %v5082, %v5083
    %v5085 = vrot.slane %v5083, 2
    %v5086 = vrot.slane %v4668, 7
    %v5087 = vsel %vm1163, %v5085, %v5086
    %v5088 = vrot.slane %v5086, 2
    %v5089 = vrot.slane %v4667, 7
    %v5090 = vsel %vm1163, %v5088, %v5089
    %v5091 = vrot.slane %v4669, 7
    %v5092 = vrot.slane %v5091, 2
    %v5093 = vrot.slane %v4677, 7
    %v5094 = vsel %vm1163, %v5092, %v5093
    %v5095 = vrot.slane %v5093, 2
    %v5096 = vrot.slane %v4685, 7
    %v5097 = vsel %vm1163, %v5095, %v5096
    %v5098 = vrot.slane %v5096, 2
    %v5099 = vrot.slane %v4684, 7
    %v5100 = vsel %vm1163, %v5098, %v5099
    %v5101 = vrot.slane %v5099, 2
    %v5102 = vrot.slane %v4686, 7
    %v5103 = vsel %vm1163, %v5101, %v5102
    %v5104 = vrot.slane %v4694, 7
    %v5105 = vrot.slane %v5104, 2
    %v5106 = vrot.slane %v4702, 7
    %v5107 = vsel %vm1163, %v5105, %v5106
    %v5108 = vrot.slane %v5106, 2
    %v5109 = vrot.slane %v4701, 7
    %v5110 = vsel %vm1163, %v5108, %v5109
    %v5111 = vrot.slane %v5109, 2
    %v5112 = vrot.slane %v4703, 7
    %v5113 = vsel %vm1163, %v5111, %v5112
    %v5114 = vrot.slane %v5112, 2
    %v5115 = vrot.slane %v4711, 7
    %v5116 = vsel %vm1163, %v5114, %v5115
    %v5117 = vrot.slane %v4719, 7
    %v5118 = vrot.slane %v5117, 2
    %v5119 = vrot.slane %v4718, 7
    %v5120 = vsel %vm1163, %v5118, %v5119
    %v5121 = vrot.slane %v5119, 2
    %v5122 = vrot.slane %v4720, 7
    %v5123 = vsel %vm1163, %v5121, %v5122
    %v5124 = vrot.slane %v5122, 2
    %v5125 = vrot.slane %v4728, 7
    %v5126 = vsel %vm1163, %v5124, %v5125
    %v5127 = vrot.slane %v5125, 2
    %v5128 = vrot.slane %v4736, 7
    %v5129 = vsel %vm1163, %v5127, %v5128
    %v5130 = vrot.slane %v4735, 7
    %v5131 = vrot.slane %v5130, 2
    %v5132 = vrot.slane %v4737, 7
    %v5133 = vsel %vm1163, %v5131, %v5132
    %v5134 = vrot.slane %v5132, 2
    %v5135 = vrot.slane %v4745, 7
    %v5136 = vsel %vm1163, %v5134, %v5135
    %v5137 = vrot.slane %v5135, 2
    %v5138 = vrot.slane %v4753, 7
    %v5139 = vsel %vm1163, %v5137, %v5138
    %v5140 = vrot.slane %v5138, 2
    %v5141 = vrot.slane %v4752, 7
    %v5142 = vsel %vm1163, %v5140, %v5141
    %v5143 = vrot.slane %v4754, 7
    %v5144 = vrot.slane %v5143, 2
    %v5145 = vrot.slane %v4762, 7
    %v5146 = vsel %vm1163, %v5144, %v5145
    %v5147 = vrot.slane %v5145, 2
    %v5148 = vrot.slane %v4770, 7
    %v5149 = vsel %vm1163, %v5147, %v5148
    %v5150 = vrot.slane %v5148, 2
    %v5151 = vrot.slane %v4769, 7
    %v5152 = vsel %vm1163, %v5150, %v5151
    %v5153 = vrot.slane %v5151, 2
    %v5154 = vrot.slane %v4771, 7
    %v5155 = vsel %vm1163, %v5153, %v5154
    %v5188 = vmul.f32 %v4617, %v5055
    %v5189 = vmul.f32 %v4616, %v5058
    %v5190 = vmul.f32 %v4618, %v5061
    %v5191 = vmul.f32 %v4626, %v5064
    %v5192 = vmul.f32 %v4633, %v5068
    %v5193 = vmul.f32 %v4635, %v5071
    %v5194 = vmul.f32 %v4643, %v5074
    %v5195 = vmul.f32 %v4651, %v5077
    %v5196 = vmul.f32 %v4652, %v5081
    %v5197 = vmul.f32 %v4660, %v5084
    %v5198 = vmul.f32 %v4668, %v5087
    %v5199 = vmul.f32 %v4667, %v5090
    %v5200 = vmul.f32 %v4677, %v5094
    %v5201 = vmul.f32 %v4685, %v5097
    %v5202 = vmul.f32 %v4684, %v5100
    %v5203 = vmul.f32 %v4686, %v5103
    %v5204 = vmul.f32 %v4702, %v5107
    %v5205 = vmul.f32 %v4701, %v5110
    %v5206 = vmul.f32 %v4703, %v5113
    %v5207 = vmul.f32 %v4711, %v5116
    %v5208 = vmul.f32 %v4718, %v5120
    %v5209 = vmul.f32 %v4720, %v5123
    %v5210 = vmul.f32 %v4728, %v5126
    %v5211 = vmul.f32 %v4736, %v5129
    %v5212 = vmul.f32 %v4737, %v5133
    %v5213 = vmul.f32 %v4745, %v5136
    %v5214 = vmul.f32 %v4753, %v5139
    %v5215 = vmul.f32 %v4752, %v5142
    %v5216 = vmul.f32 %v4762, %v5146
    %v5217 = vmul.f32 %v4770, %v5149
    %v5218 = vmul.f32 %v4769, %v5152
    %v5219 = vmul.f32 %v4771, %v5155
    %v5252 = vcombine.low %v5188, %v5189
    %v5253 = vcombine.low %v5190, %v5191
    %v5255 = vunpack.c.l.s4 1983009808
    %v5256 = vunpack.c.0.s8 %v5255
    %v5257 = vlaneseq
    %v5258 = vshrl.u32 %v5257, 7
    %v5259 = vsub.s32 %v5256, %v5258
    %v5260 = vrot.slane %v5252, %v5259
    %v5262 = vunpack.c.l.s4 1983009808
    %v5263 = vunpack.c.0.s8 %v5262
    %v5264 = vlaneseq
    %v5265 = vshrl.u32 %v5264, 7
    %v5266 = vsub.s32 %v5263, %v5265
    %v5267 = vrot.slane %v5253, %v5266
    %v5268 = vcombine.low %v5260, %v5267
    %v5269 = vcombine.low %v5192, %v5193
    %v5270 = vcombine.low %v5194, %v5195
    %v5272 = vunpack.c.l.s4 1983009808
    %v5273 = vunpack.c.0.s8 %v5272
    %v5274 = vlaneseq
    %v5275 = vshrl.u32 %v5274, 7
    %v5276 = vsub.s32 %v5273, %v5275
    %v5277 = vrot.slane %v5269, %v5276
    %v5279 = vunpack.c.l.s4 1983009808
    %v5280 = vunpack.c.0.s8 %v5279
    %v5281 = vlaneseq
    %v5282 = vshrl.u32 %v5281, 7
    %v5283 = vsub.s32 %v5280, %v5282
    %v5284 = vrot.slane %v5270, %v5283
    %v5285 = vcombine.low %v5277, %v5284
    %v5286 = vcombine.low %v5196, %v5197
    %v5287 = vcombine.low %v5198, %v5199
    %v5289 = vunpack.c.l.s4 1983009808
    %v5290 = vunpack.c.0.s8 %v5289
    %v5291 = vlaneseq
    %v5292 = vshrl.u32 %v5291, 7
    %v5293 = vsub.s32 %v5290, %v5292
    %v5294 = vrot.slane %v5286, %v5293
    %v5296 = vunpack.c.l.s4 1983009808
    %v5297 = vunpack.c.0.s8 %v5296
    %v5298 = vlaneseq
    %v5299 = vshrl.u32 %v5298, 7
    %v5300 = vsub.s32 %v5297, %v5299
    %v5301 = vrot.slane %v5287, %v5300
    %v5302 = vcombine.low %v5294, %v5301
    %v5303 = vcombine.low %v5200, %v5201
    %v5304 = vcombine.low %v5202, %v5203
    %v5306 = vunpack.c.l.s4 1983009808
    %v5307 = vunpack.c.0.s8 %v5306
    %v5308 = vlaneseq
    %v5309 = vshrl.u32 %v5308, 7
    %v5310 = vsub.s32 %v5307, %v5309
    %v5311 = vrot.slane %v5303, %v5310
    %v5313 = vunpack.c.l.s4 1983009808
    %v5314 = vunpack.c.0.s8 %v5313
    %v5315 = vlaneseq
    %v5316 = vshrl.u32 %v5315, 7
    %v5317 = vsub.s32 %v5314, %v5316
    %v5318 = vrot.slane %v5304, %v5317
    %v5319 = vcombine.low %v5311, %v5318
    %v5320 = vcombine.low %v5204, %v5205
    %v5321 = vcombine.low %v5206, %v5207
    %v5323 = vunpack.c.l.s4 1983009808
    %v5324 = vunpack.c.0.s8 %v5323
    %v5325 = vlaneseq
    %v5326 = vshrl.u32 %v5325, 7
    %v5327 = vsub.s32 %v5324, %v5326
    %v5328 = vrot.slane %v5320, %v5327
    %v5330 = vunpack.c.l.s4 1983009808
    %v5331 = vunpack.c.0.s8 %v5330
    %v5332 = vlaneseq
    %v5333 = vshrl.u32 %v5332, 7
    %v5334 = vsub.s32 %v5331, %v5333
    %v5335 = vrot.slane %v5321, %v5334
    %v5336 = vcombine.low %v5328, %v5335
    %v5337 = vcombine.low %v5208, %v5209
    %v5338 = vcombine.low %v5210, %v5211
    %v5340 = vunpack.c.l.s4 1983009808
    %v5341 = vunpack.c.0.s8 %v5340
    %v5342 = vlaneseq
    %v5343 = vshrl.u32 %v5342, 7
    %v5344 = vsub.s32 %v5341, %v5343
    %v5345 = vrot.slane %v5337, %v5344
    %v5347 = vunpack.c.l.s4 1983009808
    %v5348 = vunpack.c.0.s8 %v5347
    %v5349 = vlaneseq
    %v5350 = vshrl.u32 %v5349, 7
    %v5351 = vsub.s32 %v5348, %v5350
    %v5352 = vrot.slane %v5338, %v5351
    %v5353 = vcombine.low %v5345, %v5352
    %v5354 = vcombine.low %v5212, %v5213
    %v5355 = vcombine.low %v5214, %v5215
    %v5357 = vunpack.c.l.s4 1983009808
    %v5358 = vunpack.c.0.s8 %v5357
    %v5359 = vlaneseq
    %v5360 = vshrl.u32 %v5359, 7
    %v5361 = vsub.s32 %v5358, %v5360
    %v5362 = vrot.slane %v5354, %v5361
    %v5364 = vunpack.c.l.s4 1983009808
    %v5365 = vunpack.c.0.s8 %v5364
    %v5366 = vlaneseq
    %v5367 = vshrl.u32 %v5366, 7
    %v5368 = vsub.s32 %v5365, %v5367
    %v5369 = vrot.slane %v5355, %v5368
    %v5370 = vcombine.low %v5362, %v5369
    %v5371 = vcombine.low %v5216, %v5217
    %v5372 = vcombine.low %v5218, %v5219
    %v5374 = vunpack.c.l.s4 1983009808
    %v5375 = vunpack.c.0.s8 %v5374
    %v5376 = vlaneseq
    %v5377 = vshrl.u32 %v5376, 7
    %v5378 = vsub.s32 %v5375, %v5377
    %v5379 = vrot.slane %v5371, %v5378
    %v5381 = vunpack.c.l.s4 1983009808
    %v5382 = vunpack.c.0.s8 %v5381
    %v5383 = vlaneseq
    %v5384 = vshrl.u32 %v5383, 7
    %v5385 = vsub.s32 %v5382, %v5384
    %v5386 = vrot.slane %v5372, %v5385
    %v5387 = vcombine.low %v5379, %v5386
    %v5396 = vsel %vm561, %v5268, 0.0
    %5397 = vadd.xlane.f32.xlu0 %v5396
    %v5398 = vpop.xlane.xlu0 %5397
    %v5399 = vsel %vm561, %v5285, 0.0
    %5400 = vadd.xlane.f32.xlu0 %v5399
    %v5401 = vpop.xlane.xlu0 %5400
    %v5402 = vsel %vm561, %v5302, 0.0
    %5403 = vadd.xlane.f32.xlu0 %v5402
    %v5404 = vpop.xlane.xlu0 %5403
    %v5405 = vsel %vm561, %v5319, 0.0
    %5406 = vadd.xlane.f32.xlu0 %v5405
    %v5407 = vpop.xlane.xlu0 %5406
    %v5408 = vsel %vm561, %v5336, 0.0
    %5409 = vadd.xlane.f32.xlu0 %v5408
    %v5410 = vpop.xlane.xlu0 %5409
    %v5411 = vsel %vm561, %v5353, 0.0
    %5412 = vadd.xlane.f32.xlu0 %v5411
    %v5413 = vpop.xlane.xlu0 %5412
    %v5414 = vsel %vm561, %v5370, 0.0
    %5415 = vadd.xlane.f32.xlu0 %v5414
    %v5416 = vpop.xlane.xlu0 %5415
    %v5417 = vsel %vm561, %v5387, 0.0
    %5418 = vadd.xlane.f32.xlu0 %v5417
    %v5419 = vpop.xlane.xlu0 %5418
    %v5420 = vmul.f32 %v5398, 0.17677669
    %v5421 = vmul.f32 %v5401, 0.17677669
    %v5422 = vmul.f32 %v5404, 0.17677669
    %v5423 = vmul.f32 %v5407, 0.17677669
    %v5424 = vmul.f32 %v5410, 0.17677669
    %v5425 = vmul.f32 %v5413, 0.17677669
    %v5426 = vmul.f32 %v5416, 0.17677669
    %v5427 = vmul.f32 %v5419, 0.17677669
    %v5428 = vmul.f32 %v4617, %v4617
    %v5429 = vmul.f32 %v4616, %v4616
    %v5430 = vmul.f32 %v4618, %v4618
    %v5431 = vmul.f32 %v4626, %v4626
    %v5432 = vmul.f32 %v4633, %v4633
    %v5433 = vmul.f32 %v4635, %v4635
    %v5434 = vmul.f32 %v4643, %v4643
    %v5435 = vmul.f32 %v4651, %v4651
    %v5436 = vmul.f32 %v4652, %v4652
    %v5437 = vmul.f32 %v4660, %v4660
    %v5438 = vmul.f32 %v4668, %v4668
    %v5439 = vmul.f32 %v4667, %v4667
    %v5440 = vmul.f32 %v4677, %v4677
    %v5441 = vmul.f32 %v4685, %v4685
    %v5442 = vmul.f32 %v4684, %v4684
    %v5443 = vmul.f32 %v4686, %v4686
    %v5444 = vmul.f32 %v4702, %v4702
    %v5445 = vmul.f32 %v4701, %v4701
    %v5446 = vmul.f32 %v4703, %v4703
    %v5447 = vmul.f32 %v4711, %v4711
    %v5448 = vmul.f32 %v4718, %v4718
    %v5449 = vmul.f32 %v4720, %v4720
    %v5450 = vmul.f32 %v4728, %v4728
    %v5451 = vmul.f32 %v4736, %v4736
    %v5452 = vmul.f32 %v4737, %v4737
    %v5453 = vmul.f32 %v4745, %v4745
    %v5454 = vmul.f32 %v4753, %v4753
    %v5455 = vmul.f32 %v4752, %v4752
    %v5456 = vmul.f32 %v4762, %v4762
    %v5457 = vmul.f32 %v4770, %v4770
    %v5458 = vmul.f32 %v4769, %v4769
    %v5459 = vmul.f32 %v4771, %v4771
    %v5492 = vcombine.low %v5428, %v5429
    %v5493 = vcombine.low %v5430, %v5431
    %v5495 = vunpack.c.l.s4 1983009808
    %v5496 = vunpack.c.0.s8 %v5495
    %v5497 = vlaneseq
    %v5498 = vshrl.u32 %v5497, 7
    %v5499 = vsub.s32 %v5496, %v5498
    %v5500 = vrot.slane %v5492, %v5499
    %v5502 = vunpack.c.l.s4 1983009808
    %v5503 = vunpack.c.0.s8 %v5502
    %v5504 = vlaneseq
    %v5505 = vshrl.u32 %v5504, 7
    %v5506 = vsub.s32 %v5503, %v5505
    %v5507 = vrot.slane %v5493, %v5506
    %v5508 = vcombine.low %v5500, %v5507
    %v5509 = vcombine.low %v5432, %v5433
    %v5510 = vcombine.low %v5434, %v5435
    %v5512 = vunpack.c.l.s4 1983009808
    %v5513 = vunpack.c.0.s8 %v5512
    %v5514 = vlaneseq
    %v5515 = vshrl.u32 %v5514, 7
    %v5516 = vsub.s32 %v5513, %v5515
    %v5517 = vrot.slane %v5509, %v5516
    %v5519 = vunpack.c.l.s4 1983009808
    %v5520 = vunpack.c.0.s8 %v5519
    %v5521 = vlaneseq
    %v5522 = vshrl.u32 %v5521, 7
    %v5523 = vsub.s32 %v5520, %v5522
    %v5524 = vrot.slane %v5510, %v5523
    %v5525 = vcombine.low %v5517, %v5524
    %v5526 = vcombine.low %v5436, %v5437
    %v5527 = vcombine.low %v5438, %v5439
    %v5529 = vunpack.c.l.s4 1983009808
    %v5530 = vunpack.c.0.s8 %v5529
    %v5531 = vlaneseq
    %v5532 = vshrl.u32 %v5531, 7
    %v5533 = vsub.s32 %v5530, %v5532
    %v5534 = vrot.slane %v5526, %v5533
    %v5536 = vunpack.c.l.s4 1983009808
    %v5537 = vunpack.c.0.s8 %v5536
    %v5538 = vlaneseq
    %v5539 = vshrl.u32 %v5538, 7
    %v5540 = vsub.s32 %v5537, %v5539
    %v5541 = vrot.slane %v5527, %v5540
    %v5542 = vcombine.low %v5534, %v5541
    %v5543 = vcombine.low %v5440, %v5441
    %v5544 = vcombine.low %v5442, %v5443
    %v5546 = vunpack.c.l.s4 1983009808
    %v5547 = vunpack.c.0.s8 %v5546
    %v5548 = vlaneseq
    %v5549 = vshrl.u32 %v5548, 7
    %v5550 = vsub.s32 %v5547, %v5549
    %v5551 = vrot.slane %v5543, %v5550
    %v5553 = vunpack.c.l.s4 1983009808
    %v5554 = vunpack.c.0.s8 %v5553
    %v5555 = vlaneseq
    %v5556 = vshrl.u32 %v5555, 7
    %v5557 = vsub.s32 %v5554, %v5556
    %v5558 = vrot.slane %v5544, %v5557
    %v5559 = vcombine.low %v5551, %v5558
    %v5560 = vcombine.low %v5444, %v5445
    %v5561 = vcombine.low %v5446, %v5447
    %v5563 = vunpack.c.l.s4 1983009808
    %v5564 = vunpack.c.0.s8 %v5563
    %v5565 = vlaneseq
    %v5566 = vshrl.u32 %v5565, 7
    %v5567 = vsub.s32 %v5564, %v5566
    %v5568 = vrot.slane %v5560, %v5567
    %v5570 = vunpack.c.l.s4 1983009808
    %v5571 = vunpack.c.0.s8 %v5570
    %v5572 = vlaneseq
    %v5573 = vshrl.u32 %v5572, 7
    %v5574 = vsub.s32 %v5571, %v5573
    %v5575 = vrot.slane %v5561, %v5574
    %v5576 = vcombine.low %v5568, %v5575
    %v5577 = vcombine.low %v5448, %v5449
    %v5578 = vcombine.low %v5450, %v5451
    %v5580 = vunpack.c.l.s4 1983009808
    %v5581 = vunpack.c.0.s8 %v5580
    %v5582 = vlaneseq
    %v5583 = vshrl.u32 %v5582, 7
    %v5584 = vsub.s32 %v5581, %v5583
    %v5585 = vrot.slane %v5577, %v5584
    %v5587 = vunpack.c.l.s4 1983009808
    %v5588 = vunpack.c.0.s8 %v5587
    %v5589 = vlaneseq
    %v5590 = vshrl.u32 %v5589, 7
    %v5591 = vsub.s32 %v5588, %v5590
    %v5592 = vrot.slane %v5578, %v5591
    %v5593 = vcombine.low %v5585, %v5592
    %v5594 = vcombine.low %v5452, %v5453
    %v5595 = vcombine.low %v5454, %v5455
    %v5597 = vunpack.c.l.s4 1983009808
    %v5598 = vunpack.c.0.s8 %v5597
    %v5599 = vlaneseq
    %v5600 = vshrl.u32 %v5599, 7
    %v5601 = vsub.s32 %v5598, %v5600
    %v5602 = vrot.slane %v5594, %v5601
    %v5604 = vunpack.c.l.s4 1983009808
    %v5605 = vunpack.c.0.s8 %v5604
    %v5606 = vlaneseq
    %v5607 = vshrl.u32 %v5606, 7
    %v5608 = vsub.s32 %v5605, %v5607
    %v5609 = vrot.slane %v5595, %v5608
    %v5610 = vcombine.low %v5602, %v5609
    %v5611 = vcombine.low %v5456, %v5457
    %v5612 = vcombine.low %v5458, %v5459
    %v5614 = vunpack.c.l.s4 1983009808
    %v5615 = vunpack.c.0.s8 %v5614
    %v5616 = vlaneseq
    %v5617 = vshrl.u32 %v5616, 7
    %v5618 = vsub.s32 %v5615, %v5617
    %v5619 = vrot.slane %v5611, %v5618
    %v5621 = vunpack.c.l.s4 1983009808
    %v5622 = vunpack.c.0.s8 %v5621
    %v5623 = vlaneseq
    %v5624 = vshrl.u32 %v5623, 7
    %v5625 = vsub.s32 %v5622, %v5624
    %v5626 = vrot.slane %v5612, %v5625
    %v5627 = vcombine.low %v5619, %v5626
    %v5636 = vsel %vm561, %v5508, 0.0
    %5637 = vadd.xlane.f32.xlu0 %v5636
    %v5638 = vpop.xlane.xlu0 %5637
    %v5639 = vsel %vm561, %v5525, 0.0
    %5640 = vadd.xlane.f32.xlu0 %v5639
    %v5641 = vpop.xlane.xlu0 %5640
    %v5642 = vsel %vm561, %v5542, 0.0
    %5643 = vadd.xlane.f32.xlu0 %v5642
    %v5644 = vpop.xlane.xlu0 %5643
    %v5645 = vsel %vm561, %v5559, 0.0
    %5646 = vadd.xlane.f32.xlu0 %v5645
    %v5647 = vpop.xlane.xlu0 %5646
    %v5648 = vsel %vm561, %v5576, 0.0
    %5649 = vadd.xlane.f32.xlu0 %v5648
    %v5650 = vpop.xlane.xlu0 %5649
    %v5651 = vsel %vm561, %v5593, 0.0
    %5652 = vadd.xlane.f32.xlu0 %v5651
    %v5653 = vpop.xlane.xlu0 %5652
    %v5654 = vsel %vm561, %v5610, 0.0
    %5655 = vadd.xlane.f32.xlu0 %v5654
    %v5656 = vpop.xlane.xlu0 %5655
    %v5657 = vsel %vm561, %v5627, 0.0
    %5658 = vadd.xlane.f32.xlu0 %v5657
    %v5659 = vpop.xlane.xlu0 %5658
    %v5660 = vmul.f32 %v5638, 0.17677669
    %v5661 = vmul.f32 %v5641, 0.17677669
    %v5662 = vmul.f32 %v5644, 0.17677669
    %v5663 = vmul.f32 %v5647, 0.17677669
    %v5664 = vmul.f32 %v5650, 0.17677669
    %v5665 = vmul.f32 %v5653, 0.17677669
    %v5666 = vmul.f32 %v5656, 0.17677669
    %v5667 = vmul.f32 %v5659, 0.17677669
    %v5668 = vmax.f32 %v5044, %v5420
    %v5669 = vmax.f32 %v5045, %v5421
    %v5670 = vmax.f32 %v5046, %v5422
    %v5671 = vmax.f32 %v5047, %v5423
    %v5672 = vmax.f32 %v5048, %v5424
    %v5673 = vmax.f32 %v5049, %v5425
    %v5674 = vmax.f32 %v5050, %v5426
    %v5675 = vmax.f32 %v5051, %v5427
    %v5676 = vmax.f32 %v5668, %v5660
    %v5677 = vmax.f32 %v5669, %v5661
    %v5678 = vmax.f32 %v5670, %v5662
    %v5679 = vmax.f32 %v5671, %v5663
    %v5680 = vmax.f32 %v5672, %v5664
    %v5681 = vmax.f32 %v5673, %v5665
    %v5682 = vmax.f32 %v5674, %v5666
    %v5683 = vmax.f32 %v5675, %v5667
    %v5684 = vsub.f32 %v5044, %v5676
    %v5685 = vsub.f32 %v5045, %v5677
    %v5686 = vsub.f32 %v5046, %v5678
    %v5687 = vsub.f32 %v5047, %v5679
    %v5688 = vsub.f32 %v5048, %v5680
    %v5689 = vsub.f32 %v5049, %v5681
    %v5690 = vsub.f32 %v5050, %v5682
    %v5691 = vsub.f32 %v5051, %v5683
    %v5692 = vmul.f32 %v5684, 1.442695
    %v5693 = vpow.pop %v5692
    %v5694 = vmul.f32 %v5685, 1.442695
    %v5695 = vpow.pop %v5694
    %v5696 = vmul.f32 %v5686, 1.442695
    %v5697 = vpow.pop %v5696
    %v5698 = vmul.f32 %v5687, 1.442695
    %v5699 = vpow.pop %v5698
    %v5700 = vmul.f32 %v5688, 1.442695
    %v5701 = vpow.pop %v5700
    %v5702 = vmul.f32 %v5689, 1.442695
    %v5703 = vpow.pop %v5702
    %v5704 = vmul.f32 %v5690, 1.442695
    %v5705 = vpow.pop %v5704
    %v5706 = vmul.f32 %v5691, 1.442695
    %v5707 = vpow.pop %v5706
    %v5708 = vsub.f32 %v5420, %v5676
    %v5709 = vsub.f32 %v5421, %v5677
    %v5710 = vsub.f32 %v5422, %v5678
    %v5711 = vsub.f32 %v5423, %v5679
    %v5712 = vsub.f32 %v5424, %v5680
    %v5713 = vsub.f32 %v5425, %v5681
    %v5714 = vsub.f32 %v5426, %v5682
    %v5715 = vsub.f32 %v5427, %v5683
    %v5716 = vmul.f32 %v5708, 1.442695
    %v5717 = vpow.pop %v5716
    %v5718 = vmul.f32 %v5709, 1.442695
    %v5719 = vpow.pop %v5718
    %v5720 = vmul.f32 %v5710, 1.442695
    %v5721 = vpow.pop %v5720
    %v5722 = vmul.f32 %v5711, 1.442695
    %v5723 = vpow.pop %v5722
    %v5724 = vmul.f32 %v5712, 1.442695
    %v5725 = vpow.pop %v5724
    %v5726 = vmul.f32 %v5713, 1.442695
    %v5727 = vpow.pop %v5726
    %v5728 = vmul.f32 %v5714, 1.442695
    %v5729 = vpow.pop %v5728
    %v5730 = vmul.f32 %v5715, 1.442695
    %v5731 = vpow.pop %v5730
    %v5732 = vsub.f32 %v5660, %v5676
    %v5733 = vsub.f32 %v5661, %v5677
    %v5734 = vsub.f32 %v5662, %v5678
    %v5735 = vsub.f32 %v5663, %v5679
    %v5736 = vsub.f32 %v5664, %v5680
    %v5737 = vsub.f32 %v5665, %v5681
    %v5738 = vsub.f32 %v5666, %v5682
    %v5739 = vsub.f32 %v5667, %v5683
    %v5740 = vmul.f32 %v5732, 1.442695
    %v5741 = vpow.pop %v5740
    %v5742 = vmul.f32 %v5733, 1.442695
    %v5743 = vpow.pop %v5742
    %v5744 = vmul.f32 %v5734, 1.442695
    %v5745 = vpow.pop %v5744
    %v5746 = vmul.f32 %v5735, 1.442695
    %v5747 = vpow.pop %v5746
    %v5748 = vmul.f32 %v5736, 1.442695
    %v5749 = vpow.pop %v5748
    %v5750 = vmul.f32 %v5737, 1.442695
    %v5751 = vpow.pop %v5750
    %v5752 = vmul.f32 %v5738, 1.442695
    %v5753 = vpow.pop %v5752
    %v5754 = vmul.f32 %v5739, 1.442695
    %v5755 = vpow.pop %v5754
    %v5756 = vadd.f32 %v5693, %v5717
    %v5757 = vadd.f32 %v5695, %v5719
    %v5758 = vadd.f32 %v5697, %v5721
    %v5759 = vadd.f32 %v5699, %v5723
    %v5760 = vadd.f32 %v5701, %v5725
    %v5761 = vadd.f32 %v5703, %v5727
    %v5762 = vadd.f32 %v5705, %v5729
    %v5763 = vadd.f32 %v5707, %v5731
    %v5764 = vadd.f32 %v5756, %v5741
    %v5765 = vadd.f32 %v5757, %v5743
    %v5766 = vadd.f32 %v5758, %v5745
    %v5767 = vadd.f32 %v5759, %v5747
    %v5768 = vadd.f32 %v5760, %v5749
    %v5769 = vadd.f32 %v5761, %v5751
    %v5770 = vadd.f32 %v5762, %v5753
    %v5771 = vadd.f32 %v5763, %v5755
    %v5772 = vrcp.pop %v5764
    %v5773 = vrcp.pop %v5765
    %v5774 = vrcp.pop %v5766
    %v5775 = vrcp.pop %v5767
    %v5776 = vrcp.pop %v5768
    %v5777 = vrcp.pop %v5769
    %v5778 = vrcp.pop %v5770
    %v5779 = vrcp.pop %v5771
    %v5780 = vmul.f32 %v5693, %v5772
    %v5781 = vmul.f32 %v5695, %v5773
    %v5782 = vmul.f32 %v5697, %v5774
    %v5783 = vmul.f32 %v5699, %v5775
    %v5784 = vmul.f32 %v5701, %v5776
    %v5785 = vmul.f32 %v5703, %v5777
    %v5786 = vmul.f32 %v5705, %v5778
    %v5787 = vmul.f32 %v5707, %v5779
    %v5788 = vcombine.low %v4609, %v4617
    %v5789 = vcombine.low %v4616, %v4618
    %v5791 = vunpack.c.l.s4 1983009808
    %v5792 = vunpack.c.0.s8 %v5791
    %v5793 = vlaneseq
    %v5794 = vshrl.u32 %v5793, 7
    %v5795 = vsub.s32 %v5792, %v5794
    %v5796 = vrot.slane %v5788, %v5795
    %v5798 = vunpack.c.l.s4 1983009808
    %v5799 = vunpack.c.0.s8 %v5798
    %v5800 = vlaneseq
    %v5801 = vshrl.u32 %v5800, 7
    %v5802 = vsub.s32 %v5799, %v5801
    %v5803 = vrot.slane %v5789, %v5802
    %v5804 = vcombine.low %v5796, %v5803
    %v5805 = vcombine.low %v4634, %v4633
    %v5806 = vcombine.low %v4635, %v4643
    %v5808 = vunpack.c.l.s4 1983009808
    %v5809 = vunpack.c.0.s8 %v5808
    %v5810 = vlaneseq
    %v5811 = vshrl.u32 %v5810, 7
    %v5812 = vsub.s32 %v5809, %v5811
    %v5813 = vrot.slane %v5805, %v5812
    %v5815 = vunpack.c.l.s4 1983009808
    %v5816 = vunpack.c.0.s8 %v5815
    %v5817 = vlaneseq
    %v5818 = vshrl.u32 %v5817, 7
    %v5819 = vsub.s32 %v5816, %v5818
    %v5820 = vrot.slane %v5806, %v5819
    %v5821 = vcombine.low %v5813, %v5820
    %v5822 = vcombine.low %v4650, %v4652
    %v5823 = vcombine.low %v4660, %v4668
    %v5825 = vunpack.c.l.s4 1983009808
    %v5826 = vunpack.c.0.s8 %v5825
    %v5827 = vlaneseq
    %v5828 = vshrl.u32 %v5827, 7
    %v5829 = vsub.s32 %v5826, %v5828
    %v5830 = vrot.slane %v5822, %v5829
    %v5832 = vunpack.c.l.s4 1983009808
    %v5833 = vunpack.c.0.s8 %v5832
    %v5834 = vlaneseq
    %v5835 = vshrl.u32 %v5834, 7
    %v5836 = vsub.s32 %v5833, %v5835
    %v5837 = vrot.slane %v5823, %v5836
    %v5838 = vcombine.low %v5830, %v5837
    %v5839 = vcombine.low %v4669, %v4677
    %v5840 = vcombine.low %v4685, %v4684
    %v5842 = vunpack.c.l.s4 1983009808
    %v5843 = vunpack.c.0.s8 %v5842
    %v5844 = vlaneseq
    %v5845 = vshrl.u32 %v5844, 7
    %v5846 = vsub.s32 %v5843, %v5845
    %v5847 = vrot.slane %v5839, %v5846
    %v5849 = vunpack.c.l.s4 1983009808
    %v5850 = vunpack.c.0.s8 %v5849
    %v5851 = vlaneseq
    %v5852 = vshrl.u32 %v5851, 7
    %v5853 = vsub.s32 %v5850, %v5852
    %v5854 = vrot.slane %v5840, %v5853
    %v5855 = vcombine.low %v5847, %v5854
    %v5856 = vcombine.low %v4694, %v4702
    %v5857 = vcombine.low %v4701, %v4703
    %v5859 = vunpack.c.l.s4 1983009808
    %v5860 = vunpack.c.0.s8 %v5859
    %v5861 = vlaneseq
    %v5862 = vshrl.u32 %v5861, 7
    %v5863 = vsub.s32 %v5860, %v5862
    %v5864 = vrot.slane %v5856, %v5863
    %v5866 = vunpack.c.l.s4 1983009808
    %v5867 = vunpack.c.0.s8 %v5866
    %v5868 = vlaneseq
    %v5869 = vshrl.u32 %v5868, 7
    %v5870 = vsub.s32 %v5867, %v5869
    %v5871 = vrot.slane %v5857, %v5870
    %v5872 = vcombine.low %v5864, %v5871
    %v5873 = vcombine.low %v4719, %v4718
    %v5874 = vcombine.low %v4720, %v4728
    %v5876 = vunpack.c.l.s4 1983009808
    %v5877 = vunpack.c.0.s8 %v5876
    %v5878 = vlaneseq
    %v5879 = vshrl.u32 %v5878, 7
    %v5880 = vsub.s32 %v5877, %v5879
    %v5881 = vrot.slane %v5873, %v5880
    %v5883 = vunpack.c.l.s4 1983009808
    %v5884 = vunpack.c.0.s8 %v5883
    %v5885 = vlaneseq
    %v5886 = vshrl.u32 %v5885, 7
    %v5887 = vsub.s32 %v5884, %v5886
    %v5888 = vrot.slane %v5874, %v5887
    %v5889 = vcombine.low %v5881, %v5888
    %v5890 = vcombine.low %v4735, %v4737
    %v5891 = vcombine.low %v4745, %v4753
    %v5893 = vunpack.c.l.s4 1983009808
    %v5894 = vunpack.c.0.s8 %v5893
    %v5895 = vlaneseq
    %v5896 = vshrl.u32 %v5895, 7
    %v5897 = vsub.s32 %v5894, %v5896
    %v5898 = vrot.slane %v5890, %v5897
    %v5900 = vunpack.c.l.s4 1983009808
    %v5901 = vunpack.c.0.s8 %v5900
    %v5902 = vlaneseq
    %v5903 = vshrl.u32 %v5902, 7
    %v5904 = vsub.s32 %v5901, %v5903
    %v5905 = vrot.slane %v5891, %v5904
    %v5906 = vcombine.low %v5898, %v5905
    %v5907 = vcombine.low %v4754, %v4762
    %v5908 = vcombine.low %v4770, %v4769
    %v5910 = vunpack.c.l.s4 1983009808
    %v5911 = vunpack.c.0.s8 %v5910
    %v5912 = vlaneseq
    %v5913 = vshrl.u32 %v5912, 7
    %v5914 = vsub.s32 %v5911, %v5913
    %v5915 = vrot.slane %v5907, %v5914
    %v5917 = vunpack.c.l.s4 1983009808
    %v5918 = vunpack.c.0.s8 %v5917
    %v5919 = vlaneseq
    %v5920 = vshrl.u32 %v5919, 7
    %v5921 = vsub.s32 %v5918, %v5920
    %v5922 = vrot.slane %v5908, %v5921
    %v5923 = vcombine.low %v5915, %v5922
    %v5932 = vmul.f32 %v5780, %v5804
    %v5933 = vmul.f32 %v5781, %v5821
    %v5934 = vmul.f32 %v5782, %v5838
    %v5935 = vmul.f32 %v5783, %v5855
    %v5936 = vmul.f32 %v5784, %v5872
    %v5937 = vmul.f32 %v5785, %v5889
    %v5938 = vmul.f32 %v5786, %v5906
    %v5939 = vmul.f32 %v5787, %v5923
    %v5940 = vld [vmem:[#allocation13] sm:$0xff]
    %v5941 = vmul.f32 %v5717, %v5772
    %v5942 = vmul.f32 %v5719, %v5773
    %v5943 = vmul.f32 %v5721, %v5774
    %v5944 = vmul.f32 %v5723, %v5775
    %v5945 = vmul.f32 %v5725, %v5776
    %v5946 = vmul.f32 %v5727, %v5777
    %v5947 = vmul.f32 %v5729, %v5778
    %v5948 = vmul.f32 %v5731, %v5779
    %v5950 = vunpack.c.l.s4 1983009808
    %v5951 = vunpack.c.0.s8 %v5950
    %v5952 = vlaneseq
    %v5953 = vshrl.u32 %v5952, 7
    %v5954 = vsub.s32 %v5951, %v5953
    %v5955 = vrot.slane %v4626, %v5954
    %v5957 = vunpack.c.l.s4 1983009808
    %v5958 = vunpack.c.0.s8 %v5957
    %v5959 = vlaneseq
    %v5960 = vshrl.u32 %v5959, 7
    %v5961 = vsub.s32 %v5958, %v5960
    %v5962 = vrot.slane %v4651, %v5961
    %v5964 = vunpack.c.l.s4 1983009808
    %v5965 = vunpack.c.0.s8 %v5964
    %v5966 = vlaneseq
    %v5967 = vshrl.u32 %v5966, 7
    %v5968 = vsub.s32 %v5965, %v5967
    %v5969 = vrot.slane %v4667, %v5968
    %v5971 = vunpack.c.l.s4 1983009808
    %v5972 = vunpack.c.0.s8 %v5971
    %v5973 = vlaneseq
    %v5974 = vshrl.u32 %v5973, 7
    %v5975 = vsub.s32 %v5972, %v5974
    %v5976 = vrot.slane %v4686, %v5975
    %v5978 = vunpack.c.l.s4 1983009808
    %v5979 = vunpack.c.0.s8 %v5978
    %v5980 = vlaneseq
    %v5981 = vshrl.u32 %v5980, 7
    %v5982 = vsub.s32 %v5979, %v5981
    %v5983 = vrot.slane %v4711, %v5982
    %v5985 = vunpack.c.l.s4 1983009808
    %v5986 = vunpack.c.0.s8 %v5985
    %v5987 = vlaneseq
    %v5988 = vshrl.u32 %v5987, 7
    %v5989 = vsub.s32 %v5986, %v5988
    %v5990 = vrot.slane %v4736, %v5989
    %v5992 = vunpack.c.l.s4 1983009808
    %v5993 = vunpack.c.0.s8 %v5992
    %v5994 = vlaneseq
    %v5995 = vshrl.u32 %v5994, 7
    %v5996 = vsub.s32 %v5993, %v5995
    %v5997 = vrot.slane %v4752, %v5996
    %v5999 = vunpack.c.l.s4 1983009808
    %v6000 = vunpack.c.0.s8 %v5999
    %v6001 = vlaneseq
    %v6002 = vshrl.u32 %v6001, 7
    %v6003 = vsub.s32 %v6000, %v6002
    %v6004 = vrot.slane %v4771, %v6003
    %v6005 = vrot.slane %v5804, 1
    %v6006 = vrot.slane %v5955, 1
    %v6007 = vsel %vm2117, %v6005, %v6006
    %v6008 = vrot.slane %v5821, 1
    %v6009 = vrot.slane %v5962, 1
    %v6010 = vsel %vm2117, %v6008, %v6009
    %v6011 = vrot.slane %v5838, 1
    %v6012 = vrot.slane %v5969, 1
    %v6013 = vsel %vm2117, %v6011, %v6012
    %v6014 = vrot.slane %v5855, 1
    %v6015 = vrot.slane %v5976, 1
    %v6016 = vsel %vm2117, %v6014, %v6015
    %v6017 = vrot.slane %v5872, 1
    %v6018 = vrot.slane %v5983, 1
    %v6019 = vsel %vm2117, %v6017, %v6018
    %v6020 = vrot.slane %v5889, 1
    %v6021 = vrot.slane %v5990, 1
    %v6022 = vsel %vm2117, %v6020, %v6021
    %v6023 = vrot.slane %v5906, 1
    %v6024 = vrot.slane %v5997, 1
    %v6025 = vsel %vm2117, %v6023, %v6024
    %v6026 = vrot.slane %v5923, 1
    %v6027 = vrot.slane %v6004, 1
    %v6028 = vsel %vm2117, %v6026, %v6027
    %v6037 = vmul.f32 %v5941, %v6007
    %v6038 = vmul.f32 %v5942, %v6010
    %v6039 = vmul.f32 %v5943, %v6013
    %v6040 = vmul.f32 %v5944, %v6016
    %v6041 = vmul.f32 %v5945, %v6019
    %v6042 = vmul.f32 %v5946, %v6022
    %v6043 = vmul.f32 %v5947, %v6025
    %v6044 = vmul.f32 %v5948, %v6028
    %v6045 = vld [vmem:[%s2158] sm:$0xff]
    %v6047 = vsel %vm2160, %v6045, 0
    %6049 = vmatprep.subr.mxu0 0.0
    %6050 = vmatpush1.msra.mxu0 0.0
    %6051 = vmatprep.subr.mxu0 0.0
    %6052 = vmatpush1.msra.mxu0 0.0
    %6053 = vmatprep.subr.mxu0 0.0
    %6054 = vmatpush1.msra.mxu0 0.0
    %6055 = vmatprep.subr.mxu0 0.0
    %6056 = vmatpush1.msra.mxu0 0.0
    %6057 = vmatprep.subr.mxu0 0.0
    %6058 = vmatpush1.msra.mxu0 0.0
    %6059 = vmatprep.subr.mxu0 0.0
    %6060 = vmatpush1.msra.mxu0 0.0
    %6061 = vmatprep.subr.mxu0 0.0
    %6062 = vmatpush1.msra.mxu0 0.0
    %6063 = vmatprep.subr.mxu0 0.0
    %6064 = vmatpush1.msra.mxu0 0.0
    %6065 = vmatprep.subr.mxu0 0.0
    %6066 = vmatpush1.msra.mxu0 0.0
    %6067 = vmatprep.subr.mxu0 0.0
    %6068 = vmatpush1.msra.mxu0 0.0
    %6069 = vmatprep.subr.mxu0 0.0
    %6070 = vmatpush1.msra.mxu0 0.0
    %6071 = vmatprep.subr.mxu0 0.0
    %6072 = vmatpush1.msra.mxu0 0.0
    %6073 = vmatprep.subr.mxu0 0.0
    %6074 = vmatpush1.msra.mxu0 0.0
    %6075 = vmatprep.subr.mxu0 0.0
    %6076 = vmatpush1.msra.mxu0 0.0
    %6077 = vmatprep.subr.mxu0 0.0
    %6078 = vmatpush1.msra.mxu0 0.0
    %6079 = vmatprep.subr.mxu0 0.0
    %6080 = vmatpush1.msra.mxu0 %v6037
    %6081 = vmatprep.subr.mxu0 0.0
    %6082 = vmatpush2.msra.mxu0 0.0
    %6083 = vmatprep.subr.mxu0 0.0
    %6084 = vmatpush2.msra.mxu0 0.0
    %6085 = vmatprep.subr.mxu0 0.0
    %6086 = vmatpush2.msra.mxu0 0.0
    %6087 = vmatprep.subr.mxu0 0.0
    %6088 = vmatpush2.msra.mxu0 0.0
    %6089 = vmatprep.subr.mxu0 0.0
    %6090 = vmatpush2.msra.mxu0 0.0
    %6091 = vmatprep.subr.mxu0 0.0
    %6092 = vmatpush2.msra.mxu0 0.0
    %6093 = vmatprep.subr.mxu0 0.0
    %6094 = vmatpush2.msra.mxu0 0.0
    %6095 = vmatprep.subr.mxu0 0.0
    %6096 = vmatpush2.msra.mxu0 0.0
    %6097 = vmatprep.subr.mxu0 0.0
    %6098 = vmatpush2.msra.mxu0 0.0
    %6099 = vmatprep.subr.mxu0 0.0
    %6100 = vmatpush2.msra.mxu0 0.0
    %6101 = vmatprep.subr.mxu0 0.0
    %6102 = vmatpush2.msra.mxu0 0.0
    %6103 = vmatprep.subr.mxu0 0.0
    %6104 = vmatpush2.msra.mxu0 0.0
    %6105 = vmatprep.subr.mxu0 0.0
    %6106 = vmatpush2.msra.mxu0 0.0
    %6107 = vmatprep.subr.mxu0 0.0
    %6108 = vmatpush2.msra.mxu0 0.0
    %6109 = vmatprep.subr.mxu0 0.0
    %6110 = vmatpush2.msra.mxu0 0.0
    %6111 = vmatprep.subr.mxu0 0.0
    %6112 = vmatpush2.msra.mxu0 0.0
    %6113 = vmatprep.mubr.f32.mxu0 0.0
    %6114 = vmatmul.mubr.f32.gmra.mxu0 %v6047
    %v6115 = vpop.f32.mrf.mxu0
    %v6116 = vadd.f32 0.0, %v6115
    %v6117 = vpop.f32.mrf.mxu0
    %6118 = vdwg.mxu0
    %6119 = vmatprep.subr.mxu0 0.0
    %6120 = vmatpush1.msra.mxu0 0.0
    %6121 = vmatprep.subr.mxu0 0.0
    %6122 = vmatpush1.msra.mxu0 0.0
    %6123 = vmatprep.subr.mxu0 0.0
    %6124 = vmatpush1.msra.mxu0 0.0
    %6125 = vmatprep.subr.mxu0 0.0
    %6126 = vmatpush1.msra.mxu0 0.0
    %6127 = vmatprep.subr.mxu0 0.0
    %6128 = vmatpush1.msra.mxu0 0.0
    %6129 = vmatprep.subr.mxu0 0.0
    %6130 = vmatpush1.msra.mxu0 0.0
    %6131 = vmatprep.subr.mxu0 0.0
    %6132 = vmatpush1.msra.mxu0 0.0
    %6133 = vmatprep.subr.mxu0 0.0
    %6134 = vmatpush1.msra.mxu0 0.0
    %6135 = vmatprep.subr.mxu0 0.0
    %6136 = vmatpush1.msra.mxu0 0.0
    %6137 = vmatprep.subr.mxu0 0.0
    %6138 = vmatpush1.msra.mxu0 0.0
    %6139 = vmatprep.subr.mxu0 0.0
    %6140 = vmatpush1.msra.mxu0 0.0
    %6141 = vmatprep.subr.mxu0 0.0
    %6142 = vmatpush1.msra.mxu0 0.0
    %6143 = vmatprep.subr.mxu0 0.0
    %6144 = vmatpush1.msra.mxu0 0.0
    %6145 = vmatprep.subr.mxu0 0.0
    %6146 = vmatpush1.msra.mxu0 0.0
    %6147 = vmatprep.subr.mxu0 0.0
    %6148 = vmatpush1.msra.mxu0 0.0
    %6149 = vmatprep.subr.mxu0 0.0
    %6150 = vmatpush1.msra.mxu0 %v6038
    %6151 = vmatprep.subr.mxu0 0.0
    %6152 = vmatpush2.msra.mxu0 0.0
    %6153 = vmatprep.subr.mxu0 0.0
    %6154 = vmatpush2.msra.mxu0 0.0
    %6155 = vmatprep.subr.mxu0 0.0
    %6156 = vmatpush2.msra.mxu0 0.0
    %6157 = vmatprep.subr.mxu0 0.0
    %6158 = vmatpush2.msra.mxu0 0.0
    %6159 = vmatprep.subr.mxu0 0.0
    %6160 = vmatpush2.msra.mxu0 0.0
    %6161 = vmatprep.subr.mxu0 0.0
    %6162 = vmatpush2.msra.mxu0 0.0
    %6163 = vmatprep.subr.mxu0 0.0
    %6164 = vmatpush2.msra.mxu0 0.0
    %6165 = vmatprep.subr.mxu0 0.0
    %6166 = vmatpush2.msra.mxu0 0.0
    %6167 = vmatprep.subr.mxu0 0.0
    %6168 = vmatpush2.msra.mxu0 0.0
    %6169 = vmatprep.subr.mxu0 0.0
    %6170 = vmatpush2.msra.mxu0 0.0
    %6171 = vmatprep.subr.mxu0 0.0
    %6172 = vmatpush2.msra.mxu0 0.0
    %6173 = vmatprep.subr.mxu0 0.0
    %6174 = vmatpush2.msra.mxu0 0.0
    %6175 = vmatprep.subr.mxu0 0.0
    %6176 = vmatpush2.msra.mxu0 0.0
    %6177 = vmatprep.subr.mxu0 0.0
    %6178 = vmatpush2.msra.mxu0 0.0
    %6179 = vmatprep.subr.mxu0 0.0
    %6180 = vmatpush2.msra.mxu0 0.0
    %6181 = vmatprep.subr.mxu0 0.0
    %6182 = vmatpush2.msra.mxu0 0.0
    %6183 = vmatprep.mubr.f32.mxu0 0.0
    %6184 = vmatmul.mubr.f32.gmra.mxu0 %v6047
    %v6185 = vpop.f32.mrf.mxu0
    %v6186 = vadd.f32 0.0, %v6185
    %v6187 = vpop.f32.mrf.mxu0
    %6188 = vdwg.mxu0
    %6189 = vmatprep.subr.mxu0 0.0
    %6190 = vmatpush1.msra.mxu0 0.0
    %6191 = vmatprep.subr.mxu0 0.0
    %6192 = vmatpush1.msra.mxu0 0.0
    %6193 = vmatprep.subr.mxu0 0.0
    %6194 = vmatpush1.msra.mxu0 0.0
    %6195 = vmatprep.subr.mxu0 0.0
    %6196 = vmatpush1.msra.mxu0 0.0
    %6197 = vmatprep.subr.mxu0 0.0
    %6198 = vmatpush1.msra.mxu0 0.0
    %6199 = vmatprep.subr.mxu0 0.0
    %6200 = vmatpush1.msra.mxu0 0.0
    %6201 = vmatprep.subr.mxu0 0.0
    %6202 = vmatpush1.msra.mxu0 0.0
    %6203 = vmatprep.subr.mxu0 0.0
    %6204 = vmatpush1.msra.mxu0 0.0
    %6205 = vmatprep.subr.mxu0 0.0
    %6206 = vmatpush1.msra.mxu0 0.0
    %6207 = vmatprep.subr.mxu0 0.0
    %6208 = vmatpush1.msra.mxu0 0.0
    %6209 = vmatprep.subr.mxu0 0.0
    %6210 = vmatpush1.msra.mxu0 0.0
    %6211 = vmatprep.subr.mxu0 0.0
    %6212 = vmatpush1.msra.mxu0 0.0
    %6213 = vmatprep.subr.mxu0 0.0
    %6214 = vmatpush1.msra.mxu0 0.0
    %6215 = vmatprep.subr.mxu0 0.0
    %6216 = vmatpush1.msra.mxu0 0.0
    %6217 = vmatprep.subr.mxu0 0.0
    %6218 = vmatpush1.msra.mxu0 0.0
    %6219 = vmatprep.subr.mxu0 0.0
    %6220 = vmatpush1.msra.mxu0 %v6039
    %6221 = vmatprep.subr.mxu0 0.0
    %6222 = vmatpush2.msra.mxu0 0.0
    %6223 = vmatprep.subr.mxu0 0.0
    %6224 = vmatpush2.msra.mxu0 0.0
    %6225 = vmatprep.subr.mxu0 0.0
    %6226 = vmatpush2.msra.mxu0 0.0
    %6227 = vmatprep.subr.mxu0 0.0
    %6228 = vmatpush2.msra.mxu0 0.0
    %6229 = vmatprep.subr.mxu0 0.0
    %6230 = vmatpush2.msra.mxu0 0.0
    %6231 = vmatprep.subr.mxu0 0.0
    %6232 = vmatpush2.msra.mxu0 0.0
    %6233 = vmatprep.subr.mxu0 0.0
    %6234 = vmatpush2.msra.mxu0 0.0
    %6235 = vmatprep.subr.mxu0 0.0
    %6236 = vmatpush2.msra.mxu0 0.0
    %6237 = vmatprep.subr.mxu0 0.0
    %6238 = vmatpush2.msra.mxu0 0.0
    %6239 = vmatprep.subr.mxu0 0.0
    %6240 = vmatpush2.msra.mxu0 0.0
    %6241 = vmatprep.subr.mxu0 0.0
    %6242 = vmatpush2.msra.mxu0 0.0
    %6243 = vmatprep.subr.mxu0 0.0
    %6244 = vmatpush2.msra.mxu0 0.0
    %6245 = vmatprep.subr.mxu0 0.0
    %6246 = vmatpush2.msra.mxu0 0.0
    %6247 = vmatprep.subr.mxu0 0.0
    %6248 = vmatpush2.msra.mxu0 0.0
    %6249 = vmatprep.subr.mxu0 0.0
    %6250 = vmatpush2.msra.mxu0 0.0
    %6251 = vmatprep.subr.mxu0 0.0
    %6252 = vmatpush2.msra.mxu0 0.0
    %6253 = vmatprep.mubr.f32.mxu0 0.0
    %6254 = vmatmul.mubr.f32.gmra.mxu0 %v6047
    %v6255 = vpop.f32.mrf.mxu0
    %v6256 = vadd.f32 0.0, %v6255
    %v6257 = vpop.f32.mrf.mxu0
    %6258 = vdwg.mxu0
    %6259 = vmatprep.subr.mxu0 0.0
    %6260 = vmatpush1.msra.mxu0 0.0
    %6261 = vmatprep.subr.mxu0 0.0
    %6262 = vmatpush1.msra.mxu0 0.0
    %6263 = vmatprep.subr.mxu0 0.0
    %6264 = vmatpush1.msra.mxu0 0.0
    %6265 = vmatprep.subr.mxu0 0.0
    %6266 = vmatpush1.msra.mxu0 0.0
    %6267 = vmatprep.subr.mxu0 0.0
    %6268 = vmatpush1.msra.mxu0 0.0
    %6269 = vmatprep.subr.mxu0 0.0
    %6270 = vmatpush1.msra.mxu0 0.0
    %6271 = vmatprep.subr.mxu0 0.0
    %6272 = vmatpush1.msra.mxu0 0.0
    %6273 = vmatprep.subr.mxu0 0.0
    %6274 = vmatpush1.msra.mxu0 0.0
    %6275 = vmatprep.subr.mxu0 0.0
    %6276 = vmatpush1.msra.mxu0 0.0
    %6277 = vmatprep.subr.mxu0 0.0
    %6278 = vmatpush1.msra.mxu0 0.0
    %6279 = vmatprep.subr.mxu0 0.0
    %6280 = vmatpush1.msra.mxu0 0.0
    %6281 = vmatprep.subr.mxu0 0.0
    %6282 = vmatpush1.msra.mxu0 0.0
    %6283 = vmatprep.subr.mxu0 0.0
    %6284 = vmatpush1.msra.mxu0 0.0
    %6285 = vmatprep.subr.mxu0 0.0
    %6286 = vmatpush1.msra.mxu0 0.0
    %6287 = vmatprep.subr.mxu0 0.0
    %6288 = vmatpush1.msra.mxu0 0.0
    %6289 = vmatprep.subr.mxu0 0.0
    %6290 = vmatpush1.msra.mxu0 %v6040
    %6291 = vmatprep.subr.mxu0 0.0
    %6292 = vmatpush2.msra.mxu0 0.0
    %6293 = vmatprep.subr.mxu0 0.0
    %6294 = vmatpush2.msra.mxu0 0.0
    %6295 = vmatprep.subr.mxu0 0.0
    %6296 = vmatpush2.msra.mxu0 0.0
    %6297 = vmatprep.subr.mxu0 0.0
    %6298 = vmatpush2.msra.mxu0 0.0
    %6299 = vmatprep.subr.mxu0 0.0
    %6300 = vmatpush2.msra.mxu0 0.0
    %6301 = vmatprep.subr.mxu0 0.0
    %6302 = vmatpush2.msra.mxu0 0.0
    %6303 = vmatprep.subr.mxu0 0.0
    %6304 = vmatpush2.msra.mxu0 0.0
    %6305 = vmatprep.subr.mxu0 0.0
    %6306 = vmatpush2.msra.mxu0 0.0
    %6307 = vmatprep.subr.mxu0 0.0
    %6308 = vmatpush2.msra.mxu0 0.0
    %6309 = vmatprep.subr.mxu0 0.0
    %6310 = vmatpush2.msra.mxu0 0.0
    %6311 = vmatprep.subr.mxu0 0.0
    %6312 = vmatpush2.msra.mxu0 0.0
    %6313 = vmatprep.subr.mxu0 0.0
    %6314 = vmatpush2.msra.mxu0 0.0
    %6315 = vmatprep.subr.mxu0 0.0
    %6316 = vmatpush2.msra.mxu0 0.0
    %6317 = vmatprep.subr.mxu0 0.0
    %6318 = vmatpush2.msra.mxu0 0.0
    %6319 = vmatprep.subr.mxu0 0.0
    %6320 = vmatpush2.msra.mxu0 0.0
    %6321 = vmatprep.subr.mxu0 0.0
    %6322 = vmatpush2.msra.mxu0 0.0
    %6323 = vmatprep.mubr.f32.mxu0 0.0
    %6324 = vmatmul.mubr.f32.gmra.mxu0 %v6047
    %v6325 = vpop.f32.mrf.mxu0
    %v6326 = vadd.f32 0.0, %v6325
    %v6327 = vpop.f32.mrf.mxu0
    %6328 = vdwg.mxu0
    %6329 = vmatprep.subr.mxu0 0.0
    %6330 = vmatpush1.msra.mxu0 0.0
    %6331 = vmatprep.subr.mxu0 0.0
    %6332 = vmatpush1.msra.mxu0 0.0
    %6333 = vmatprep.subr.mxu0 0.0
    %6334 = vmatpush1.msra.mxu0 0.0
    %6335 = vmatprep.subr.mxu0 0.0
    %6336 = vmatpush1.msra.mxu0 0.0
    %6337 = vmatprep.subr.mxu0 0.0
    %6338 = vmatpush1.msra.mxu0 0.0
    %6339 = vmatprep.subr.mxu0 0.0
    %6340 = vmatpush1.msra.mxu0 0.0
    %6341 = vmatprep.subr.mxu0 0.0
    %6342 = vmatpush1.msra.mxu0 0.0
    %6343 = vmatprep.subr.mxu0 0.0
    %6344 = vmatpush1.msra.mxu0 0.0
    %6345 = vmatprep.subr.mxu0 0.0
    %6346 = vmatpush1.msra.mxu0 0.0
    %6347 = vmatprep.subr.mxu0 0.0
    %6348 = vmatpush1.msra.mxu0 0.0
    %6349 = vmatprep.subr.mxu0 0.0
    %6350 = vmatpush1.msra.mxu0 0.0
    %6351 = vmatprep.subr.mxu0 0.0
    %6352 = vmatpush1.msra.mxu0 0.0
    %6353 = vmatprep.subr.mxu0 0.0
    %6354 = vmatpush1.msra.mxu0 0.0
    %6355 = vmatprep.subr.mxu0 0.0
    %6356 = vmatpush1.msra.mxu0 0.0
    %6357 = vmatprep.subr.mxu0 0.0
    %6358 = vmatpush1.msra.mxu0 0.0
    %6359 = vmatprep.subr.mxu0 0.0
    %6360 = vmatpush1.msra.mxu0 %v6041
    %6361 = vmatprep.subr.mxu0 0.0
    %6362 = vmatpush2.msra.mxu0 0.0
    %6363 = vmatprep.subr.mxu0 0.0
    %6364 = vmatpush2.msra.mxu0 0.0
    %6365 = vmatprep.subr.mxu0 0.0
    %6366 = vmatpush2.msra.mxu0 0.0
    %6367 = vmatprep.subr.mxu0 0.0
    %6368 = vmatpush2.msra.mxu0 0.0
    %6369 = vmatprep.subr.mxu0 0.0
    %6370 = vmatpush2.msra.mxu0 0.0
    %6371 = vmatprep.subr.mxu0 0.0
    %6372 = vmatpush2.msra.mxu0 0.0
    %6373 = vmatprep.subr.mxu0 0.0
    %6374 = vmatpush2.msra.mxu0 0.0
    %6375 = vmatprep.subr.mxu0 0.0
    %6376 = vmatpush2.msra.mxu0 0.0
    %6377 = vmatprep.subr.mxu0 0.0
    %6378 = vmatpush2.msra.mxu0 0.0
    %6379 = vmatprep.subr.mxu0 0.0
    %6380 = vmatpush2.msra.mxu0 0.0
    %6381 = vmatprep.subr.mxu0 0.0
    %6382 = vmatpush2.msra.mxu0 0.0
    %6383 = vmatprep.subr.mxu0 0.0
    %6384 = vmatpush2.msra.mxu0 0.0
    %6385 = vmatprep.subr.mxu0 0.0
    %6386 = vmatpush2.msra.mxu0 0.0
    %6387 = vmatprep.subr.mxu0 0.0
    %6388 = vmatpush2.msra.mxu0 0.0
    %6389 = vmatprep.subr.mxu0 0.0
    %6390 = vmatpush2.msra.mxu0 0.0
    %6391 = vmatprep.subr.mxu0 0.0
    %6392 = vmatpush2.msra.mxu0 0.0
    %6393 = vmatprep.mubr.f32.mxu0 0.0
    %6394 = vmatmul.mubr.f32.gmra.mxu0 %v6047
    %v6395 = vpop.f32.mrf.mxu0
    %v6396 = vadd.f32 0.0, %v6395
    %v6397 = vpop.f32.mrf.mxu0
    %6398 = vdwg.mxu0
    %6399 = vmatprep.subr.mxu0 0.0
    %6400 = vmatpush1.msra.mxu0 0.0
    %6401 = vmatprep.subr.mxu0 0.0
    %6402 = vmatpush1.msra.mxu0 0.0
    %6403 = vmatprep.subr.mxu0 0.0
    %6404 = vmatpush1.msra.mxu0 0.0
    %6405 = vmatprep.subr.mxu0 0.0
    %6406 = vmatpush1.msra.mxu0 0.0
    %6407 = vmatprep.subr.mxu0 0.0
    %6408 = vmatpush1.msra.mxu0 0.0
    %6409 = vmatprep.subr.mxu0 0.0
    %6410 = vmatpush1.msra.mxu0 0.0
    %6411 = vmatprep.subr.mxu0 0.0
    %6412 = vmatpush1.msra.mxu0 0.0
    %6413 = vmatprep.subr.mxu0 0.0
    %6414 = vmatpush1.msra.mxu0 0.0
    %6415 = vmatprep.subr.mxu0 0.0
    %6416 = vmatpush1.msra.mxu0 0.0
    %6417 = vmatprep.subr.mxu0 0.0
    %6418 = vmatpush1.msra.mxu0 0.0
    %6419 = vmatprep.subr.mxu0 0.0
    %6420 = vmatpush1.msra.mxu0 0.0
    %6421 = vmatprep.subr.mxu0 0.0
    %6422 = vmatpush1.msra.mxu0 0.0
    %6423 = vmatprep.subr.mxu0 0.0
    %6424 = vmatpush1.msra.mxu0 0.0
    %6425 = vmatprep.subr.mxu0 0.0
    %6426 = vmatpush1.msra.mxu0 0.0
    %6427 = vmatprep.subr.mxu0 0.0
    %6428 = vmatpush1.msra.mxu0 0.0
    %6429 = vmatprep.subr.mxu0 0.0
    %6430 = vmatpush1.msra.mxu0 %v6042
    %6431 = vmatprep.subr.mxu0 0.0
    %6432 = vmatpush2.msra.mxu0 0.0
    %6433 = vmatprep.subr.mxu0 0.0
    %6434 = vmatpush2.msra.mxu0 0.0
    %6435 = vmatprep.subr.mxu0 0.0
    %6436 = vmatpush2.msra.mxu0 0.0
    %6437 = vmatprep.subr.mxu0 0.0
    %6438 = vmatpush2.msra.mxu0 0.0
    %6439 = vmatprep.subr.mxu0 0.0
    %6440 = vmatpush2.msra.mxu0 0.0
    %6441 = vmatprep.subr.mxu0 0.0
    %6442 = vmatpush2.msra.mxu0 0.0
    %6443 = vmatprep.subr.mxu0 0.0
    %6444 = vmatpush2.msra.mxu0 0.0
    %6445 = vmatprep.subr.mxu0 0.0
    %6446 = vmatpush2.msra.mxu0 0.0
    %6447 = vmatprep.subr.mxu0 0.0
    %6448 = vmatpush2.msra.mxu0 0.0
    %6449 = vmatprep.subr.mxu0 0.0
    %6450 = vmatpush2.msra.mxu0 0.0
    %6451 = vmatprep.subr.mxu0 0.0
    %6452 = vmatpush2.msra.mxu0 0.0
    %6453 = vmatprep.subr.mxu0 0.0
    %6454 = vmatpush2.msra.mxu0 0.0
    %6455 = vmatprep.subr.mxu0 0.0
    %6456 = vmatpush2.msra.mxu0 0.0
    %6457 = vmatprep.subr.mxu0 0.0
    %6458 = vmatpush2.msra.mxu0 0.0
    %6459 = vmatprep.subr.mxu0 0.0
    %6460 = vmatpush2.msra.mxu0 0.0
    %6461 = vmatprep.subr.mxu0 0.0
    %6462 = vmatpush2.msra.mxu0 0.0
    %6463 = vmatprep.mubr.f32.mxu0 0.0
    %6464 = vmatmul.mubr.f32.gmra.mxu0 %v6047
    %v6465 = vpop.f32.mrf.mxu0
    %v6466 = vadd.f32 0.0, %v6465
    %v6467 = vpop.f32.mrf.mxu0
    %6468 = vdwg.mxu0
    %6469 = vmatprep.subr.mxu0 0.0
    %6470 = vmatpush1.msra.mxu0 0.0
    %6471 = vmatprep.subr.mxu0 0.0
    %6472 = vmatpush1.msra.mxu0 0.0
    %6473 = vmatprep.subr.mxu0 0.0
    %6474 = vmatpush1.msra.mxu0 0.0
    %6475 = vmatprep.subr.mxu0 0.0
    %6476 = vmatpush1.msra.mxu0 0.0
    %6477 = vmatprep.subr.mxu0 0.0
    %6478 = vmatpush1.msra.mxu0 0.0
    %6479 = vmatprep.subr.mxu0 0.0
    %6480 = vmatpush1.msra.mxu0 0.0
    %6481 = vmatprep.subr.mxu0 0.0
    %6482 = vmatpush1.msra.mxu0 0.0
    %6483 = vmatprep.subr.mxu0 0.0
    %6484 = vmatpush1.msra.mxu0 0.0
    %6485 = vmatprep.subr.mxu0 0.0
    %6486 = vmatpush1.msra.mxu0 0.0
    %6487 = vmatprep.subr.mxu0 0.0
    %6488 = vmatpush1.msra.mxu0 0.0
    %6489 = vmatprep.subr.mxu0 0.0
    %6490 = vmatpush1.msra.mxu0 0.0
    %6491 = vmatprep.subr.mxu0 0.0
    %6492 = vmatpush1.msra.mxu0 0.0
    %6493 = vmatprep.subr.mxu0 0.0
    %6494 = vmatpush1.msra.mxu0 0.0
    %6495 = vmatprep.subr.mxu0 0.0
    %6496 = vmatpush1.msra.mxu0 0.0
    %6497 = vmatprep.subr.mxu0 0.0
    %6498 = vmatpush1.msra.mxu0 0.0
    %6499 = vmatprep.subr.mxu0 0.0
    %6500 = vmatpush1.msra.mxu0 %v6043
    %6501 = vmatprep.subr.mxu0 0.0
    %6502 = vmatpush2.msra.mxu0 0.0
    %6503 = vmatprep.subr.mxu0 0.0
    %6504 = vmatpush2.msra.mxu0 0.0
    %6505 = vmatprep.subr.mxu0 0.0
    %6506 = vmatpush2.msra.mxu0 0.0
    %6507 = vmatprep.subr.mxu0 0.0
    %6508 = vmatpush2.msra.mxu0 0.0
    %6509 = vmatprep.subr.mxu0 0.0
    %6510 = vmatpush2.msra.mxu0 0.0
    %6511 = vmatprep.subr.mxu0 0.0
    %6512 = vmatpush2.msra.mxu0 0.0
    %6513 = vmatprep.subr.mxu0 0.0
    %6514 = vmatpush2.msra.mxu0 0.0
    %6515 = vmatprep.subr.mxu0 0.0
    %6516 = vmatpush2.msra.mxu0 0.0
    %6517 = vmatprep.subr.mxu0 0.0
    %6518 = vmatpush2.msra.mxu0 0.0
    %6519 = vmatprep.subr.mxu0 0.0
    %6520 = vmatpush2.msra.mxu0 0.0
    %6521 = vmatprep.subr.mxu0 0.0
    %6522 = vmatpush2.msra.mxu0 0.0
    %6523 = vmatprep.subr.mxu0 0.0
    %6524 = vmatpush2.msra.mxu0 0.0
    %6525 = vmatprep.subr.mxu0 0.0
    %6526 = vmatpush2.msra.mxu0 0.0
    %6527 = vmatprep.subr.mxu0 0.0
    %6528 = vmatpush2.msra.mxu0 0.0
    %6529 = vmatprep.subr.mxu0 0.0
    %6530 = vmatpush2.msra.mxu0 0.0
    %6531 = vmatprep.subr.mxu0 0.0
    %6532 = vmatpush2.msra.mxu0 0.0
    %6533 = vmatprep.mubr.f32.mxu0 0.0
    %6534 = vmatmul.mubr.f32.gmra.mxu0 %v6047
    %v6535 = vpop.f32.mrf.mxu0
    %v6536 = vadd.f32 0.0, %v6535
    %v6537 = vpop.f32.mrf.mxu0
    %6538 = vdwg.mxu0
    %6539 = vmatprep.subr.mxu0 0.0
    %6540 = vmatpush1.msra.mxu0 0.0
    %6541 = vmatprep.subr.mxu0 0.0
    %6542 = vmatpush1.msra.mxu0 0.0
    %6543 = vmatprep.subr.mxu0 0.0
    %6544 = vmatpush1.msra.mxu0 0.0
    %6545 = vmatprep.subr.mxu0 0.0
    %6546 = vmatpush1.msra.mxu0 0.0
    %6547 = vmatprep.subr.mxu0 0.0
    %6548 = vmatpush1.msra.mxu0 0.0
    %6549 = vmatprep.subr.mxu0 0.0
    %6550 = vmatpush1.msra.mxu0 0.0
    %6551 = vmatprep.subr.mxu0 0.0
    %6552 = vmatpush1.msra.mxu0 0.0
    %6553 = vmatprep.subr.mxu0 0.0
    %6554 = vmatpush1.msra.mxu0 0.0
    %6555 = vmatprep.subr.mxu0 0.0
    %6556 = vmatpush1.msra.mxu0 0.0
    %6557 = vmatprep.subr.mxu0 0.0
    %6558 = vmatpush1.msra.mxu0 0.0
    %6559 = vmatprep.subr.mxu0 0.0
    %6560 = vmatpush1.msra.mxu0 0.0
    %6561 = vmatprep.subr.mxu0 0.0
    %6562 = vmatpush1.msra.mxu0 0.0
    %6563 = vmatprep.subr.mxu0 0.0
    %6564 = vmatpush1.msra.mxu0 0.0
    %6565 = vmatprep.subr.mxu0 0.0
    %6566 = vmatpush1.msra.mxu0 0.0
    %6567 = vmatprep.subr.mxu0 0.0
    %6568 = vmatpush1.msra.mxu0 0.0
    %6569 = vmatprep.subr.mxu0 0.0
    %6570 = vmatpush1.msra.mxu0 %v6044
    %6571 = vmatprep.subr.mxu0 0.0
    %6572 = vmatpush2.msra.mxu0 0.0
    %6573 = vmatprep.subr.mxu0 0.0
    %6574 = vmatpush2.msra.mxu0 0.0
    %6575 = vmatprep.subr.mxu0 0.0
    %6576 = vmatpush2.msra.mxu0 0.0
    %6577 = vmatprep.subr.mxu0 0.0
    %6578 = vmatpush2.msra.mxu0 0.0
    %6579 = vmatprep.subr.mxu0 0.0
    %6580 = vmatpush2.msra.mxu0 0.0
    %6581 = vmatprep.subr.mxu0 0.0
    %6582 = vmatpush2.msra.mxu0 0.0
    %6583 = vmatprep.subr.mxu0 0.0
    %6584 = vmatpush2.msra.mxu0 0.0
    %6585 = vmatprep.subr.mxu0 0.0
    %6586 = vmatpush2.msra.mxu0 0.0
    %6587 = vmatprep.subr.mxu0 0.0
    %6588 = vmatpush2.msra.mxu0 0.0
    %6589 = vmatprep.subr.mxu0 0.0
    %6590 = vmatpush2.msra.mxu0 0.0
    %6591 = vmatprep.subr.mxu0 0.0
    %6592 = vmatpush2.msra.mxu0 0.0
    %6593 = vmatprep.subr.mxu0 0.0
    %6594 = vmatpush2.msra.mxu0 0.0
    %6595 = vmatprep.subr.mxu0 0.0
    %6596 = vmatpush2.msra.mxu0 0.0
    %6597 = vmatprep.subr.mxu0 0.0
    %6598 = vmatpush2.msra.mxu0 0.0
    %6599 = vmatprep.subr.mxu0 0.0
    %6600 = vmatpush2.msra.mxu0 0.0
    %6601 = vmatprep.subr.mxu0 0.0
    %6602 = vmatpush2.msra.mxu0 0.0
    %6603 = vmatprep.mubr.f32.mxu0 0.0
    %6604 = vmatmul.mubr.f32.gmra.mxu0 %v6047
    %v6605 = vpop.f32.mrf.mxu0
    %v6606 = vadd.f32 0.0, %v6605
    %v6607 = vpop.f32.mrf.mxu0
    %6608 = vdwg.mxu0
    %v6610 = vsel %vm2160, %v5940, 0
    %6612 = vmatprep.subr.mxu0 0.0
    %6613 = vmatpush1.msra.mxu0 0.0
    %6614 = vmatprep.subr.mxu0 0.0
    %6615 = vmatpush1.msra.mxu0 0.0
    %6616 = vmatprep.subr.mxu0 0.0
    %6617 = vmatpush1.msra.mxu0 0.0
    %6618 = vmatprep.subr.mxu0 0.0
    %6619 = vmatpush1.msra.mxu0 0.0
    %6620 = vmatprep.subr.mxu0 0.0
    %6621 = vmatpush1.msra.mxu0 0.0
    %6622 = vmatprep.subr.mxu0 0.0
    %6623 = vmatpush1.msra.mxu0 0.0
    %6624 = vmatprep.subr.mxu0 0.0
    %6625 = vmatpush1.msra.mxu0 0.0
    %6626 = vmatprep.subr.mxu0 0.0
    %6627 = vmatpush1.msra.mxu0 0.0
    %6628 = vmatprep.subr.mxu0 0.0
    %6629 = vmatpush1.msra.mxu0 0.0
    %6630 = vmatprep.subr.mxu0 0.0
    %6631 = vmatpush1.msra.mxu0 0.0
    %6632 = vmatprep.subr.mxu0 0.0
    %6633 = vmatpush1.msra.mxu0 0.0
    %6634 = vmatprep.subr.mxu0 0.0
    %6635 = vmatpush1.msra.mxu0 0.0
    %6636 = vmatprep.subr.mxu0 0.0
    %6637 = vmatpush1.msra.mxu0 0.0
    %6638 = vmatprep.subr.mxu0 0.0
    %6639 = vmatpush1.msra.mxu0 0.0
    %6640 = vmatprep.subr.mxu0 0.0
    %6641 = vmatpush1.msra.mxu0 0.0
    %6642 = vmatprep.subr.mxu0 0.0
    %6643 = vmatpush1.msra.mxu0 %v5932
    %6644 = vmatprep.subr.mxu0 0.0
    %6645 = vmatpush2.msra.mxu0 0.0
    %6646 = vmatprep.subr.mxu0 0.0
    %6647 = vmatpush2.msra.mxu0 0.0
    %6648 = vmatprep.subr.mxu0 0.0
    %6649 = vmatpush2.msra.mxu0 0.0
    %6650 = vmatprep.subr.mxu0 0.0
    %6651 = vmatpush2.msra.mxu0 0.0
    %6652 = vmatprep.subr.mxu0 0.0
    %6653 = vmatpush2.msra.mxu0 0.0
    %6654 = vmatprep.subr.mxu0 0.0
    %6655 = vmatpush2.msra.mxu0 0.0
    %6656 = vmatprep.subr.mxu0 0.0
    %6657 = vmatpush2.msra.mxu0 0.0
    %6658 = vmatprep.subr.mxu0 0.0
    %6659 = vmatpush2.msra.mxu0 0.0
    %6660 = vmatprep.subr.mxu0 0.0
    %6661 = vmatpush2.msra.mxu0 0.0
    %6662 = vmatprep.subr.mxu0 0.0
    %6663 = vmatpush2.msra.mxu0 0.0
    %6664 = vmatprep.subr.mxu0 0.0
    %6665 = vmatpush2.msra.mxu0 0.0
    %6666 = vmatprep.subr.mxu0 0.0
    %6667 = vmatpush2.msra.mxu0 0.0
    %6668 = vmatprep.subr.mxu0 0.0
    %6669 = vmatpush2.msra.mxu0 0.0
    %6670 = vmatprep.subr.mxu0 0.0
    %6671 = vmatpush2.msra.mxu0 0.0
    %6672 = vmatprep.subr.mxu0 0.0
    %6673 = vmatpush2.msra.mxu0 0.0
    %6674 = vmatprep.subr.mxu0 0.0
    %6675 = vmatpush2.msra.mxu0 0.0
    %6676 = vmatprep.mubr.f32.mxu0 0.0
    %6677 = vmatmul.mubr.f32.gmra.mxu0 %v6610
    %v6678 = vpop.f32.mrf.mxu0
    %v6679 = vadd.f32 %v6116, %v6678
    %v6680 = vpop.f32.mrf.mxu0
    %6681 = vdwg.mxu0
    %6682 = vmatprep.subr.mxu0 0.0
    %6683 = vmatpush1.msra.mxu0 0.0
    %6684 = vmatprep.subr.mxu0 0.0
    %6685 = vmatpush1.msra.mxu0 0.0
    %6686 = vmatprep.subr.mxu0 0.0
    %6687 = vmatpush1.msra.mxu0 0.0
    %6688 = vmatprep.subr.mxu0 0.0
    %6689 = vmatpush1.msra.mxu0 0.0
    %6690 = vmatprep.subr.mxu0 0.0
    %6691 = vmatpush1.msra.mxu0 0.0
    %6692 = vmatprep.subr.mxu0 0.0
    %6693 = vmatpush1.msra.mxu0 0.0
    %6694 = vmatprep.subr.mxu0 0.0
    %6695 = vmatpush1.msra.mxu0 0.0
    %6696 = vmatprep.subr.mxu0 0.0
    %6697 = vmatpush1.msra.mxu0 0.0
    %6698 = vmatprep.subr.mxu0 0.0
    %6699 = vmatpush1.msra.mxu0 0.0
    %6700 = vmatprep.subr.mxu0 0.0
    %6701 = vmatpush1.msra.mxu0 0.0
    %6702 = vmatprep.subr.mxu0 0.0
    %6703 = vmatpush1.msra.mxu0 0.0
    %6704 = vmatprep.subr.mxu0 0.0
    %6705 = vmatpush1.msra.mxu0 0.0
    %6706 = vmatprep.subr.mxu0 0.0
    %6707 = vmatpush1.msra.mxu0 0.0
    %6708 = vmatprep.subr.mxu0 0.0
    %6709 = vmatpush1.msra.mxu0 0.0
    %6710 = vmatprep.subr.mxu0 0.0
    %6711 = vmatpush1.msra.mxu0 0.0
    %6712 = vmatprep.subr.mxu0 0.0
    %6713 = vmatpush1.msra.mxu0 %v5933
    %6714 = vmatprep.subr.mxu0 0.0
    %6715 = vmatpush2.msra.mxu0 0.0
    %6716 = vmatprep.subr.mxu0 0.0
    %6717 = vmatpush2.msra.mxu0 0.0
    %6718 = vmatprep.subr.mxu0 0.0
    %6719 = vmatpush2.msra.mxu0 0.0
    %6720 = vmatprep.subr.mxu0 0.0
    %6721 = vmatpush2.msra.mxu0 0.0
    %6722 = vmatprep.subr.mxu0 0.0
    %6723 = vmatpush2.msra.mxu0 0.0
    %6724 = vmatprep.subr.mxu0 0.0
    %6725 = vmatpush2.msra.mxu0 0.0
    %6726 = vmatprep.subr.mxu0 0.0
    %6727 = vmatpush2.msra.mxu0 0.0
    %6728 = vmatprep.subr.mxu0 0.0
    %6729 = vmatpush2.msra.mxu0 0.0
    %6730 = vmatprep.subr.mxu0 0.0
    %6731 = vmatpush2.msra.mxu0 0.0
    %6732 = vmatprep.subr.mxu0 0.0
    %6733 = vmatpush2.msra.mxu0 0.0
    %6734 = vmatprep.subr.mxu0 0.0
    %6735 = vmatpush2.msra.mxu0 0.0
    %6736 = vmatprep.subr.mxu0 0.0
    %6737 = vmatpush2.msra.mxu0 0.0
    %6738 = vmatprep.subr.mxu0 0.0
    %6739 = vmatpush2.msra.mxu0 0.0
    %6740 = vmatprep.subr.mxu0 0.0
    %6741 = vmatpush2.msra.mxu0 0.0
    %6742 = vmatprep.subr.mxu0 0.0
    %6743 = vmatpush2.msra.mxu0 0.0
    %6744 = vmatprep.subr.mxu0 0.0
    %6745 = vmatpush2.msra.mxu0 0.0
    %6746 = vmatprep.mubr.f32.mxu0 0.0
    %6747 = vmatmul.mubr.f32.gmra.mxu0 %v6610
    %v6748 = vpop.f32.mrf.mxu0
    %v6749 = vadd.f32 %v6186, %v6748
    %v6750 = vpop.f32.mrf.mxu0
    %6751 = vdwg.mxu0
    %6752 = vmatprep.subr.mxu0 0.0
    %6753 = vmatpush1.msra.mxu0 0.0
    %6754 = vmatprep.subr.mxu0 0.0
    %6755 = vmatpush1.msra.mxu0 0.0
    %6756 = vmatprep.subr.mxu0 0.0
    %6757 = vmatpush1.msra.mxu0 0.0
    %6758 = vmatprep.subr.mxu0 0.0
    %6759 = vmatpush1.msra.mxu0 0.0
    %6760 = vmatprep.subr.mxu0 0.0
    %6761 = vmatpush1.msra.mxu0 0.0
    %6762 = vmatprep.subr.mxu0 0.0
    %6763 = vmatpush1.msra.mxu0 0.0
    %6764 = vmatprep.subr.mxu0 0.0
    %6765 = vmatpush1.msra.mxu0 0.0
    %6766 = vmatprep.subr.mxu0 0.0
    %6767 = vmatpush1.msra.mxu0 0.0
    %6768 = vmatprep.subr.mxu0 0.0
    %6769 = vmatpush1.msra.mxu0 0.0
    %6770 = vmatprep.subr.mxu0 0.0
    %6771 = vmatpush1.msra.mxu0 0.0
    %6772 = vmatprep.subr.mxu0 0.0
    %6773 = vmatpush1.msra.mxu0 0.0
    %6774 = vmatprep.subr.mxu0 0.0
    %6775 = vmatpush1.msra.mxu0 0.0
    %6776 = vmatprep.subr.mxu0 0.0
    %6777 = vmatpush1.msra.mxu0 0.0
    %6778 = vmatprep.subr.mxu0 0.0
    %6779 = vmatpush1.msra.mxu0 0.0
    %6780 = vmatprep.subr.mxu0 0.0
    %6781 = vmatpush1.msra.mxu0 0.0
    %6782 = vmatprep.subr.mxu0 0.0
    %6783 = vmatpush1.msra.mxu0 %v5934
    %6784 = vmatprep.subr.mxu0 0.0
    %6785 = vmatpush2.msra.mxu0 0.0
    %6786 = vmatprep.subr.mxu0 0.0
    %6787 = vmatpush2.msra.mxu0 0.0
    %6788 = vmatprep.subr.mxu0 0.0
    %6789 = vmatpush2.msra.mxu0 0.0
    %6790 = vmatprep.subr.mxu0 0.0
    %6791 = vmatpush2.msra.mxu0 0.0
    %6792 = vmatprep.subr.mxu0 0.0
    %6793 = vmatpush2.msra.mxu0 0.0
    %6794 = vmatprep.subr.mxu0 0.0
    %6795 = vmatpush2.msra.mxu0 0.0
    %6796 = vmatprep.subr.mxu0 0.0
    %6797 = vmatpush2.msra.mxu0 0.0
    %6798 = vmatprep.subr.mxu0 0.0
    %6799 = vmatpush2.msra.mxu0 0.0
    %6800 = vmatprep.subr.mxu0 0.0
    %6801 = vmatpush2.msra.mxu0 0.0
    %6802 = vmatprep.subr.mxu0 0.0
    %6803 = vmatpush2.msra.mxu0 0.0
    %6804 = vmatprep.subr.mxu0 0.0
    %6805 = vmatpush2.msra.mxu0 0.0
    %6806 = vmatprep.subr.mxu0 0.0
    %6807 = vmatpush2.msra.mxu0 0.0
    %6808 = vmatprep.subr.mxu0 0.0
    %6809 = vmatpush2.msra.mxu0 0.0
    %6810 = vmatprep.subr.mxu0 0.0
    %6811 = vmatpush2.msra.mxu0 0.0
    %6812 = vmatprep.subr.mxu0 0.0
    %6813 = vmatpush2.msra.mxu0 0.0
    %6814 = vmatprep.subr.mxu0 0.0
    %6815 = vmatpush2.msra.mxu0 0.0
    %6816 = vmatprep.mubr.f32.mxu0 0.0
    %6817 = vmatmul.mubr.f32.gmra.mxu0 %v6610
    %v6818 = vpop.f32.mrf.mxu0
    %v6819 = vadd.f32 %v6256, %v6818
    %v6820 = vpop.f32.mrf.mxu0
    %6821 = vdwg.mxu0
    %6822 = vmatprep.subr.mxu0 0.0
    %6823 = vmatpush1.msra.mxu0 0.0
    %6824 = vmatprep.subr.mxu0 0.0
    %6825 = vmatpush1.msra.mxu0 0.0
    %6826 = vmatprep.subr.mxu0 0.0
    %6827 = vmatpush1.msra.mxu0 0.0
    %6828 = vmatprep.subr.mxu0 0.0
    %6829 = vmatpush1.msra.mxu0 0.0
    %6830 = vmatprep.subr.mxu0 0.0
    %6831 = vmatpush1.msra.mxu0 0.0
    %6832 = vmatprep.subr.mxu0 0.0
    %6833 = vmatpush1.msra.mxu0 0.0
    %6834 = vmatprep.subr.mxu0 0.0
    %6835 = vmatpush1.msra.mxu0 0.0
    %6836 = vmatprep.subr.mxu0 0.0
    %6837 = vmatpush1.msra.mxu0 0.0
    %6838 = vmatprep.subr.mxu0 0.0
    %6839 = vmatpush1.msra.mxu0 0.0
    %6840 = vmatprep.subr.mxu0 0.0
    %6841 = vmatpush1.msra.mxu0 0.0
    %6842 = vmatprep.subr.mxu0 0.0
    %6843 = vmatpush1.msra.mxu0 0.0
    %6844 = vmatprep.subr.mxu0 0.0
    %6845 = vmatpush1.msra.mxu0 0.0
    %6846 = vmatprep.subr.mxu0 0.0
    %6847 = vmatpush1.msra.mxu0 0.0
    %6848 = vmatprep.subr.mxu0 0.0
    %6849 = vmatpush1.msra.mxu0 0.0
    %6850 = vmatprep.subr.mxu0 0.0
    %6851 = vmatpush1.msra.mxu0 0.0
    %6852 = vmatprep.subr.mxu0 0.0
    %6853 = vmatpush1.msra.mxu0 %v5935
    %6854 = vmatprep.subr.mxu0 0.0
    %6855 = vmatpush2.msra.mxu0 0.0
    %6856 = vmatprep.subr.mxu0 0.0
    %6857 = vmatpush2.msra.mxu0 0.0
    %6858 = vmatprep.subr.mxu0 0.0
    %6859 = vmatpush2.msra.mxu0 0.0
    %6860 = vmatprep.subr.mxu0 0.0
    %6861 = vmatpush2.msra.mxu0 0.0
    %6862 = vmatprep.subr.mxu0 0.0
    %6863 = vmatpush2.msra.mxu0 0.0
    %6864 = vmatprep.subr.mxu0 0.0
    %6865 = vmatpush2.msra.mxu0 0.0
    %6866 = vmatprep.subr.mxu0 0.0
    %6867 = vmatpush2.msra.mxu0 0.0
    %6868 = vmatprep.subr.mxu0 0.0
    %6869 = vmatpush2.msra.mxu0 0.0
    %6870 = vmatprep.subr.mxu0 0.0
    %6871 = vmatpush2.msra.mxu0 0.0
    %6872 = vmatprep.subr.mxu0 0.0
    %6873 = vmatpush2.msra.mxu0 0.0
    %6874 = vmatprep.subr.mxu0 0.0
    %6875 = vmatpush2.msra.mxu0 0.0
    %6876 = vmatprep.subr.mxu0 0.0
    %6877 = vmatpush2.msra.mxu0 0.0
    %6878 = vmatprep.subr.mxu0 0.0
    %6879 = vmatpush2.msra.mxu0 0.0
    %6880 = vmatprep.subr.mxu0 0.0
    %6881 = vmatpush2.msra.mxu0 0.0
    %6882 = vmatprep.subr.mxu0 0.0
    %6883 = vmatpush2.msra.mxu0 0.0
    %6884 = vmatprep.subr.mxu0 0.0
    %6885 = vmatpush2.msra.mxu0 0.0
    %6886 = vmatprep.mubr.f32.mxu0 0.0
    %6887 = vmatmul.mubr.f32.gmra.mxu0 %v6610
    %v6888 = vpop.f32.mrf.mxu0
    %v6889 = vadd.f32 %v6326, %v6888
    %v6890 = vpop.f32.mrf.mxu0
    %6891 = vdwg.mxu0
    %6892 = vmatprep.subr.mxu0 0.0
    %6893 = vmatpush1.msra.mxu0 0.0
    %6894 = vmatprep.subr.mxu0 0.0
    %6895 = vmatpush1.msra.mxu0 0.0
    %6896 = vmatprep.subr.mxu0 0.0
    %6897 = vmatpush1.msra.mxu0 0.0
    %6898 = vmatprep.subr.mxu0 0.0
    %6899 = vmatpush1.msra.mxu0 0.0
    %6900 = vmatprep.subr.mxu0 0.0
    %6901 = vmatpush1.msra.mxu0 0.0
    %6902 = vmatprep.subr.mxu0 0.0
    %6903 = vmatpush1.msra.mxu0 0.0
    %6904 = vmatprep.subr.mxu0 0.0
    %6905 = vmatpush1.msra.mxu0 0.0
    %6906 = vmatprep.subr.mxu0 0.0
    %6907 = vmatpush1.msra.mxu0 0.0
    %6908 = vmatprep.subr.mxu0 0.0
    %6909 = vmatpush1.msra.mxu0 0.0
    %6910 = vmatprep.subr.mxu0 0.0
    %6911 = vmatpush1.msra.mxu0 0.0
    %6912 = vmatprep.subr.mxu0 0.0
    %6913 = vmatpush1.msra.mxu0 0.0
    %6914 = vmatprep.subr.mxu0 0.0
    %6915 = vmatpush1.msra.mxu0 0.0
    %6916 = vmatprep.subr.mxu0 0.0
    %6917 = vmatpush1.msra.mxu0 0.0
    %6918 = vmatprep.subr.mxu0 0.0
    %6919 = vmatpush1.msra.mxu0 0.0
    %6920 = vmatprep.subr.mxu0 0.0
    %6921 = vmatpush1.msra.mxu0 0.0
    %6922 = vmatprep.subr.mxu0 0.0
    %6923 = vmatpush1.msra.mxu0 %v5936
    %6924 = vmatprep.subr.mxu0 0.0
    %6925 = vmatpush2.msra.mxu0 0.0
    %6926 = vmatprep.subr.mxu0 0.0
    %6927 = vmatpush2.msra.mxu0 0.0
    %6928 = vmatprep.subr.mxu0 0.0
    %6929 = vmatpush2.msra.mxu0 0.0
    %6930 = vmatprep.subr.mxu0 0.0
    %6931 = vmatpush2.msra.mxu0 0.0
    %6932 = vmatprep.subr.mxu0 0.0
    %6933 = vmatpush2.msra.mxu0 0.0
    %6934 = vmatprep.subr.mxu0 0.0
    %6935 = vmatpush2.msra.mxu0 0.0
    %6936 = vmatprep.subr.mxu0 0.0
    %6937 = vmatpush2.msra.mxu0 0.0
    %6938 = vmatprep.subr.mxu0 0.0
    %6939 = vmatpush2.msra.mxu0 0.0
    %6940 = vmatprep.subr.mxu0 0.0
    %6941 = vmatpush2.msra.mxu0 0.0
    %6942 = vmatprep.subr.mxu0 0.0
    %6943 = vmatpush2.msra.mxu0 0.0
    %6944 = vmatprep.subr.mxu0 0.0
    %6945 = vmatpush2.msra.mxu0 0.0
    %6946 = vmatprep.subr.mxu0 0.0
    %6947 = vmatpush2.msra.mxu0 0.0
    %6948 = vmatprep.subr.mxu0 0.0
    %6949 = vmatpush2.msra.mxu0 0.0
    %6950 = vmatprep.subr.mxu0 0.0
    %6951 = vmatpush2.msra.mxu0 0.0
    %6952 = vmatprep.subr.mxu0 0.0
    %6953 = vmatpush2.msra.mxu0 0.0
    %6954 = vmatprep.subr.mxu0 0.0
    %6955 = vmatpush2.msra.mxu0 0.0
    %6956 = vmatprep.mubr.f32.mxu0 0.0
    %6957 = vmatmul.mubr.f32.gmra.mxu0 %v6610
    %v6958 = vpop.f32.mrf.mxu0
    %v6959 = vadd.f32 %v6396, %v6958
    %v6960 = vpop.f32.mrf.mxu0
    %6961 = vdwg.mxu0
    %6962 = vmatprep.subr.mxu0 0.0
    %6963 = vmatpush1.msra.mxu0 0.0
    %6964 = vmatprep.subr.mxu0 0.0
    %6965 = vmatpush1.msra.mxu0 0.0
    %6966 = vmatprep.subr.mxu0 0.0
    %6967 = vmatpush1.msra.mxu0 0.0
    %6968 = vmatprep.subr.mxu0 0.0
    %6969 = vmatpush1.msra.mxu0 0.0
    %6970 = vmatprep.subr.mxu0 0.0
    %6971 = vmatpush1.msra.mxu0 0.0
    %6972 = vmatprep.subr.mxu0 0.0
    %6973 = vmatpush1.msra.mxu0 0.0
    %6974 = vmatprep.subr.mxu0 0.0
    %6975 = vmatpush1.msra.mxu0 0.0
    %6976 = vmatprep.subr.mxu0 0.0
    %6977 = vmatpush1.msra.mxu0 0.0
    %6978 = vmatprep.subr.mxu0 0.0
    %6979 = vmatpush1.msra.mxu0 0.0
    %6980 = vmatprep.subr.mxu0 0.0
    %6981 = vmatpush1.msra.mxu0 0.0
    %6982 = vmatprep.subr.mxu0 0.0
    %6983 = vmatpush1.msra.mxu0 0.0
    %6984 = vmatprep.subr.mxu0 0.0
    %6985 = vmatpush1.msra.mxu0 0.0
    %6986 = vmatprep.subr.mxu0 0.0
    %6987 = vmatpush1.msra.mxu0 0.0
    %6988 = vmatprep.subr.mxu0 0.0
    %6989 = vmatpush1.msra.mxu0 0.0
    %6990 = vmatprep.subr.mxu0 0.0
    %6991 = vmatpush1.msra.mxu0 0.0
    %6992 = vmatprep.subr.mxu0 0.0
    %6993 = vmatpush1.msra.mxu0 %v5937
    %6994 = vmatprep.subr.mxu0 0.0
    %6995 = vmatpush2.msra.mxu0 0.0
    %6996 = vmatprep.subr.mxu0 0.0
    %6997 = vmatpush2.msra.mxu0 0.0
    %6998 = vmatprep.subr.mxu0 0.0
    %6999 = vmatpush2.msra.mxu0 0.0
    %7000 = vmatprep.subr.mxu0 0.0
    %7001 = vmatpush2.msra.mxu0 0.0
    %7002 = vmatprep.subr.mxu0 0.0
    %7003 = vmatpush2.msra.mxu0 0.0
    %7004 = vmatprep.subr.mxu0 0.0
    %7005 = vmatpush2.msra.mxu0 0.0
    %7006 = vmatprep.subr.mxu0 0.0
    %7007 = vmatpush2.msra.mxu0 0.0
    %7008 = vmatprep.subr.mxu0 0.0
    %7009 = vmatpush2.msra.mxu0 0.0
    %7010 = vmatprep.subr.mxu0 0.0
    %7011 = vmatpush2.msra.mxu0 0.0
    %7012 = vmatprep.subr.mxu0 0.0
    %7013 = vmatpush2.msra.mxu0 0.0
    %7014 = vmatprep.subr.mxu0 0.0
    %7015 = vmatpush2.msra.mxu0 0.0
    %7016 = vmatprep.subr.mxu0 0.0
    %7017 = vmatpush2.msra.mxu0 0.0
    %7018 = vmatprep.subr.mxu0 0.0
    %7019 = vmatpush2.msra.mxu0 0.0
    %7020 = vmatprep.subr.mxu0 0.0
    %7021 = vmatpush2.msra.mxu0 0.0
    %7022 = vmatprep.subr.mxu0 0.0
    %7023 = vmatpush2.msra.mxu0 0.0
    %7024 = vmatprep.subr.mxu0 0.0
    %7025 = vmatpush2.msra.mxu0 0.0
    %7026 = vmatprep.mubr.f32.mxu0 0.0
    %7027 = vmatmul.mubr.f32.gmra.mxu0 %v6610
    %v7028 = vpop.f32.mrf.mxu0
    %v7029 = vadd.f32 %v6466, %v7028
    %v7030 = vpop.f32.mrf.mxu0
    %7031 = vdwg.mxu0
    %7032 = vmatprep.subr.mxu0 0.0
    %7033 = vmatpush1.msra.mxu0 0.0
    %7034 = vmatprep.subr.mxu0 0.0
    %7035 = vmatpush1.msra.mxu0 0.0
    %7036 = vmatprep.subr.mxu0 0.0
    %7037 = vmatpush1.msra.mxu0 0.0
    %7038 = vmatprep.subr.mxu0 0.0
    %7039 = vmatpush1.msra.mxu0 0.0
    %7040 = vmatprep.subr.mxu0 0.0
    %7041 = vmatpush1.msra.mxu0 0.0
    %7042 = vmatprep.subr.mxu0 0.0
    %7043 = vmatpush1.msra.mxu0 0.0
    %7044 = vmatprep.subr.mxu0 0.0
    %7045 = vmatpush1.msra.mxu0 0.0
    %7046 = vmatprep.subr.mxu0 0.0
    %7047 = vmatpush1.msra.mxu0 0.0
    %7048 = vmatprep.subr.mxu0 0.0
    %7049 = vmatpush1.msra.mxu0 0.0
    %7050 = vmatprep.subr.mxu0 0.0
    %7051 = vmatpush1.msra.mxu0 0.0
    %7052 = vmatprep.subr.mxu0 0.0
    %7053 = vmatpush1.msra.mxu0 0.0
    %7054 = vmatprep.subr.mxu0 0.0
    %7055 = vmatpush1.msra.mxu0 0.0
    %7056 = vmatprep.subr.mxu0 0.0
    %7057 = vmatpush1.msra.mxu0 0.0
    %7058 = vmatprep.subr.mxu0 0.0
    %7059 = vmatpush1.msra.mxu0 0.0
    %7060 = vmatprep.subr.mxu0 0.0
    %7061 = vmatpush1.msra.mxu0 0.0
    %7062 = vmatprep.subr.mxu0 0.0
    %7063 = vmatpush1.msra.mxu0 %v5938
    %7064 = vmatprep.subr.mxu0 0.0
    %7065 = vmatpush2.msra.mxu0 0.0
    %7066 = vmatprep.subr.mxu0 0.0
    %7067 = vmatpush2.msra.mxu0 0.0
    %7068 = vmatprep.subr.mxu0 0.0
    %7069 = vmatpush2.msra.mxu0 0.0
    %7070 = vmatprep.subr.mxu0 0.0
    %7071 = vmatpush2.msra.mxu0 0.0
    %7072 = vmatprep.subr.mxu0 0.0
    %7073 = vmatpush2.msra.mxu0 0.0
    %7074 = vmatprep.subr.mxu0 0.0
    %7075 = vmatpush2.msra.mxu0 0.0
    %7076 = vmatprep.subr.mxu0 0.0
    %7077 = vmatpush2.msra.mxu0 0.0
    %7078 = vmatprep.subr.mxu0 0.0
    %7079 = vmatpush2.msra.mxu0 0.0
    %7080 = vmatprep.subr.mxu0 0.0
    %7081 = vmatpush2.msra.mxu0 0.0
    %7082 = vmatprep.subr.mxu0 0.0
    %7083 = vmatpush2.msra.mxu0 0.0
    %7084 = vmatprep.subr.mxu0 0.0
    %7085 = vmatpush2.msra.mxu0 0.0
    %7086 = vmatprep.subr.mxu0 0.0
    %7087 = vmatpush2.msra.mxu0 0.0
    %7088 = vmatprep.subr.mxu0 0.0
    %7089 = vmatpush2.msra.mxu0 0.0
    %7090 = vmatprep.subr.mxu0 0.0
    %7091 = vmatpush2.msra.mxu0 0.0
    %7092 = vmatprep.subr.mxu0 0.0
    %7093 = vmatpush2.msra.mxu0 0.0
    %7094 = vmatprep.subr.mxu0 0.0
    %7095 = vmatpush2.msra.mxu0 0.0
    %7096 = vmatprep.mubr.f32.mxu0 0.0
    %7097 = vmatmul.mubr.f32.gmra.mxu0 %v6610
    %v7098 = vpop.f32.mrf.mxu0
    %v7099 = vadd.f32 %v6536, %v7098
    %v7100 = vpop.f32.mrf.mxu0
    %7101 = vdwg.mxu0
    %7102 = vmatprep.subr.mxu0 0.0
    %7103 = vmatpush1.msra.mxu0 0.0
    %7104 = vmatprep.subr.mxu0 0.0
    %7105 = vmatpush1.msra.mxu0 0.0
    %7106 = vmatprep.subr.mxu0 0.0
    %7107 = vmatpush1.msra.mxu0 0.0
    %7108 = vmatprep.subr.mxu0 0.0
    %7109 = vmatpush1.msra.mxu0 0.0
    %7110 = vmatprep.subr.mxu0 0.0
    %7111 = vmatpush1.msra.mxu0 0.0
    %7112 = vmatprep.subr.mxu0 0.0
    %7113 = vmatpush1.msra.mxu0 0.0
    %7114 = vmatprep.subr.mxu0 0.0
    %7115 = vmatpush1.msra.mxu0 0.0
    %7116 = vmatprep.subr.mxu0 0.0
    %7117 = vmatpush1.msra.mxu0 0.0
    %7118 = vmatprep.subr.mxu0 0.0
    %7119 = vmatpush1.msra.mxu0 0.0
    %7120 = vmatprep.subr.mxu0 0.0
    %7121 = vmatpush1.msra.mxu0 0.0
    %7122 = vmatprep.subr.mxu0 0.0
    %7123 = vmatpush1.msra.mxu0 0.0
    %7124 = vmatprep.subr.mxu0 0.0
    %7125 = vmatpush1.msra.mxu0 0.0
    %7126 = vmatprep.subr.mxu0 0.0
    %7127 = vmatpush1.msra.mxu0 0.0
    %7128 = vmatprep.subr.mxu0 0.0
    %7129 = vmatpush1.msra.mxu0 0.0
    %7130 = vmatprep.subr.mxu0 0.0
    %7131 = vmatpush1.msra.mxu0 0.0
    %7132 = vmatprep.subr.mxu0 0.0
    %7133 = vmatpush1.msra.mxu0 %v5939
    %7134 = vmatprep.subr.mxu0 0.0
    %7135 = vmatpush2.msra.mxu0 0.0
    %7136 = vmatprep.subr.mxu0 0.0
    %7137 = vmatpush2.msra.mxu0 0.0
    %7138 = vmatprep.subr.mxu0 0.0
    %7139 = vmatpush2.msra.mxu0 0.0
    %7140 = vmatprep.subr.mxu0 0.0
    %7141 = vmatpush2.msra.mxu0 0.0
    %7142 = vmatprep.subr.mxu0 0.0
    %7143 = vmatpush2.msra.mxu0 0.0
    %7144 = vmatprep.subr.mxu0 0.0
    %7145 = vmatpush2.msra.mxu0 0.0
    %7146 = vmatprep.subr.mxu0 0.0
    %7147 = vmatpush2.msra.mxu0 0.0
    %7148 = vmatprep.subr.mxu0 0.0
    %7149 = vmatpush2.msra.mxu0 0.0
    %7150 = vmatprep.subr.mxu0 0.0
    %7151 = vmatpush2.msra.mxu0 0.0
    %7152 = vmatprep.subr.mxu0 0.0
    %7153 = vmatpush2.msra.mxu0 0.0
    %7154 = vmatprep.subr.mxu0 0.0
    %7155 = vmatpush2.msra.mxu0 0.0
    %7156 = vmatprep.subr.mxu0 0.0
    %7157 = vmatpush2.msra.mxu0 0.0
    %7158 = vmatprep.subr.mxu0 0.0
    %7159 = vmatpush2.msra.mxu0 0.0
    %7160 = vmatprep.subr.mxu0 0.0
    %7161 = vmatpush2.msra.mxu0 0.0
    %7162 = vmatprep.subr.mxu0 0.0
    %7163 = vmatpush2.msra.mxu0 0.0
    %7164 = vmatprep.subr.mxu0 0.0
    %7165 = vmatpush2.msra.mxu0 0.0
    %7166 = vmatprep.mubr.f32.mxu0 0.0
    %7167 = vmatmul.mubr.f32.gmra.mxu0 %v6610
    %v7168 = vpop.f32.mrf.mxu0
    %v7169 = vadd.f32 %v6606, %v7168
    %v7170 = vpop.f32.mrf.mxu0
    %7171 = vdwg.mxu0
    %v7172 = vmul.f32 %v5741, %v5772
    %v7173 = vmul.f32 %v5743, %v5773
    %v7174 = vmul.f32 %v5745, %v5774
    %v7175 = vmul.f32 %v5747, %v5775
    %v7176 = vmul.f32 %v5749, %v5776
    %v7177 = vmul.f32 %v5751, %v5777
    %v7178 = vmul.f32 %v5753, %v5778
    %v7179 = vmul.f32 %v5755, %v5779
    %v7180 = vcombine.low %v4617, %v4616
    %v7181 = vcombine.low %v4618, %v4626
    %v7183 = vunpack.c.l.s4 1983009808
    %v7184 = vunpack.c.0.s8 %v7183
    %v7185 = vlaneseq
    %v7186 = vshrl.u32 %v7185, 7
    %v7187 = vsub.s32 %v7184, %v7186
    %v7188 = vrot.slane %v7180, %v7187
    %v7190 = vunpack.c.l.s4 1983009808
    %v7191 = vunpack.c.0.s8 %v7190
    %v7192 = vlaneseq
    %v7193 = vshrl.u32 %v7192, 7
    %v7194 = vsub.s32 %v7191, %v7193
    %v7195 = vrot.slane %v7181, %v7194
    %v7196 = vcombine.low %v7188, %v7195
    %v7197 = vcombine.low %v4633, %v4635
    %v7198 = vcombine.low %v4643, %v4651
    %v7200 = vunpack.c.l.s4 1983009808
    %v7201 = vunpack.c.0.s8 %v7200
    %v7202 = vlaneseq
    %v7203 = vshrl.u32 %v7202, 7
    %v7204 = vsub.s32 %v7201, %v7203
    %v7205 = vrot.slane %v7197, %v7204
    %v7207 = vunpack.c.l.s4 1983009808
    %v7208 = vunpack.c.0.s8 %v7207
    %v7209 = vlaneseq
    %v7210 = vshrl.u32 %v7209, 7
    %v7211 = vsub.s32 %v7208, %v7210
    %v7212 = vrot.slane %v7198, %v7211
    %v7213 = vcombine.low %v7205, %v7212
    %v7214 = vcombine.low %v4652, %v4660
    %v7215 = vcombine.low %v4668, %v4667
    %v7217 = vunpack.c.l.s4 1983009808
    %v7218 = vunpack.c.0.s8 %v7217
    %v7219 = vlaneseq
    %v7220 = vshrl.u32 %v7219, 7
    %v7221 = vsub.s32 %v7218, %v7220
    %v7222 = vrot.slane %v7214, %v7221
    %v7224 = vunpack.c.l.s4 1983009808
    %v7225 = vunpack.c.0.s8 %v7224
    %v7226 = vlaneseq
    %v7227 = vshrl.u32 %v7226, 7
    %v7228 = vsub.s32 %v7225, %v7227
    %v7229 = vrot.slane %v7215, %v7228
    %v7230 = vcombine.low %v7222, %v7229
    %v7231 = vcombine.low %v4677, %v4685
    %v7232 = vcombine.low %v4684, %v4686
    %v7234 = vunpack.c.l.s4 1983009808
    %v7235 = vunpack.c.0.s8 %v7234
    %v7236 = vlaneseq
    %v7237 = vshrl.u32 %v7236, 7
    %v7238 = vsub.s32 %v7235, %v7237
    %v7239 = vrot.slane %v7231, %v7238
    %v7241 = vunpack.c.l.s4 1983009808
    %v7242 = vunpack.c.0.s8 %v7241
    %v7243 = vlaneseq
    %v7244 = vshrl.u32 %v7243, 7
    %v7245 = vsub.s32 %v7242, %v7244
    %v7246 = vrot.slane %v7232, %v7245
    %v7247 = vcombine.low %v7239, %v7246
    %v7248 = vcombine.low %v4702, %v4701
    %v7249 = vcombine.low %v4703, %v4711
    %v7251 = vunpack.c.l.s4 1983009808
    %v7252 = vunpack.c.0.s8 %v7251
    %v7253 = vlaneseq
    %v7254 = vshrl.u32 %v7253, 7
    %v7255 = vsub.s32 %v7252, %v7254
    %v7256 = vrot.slane %v7248, %v7255
    %v7258 = vunpack.c.l.s4 1983009808
    %v7259 = vunpack.c.0.s8 %v7258
    %v7260 = vlaneseq
    %v7261 = vshrl.u32 %v7260, 7
    %v7262 = vsub.s32 %v7259, %v7261
    %v7263 = vrot.slane %v7249, %v7262
    %v7264 = vcombine.low %v7256, %v7263
    %v7265 = vcombine.low %v4718, %v4720
    %v7266 = vcombine.low %v4728, %v4736
    %v7268 = vunpack.c.l.s4 1983009808
    %v7269 = vunpack.c.0.s8 %v7268
    %v7270 = vlaneseq
    %v7271 = vshrl.u32 %v7270, 7
    %v7272 = vsub.s32 %v7269, %v7271
    %v7273 = vrot.slane %v7265, %v7272
    %v7275 = vunpack.c.l.s4 1983009808
    %v7276 = vunpack.c.0.s8 %v7275
    %v7277 = vlaneseq
    %v7278 = vshrl.u32 %v7277, 7
    %v7279 = vsub.s32 %v7276, %v7278
    %v7280 = vrot.slane %v7266, %v7279
    %v7281 = vcombine.low %v7273, %v7280
    %v7282 = vcombine.low %v4737, %v4745
    %v7283 = vcombine.low %v4753, %v4752
    %v7285 = vunpack.c.l.s4 1983009808
    %v7286 = vunpack.c.0.s8 %v7285
    %v7287 = vlaneseq
    %v7288 = vshrl.u32 %v7287, 7
    %v7289 = vsub.s32 %v7286, %v7288
    %v7290 = vrot.slane %v7282, %v7289
    %v7292 = vunpack.c.l.s4 1983009808
    %v7293 = vunpack.c.0.s8 %v7292
    %v7294 = vlaneseq
    %v7295 = vshrl.u32 %v7294, 7
    %v7296 = vsub.s32 %v7293, %v7295
    %v7297 = vrot.slane %v7283, %v7296
    %v7298 = vcombine.low %v7290, %v7297
    %v7299 = vcombine.low %v4762, %v4770
    %v7300 = vcombine.low %v4769, %v4771
    %v7302 = vunpack.c.l.s4 1983009808
    %v7303 = vunpack.c.0.s8 %v7302
    %v7304 = vlaneseq
    %v7305 = vshrl.u32 %v7304, 7
    %v7306 = vsub.s32 %v7303, %v7305
    %v7307 = vrot.slane %v7299, %v7306
    %v7309 = vunpack.c.l.s4 1983009808
    %v7310 = vunpack.c.0.s8 %v7309
    %v7311 = vlaneseq
    %v7312 = vshrl.u32 %v7311, 7
    %v7313 = vsub.s32 %v7310, %v7312
    %v7314 = vrot.slane %v7300, %v7313
    %v7315 = vcombine.low %v7307, %v7314
    %v7324 = vmul.f32 %v7172, %v7196
    %v7325 = vmul.f32 %v7173, %v7213
    %v7326 = vmul.f32 %v7174, %v7230
    %v7327 = vmul.f32 %v7175, %v7247
    %v7328 = vmul.f32 %v7176, %v7264
    %v7329 = vmul.f32 %v7177, %v7281
    %v7330 = vmul.f32 %v7178, %v7298
    %v7331 = vmul.f32 %v7179, %v7315
    %v7332 = vld [vmem:[%s3447] sm:$0xff]
    %v7334 = vsel %vm2160, %v7332, 0
    %7336 = vmatprep.subr.mxu0 0.0
    %7337 = vmatpush1.msra.mxu0 0.0
    %7338 = vmatprep.subr.mxu0 0.0
    %7339 = vmatpush1.msra.mxu0 0.0
    %7340 = vmatprep.subr.mxu0 0.0
    %7341 = vmatpush1.msra.mxu0 0.0
    %7342 = vmatprep.subr.mxu0 0.0
    %7343 = vmatpush1.msra.mxu0 0.0
    %7344 = vmatprep.subr.mxu0 0.0
    %7345 = vmatpush1.msra.mxu0 0.0
    %7346 = vmatprep.subr.mxu0 0.0
    %7347 = vmatpush1.msra.mxu0 0.0
    %7348 = vmatprep.subr.mxu0 0.0
    %7349 = vmatpush1.msra.mxu0 0.0
    %7350 = vmatprep.subr.mxu0 0.0
    %7351 = vmatpush1.msra.mxu0 0.0
    %7352 = vmatprep.subr.mxu0 0.0
    %7353 = vmatpush1.msra.mxu0 0.0
    %7354 = vmatprep.subr.mxu0 0.0
    %7355 = vmatpush1.msra.mxu0 0.0
    %7356 = vmatprep.subr.mxu0 0.0
    %7357 = vmatpush1.msra.mxu0 0.0
    %7358 = vmatprep.subr.mxu0 0.0
    %7359 = vmatpush1.msra.mxu0 0.0
    %7360 = vmatprep.subr.mxu0 0.0
    %7361 = vmatpush1.msra.mxu0 0.0
    %7362 = vmatprep.subr.mxu0 0.0
    %7363 = vmatpush1.msra.mxu0 0.0
    %7364 = vmatprep.subr.mxu0 0.0
    %7365 = vmatpush1.msra.mxu0 0.0
    %7366 = vmatprep.subr.mxu0 0.0
    %7367 = vmatpush1.msra.mxu0 %v7324
    %7368 = vmatprep.subr.mxu0 0.0
    %7369 = vmatpush2.msra.mxu0 0.0
    %7370 = vmatprep.subr.mxu0 0.0
    %7371 = vmatpush2.msra.mxu0 0.0
    %7372 = vmatprep.subr.mxu0 0.0
    %7373 = vmatpush2.msra.mxu0 0.0
    %7374 = vmatprep.subr.mxu0 0.0
    %7375 = vmatpush2.msra.mxu0 0.0
    %7376 = vmatprep.subr.mxu0 0.0
    %7377 = vmatpush2.msra.mxu0 0.0
    %7378 = vmatprep.subr.mxu0 0.0
    %7379 = vmatpush2.msra.mxu0 0.0
    %7380 = vmatprep.subr.mxu0 0.0
    %7381 = vmatpush2.msra.mxu0 0.0
    %7382 = vmatprep.subr.mxu0 0.0
    %7383 = vmatpush2.msra.mxu0 0.0
    %7384 = vmatprep.subr.mxu0 0.0
    %7385 = vmatpush2.msra.mxu0 0.0
    %7386 = vmatprep.subr.mxu0 0.0
    %7387 = vmatpush2.msra.mxu0 0.0
    %7388 = vmatprep.subr.mxu0 0.0
    %7389 = vmatpush2.msra.mxu0 0.0
    %7390 = vmatprep.subr.mxu0 0.0
    %7391 = vmatpush2.msra.mxu0 0.0
    %7392 = vmatprep.subr.mxu0 0.0
    %7393 = vmatpush2.msra.mxu0 0.0
    %7394 = vmatprep.subr.mxu0 0.0
    %7395 = vmatpush2.msra.mxu0 0.0
    %7396 = vmatprep.subr.mxu0 0.0
    %7397 = vmatpush2.msra.mxu0 0.0
    %7398 = vmatprep.subr.mxu0 0.0
    %7399 = vmatpush2.msra.mxu0 0.0
    %7400 = vmatprep.mubr.f32.mxu0 0.0
    %7401 = vmatmul.mubr.f32.gmra.mxu0 %v7334
    %v7402 = vpop.f32.mrf.mxu0
    %v7403 = vadd.f32 0.0, %v7402
    %v7404 = vpop.f32.mrf.mxu0
    %7405 = vdwg.mxu0
    %7406 = vmatprep.subr.mxu0 0.0
    %7407 = vmatpush1.msra.mxu0 0.0
    %7408 = vmatprep.subr.mxu0 0.0
    %7409 = vmatpush1.msra.mxu0 0.0
    %7410 = vmatprep.subr.mxu0 0.0
    %7411 = vmatpush1.msra.mxu0 0.0
    %7412 = vmatprep.subr.mxu0 0.0
    %7413 = vmatpush1.msra.mxu0 0.0
    %7414 = vmatprep.subr.mxu0 0.0
    %7415 = vmatpush1.msra.mxu0 0.0
    %7416 = vmatprep.subr.mxu0 0.0
    %7417 = vmatpush1.msra.mxu0 0.0
    %7418 = vmatprep.subr.mxu0 0.0
    %7419 = vmatpush1.msra.mxu0 0.0
    %7420 = vmatprep.subr.mxu0 0.0
    %7421 = vmatpush1.msra.mxu0 0.0
    %7422 = vmatprep.subr.mxu0 0.0
    %7423 = vmatpush1.msra.mxu0 0.0
    %7424 = vmatprep.subr.mxu0 0.0
    %7425 = vmatpush1.msra.mxu0 0.0
    %7426 = vmatprep.subr.mxu0 0.0
    %7427 = vmatpush1.msra.mxu0 0.0
    %7428 = vmatprep.subr.mxu0 0.0
    %7429 = vmatpush1.msra.mxu0 0.0
    %7430 = vmatprep.subr.mxu0 0.0
    %7431 = vmatpush1.msra.mxu0 0.0
    %7432 = vmatprep.subr.mxu0 0.0
    %7433 = vmatpush1.msra.mxu0 0.0
    %7434 = vmatprep.subr.mxu0 0.0
    %7435 = vmatpush1.msra.mxu0 0.0
    %7436 = vmatprep.subr.mxu0 0.0
    %7437 = vmatpush1.msra.mxu0 %v7325
    %7438 = vmatprep.subr.mxu0 0.0
    %7439 = vmatpush2.msra.mxu0 0.0
    %7440 = vmatprep.subr.mxu0 0.0
    %7441 = vmatpush2.msra.mxu0 0.0
    %7442 = vmatprep.subr.mxu0 0.0
    %7443 = vmatpush2.msra.mxu0 0.0
    %7444 = vmatprep.subr.mxu0 0.0
    %7445 = vmatpush2.msra.mxu0 0.0
    %7446 = vmatprep.subr.mxu0 0.0
    %7447 = vmatpush2.msra.mxu0 0.0
    %7448 = vmatprep.subr.mxu0 0.0
    %7449 = vmatpush2.msra.mxu0 0.0
    %7450 = vmatprep.subr.mxu0 0.0
    %7451 = vmatpush2.msra.mxu0 0.0
    %7452 = vmatprep.subr.mxu0 0.0
    %7453 = vmatpush2.msra.mxu0 0.0
    %7454 = vmatprep.subr.mxu0 0.0
    %7455 = vmatpush2.msra.mxu0 0.0
    %7456 = vmatprep.subr.mxu0 0.0
    %7457 = vmatpush2.msra.mxu0 0.0
    %7458 = vmatprep.subr.mxu0 0.0
    %7459 = vmatpush2.msra.mxu0 0.0
    %7460 = vmatprep.subr.mxu0 0.0
    %7461 = vmatpush2.msra.mxu0 0.0
    %7462 = vmatprep.subr.mxu0 0.0
    %7463 = vmatpush2.msra.mxu0 0.0
    %7464 = vmatprep.subr.mxu0 0.0
    %7465 = vmatpush2.msra.mxu0 0.0
    %7466 = vmatprep.subr.mxu0 0.0
    %7467 = vmatpush2.msra.mxu0 0.0
    %7468 = vmatprep.subr.mxu0 0.0
    %7469 = vmatpush2.msra.mxu0 0.0
    %7470 = vmatprep.mubr.f32.mxu0 0.0
    %7471 = vmatmul.mubr.f32.gmra.mxu0 %v7334
    %v7472 = vpop.f32.mrf.mxu0
    %v7473 = vadd.f32 0.0, %v7472
    %v7474 = vpop.f32.mrf.mxu0
    %7475 = vdwg.mxu0
    %7476 = vmatprep.subr.mxu0 0.0
    %7477 = vmatpush1.msra.mxu0 0.0
    %7478 = vmatprep.subr.mxu0 0.0
    %7479 = vmatpush1.msra.mxu0 0.0
    %7480 = vmatprep.subr.mxu0 0.0
    %7481 = vmatpush1.msra.mxu0 0.0
    %7482 = vmatprep.subr.mxu0 0.0
    %7483 = vmatpush1.msra.mxu0 0.0
    %7484 = vmatprep.subr.mxu0 0.0
    %7485 = vmatpush1.msra.mxu0 0.0
    %7486 = vmatprep.subr.mxu0 0.0
    %7487 = vmatpush1.msra.mxu0 0.0
    %7488 = vmatprep.subr.mxu0 0.0
    %7489 = vmatpush1.msra.mxu0 0.0
    %7490 = vmatprep.subr.mxu0 0.0
    %7491 = vmatpush1.msra.mxu0 0.0
    %7492 = vmatprep.subr.mxu0 0.0
    %7493 = vmatpush1.msra.mxu0 0.0
    %7494 = vmatprep.subr.mxu0 0.0
    %7495 = vmatpush1.msra.mxu0 0.0
    %7496 = vmatprep.subr.mxu0 0.0
    %7497 = vmatpush1.msra.mxu0 0.0
    %7498 = vmatprep.subr.mxu0 0.0
    %7499 = vmatpush1.msra.mxu0 0.0
    %7500 = vmatprep.subr.mxu0 0.0
    %7501 = vmatpush1.msra.mxu0 0.0
    %7502 = vmatprep.subr.mxu0 0.0
    %7503 = vmatpush1.msra.mxu0 0.0
    %7504 = vmatprep.subr.mxu0 0.0
    %7505 = vmatpush1.msra.mxu0 0.0
    %7506 = vmatprep.subr.mxu0 0.0
    %7507 = vmatpush1.msra.mxu0 %v7326
    %7508 = vmatprep.subr.mxu0 0.0
    %7509 = vmatpush2.msra.mxu0 0.0
    %7510 = vmatprep.subr.mxu0 0.0
    %7511 = vmatpush2.msra.mxu0 0.0
    %7512 = vmatprep.subr.mxu0 0.0
    %7513 = vmatpush2.msra.mxu0 0.0
    %7514 = vmatprep.subr.mxu0 0.0
    %7515 = vmatpush2.msra.mxu0 0.0
    %7516 = vmatprep.subr.mxu0 0.0
    %7517 = vmatpush2.msra.mxu0 0.0
    %7518 = vmatprep.subr.mxu0 0.0
    %7519 = vmatpush2.msra.mxu0 0.0
    %7520 = vmatprep.subr.mxu0 0.0
    %7521 = vmatpush2.msra.mxu0 0.0
    %7522 = vmatprep.subr.mxu0 0.0
    %7523 = vmatpush2.msra.mxu0 0.0
    %7524 = vmatprep.subr.mxu0 0.0
    %7525 = vmatpush2.msra.mxu0 0.0
    %7526 = vmatprep.subr.mxu0 0.0
    %7527 = vmatpush2.msra.mxu0 0.0
    %7528 = vmatprep.subr.mxu0 0.0
    %7529 = vmatpush2.msra.mxu0 0.0
    %7530 = vmatprep.subr.mxu0 0.0
    %7531 = vmatpush2.msra.mxu0 0.0
    %7532 = vmatprep.subr.mxu0 0.0
    %7533 = vmatpush2.msra.mxu0 0.0
    %7534 = vmatprep.subr.mxu0 0.0
    %7535 = vmatpush2.msra.mxu0 0.0
    %7536 = vmatprep.subr.mxu0 0.0
    %7537 = vmatpush2.msra.mxu0 0.0
    %7538 = vmatprep.subr.mxu0 0.0
    %7539 = vmatpush2.msra.mxu0 0.0
    %7540 = vmatprep.mubr.f32.mxu0 0.0
    %7541 = vmatmul.mubr.f32.gmra.mxu0 %v7334
    %v7542 = vpop.f32.mrf.mxu0
    %v7543 = vadd.f32 0.0, %v7542
    %v7544 = vpop.f32.mrf.mxu0
    %7545 = vdwg.mxu0
    %7546 = vmatprep.subr.mxu0 0.0
    %7547 = vmatpush1.msra.mxu0 0.0
    %7548 = vmatprep.subr.mxu0 0.0
    %7549 = vmatpush1.msra.mxu0 0.0
    %7550 = vmatprep.subr.mxu0 0.0
    %7551 = vmatpush1.msra.mxu0 0.0
    %7552 = vmatprep.subr.mxu0 0.0
    %7553 = vmatpush1.msra.mxu0 0.0
    %7554 = vmatprep.subr.mxu0 0.0
    %7555 = vmatpush1.msra.mxu0 0.0
    %7556 = vmatprep.subr.mxu0 0.0
    %7557 = vmatpush1.msra.mxu0 0.0
    %7558 = vmatprep.subr.mxu0 0.0
    %7559 = vmatpush1.msra.mxu0 0.0
    %7560 = vmatprep.subr.mxu0 0.0
    %7561 = vmatpush1.msra.mxu0 0.0
    %7562 = vmatprep.subr.mxu0 0.0
    %7563 = vmatpush1.msra.mxu0 0.0
    %7564 = vmatprep.subr.mxu0 0.0
    %7565 = vmatpush1.msra.mxu0 0.0
    %7566 = vmatprep.subr.mxu0 0.0
    %7567 = vmatpush1.msra.mxu0 0.0
    %7568 = vmatprep.subr.mxu0 0.0
    %7569 = vmatpush1.msra.mxu0 0.0
    %7570 = vmatprep.subr.mxu0 0.0
    %7571 = vmatpush1.msra.mxu0 0.0
    %7572 = vmatprep.subr.mxu0 0.0
    %7573 = vmatpush1.msra.mxu0 0.0
    %7574 = vmatprep.subr.mxu0 0.0
    %7575 = vmatpush1.msra.mxu0 0.0
    %7576 = vmatprep.subr.mxu0 0.0
    %7577 = vmatpush1.msra.mxu0 %v7327
    %7578 = vmatprep.subr.mxu0 0.0
    %7579 = vmatpush2.msra.mxu0 0.0
    %7580 = vmatprep.subr.mxu0 0.0
    %7581 = vmatpush2.msra.mxu0 0.0
    %7582 = vmatprep.subr.mxu0 0.0
    %7583 = vmatpush2.msra.mxu0 0.0
    %7584 = vmatprep.subr.mxu0 0.0
    %7585 = vmatpush2.msra.mxu0 0.0
    %7586 = vmatprep.subr.mxu0 0.0
    %7587 = vmatpush2.msra.mxu0 0.0
    %7588 = vmatprep.subr.mxu0 0.0
    %7589 = vmatpush2.msra.mxu0 0.0
    %7590 = vmatprep.subr.mxu0 0.0
    %7591 = vmatpush2.msra.mxu0 0.0
    %7592 = vmatprep.subr.mxu0 0.0
    %7593 = vmatpush2.msra.mxu0 0.0
    %7594 = vmatprep.subr.mxu0 0.0
    %7595 = vmatpush2.msra.mxu0 0.0
    %7596 = vmatprep.subr.mxu0 0.0
    %7597 = vmatpush2.msra.mxu0 0.0
    %7598 = vmatprep.subr.mxu0 0.0
    %7599 = vmatpush2.msra.mxu0 0.0
    %7600 = vmatprep.subr.mxu0 0.0
    %7601 = vmatpush2.msra.mxu0 0.0
    %7602 = vmatprep.subr.mxu0 0.0
    %7603 = vmatpush2.msra.mxu0 0.0
    %7604 = vmatprep.subr.mxu0 0.0
    %7605 = vmatpush2.msra.mxu0 0.0
    %7606 = vmatprep.subr.mxu0 0.0
    %7607 = vmatpush2.msra.mxu0 0.0
    %7608 = vmatprep.subr.mxu0 0.0
    %7609 = vmatpush2.msra.mxu0 0.0
    %7610 = vmatprep.mubr.f32.mxu0 0.0
    %7611 = vmatmul.mubr.f32.gmra.mxu0 %v7334
    %v7612 = vpop.f32.mrf.mxu0
    %v7613 = vadd.f32 0.0, %v7612
    %v7614 = vpop.f32.mrf.mxu0
    %7615 = vdwg.mxu0
    %7616 = vmatprep.subr.mxu0 0.0
    %7617 = vmatpush1.msra.mxu0 0.0
    %7618 = vmatprep.subr.mxu0 0.0
    %7619 = vmatpush1.msra.mxu0 0.0
    %7620 = vmatprep.subr.mxu0 0.0
    %7621 = vmatpush1.msra.mxu0 0.0
    %7622 = vmatprep.subr.mxu0 0.0
    %7623 = vmatpush1.msra.mxu0 0.0
    %7624 = vmatprep.subr.mxu0 0.0
    %7625 = vmatpush1.msra.mxu0 0.0
    %7626 = vmatprep.subr.mxu0 0.0
    %7627 = vmatpush1.msra.mxu0 0.0
    %7628 = vmatprep.subr.mxu0 0.0
    %7629 = vmatpush1.msra.mxu0 0.0
    %7630 = vmatprep.subr.mxu0 0.0
    %7631 = vmatpush1.msra.mxu0 0.0
    %7632 = vmatprep.subr.mxu0 0.0
    %7633 = vmatpush1.msra.mxu0 0.0
    %7634 = vmatprep.subr.mxu0 0.0
    %7635 = vmatpush1.msra.mxu0 0.0
    %7636 = vmatprep.subr.mxu0 0.0
    %7637 = vmatpush1.msra.mxu0 0.0
    %7638 = vmatprep.subr.mxu0 0.0
    %7639 = vmatpush1.msra.mxu0 0.0
    %7640 = vmatprep.subr.mxu0 0.0
    %7641 = vmatpush1.msra.mxu0 0.0
    %7642 = vmatprep.subr.mxu0 0.0
    %7643 = vmatpush1.msra.mxu0 0.0
    %7644 = vmatprep.subr.mxu0 0.0
    %7645 = vmatpush1.msra.mxu0 0.0
    %7646 = vmatprep.subr.mxu0 0.0
    %7647 = vmatpush1.msra.mxu0 %v7328
    %7648 = vmatprep.subr.mxu0 0.0
    %7649 = vmatpush2.msra.mxu0 0.0
    %7650 = vmatprep.subr.mxu0 0.0
    %7651 = vmatpush2.msra.mxu0 0.0
    %7652 = vmatprep.subr.mxu0 0.0
    %7653 = vmatpush2.msra.mxu0 0.0
    %7654 = vmatprep.subr.mxu0 0.0
    %7655 = vmatpush2.msra.mxu0 0.0
    %7656 = vmatprep.subr.mxu0 0.0
    %7657 = vmatpush2.msra.mxu0 0.0
    %7658 = vmatprep.subr.mxu0 0.0
    %7659 = vmatpush2.msra.mxu0 0.0
    %7660 = vmatprep.subr.mxu0 0.0
    %7661 = vmatpush2.msra.mxu0 0.0
    %7662 = vmatprep.subr.mxu0 0.0
    %7663 = vmatpush2.msra.mxu0 0.0
    %7664 = vmatprep.subr.mxu0 0.0
    %7665 = vmatpush2.msra.mxu0 0.0
    %7666 = vmatprep.subr.mxu0 0.0
    %7667 = vmatpush2.msra.mxu0 0.0
    %7668 = vmatprep.subr.mxu0 0.0
    %7669 = vmatpush2.msra.mxu0 0.0
    %7670 = vmatprep.subr.mxu0 0.0
    %7671 = vmatpush2.msra.mxu0 0.0
    %7672 = vmatprep.subr.mxu0 0.0
    %7673 = vmatpush2.msra.mxu0 0.0
    %7674 = vmatprep.subr.mxu0 0.0
    %7675 = vmatpush2.msra.mxu0 0.0
    %7676 = vmatprep.subr.mxu0 0.0
    %7677 = vmatpush2.msra.mxu0 0.0
    %7678 = vmatprep.subr.mxu0 0.0
    %7679 = vmatpush2.msra.mxu0 0.0
    %7680 = vmatprep.mubr.f32.mxu0 0.0
    %7681 = vmatmul.mubr.f32.gmra.mxu0 %v7334
    %v7682 = vpop.f32.mrf.mxu0
    %v7683 = vadd.f32 0.0, %v7682
    %v7684 = vpop.f32.mrf.mxu0
    %7685 = vdwg.mxu0
    %7686 = vmatprep.subr.mxu0 0.0
    %7687 = vmatpush1.msra.mxu0 0.0
    %7688 = vmatprep.subr.mxu0 0.0
    %7689 = vmatpush1.msra.mxu0 0.0
    %7690 = vmatprep.subr.mxu0 0.0
    %7691 = vmatpush1.msra.mxu0 0.0
    %7692 = vmatprep.subr.mxu0 0.0
    %7693 = vmatpush1.msra.mxu0 0.0
    %7694 = vmatprep.subr.mxu0 0.0
    %7695 = vmatpush1.msra.mxu0 0.0
    %7696 = vmatprep.subr.mxu0 0.0
    %7697 = vmatpush1.msra.mxu0 0.0
    %7698 = vmatprep.subr.mxu0 0.0
    %7699 = vmatpush1.msra.mxu0 0.0
    %7700 = vmatprep.subr.mxu0 0.0
    %7701 = vmatpush1.msra.mxu0 0.0
    %7702 = vmatprep.subr.mxu0 0.0
    %7703 = vmatpush1.msra.mxu0 0.0
    %7704 = vmatprep.subr.mxu0 0.0
    %7705 = vmatpush1.msra.mxu0 0.0
    %7706 = vmatprep.subr.mxu0 0.0
    %7707 = vmatpush1.msra.mxu0 0.0
    %7708 = vmatprep.subr.mxu0 0.0
    %7709 = vmatpush1.msra.mxu0 0.0
    %7710 = vmatprep.subr.mxu0 0.0
    %7711 = vmatpush1.msra.mxu0 0.0
    %7712 = vmatprep.subr.mxu0 0.0
    %7713 = vmatpush1.msra.mxu0 0.0
    %7714 = vmatprep.subr.mxu0 0.0
    %7715 = vmatpush1.msra.mxu0 0.0
    %7716 = vmatprep.subr.mxu0 0.0
    %7717 = vmatpush1.msra.mxu0 %v7329
    %7718 = vmatprep.subr.mxu0 0.0
    %7719 = vmatpush2.msra.mxu0 0.0
    %7720 = vmatprep.subr.mxu0 0.0
    %7721 = vmatpush2.msra.mxu0 0.0
    %7722 = vmatprep.subr.mxu0 0.0
    %7723 = vmatpush2.msra.mxu0 0.0
    %7724 = vmatprep.subr.mxu0 0.0
    %7725 = vmatpush2.msra.mxu0 0.0
    %7726 = vmatprep.subr.mxu0 0.0
    %7727 = vmatpush2.msra.mxu0 0.0
    %7728 = vmatprep.subr.mxu0 0.0
    %7729 = vmatpush2.msra.mxu0 0.0
    %7730 = vmatprep.subr.mxu0 0.0
    %7731 = vmatpush2.msra.mxu0 0.0
    %7732 = vmatprep.subr.mxu0 0.0
    %7733 = vmatpush2.msra.mxu0 0.0
    %7734 = vmatprep.subr.mxu0 0.0
    %7735 = vmatpush2.msra.mxu0 0.0
    %7736 = vmatprep.subr.mxu0 0.0
    %7737 = vmatpush2.msra.mxu0 0.0
    %7738 = vmatprep.subr.mxu0 0.0
    %7739 = vmatpush2.msra.mxu0 0.0
    %7740 = vmatprep.subr.mxu0 0.0
    %7741 = vmatpush2.msra.mxu0 0.0
    %7742 = vmatprep.subr.mxu0 0.0
    %7743 = vmatpush2.msra.mxu0 0.0
    %7744 = vmatprep.subr.mxu0 0.0
    %7745 = vmatpush2.msra.mxu0 0.0
    %7746 = vmatprep.subr.mxu0 0.0
    %7747 = vmatpush2.msra.mxu0 0.0
    %7748 = vmatprep.subr.mxu0 0.0
    %7749 = vmatpush2.msra.mxu0 0.0
    %7750 = vmatprep.mubr.f32.mxu0 0.0
    %7751 = vmatmul.mubr.f32.gmra.mxu0 %v7334
    %v7752 = vpop.f32.mrf.mxu0
    %v7753 = vadd.f32 0.0, %v7752
    %v7754 = vpop.f32.mrf.mxu0
    %7755 = vdwg.mxu0
    %7756 = vmatprep.subr.mxu0 0.0
    %7757 = vmatpush1.msra.mxu0 0.0
    %7758 = vmatprep.subr.mxu0 0.0
    %7759 = vmatpush1.msra.mxu0 0.0
    %7760 = vmatprep.subr.mxu0 0.0
    %7761 = vmatpush1.msra.mxu0 0.0
    %7762 = vmatprep.subr.mxu0 0.0
    %7763 = vmatpush1.msra.mxu0 0.0
    %7764 = vmatprep.subr.mxu0 0.0
    %7765 = vmatpush1.msra.mxu0 0.0
    %7766 = vmatprep.subr.mxu0 0.0
    %7767 = vmatpush1.msra.mxu0 0.0
    %7768 = vmatprep.subr.mxu0 0.0
    %7769 = vmatpush1.msra.mxu0 0.0
    %7770 = vmatprep.subr.mxu0 0.0
    %7771 = vmatpush1.msra.mxu0 0.0
    %7772 = vmatprep.subr.mxu0 0.0
    %7773 = vmatpush1.msra.mxu0 0.0
    %7774 = vmatprep.subr.mxu0 0.0
    %7775 = vmatpush1.msra.mxu0 0.0
    %7776 = vmatprep.subr.mxu0 0.0
    %7777 = vmatpush1.msra.mxu0 0.0
    %7778 = vmatprep.subr.mxu0 0.0
    %7779 = vmatpush1.msra.mxu0 0.0
    %7780 = vmatprep.subr.mxu0 0.0
    %7781 = vmatpush1.msra.mxu0 0.0
    %7782 = vmatprep.subr.mxu0 0.0
    %7783 = vmatpush1.msra.mxu0 0.0
    %7784 = vmatprep.subr.mxu0 0.0
    %7785 = vmatpush1.msra.mxu0 0.0
    %7786 = vmatprep.subr.mxu0 0.0
    %7787 = vmatpush1.msra.mxu0 %v7330
    %7788 = vmatprep.subr.mxu0 0.0
    %7789 = vmatpush2.msra.mxu0 0.0
    %7790 = vmatprep.subr.mxu0 0.0
    %7791 = vmatpush2.msra.mxu0 0.0
    %7792 = vmatprep.subr.mxu0 0.0
    %7793 = vmatpush2.msra.mxu0 0.0
    %7794 = vmatprep.subr.mxu0 0.0
    %7795 = vmatpush2.msra.mxu0 0.0
    %7796 = vmatprep.subr.mxu0 0.0
    %7797 = vmatpush2.msra.mxu0 0.0
    %7798 = vmatprep.subr.mxu0 0.0
    %7799 = vmatpush2.msra.mxu0 0.0
    %7800 = vmatprep.subr.mxu0 0.0
    %7801 = vmatpush2.msra.mxu0 0.0
    %7802 = vmatprep.subr.mxu0 0.0
    %7803 = vmatpush2.msra.mxu0 0.0
    %7804 = vmatprep.subr.mxu0 0.0
    %7805 = vmatpush2.msra.mxu0 0.0
    %7806 = vmatprep.subr.mxu0 0.0
    %7807 = vmatpush2.msra.mxu0 0.0
    %7808 = vmatprep.subr.mxu0 0.0
    %7809 = vmatpush2.msra.mxu0 0.0
    %7810 = vmatprep.subr.mxu0 0.0
    %7811 = vmatpush2.msra.mxu0 0.0
    %7812 = vmatprep.subr.mxu0 0.0
    %7813 = vmatpush2.msra.mxu0 0.0
    %7814 = vmatprep.subr.mxu0 0.0
    %7815 = vmatpush2.msra.mxu0 0.0
    %7816 = vmatprep.subr.mxu0 0.0
    %7817 = vmatpush2.msra.mxu0 0.0
    %7818 = vmatprep.subr.mxu0 0.0
    %7819 = vmatpush2.msra.mxu0 0.0
    %7820 = vmatprep.mubr.f32.mxu0 0.0
    %7821 = vmatmul.mubr.f32.gmra.mxu0 %v7334
    %v7822 = vpop.f32.mrf.mxu0
    %v7823 = vadd.f32 0.0, %v7822
    %v7824 = vpop.f32.mrf.mxu0
    %7825 = vdwg.mxu0
    %7826 = vmatprep.subr.mxu0 0.0
    %7827 = vmatpush1.msra.mxu0 0.0
    %7828 = vmatprep.subr.mxu0 0.0
    %7829 = vmatpush1.msra.mxu0 0.0
    %7830 = vmatprep.subr.mxu0 0.0
    %7831 = vmatpush1.msra.mxu0 0.0
    %7832 = vmatprep.subr.mxu0 0.0
    %7833 = vmatpush1.msra.mxu0 0.0
    %7834 = vmatprep.subr.mxu0 0.0
    %7835 = vmatpush1.msra.mxu0 0.0
    %7836 = vmatprep.subr.mxu0 0.0
    %7837 = vmatpush1.msra.mxu0 0.0
    %7838 = vmatprep.subr.mxu0 0.0
    %7839 = vmatpush1.msra.mxu0 0.0
    %7840 = vmatprep.subr.mxu0 0.0
    %7841 = vmatpush1.msra.mxu0 0.0
    %7842 = vmatprep.subr.mxu0 0.0
    %7843 = vmatpush1.msra.mxu0 0.0
    %7844 = vmatprep.subr.mxu0 0.0
    %7845 = vmatpush1.msra.mxu0 0.0
    %7846 = vmatprep.subr.mxu0 0.0
    %7847 = vmatpush1.msra.mxu0 0.0
    %7848 = vmatprep.subr.mxu0 0.0
    %7849 = vmatpush1.msra.mxu0 0.0
    %7850 = vmatprep.subr.mxu0 0.0
    %7851 = vmatpush1.msra.mxu0 0.0
    %7852 = vmatprep.subr.mxu0 0.0
    %7853 = vmatpush1.msra.mxu0 0.0
    %7854 = vmatprep.subr.mxu0 0.0
    %7855 = vmatpush1.msra.mxu0 0.0
    %7856 = vmatprep.subr.mxu0 0.0
    %7857 = vmatpush1.msra.mxu0 %v7331
    %7858 = vmatprep.subr.mxu0 0.0
    %7859 = vmatpush2.msra.mxu0 0.0
    %7860 = vmatprep.subr.mxu0 0.0
    %7861 = vmatpush2.msra.mxu0 0.0
    %7862 = vmatprep.subr.mxu0 0.0
    %7863 = vmatpush2.msra.mxu0 0.0
    %7864 = vmatprep.subr.mxu0 0.0
    %7865 = vmatpush2.msra.mxu0 0.0
    %7866 = vmatprep.subr.mxu0 0.0
    %7867 = vmatpush2.msra.mxu0 0.0
    %7868 = vmatprep.subr.mxu0 0.0
    %7869 = vmatpush2.msra.mxu0 0.0
    %7870 = vmatprep.subr.mxu0 0.0
    %7871 = vmatpush2.msra.mxu0 0.0
    %7872 = vmatprep.subr.mxu0 0.0
    %7873 = vmatpush2.msra.mxu0 0.0
    %7874 = vmatprep.subr.mxu0 0.0
    %7875 = vmatpush2.msra.mxu0 0.0
    %7876 = vmatprep.subr.mxu0 0.0
    %7877 = vmatpush2.msra.mxu0 0.0
    %7878 = vmatprep.subr.mxu0 0.0
    %7879 = vmatpush2.msra.mxu0 0.0
    %7880 = vmatprep.subr.mxu0 0.0
    %7881 = vmatpush2.msra.mxu0 0.0
    %7882 = vmatprep.subr.mxu0 0.0
    %7883 = vmatpush2.msra.mxu0 0.0
    %7884 = vmatprep.subr.mxu0 0.0
    %7885 = vmatpush2.msra.mxu0 0.0
    %7886 = vmatprep.subr.mxu0 0.0
    %7887 = vmatpush2.msra.mxu0 0.0
    %7888 = vmatprep.subr.mxu0 0.0
    %7889 = vmatpush2.msra.mxu0 0.0
    %7890 = vmatprep.mubr.f32.mxu0 0.0
    %7891 = vmatmul.mubr.f32.gmra.mxu0 %v7334
    %v7892 = vpop.f32.mrf.mxu0
    %v7893 = vadd.f32 0.0, %v7892
    %v7894 = vpop.f32.mrf.mxu0
    %7895 = vdwg.mxu0
    %v7896 = vadd.f32 %v6679, %v7403
    %v7897 = vadd.f32 %v6749, %v7473
    %v7898 = vadd.f32 %v6819, %v7543
    %v7899 = vadd.f32 %v6889, %v7613
    %v7900 = vadd.f32 %v6959, %v7683
    %v7901 = vadd.f32 %v7029, %v7753
    %v7902 = vadd.f32 %v7099, %v7823
    %v7903 = vadd.f32 %v7169, %v7893
    %7904 = vst.msk [vmem:[#allocation15] sm:$0xff] %vm561, %v7896
    %7905 = vst.msk [vmem:[#allocation15 + $0x8] sm:$0xff] %vm561, %v7897
    %7906 = vst.msk [vmem:[#allocation15 + $0x10] sm:$0xff] %vm561, %v7898
    %7907 = vst.msk [vmem:[#allocation15 + $0x18] sm:$0xff] %vm561, %v7899
    %7908 = vst.msk [vmem:[#allocation15 + $0x20] sm:$0xff] %vm561, %v7900
    %7909 = vst.msk [vmem:[#allocation15 + $0x28] sm:$0xff] %vm561, %v7901
    %7910 = vst.msk [vmem:[#allocation15 + $0x30] sm:$0xff] %vm561, %v7902
    %7911 = vst.msk [vmem:[#allocation15 + $0x38] sm:$0xff] %vm561, %v7903
    // Predicated region
    $region66: #{tpu_custom_call.1} parent=1 // pred_check
      _
    $region67: #{tpu_custom_call.1} parent=1 // pred_check_branch
      %7913 = sbr.rel (0) target = $region69
    $region68: #{tpu_custom_call.1} parent=1 // pred_region
      %s7915 = ssub.s32 1024, 1024
      %7916 = vsyncadd [#allocation4], %s7915
      %s7917 = sshll.u32 [#allocation14], 4
      %s7918 = int_to_ptr.vmem [resolvable:$true] %s7917
      %7923 = dma.vmem_to_hbm [thread:$0]  %s7918, 1024, %s9, [#allocation4], 128, 128, 8
    $region69: #{tpu_custom_call.1} parent=1 // pred_fallthru
      _
    // Predicated region
    $region70: #{tpu_custom_call.1} parent=1 // pred_check
      _
    $region71: #{tpu_custom_call.1} parent=1 // pred_check_branch
      %7925 = sbr.rel (0) target = $region73
    $region72: #{tpu_custom_call.1} parent=1 // pred_region
      %s7927 = ssub.s32 1024, 1024
      %7928 = vsyncadd [#allocation16], %s7927
      %s7929 = sshll.u32 [#allocation15], 4
      %s7930 = int_to_ptr.vmem [resolvable:$true] %s7929
      %7935 = dma.vmem_to_hbm [thread:$0]  %s7930, 1024, %s10, [#allocation16], 128, 128, 8
    $region73: #{tpu_custom_call.1} parent=1 // pred_fallthru
      _
    // Predicated region
    $region74: #{tpu_custom_call.1} parent=1 // pred_check
      _
    $region75: #{tpu_custom_call.1} parent=1 // pred_check_branch
      %7937 = sbr.rel (0) target = $region77
    $region76: #{tpu_custom_call.1} parent=1 // pred_region
      %7938 = dma.done [#allocation4], 1024
    $region77: #{tpu_custom_call.1} parent=1 // pred_fallthru
      _
    // Predicated region
    $region78: #{tpu_custom_call.1} parent=1 // pred_check
      _
    $region79: #{tpu_custom_call.1} parent=1 // pred_check_branch
      %7940 = sbr.rel (0) target = $region81
    $region80: #{tpu_custom_call.1} parent=1 // pred_region
      %7941 = dma.done [#allocation16], 1024
    $region81: #{tpu_custom_call.1} parent=1 // pred_fallthru
      _
    %7942 = vsyncpa [#allocation3], 1
    %7943 = vsyncpa [#allocation6], 1
    %7944 = vsyncpa [#allocation9], 1
    %7945 = vsyncpa [#allocation12], 1
    %7946 = vsyncpa [#allocation4], 1
    %7947 = vsyncpa [#allocation16], 1

</llo_original>
